<compile_context>
chip_gen: v7x
topology: tpu7x:2x2x1
jax: 0.10.0
libtpu: 0.0.40
codegen_flags: <defaults>
</compile_context>

<pallas_src>
import jax
import jax.numpy as jnp
from jax.experimental import pallas as pl
from jax.experimental.pallas import tpu as pltpu


def _prod(xs):
    p = 1
    for v in xs:
        p *= int(v)
    return p


def _pick_row_tile(out_h, out_w, batch, target_rows):
    """Largest divisor of out_h that is <= target_rows and keeps the flattened
    (tr * out_w) output-row count a multiple of 8 (sublane-aligned out block)."""
    limit = max(1, min(out_h, target_rows))
    if batch < 2:
        # Keep >= 2 grid steps so both v7x TensorCores get work at batch 1.
        limit = min(limit, max(1, out_h // 2))
    best = None
    for tr in range(1, out_h + 1):
        if out_h % tr == 0 and tr <= limit and (tr * out_w) % 8 == 0:
            best = tr
    if best is None:
        best = out_h
    return best


def _make_crnn_kernel(*, K, dilation, tr, out_w, cin, chid, cout, has_hidden):
    """Kernel: per (batch, row-tile) step, slice the VMEM-resident padded
    image(s), accumulate K*K (+ K*K) tap matmuls in f32, add fused bias,
    apply LeakyReLU(0.01), store a (tr*out_w, cout) output slab."""
    trw = tr * out_w

    def kernel(*refs):
        if has_hidden:
            x_ref, h_ref, wx_ref, wh_ref, b_ref, o_ref = refs
        else:
            x_ref, wx_ref, b_ref, o_ref = refs

        r = pl.program_id(1)
        row0 = pl.multiple_of(r * tr, tr)

        acc = jnp.zeros((trw, cout), jnp.float32)

        # i2h: K*K dilated taps of the padded input (padding=dilation).
        for t in range(K * K):
            kh, kw = divmod(t, K)
            xs = x_ref[:, pl.ds(row0 + kh * dilation, tr),
                       pl.ds(kw * dilation, out_w), :]
            acc = acc + jnp.dot(xs.reshape(trw, cin),
                                wx_ref[t * cin:(t + 1) * cin, :],
                                preferred_element_type=jnp.float32)

        # ih2ih: K*K unit-dilation taps of the padded hidden (padding=K//2).
        if has_hidden:
            for t in range(K * K):
                kh, kw = divmod(t, K)
                hs = h_ref[:, pl.ds(row0 + kh, tr), pl.ds(kw, out_w), :]
                acc = acc + jnp.dot(hs.reshape(trw, chid),
                                    wh_ref[t * chid:(t + 1) * chid, :],
                                    preferred_element_type=jnp.float32)

        acc = acc + b_ref[...]                      # fused (bx + bh) bias
        o_ref[...] = jnp.where(acc > 0, acc, 0.01 * acc).astype(o_ref.dtype)

    return kernel


def crnn_i_forward(x, hidden, wx, bx, wh=None, bh=None, *,
                   kernel_size, dilation,
                   compute_dtype=jnp.bfloat16, out_dtype=None,
                   row_tile=None):
    """CRNN_i.forward in NHWC.

    x:      (B, H, W, Cin)          -- `input`
    hidden: (B, H, W, Chid) or None -- `hidden_iteration`
    wx:     (K, K, Cin,  Chid) HWIO i2h weight,   bx: (Chid,)
    wh:     (K, K, Chid, Chid) HWIO ih2ih weight, bh: (Chid,)  (unused if hidden is None)
    compute_dtype: dtype for activations/weights inside the matmuls
                   (default bf16); accumulation is always f32.
    """
    B, H, W, cin = x.shape
    K = kernel_size
    cout = wx.shape[-1]
    pad_x = dilation                       # i2h:   padding=dilation, dilation=dilation
    out_h = H + 2 * pad_x - dilation * (K - 1)
    out_w = W + 2 * pad_x - dilation * (K - 1)
    has_hidden = hidden is not None
    if has_hidden:
        chid = hidden.shape[-1]
        pad_h = K // 2                     # ih2ih: padding=K//2, dilation=1
        # The module sums the two conv outputs, so sizes must match spatially.
        assert (out_h, out_w) == (H, W), "i2h/ih2ih output sizes must match"
    else:
        chid = 0

    cdt = jnp.dtype(compute_dtype) if compute_dtype is not None else jnp.dtype(x.dtype)
    odt = jnp.dtype(out_dtype) if out_dtype is not None else jnp.dtype(x.dtype)

    # ---- glue (plain JAX): cast first so the small pad copies are half-width.
    xp = jnp.pad(x.astype(cdt), ((0, 0), (pad_x, pad_x), (pad_x, pad_x), (0, 0)))
    wxr = wx.reshape(K * K * cin, cout).astype(cdt)
    bias = bx.astype(jnp.float32)

    operands = [xp]
    if has_hidden:
        hp = jnp.pad(hidden.astype(cdt),
                     ((0, 0), (pad_h, pad_h), (pad_h, pad_h), (0, 0)))
        whr = wh.reshape(K * K * chid, cout).astype(cdt)
        bias = bias + bh.astype(jnp.float32)
        operands += [hp, wxr, whr]
    else:
        operands += [wxr]
    operands.append(bias.reshape(1, cout))

    # ---- tiling ----
    target_rows = row_tile if row_tile is not None else max(8, pl.cdiv(1024, out_w))
    tr = _pick_row_tile(out_h, out_w, B, target_rows)
    # TODO(synk): support ragged (tr*out_w) % 8 != 0 shapes via a padded out slab.
    assert (tr * out_w) % 8 == 0, "flattened row tile must be a multiple of 8"
    n_r = out_h // tr
    trw = tr * out_w
    M = B * out_h * out_w

    kernel = _make_crnn_kernel(K=K, dilation=dilation, tr=tr, out_w=out_w,
                               cin=cin, chid=chid, cout=cout,
                               has_hidden=has_hidden)

    # Image blocks: full padded image per batch element; constant block index
    # along the row-tile axis -> DMA'd once per batch, VMEM-resident across r.
    in_specs = [pl.BlockSpec((1,) + tuple(xp.shape[1:]), lambda b, r: (b, 0, 0, 0))]
    if has_hidden:
        in_specs.append(pl.BlockSpec((1,) + tuple(hp.shape[1:]),
                                     lambda b, r: (b, 0, 0, 0)))
    in_specs.append(pl.BlockSpec(tuple(wxr.shape), lambda b, r: (0, 0)))
    if has_hidden:
        in_specs.append(pl.BlockSpec(tuple(whr.shape), lambda b, r: (0, 0)))
    in_specs.append(pl.BlockSpec((1, cout), lambda b, r: (0, 0)))

    out_specs = pl.BlockSpec((trw, cout), lambda b, r: (b * n_r + r, 0))

    # ---- VMEM budget / cost estimate ----
    itemsize = cdt.itemsize
    bytes_accessed = (xp.size * itemsize + wxr.size * itemsize
                      + cout * 4 + M * cout * odt.itemsize)
    block_bytes = _prod(xp.shape[1:]) * itemsize + wxr.size * itemsize
    if has_hidden:
        bytes_accessed += hp.size * itemsize + whr.size * itemsize
        block_bytes += _prod(hp.shape[1:]) * itemsize + whr.size * itemsize
    block_bytes += cout * 4 + trw * cout * (odt.itemsize + 4)
    # Never clamp below the default scoped-VMEM limit; cap for v7x (64 MiB phys).
    vmem_limit = int(min(48 * 1024 * 1024, max(32 * 1024 * 1024, 4 * block_bytes)))

    kc = K * K * (cin + chid)
    cost = pl.CostEstimate(flops=2 * M * kc * cout, transcendentals=0,
                           bytes_accessed=int(bytes_accessed))

    out = pl.pallas_call(
        kernel,
        out_shape=jax.ShapeDtypeStruct((M, cout), odt),
        grid_spec=pltpu.PrefetchScalarGridSpec(
            num_scalar_prefetch=0,
            grid=(B, n_r),
            in_specs=in_specs,
            out_specs=out_specs,
        ),
        compiler_params=pltpu.CompilerParams(
            dimension_semantics=("parallel", "parallel"),
            vmem_limit_bytes=vmem_limit),
        cost_estimate=cost,
    )(*operands)

    # Free trailing-dim split (row-major): (B*out_h*out_w, cout) -> NHWC.
    return out.reshape(B, out_h, out_w, cout)


def _ref_forward(x, hidden, wx, bx, wh=None, bh=None, *, kernel_size, dilation):
    """Pure-JAX reference (lax conv, f32) for verification."""
    pad_x = dilation
    pad_h = kernel_size // 2
    dn = ("NHWC", "HWIO", "NHWC")
    s = jax.lax.conv_general_dilated(
        x, wx, window_strides=(1, 1),
        padding=[(pad_x, pad_x), (pad_x, pad_x)],
        rhs_dilation=(dilation, dilation),
        dimension_numbers=dn) + bx[None, None, None, :]
    if hidden is not None:
        s = s + jax.lax.conv_general_dilated(
            hidden, wh, window_strides=(1, 1),
            padding=[(pad_h, pad_h), (pad_h, pad_h)],
            dimension_numbers=dn) + bh[None, None, None, :]
    return jnp.where(s > 0, s, 0.01 * s)


if __name__ == "__main__":
    # Small shapes: CRNN_i(input_size=4, hidden_size=32, kernel_size=3,
    #                      dilation=2, iteration=True)
    B, H, W = 2, 16, 16
    cin, chid = 4, 32
    K, dil = 3, 2

    key = jax.random.PRNGKey(0)
    k1, k2, k3, k4, k5, k6 = jax.random.split(key, 6)

    x = jax.random.normal(k1, (B, H, W, cin), jnp.float32)
    hidden = jax.random.normal(k2, (B, H, W, chid), jnp.float32)

    # Deterministic conv params (HWIO layout).
    wx = 0.1 * jax.random.normal(k3, (K, K, cin, chid), jnp.float32)
    bx = 0.1 * jax.random.normal(k4, (chid,), jnp.float32)
    wh = 0.1 * jax.random.normal(k5, (K, K, chid, chid), jnp.float32)
    bh = 0.1 * jax.random.normal(k6, (chid,), jnp.float32)

    ref = _ref_forward(x, hidden, wx, bx, wh, bh, kernel_size=K, dilation=dil)
    ref_nohid = _ref_forward(x, None, wx, bx, kernel_size=K, dilation=dil)

    # Default path: bf16 compute, f32 accumulation, iteration=True (fused convs).
    out = crnn_i_forward(x, hidden, wx, bx, wh, bh, kernel_size=K, dilation=dil)
    out = jax.block_until_ready(out)
    assert out.shape == (B, H, W, chid)
    assert float(jnp.max(jnp.abs(out - ref))) < 0.15, "bf16 path mismatch vs reference"

    # f32-compute path with a small explicit row tile (exercises the
    # multi-row-tile grid and dynamic row offsets), tight tolerance.
    out_f32 = crnn_i_forward(x, hidden, wx, bx, wh, bh, kernel_size=K,
                             dilation=dil, compute_dtype=jnp.float32, row_tile=8)
    out_f32 = jax.block_until_ready(out_f32)
    assert jnp.allclose(out_f32, ref, atol=1e-4, rtol=1e-4), \
        "f32 path mismatch vs reference"

    # hidden_iteration=None path (iteration=False), specialized at trace time.
    out_nohid = crnn_i_forward(x, None, wx, bx, kernel_size=K, dilation=dil,
                               compute_dtype=jnp.float32)
    out_nohid = jax.block_until_ready(out_nohid)
    assert out_nohid.shape == (B, H, W, chid)
    assert jnp.allclose(out_nohid, ref_nohid, atol=1e-4, rtol=1e-4), \
        "mismatch vs reference (no-hidden path)"

    print("KERNEL_OK")
</pallas_src>

<mosaic_0001>
module attributes {stable_mosaic.version = 11 : i64} {
  func.func @kernel(%arg0: i32, %arg1: i32, %arg2: memref<1x20x20x4xbf16, #tpu.memory_space<vmem>>, %arg3: memref<1x18x18x32xbf16, #tpu.memory_space<vmem>>, %arg4: memref<36x32xbf16, #tpu.memory_space<vmem>>, %arg5: memref<288x32xbf16, #tpu.memory_space<vmem>>, %arg6: memref<1x32xf32, #tpu.memory_space<vmem>>, %arg7: memref<256x32xf32, #tpu.memory_space<vmem>>) attributes {dimension_semantics = [#tpu.dimension_semantics<parallel>, #tpu.dimension_semantics<parallel>], iteration_bounds = array<i64: 2, 1>, scalar_prefetch = 0 : i64, scratch_operands = 0 : i64, tpu.core_type = #tpu.core_type<tc>, window_params = [{transform_indices = @transform_0, window_bounds = array<i64: 1, 20, 20, 4>}, {transform_indices = @transform_1, window_bounds = array<i64: 1, 18, 18, 32>}, {pipeline_mode = #tpu.pipeline_mode<synchronous>, transform_indices = @transform_2, window_bounds = array<i64: 36, 32>}, {pipeline_mode = #tpu.pipeline_mode<synchronous>, transform_indices = @transform_3, window_bounds = array<i64: 288, 32>}, {pipeline_mode = #tpu.pipeline_mode<synchronous>, transform_indices = @transform_4, window_bounds = array<i64: 1, 32>}, {transform_indices = @transform_5, window_bounds = array<i64: 256, 32>}]} {
    %c16_i32 = arith.constant 16 : i32
    %0 = arith.muli %arg1, %c16_i32 : i32
    %1 = tpu.assume_multiple %0, 16 : i32
    %cst = arith.constant 0.000000e+00 : f32
    %2 = vector.broadcast %cst : f32 to vector<256x32xf32>
    %c0_i32 = arith.constant 0 : i32
    %3 = arith.addi %1, %c0_i32 : i32
    %c0 = arith.constant 0 : index
    %4 = arith.index_cast %3 : i32 to index
    %c0_0 = arith.constant 0 : index
    %c0_1 = arith.constant 0 : index
    %5 = vector.load %arg2[%c0, %4, %c0_0, %c0_1] : memref<1x20x20x4xbf16, #tpu.memory_space<vmem>>, vector<1x16x16x4xbf16>
    %6 = vector.shape_cast %5 : vector<1x16x16x4xbf16> to vector<256x4xbf16>
    %c0_2 = arith.constant 0 : index
    %c0_3 = arith.constant 0 : index
    %7 = vector.load %arg4[%c0_2, %c0_3] : memref<36x32xbf16, #tpu.memory_space<vmem>>, vector<4x32xbf16>
    %cst_4 = arith.constant dense<0.000000e+00> : vector<256x32xf32>
    %8 = tpu.matmul %6, %7, %cst_4 {dimension_numbers = #tpu.dot_dimension_numbers<[1], [0], [0], [1], [0, 0, 1, 1], [], []>} : vector<256x4xbf16>, vector<4x32xbf16>, vector<256x32xf32> -> vector<256x32xf32>
    %9 = arith.addf %2, %8 : vector<256x32xf32>
    %c0_i32_5 = arith.constant 0 : i32
    %10 = arith.addi %1, %c0_i32_5 : i32
    %c0_6 = arith.constant 0 : index
    %11 = arith.index_cast %10 : i32 to index
    %c2 = arith.constant 2 : index
    %c0_7 = arith.constant 0 : index
    %12 = vector.load %arg2[%c0_6, %11, %c2, %c0_7] : memref<1x20x20x4xbf16, #tpu.memory_space<vmem>>, vector<1x16x16x4xbf16>
    %13 = vector.shape_cast %12 : vector<1x16x16x4xbf16> to vector<256x4xbf16>
    %c4 = arith.constant 4 : index
    %c0_8 = arith.constant 0 : index
    %14 = vector.load %arg4[%c4, %c0_8] : memref<36x32xbf16, #tpu.memory_space<vmem>>, vector<4x32xbf16>
    %cst_9 = arith.constant dense<0.000000e+00> : vector<256x32xf32>
    %15 = tpu.matmul %13, %14, %cst_9 {dimension_numbers = #tpu.dot_dimension_numbers<[1], [0], [0], [1], [0, 0, 1, 1], [], []>} : vector<256x4xbf16>, vector<4x32xbf16>, vector<256x32xf32> -> vector<256x32xf32>
    %16 = arith.addf %9, %15 : vector<256x32xf32>
    %c0_i32_10 = arith.constant 0 : i32
    %17 = arith.addi %1, %c0_i32_10 : i32
    %c0_11 = arith.constant 0 : index
    %18 = arith.index_cast %17 : i32 to index
    %c4_12 = arith.constant 4 : index
    %c0_13 = arith.constant 0 : index
    %19 = vector.load %arg2[%c0_11, %18, %c4_12, %c0_13] : memref<1x20x20x4xbf16, #tpu.memory_space<vmem>>, vector<1x16x16x4xbf16>
    %20 = vector.shape_cast %19 : vector<1x16x16x4xbf16> to vector<256x4xbf16>
    %c8 = arith.constant 8 : index
    %c0_14 = arith.constant 0 : index
    %21 = vector.load %arg4[%c8, %c0_14] : memref<36x32xbf16, #tpu.memory_space<vmem>>, vector<4x32xbf16>
    %cst_15 = arith.constant dense<0.000000e+00> : vector<256x32xf32>
    %22 = tpu.matmul %20, %21, %cst_15 {dimension_numbers = #tpu.dot_dimension_numbers<[1], [0], [0], [1], [0, 0, 1, 1], [], []>} : vector<256x4xbf16>, vector<4x32xbf16>, vector<256x32xf32> -> vector<256x32xf32>
    %23 = arith.addf %16, %22 : vector<256x32xf32>
    %c2_i32 = arith.constant 2 : i32
    %24 = arith.addi %1, %c2_i32 : i32
    %c0_16 = arith.constant 0 : index
    %25 = arith.index_cast %24 : i32 to index
    %c0_17 = arith.constant 0 : index
    %c0_18 = arith.constant 0 : index
    %26 = vector.load %arg2[%c0_16, %25, %c0_17, %c0_18] : memref<1x20x20x4xbf16, #tpu.memory_space<vmem>>, vector<1x16x16x4xbf16>
    %27 = vector.shape_cast %26 : vector<1x16x16x4xbf16> to vector<256x4xbf16>
    %c12 = arith.constant 12 : index
    %c0_19 = arith.constant 0 : index
    %28 = vector.load %arg4[%c12, %c0_19] : memref<36x32xbf16, #tpu.memory_space<vmem>>, vector<4x32xbf16>
    %cst_20 = arith.constant dense<0.000000e+00> : vector<256x32xf32>
    %29 = tpu.matmul %27, %28, %cst_20 {dimension_numbers = #tpu.dot_dimension_numbers<[1], [0], [0], [1], [0, 0, 1, 1], [], []>} : vector<256x4xbf16>, vector<4x32xbf16>, vector<256x32xf32> -> vector<256x32xf32>
    %30 = arith.addf %23, %29 : vector<256x32xf32>
    %c2_i32_21 = arith.constant 2 : i32
    %31 = arith.addi %1, %c2_i32_21 : i32
    %c0_22 = arith.constant 0 : index
    %32 = arith.index_cast %31 : i32 to index
    %c2_23 = arith.constant 2 : index
    %c0_24 = arith.constant 0 : index
    %33 = vector.load %arg2[%c0_22, %32, %c2_23, %c0_24] : memref<1x20x20x4xbf16, #tpu.memory_space<vmem>>, vector<1x16x16x4xbf16>
    %34 = vector.shape_cast %33 : vector<1x16x16x4xbf16> to vector<256x4xbf16>
    %c16 = arith.constant 16 : index
    %c0_25 = arith.constant 0 : index
    %35 = vector.load %arg4[%c16, %c0_25] : memref<36x32xbf16, #tpu.memory_space<vmem>>, vector<4x32xbf16>
    %cst_26 = arith.constant dense<0.000000e+00> : vector<256x32xf32>
    %36 = tpu.matmul %34, %35, %cst_26 {dimension_numbers = #tpu.dot_dimension_numbers<[1], [0], [0], [1], [0, 0, 1, 1], [], []>} : vector<256x4xbf16>, vector<4x32xbf16>, vector<256x32xf32> -> vector<256x32xf32>
    %37 = arith.addf %30, %36 : vector<256x32xf32>
    %c2_i32_27 = arith.constant 2 : i32
    %38 = arith.addi %1, %c2_i32_27 : i32
    %c0_28 = arith.constant 0 : index
    %39 = arith.index_cast %38 : i32 to index
    %c4_29 = arith.constant 4 : index
    %c0_30 = arith.constant 0 : index
    %40 = vector.load %arg2[%c0_28, %39, %c4_29, %c0_30] : memref<1x20x20x4xbf16, #tpu.memory_space<vmem>>, vector<1x16x16x4xbf16>
    %41 = vector.shape_cast %40 : vector<1x16x16x4xbf16> to vector<256x4xbf16>
    %c20 = arith.constant 20 : index
    %c0_31 = arith.constant 0 : index
    %42 = vector.load %arg4[%c20, %c0_31] : memref<36x32xbf16, #tpu.memory_space<vmem>>, vector<4x32xbf16>
    %cst_32 = arith.constant dense<0.000000e+00> : vector<256x32xf32>
    %43 = tpu.matmul %41, %42, %cst_32 {dimension_numbers = #tpu.dot_dimension_numbers<[1], [0], [0], [1], [0, 0, 1, 1], [], []>} : vector<256x4xbf16>, vector<4x32xbf16>, vector<256x32xf32> -> vector<256x32xf32>
    %44 = arith.addf %37, %43 : vector<256x32xf32>
    %c4_i32 = arith.constant 4 : i32
    %45 = arith.addi %1, %c4_i32 : i32
    %c0_33 = arith.constant 0 : index
    %46 = arith.index_cast %45 : i32 to index
    %c0_34 = arith.constant 0 : index
    %c0_35 = arith.constant 0 : index
    %47 = vector.load %arg2[%c0_33, %46, %c0_34, %c0_35] : memref<1x20x20x4xbf16, #tpu.memory_space<vmem>>, vector<1x16x16x4xbf16>
    %48 = vector.shape_cast %47 : vector<1x16x16x4xbf16> to vector<256x4xbf16>
    %c24 = arith.constant 24 : index
    %c0_36 = arith.constant 0 : index
    %49 = vector.load %arg4[%c24, %c0_36] : memref<36x32xbf16, #tpu.memory_space<vmem>>, vector<4x32xbf16>
    %cst_37 = arith.constant dense<0.000000e+00> : vector<256x32xf32>
    %50 = tpu.matmul %48, %49, %cst_37 {dimension_numbers = #tpu.dot_dimension_numbers<[1], [0], [0], [1], [0, 0, 1, 1], [], []>} : vector<256x4xbf16>, vector<4x32xbf16>, vector<256x32xf32> -> vector<256x32xf32>
    %51 = arith.addf %44, %50 : vector<256x32xf32>
    %c4_i32_38 = arith.constant 4 : i32
    %52 = arith.addi %1, %c4_i32_38 : i32
    %c0_39 = arith.constant 0 : index
    %53 = arith.index_cast %52 : i32 to index
    %c2_40 = arith.constant 2 : index
    %c0_41 = arith.constant 0 : index
    %54 = vector.load %arg2[%c0_39, %53, %c2_40, %c0_41] : memref<1x20x20x4xbf16, #tpu.memory_space<vmem>>, vector<1x16x16x4xbf16>
    %55 = vector.shape_cast %54 : vector<1x16x16x4xbf16> to vector<256x4xbf16>
    %c28 = arith.constant 28 : index
    %c0_42 = arith.constant 0 : index
    %56 = vector.load %arg4[%c28, %c0_42] : memref<36x32xbf16, #tpu.memory_space<vmem>>, vector<4x32xbf16>
    %cst_43 = arith.constant dense<0.000000e+00> : vector<256x32xf32>
    %57 = tpu.matmul %55, %56, %cst_43 {dimension_numbers = #tpu.dot_dimension_numbers<[1], [0], [0], [1], [0, 0, 1, 1], [], []>} : vector<256x4xbf16>, vector<4x32xbf16>, vector<256x32xf32> -> vector<256x32xf32>
    %58 = arith.addf %51, %57 : vector<256x32xf32>
    %c4_i32_44 = arith.constant 4 : i32
    %59 = arith.addi %1, %c4_i32_44 : i32
    %c0_45 = arith.constant 0 : index
    %60 = arith.index_cast %59 : i32 to index
    %c4_46 = arith.constant 4 : index
    %c0_47 = arith.constant 0 : index
    %61 = vector.load %arg2[%c0_45, %60, %c4_46, %c0_47] : memref<1x20x20x4xbf16, #tpu.memory_space<vmem>>, vector<1x16x16x4xbf16>
    %62 = vector.shape_cast %61 : vector<1x16x16x4xbf16> to vector<256x4xbf16>
    %c32 = arith.constant 32 : index
    %c0_48 = arith.constant 0 : index
    %63 = vector.load %arg4[%c32, %c0_48] : memref<36x32xbf16, #tpu.memory_space<vmem>>, vector<4x32xbf16>
    %cst_49 = arith.constant dense<0.000000e+00> : vector<256x32xf32>
    %64 = tpu.matmul %62, %63, %cst_49 {dimension_numbers = #tpu.dot_dimension_numbers<[1], [0], [0], [1], [0, 0, 1, 1], [], []>} : vector<256x4xbf16>, vector<4x32xbf16>, vector<256x32xf32> -> vector<256x32xf32>
    %65 = arith.addf %58, %64 : vector<256x32xf32>
    %c0_i32_50 = arith.constant 0 : i32
    %66 = arith.addi %1, %c0_i32_50 : i32
    %c0_51 = arith.constant 0 : index
    %67 = arith.index_cast %66 : i32 to index
    %c0_52 = arith.constant 0 : index
    %c0_53 = arith.constant 0 : index
    %68 = vector.load %arg3[%c0_51, %67, %c0_52, %c0_53] : memref<1x18x18x32xbf16, #tpu.memory_space<vmem>>, vector<1x16x16x32xbf16>
    %69 = vector.shape_cast %68 : vector<1x16x16x32xbf16> to vector<256x32xbf16>
    %c0_54 = arith.constant 0 : index
    %c0_55 = arith.constant 0 : index
    %70 = vector.load %arg5[%c0_54, %c0_55] : memref<288x32xbf16, #tpu.memory_space<vmem>>, vector<32x32xbf16>
    %cst_56 = arith.constant dense<0.000000e+00> : vector<256x32xf32>
    %71 = tpu.matmul %69, %70, %cst_56 {dimension_numbers = #tpu.dot_dimension_numbers<[1], [0], [0], [1], [0, 0, 1, 1], [], []>} : vector<256x32xbf16>, vector<32x32xbf16>, vector<256x32xf32> -> vector<256x32xf32>
    %72 = arith.addf %65, %71 : vector<256x32xf32>
    %c0_i32_57 = arith.constant 0 : i32
    %73 = arith.addi %1, %c0_i32_57 : i32
    %c0_58 = arith.constant 0 : index
    %74 = arith.index_cast %73 : i32 to index
    %c1 = arith.constant 1 : index
    %c0_59 = arith.constant 0 : index
    %75 = vector.load %arg3[%c0_58, %74, %c1, %c0_59] : memref<1x18x18x32xbf16, #tpu.memory_space<vmem>>, vector<1x16x16x32xbf16>
    %76 = vector.shape_cast %75 : vector<1x16x16x32xbf16> to vector<256x32xbf16>
    %c32_60 = arith.constant 32 : index
    %c0_61 = arith.constant 0 : index
    %77 = vector.load %arg5[%c32_60, %c0_61] : memref<288x32xbf16, #tpu.memory_space<vmem>>, vector<32x32xbf16>
    %cst_62 = arith.constant dense<0.000000e+00> : vector<256x32xf32>
    %78 = tpu.matmul %76, %77, %cst_62 {dimension_numbers = #tpu.dot_dimension_numbers<[1], [0], [0], [1], [0, 0, 1, 1], [], []>} : vector<256x32xbf16>, vector<32x32xbf16>, vector<256x32xf32> -> vector<256x32xf32>
    %79 = arith.addf %72, %78 : vector<256x32xf32>
    %c0_i32_63 = arith.constant 0 : i32
    %80 = arith.addi %1, %c0_i32_63 : i32
    %c0_64 = arith.constant 0 : index
    %81 = arith.index_cast %80 : i32 to index
    %c2_65 = arith.constant 2 : index
    %c0_66 = arith.constant 0 : index
    %82 = vector.load %arg3[%c0_64, %81, %c2_65, %c0_66] : memref<1x18x18x32xbf16, #tpu.memory_space<vmem>>, vector<1x16x16x32xbf16>
    %83 = vector.shape_cast %82 : vector<1x16x16x32xbf16> to vector<256x32xbf16>
    %c64 = arith.constant 64 : index
    %c0_67 = arith.constant 0 : index
    %84 = vector.load %arg5[%c64, %c0_67] : memref<288x32xbf16, #tpu.memory_space<vmem>>, vector<32x32xbf16>
    %cst_68 = arith.constant dense<0.000000e+00> : vector<256x32xf32>
    %85 = tpu.matmul %83, %84, %cst_68 {dimension_numbers = #tpu.dot_dimension_numbers<[1], [0], [0], [1], [0, 0, 1, 1], [], []>} : vector<256x32xbf16>, vector<32x32xbf16>, vector<256x32xf32> -> vector<256x32xf32>
    %86 = arith.addf %79, %85 : vector<256x32xf32>
    %c1_i32 = arith.constant 1 : i32
    %87 = arith.addi %1, %c1_i32 : i32
    %c0_69 = arith.constant 0 : index
    %88 = arith.index_cast %87 : i32 to index
    %c0_70 = arith.constant 0 : index
    %c0_71 = arith.constant 0 : index
    %89 = vector.load %arg3[%c0_69, %88, %c0_70, %c0_71] : memref<1x18x18x32xbf16, #tpu.memory_space<vmem>>, vector<1x16x16x32xbf16>
    %90 = vector.shape_cast %89 : vector<1x16x16x32xbf16> to vector<256x32xbf16>
    %c96 = arith.constant 96 : index
    %c0_72 = arith.constant 0 : index
    %91 = vector.load %arg5[%c96, %c0_72] : memref<288x32xbf16, #tpu.memory_space<vmem>>, vector<32x32xbf16>
    %cst_73 = arith.constant dense<0.000000e+00> : vector<256x32xf32>
    %92 = tpu.matmul %90, %91, %cst_73 {dimension_numbers = #tpu.dot_dimension_numbers<[1], [0], [0], [1], [0, 0, 1, 1], [], []>} : vector<256x32xbf16>, vector<32x32xbf16>, vector<256x32xf32> -> vector<256x32xf32>
    %93 = arith.addf %86, %92 : vector<256x32xf32>
    %c1_i32_74 = arith.constant 1 : i32
    %94 = arith.addi %1, %c1_i32_74 : i32
    %c0_75 = arith.constant 0 : index
    %95 = arith.index_cast %94 : i32 to index
    %c1_76 = arith.constant 1 : index
    %c0_77 = arith.constant 0 : index
    %96 = vector.load %arg3[%c0_75, %95, %c1_76, %c0_77] : memref<1x18x18x32xbf16, #tpu.memory_space<vmem>>, vector<1x16x16x32xbf16>
    %97 = vector.shape_cast %96 : vector<1x16x16x32xbf16> to vector<256x32xbf16>
    %c128 = arith.constant 128 : index
    %c0_78 = arith.constant 0 : index
    %98 = vector.load %arg5[%c128, %c0_78] : memref<288x32xbf16, #tpu.memory_space<vmem>>, vector<32x32xbf16>
    %cst_79 = arith.constant dense<0.000000e+00> : vector<256x32xf32>
    %99 = tpu.matmul %97, %98, %cst_79 {dimension_numbers = #tpu.dot_dimension_numbers<[1], [0], [0], [1], [0, 0, 1, 1], [], []>} : vector<256x32xbf16>, vector<32x32xbf16>, vector<256x32xf32> -> vector<256x32xf32>
    %100 = arith.addf %93, %99 : vector<256x32xf32>
    %c1_i32_80 = arith.constant 1 : i32
    %101 = arith.addi %1, %c1_i32_80 : i32
    %c0_81 = arith.constant 0 : index
    %102 = arith.index_cast %101 : i32 to index
    %c2_82 = arith.constant 2 : index
    %c0_83 = arith.constant 0 : index
    %103 = vector.load %arg3[%c0_81, %102, %c2_82, %c0_83] : memref<1x18x18x32xbf16, #tpu.memory_space<vmem>>, vector<1x16x16x32xbf16>
    %104 = vector.shape_cast %103 : vector<1x16x16x32xbf16> to vector<256x32xbf16>
    %c160 = arith.constant 160 : index
    %c0_84 = arith.constant 0 : index
    %105 = vector.load %arg5[%c160, %c0_84] : memref<288x32xbf16, #tpu.memory_space<vmem>>, vector<32x32xbf16>
    %cst_85 = arith.constant dense<0.000000e+00> : vector<256x32xf32>
    %106 = tpu.matmul %104, %105, %cst_85 {dimension_numbers = #tpu.dot_dimension_numbers<[1], [0], [0], [1], [0, 0, 1, 1], [], []>} : vector<256x32xbf16>, vector<32x32xbf16>, vector<256x32xf32> -> vector<256x32xf32>
    %107 = arith.addf %100, %106 : vector<256x32xf32>
    %c2_i32_86 = arith.constant 2 : i32
    %108 = arith.addi %1, %c2_i32_86 : i32
    %c0_87 = arith.constant 0 : index
    %109 = arith.index_cast %108 : i32 to index
    %c0_88 = arith.constant 0 : index
    %c0_89 = arith.constant 0 : index
    %110 = vector.load %arg3[%c0_87, %109, %c0_88, %c0_89] : memref<1x18x18x32xbf16, #tpu.memory_space<vmem>>, vector<1x16x16x32xbf16>
    %111 = vector.shape_cast %110 : vector<1x16x16x32xbf16> to vector<256x32xbf16>
    %c192 = arith.constant 192 : index
    %c0_90 = arith.constant 0 : index
    %112 = vector.load %arg5[%c192, %c0_90] : memref<288x32xbf16, #tpu.memory_space<vmem>>, vector<32x32xbf16>
    %cst_91 = arith.constant dense<0.000000e+00> : vector<256x32xf32>
    %113 = tpu.matmul %111, %112, %cst_91 {dimension_numbers = #tpu.dot_dimension_numbers<[1], [0], [0], [1], [0, 0, 1, 1], [], []>} : vector<256x32xbf16>, vector<32x32xbf16>, vector<256x32xf32> -> vector<256x32xf32>
    %114 = arith.addf %107, %113 : vector<256x32xf32>
    %c2_i32_92 = arith.constant 2 : i32
    %115 = arith.addi %1, %c2_i32_92 : i32
    %c0_93 = arith.constant 0 : index
    %116 = arith.index_cast %115 : i32 to index
    %c1_94 = arith.constant 1 : index
    %c0_95 = arith.constant 0 : index
    %117 = vector.load %arg3[%c0_93, %116, %c1_94, %c0_95] : memref<1x18x18x32xbf16, #tpu.memory_space<vmem>>, vector<1x16x16x32xbf16>
    %118 = vector.shape_cast %117 : vector<1x16x16x32xbf16> to vector<256x32xbf16>
    %c224 = arith.constant 224 : index
    %c0_96 = arith.constant 0 : index
    %119 = vector.load %arg5[%c224, %c0_96] : memref<288x32xbf16, #tpu.memory_space<vmem>>, vector<32x32xbf16>
    %cst_97 = arith.constant dense<0.000000e+00> : vector<256x32xf32>
    %120 = tpu.matmul %118, %119, %cst_97 {dimension_numbers = #tpu.dot_dimension_numbers<[1], [0], [0], [1], [0, 0, 1, 1], [], []>} : vector<256x32xbf16>, vector<32x32xbf16>, vector<256x32xf32> -> vector<256x32xf32>
    %121 = arith.addf %114, %120 : vector<256x32xf32>
    %c2_i32_98 = arith.constant 2 : i32
    %122 = arith.addi %1, %c2_i32_98 : i32
    %c0_99 = arith.constant 0 : index
    %123 = arith.index_cast %122 : i32 to index
    %c2_100 = arith.constant 2 : index
    %c0_101 = arith.constant 0 : index
    %124 = vector.load %arg3[%c0_99, %123, %c2_100, %c0_101] : memref<1x18x18x32xbf16, #tpu.memory_space<vmem>>, vector<1x16x16x32xbf16>
    %125 = vector.shape_cast %124 : vector<1x16x16x32xbf16> to vector<256x32xbf16>
    %c256 = arith.constant 256 : index
    %c0_102 = arith.constant 0 : index
    %126 = vector.load %arg5[%c256, %c0_102] : memref<288x32xbf16, #tpu.memory_space<vmem>>, vector<32x32xbf16>
    %cst_103 = arith.constant dense<0.000000e+00> : vector<256x32xf32>
    %127 = tpu.matmul %125, %126, %cst_103 {dimension_numbers = #tpu.dot_dimension_numbers<[1], [0], [0], [1], [0, 0, 1, 1], [], []>} : vector<256x32xbf16>, vector<32x32xbf16>, vector<256x32xf32> -> vector<256x32xf32>
    %128 = arith.addf %121, %127 : vector<256x32xf32>
    %c0_104 = arith.constant 0 : index
    %c0_105 = arith.constant 0 : index
    %129 = vector.load %arg6[%c0_104, %c0_105] : memref<1x32xf32, #tpu.memory_space<vmem>>, vector<1x32xf32>
    %130 = vector.broadcast %129 : vector<1x32xf32> to vector<256x32xf32>
    %131 = arith.addf %128, %130 : vector<256x32xf32>
    %cst_106 = arith.constant 0.000000e+00 : f32
    %132 = vector.broadcast %cst_106 : f32 to vector<256x32xf32>
    %133 = arith.cmpf ogt, %131, %132 : vector<256x32xf32>
    %cst_107 = arith.constant 0.00999999977 : f32
    %134 = vector.broadcast %cst_107 : f32 to vector<256x32xf32>
    %135 = arith.mulf %134, %131 : vector<256x32xf32>
    %136 = arith.select %133, %131, %135 : vector<256x32xi1>, vector<256x32xf32>
    %c0_108 = arith.constant 0 : index
    %c0_109 = arith.constant 0 : index
    %137 = vector.load %arg7[%c0_108, %c0_109] : memref<256x32xf32, #tpu.memory_space<vmem>>, vector<256x32xf32>
    tpu.vector_store %arg7[%c0_108, %c0_109], %136 {strides = array<i32>} : memref<256x32xf32, #tpu.memory_space<vmem>>, vector<256x32xf32>,
    return
  }
  func.func @transform_0(%arg0: i32, %arg1: i32) -> (i32, i32, i32, i32) {
    %c0_i32 = arith.constant 0 : i32
    %c0_i32_0 = arith.constant 0 : i32
    %c0_i32_1 = arith.constant 0 : i32
    %c0_i32_2 = arith.constant 0 : i32
    return %arg0, %c0_i32, %c0_i32_0, %c0_i32_1 : i32, i32, i32, i32
  }
  func.func @transform_1(%arg0: i32, %arg1: i32) -> (i32, i32, i32, i32) {
    %c0_i32 = arith.constant 0 : i32
    %c0_i32_0 = arith.constant 0 : i32
    %c0_i32_1 = arith.constant 0 : i32
    %c0_i32_2 = arith.constant 0 : i32
    return %arg0, %c0_i32, %c0_i32_0, %c0_i32_1 : i32, i32, i32, i32
  }
  func.func @transform_2(%arg0: i32, %arg1: i32) -> (i32, i32) {
    %c0_i32 = arith.constant 0 : i32
    %c0_i32_0 = arith.constant 0 : i32
    %c0_i32_1 = arith.constant 0 : i32
    return %c0_i32, %c0_i32_0 : i32, i32
  }
  func.func @transform_3(%arg0: i32, %arg1: i32) -> (i32, i32) {
    %c0_i32 = arith.constant 0 : i32
    %c0_i32_0 = arith.constant 0 : i32
    %c0_i32_1 = arith.constant 0 : i32
    return %c0_i32, %c0_i32_0 : i32, i32
  }
  func.func @transform_4(%arg0: i32, %arg1: i32) -> (i32, i32) {
    %c0_i32 = arith.constant 0 : i32
    %c0_i32_0 = arith.constant 0 : i32
    %c0_i32_1 = arith.constant 0 : i32
    return %c0_i32, %c0_i32_0 : i32, i32
  }
  func.func @transform_5(%arg0: i32, %arg1: i32) -> (i32, i32) {
    %c1_i32 = arith.constant 1 : i32
    %0 = arith.muli %arg0, %c1_i32 : i32
    %1 = arith.addi %0, %arg1 : i32
    %c0_i32 = arith.constant 0 : i32
    %c0_i32_0 = arith.constant 0 : i32
    return %1, %c0_i32 : i32, i32
  }
}

</mosaic_0001>

<llo_original>
// kernel: tpu_custom_call.1
$region0: #{tpu_custom_call.1}
  #allocation0 [shape = 'u32[]', space=smem, size = 0x4, offset = 0x4, fixed_abs, tag = 'smem constant byte address 0x4 - core index']
  #allocation1 [shape = 'u32[144,128]{1,0:T(1,128)}', space=vmem, size = 0x12000, scoped, tag = 'internal scratch']
  %s0 = inlined_call_operand.vmem [shape: bf16[2,20,20,4], index: 0, kind: input, shape index: {}]
  %s1 = inlined_call_operand.vmem [shape: bf16[2,18,18,32], index: 1, kind: input, shape index: {}]
  %s2 = inlined_call_operand.vmem [shape: bf16[36,32], index: 2, kind: input, shape index: {}]
  %s3 = inlined_call_operand.vmem [shape: bf16[288,32], index: 3, kind: input, shape index: {}]
  %s4 = inlined_call_operand.vmem [shape: f32[1,32], index: 4, kind: input, shape index: {}]
  %s5 = inlined_call_operand.vmem [shape: f32[512,32], index: 5, kind: output, shape index: {}]
  %s6 = sld [smem:[#allocation0]]
  $region53: #{tpu_custom_call.1} parent=0
    _
  %s8 = ssub.s32 1, %s6
  %s9 = scalar_select 0, %s8, %s6
  loop: start=0, step=1, limit=4
  $region2: #{tpu_custom_call.1} parent=0 // loop_pre_header
    _
  $region3: #{tpu_custom_call.1} parent=0 // loop_header
    %s11 = sphi 0, %s15
    %p12 = scmp.ge.s32.totalorder %s11, 4
    %s18 = sphi 0, %s30
    %s19 = sphi 0, %s26
    %s20 = sphi 0, %s18
    %s21 = sphi 0, %s19
    %s22 = sphi 0, %s20
    %s23 = sphi 0, %s21
    %s33 = sphi 0, %s35
    %s36 = sphi 0, %s33
    %s37 = sphi 0, %s36
    %s53 = sphi 0, %s37
    %s59 = sphi 0, %s61
    %s62 = sphi 0, %s59
    %s63 = sphi 0, %s62
    %s79 = sphi 0, %s63
    %s83 = sphi 0, %s83
    %s85 = sphi 0, %s83
    %s86 = sphi 0, %s85
    %s100 = sphi 0, %s86
    %s104 = sphi 0, %s104
    %s106 = sphi 0, %s104
    %s107 = sphi 0, %s106
    %s121 = sphi 0, %s107
    %s125 = sphi 0, %s125
    %s127 = sphi 0, %s125
    %s128 = sphi 0, %s127
    %s142 = sphi 0, %s128
    %s150 = sphi 0, %s152
    %s153 = sphi 0, %s150
    %s154 = sphi 0, %s153
    %s170 = sphi 0, %s154
  $region4: #{tpu_custom_call.1} parent=0 // loop_header_branch
    %14 = sbr.rel (%p12) target = $region8
  $region5: #{tpu_custom_call.1} parent=0 // loop_body
    %s16 = ssub.s32 %s11, 1
    %s17 = ssub.s32 %s11, 2
    %s24 = sadd.s32 1, %s19
    %p25 = scmp.ge.s32.totalorder %s24, 1
    %s26 = scalar_select %p25, 0, %s24
    %s27 = sadd.s32 1, %s18
    %s28 = scalar_select %p25, %s27, %s18
    %p29 = scmp.ge.s32.totalorder %s28, 2
    %s30 = scalar_select %p29, 0, %s28
    %s31 = ssub.s32 %s18, %s30
    %p32 = scmp.eq.s32.totalorder %s31, 0
    %s34 = sadd.s32 %s33, 1
    %s35 = scalar_select %p32, %s33, %s34
    %p38 = pneg %p32
    %p39 = scmp.eq.s32.totalorder %s11, 1
    %p40 = por %p38, %p39
    %p41 = scmp.ne.s32.totalorder %s33, %s36
    %p42 = scmp.eq.s32.totalorder %s11, 0
    %p43 = por %p41, %p42
    %p44 = scmp.ne.s32.totalorder %s33, %s36
    %p45 = scmp.eq.s32.totalorder %s16, 1
    %p46 = por %p44, %p45
    %p47 = scmp.ne.s32.totalorder %s36, %s37
    %p48 = scmp.eq.s32.totalorder %s16, 0
    %p49 = por %p47, %p48
    %p50 = scmp.ne.s32.totalorder %s36, %s37
    %p51 = scmp.eq.s32.totalorder %s17, 1
    %p52 = por %p50, %p51
    %p54 = scmp.ne.s32.totalorder %s37, %s53
    %p55 = scmp.eq.s32.totalorder %s17, 0
    %p56 = por %p54, %p55
    %s57 = ssub.s32 %s18, %s30
    %p58 = scmp.eq.s32.totalorder %s57, 0
    %s60 = sadd.s32 %s59, 1
    %s61 = scalar_select %p58, %s59, %s60
    %p64 = pneg %p58
    %p65 = scmp.eq.s32.totalorder %s11, 1
    %p66 = por %p64, %p65
    %p67 = scmp.ne.s32.totalorder %s59, %s62
    %p68 = scmp.eq.s32.totalorder %s11, 0
    %p69 = por %p67, %p68
    %p70 = scmp.ne.s32.totalorder %s59, %s62
    %p71 = scmp.eq.s32.totalorder %s16, 1
    %p72 = por %p70, %p71
    %p73 = scmp.ne.s32.totalorder %s62, %s63
    %p74 = scmp.eq.s32.totalorder %s16, 0
    %p75 = por %p73, %p74
    %p76 = scmp.ne.s32.totalorder %s62, %s63
    %p77 = scmp.eq.s32.totalorder %s17, 1
    %p78 = por %p76, %p77
    %p80 = scmp.ne.s32.totalorder %s63, %s79
    %p81 = scmp.eq.s32.totalorder %s17, 0
    %p82 = por %p80, %p81
    %s84 = sadd.s32 %s83, 1
    %p87 = scmp.eq.s32.totalorder %s11, 1
    %p88 = scmp.ne.s32.totalorder %s83, %s85
    %p89 = scmp.eq.s32.totalorder %s11, 0
    %p90 = por %p88, %p89
    %p91 = scmp.ne.s32.totalorder %s83, %s85
    %p92 = scmp.eq.s32.totalorder %s16, 1
    %p93 = por %p91, %p92
    %p94 = scmp.ne.s32.totalorder %s85, %s86
    %p95 = scmp.eq.s32.totalorder %s16, 0
    %p96 = por %p94, %p95
    %p97 = scmp.ne.s32.totalorder %s85, %s86
    %p98 = scmp.eq.s32.totalorder %s17, 1
    %p99 = por %p97, %p98
    %p101 = scmp.ne.s32.totalorder %s86, %s100
    %p102 = scmp.eq.s32.totalorder %s17, 0
    %p103 = por %p101, %p102
    %s105 = sadd.s32 %s104, 1
    %p108 = scmp.eq.s32.totalorder %s11, 1
    %p109 = scmp.ne.s32.totalorder %s104, %s106
    %p110 = scmp.eq.s32.totalorder %s11, 0
    %p111 = por %p109, %p110
    %p112 = scmp.ne.s32.totalorder %s104, %s106
    %p113 = scmp.eq.s32.totalorder %s16, 1
    %p114 = por %p112, %p113
    %p115 = scmp.ne.s32.totalorder %s106, %s107
    %p116 = scmp.eq.s32.totalorder %s16, 0
    %p117 = por %p115, %p116
    %p118 = scmp.ne.s32.totalorder %s106, %s107
    %p119 = scmp.eq.s32.totalorder %s17, 1
    %p120 = por %p118, %p119
    %p122 = scmp.ne.s32.totalorder %s107, %s121
    %p123 = scmp.eq.s32.totalorder %s17, 0
    %p124 = por %p122, %p123
    %s126 = sadd.s32 %s125, 1
    %p129 = scmp.eq.s32.totalorder %s11, 1
    %p130 = scmp.ne.s32.totalorder %s125, %s127
    %p131 = scmp.eq.s32.totalorder %s11, 0
    %p132 = por %p130, %p131
    %p133 = scmp.ne.s32.totalorder %s125, %s127
    %p134 = scmp.eq.s32.totalorder %s16, 1
    %p135 = por %p133, %p134
    %p136 = scmp.ne.s32.totalorder %s127, %s128
    %p137 = scmp.eq.s32.totalorder %s16, 0
    %p138 = por %p136, %p137
    %p139 = scmp.ne.s32.totalorder %s127, %s128
    %p140 = scmp.eq.s32.totalorder %s17, 1
    %p141 = por %p139, %p140
    %p143 = scmp.ne.s32.totalorder %s128, %s142
    %p144 = scmp.eq.s32.totalorder %s17, 0
    %p145 = por %p143, %p144
    %s146 = sadd.s32 %s18, %s19
    %s147 = sadd.s32 %s30, %s26
    %s148 = ssub.s32 %s146, %s147
    %p149 = scmp.eq.s32.totalorder %s148, 0
    %s151 = sadd.s32 %s150, 1
    %s152 = scalar_select %p149, %s150, %s151
    %p155 = pneg %p149
    %p156 = scmp.eq.s32.totalorder %s11, 1
    %p157 = por %p155, %p156
    %p158 = scmp.ne.s32.totalorder %s150, %s153
    %p159 = scmp.eq.s32.totalorder %s11, 0
    %p160 = por %p158, %p159
    %p161 = scmp.ne.s32.totalorder %s150, %s153
    %p162 = scmp.eq.s32.totalorder %s16, 1
    %p163 = por %p161, %p162
    %p164 = scmp.ne.s32.totalorder %s153, %s154
    %p165 = scmp.eq.s32.totalorder %s16, 0
    %p166 = por %p164, %p165
    %p167 = scmp.ne.s32.totalorder %s153, %s154
    %p168 = scmp.eq.s32.totalorder %s17, 1
    %p169 = por %p167, %p168
    %p171 = scmp.ne.s32.totalorder %s154, %s170
    %p172 = scmp.eq.s32.totalorder %s17, 0
    %p173 = por %p171, %p172
    %p174 = scmp.le.s32.totalorder 1, %s11
    %p175 = scmp.lt.s32.totalorder %s11, 3
    %p176 = pnand %p174, %p175
    %p177 = pneg %p176
    // Predicated region
    $region9: #{tpu_custom_call.1} parent=5 // pred_check
      _
    $region10: #{tpu_custom_call.1} parent=5 // pred_check_branch
      %179 = sbr.rel (%p176) target = $region12
    $region11: #{tpu_custom_call.1} parent=5 // pred_region
      %s180 = ssub.s32 %s11, 1
      // Predicated region
      $region13: #{tpu_custom_call.1} parent=11 // pred_check
        %p181 = pneg %p96
      $region14: #{tpu_custom_call.1} parent=11 // pred_check_branch
        %183 = sbr.rel (%p181) target = $region16
      $region15: #{tpu_custom_call.1} parent=11 // pred_region
        _
      $region16: #{tpu_custom_call.1} parent=11 // pred_fallthru
        _
      // Predicated region
      $region17: #{tpu_custom_call.1} parent=11 // pred_check
        %p184 = pneg %p117
      $region18: #{tpu_custom_call.1} parent=11 // pred_check_branch
        %186 = sbr.rel (%p184) target = $region20
      $region19: #{tpu_custom_call.1} parent=11 // pred_region
        _
      $region20: #{tpu_custom_call.1} parent=11 // pred_fallthru
        _
      // Predicated region
      $region21: #{tpu_custom_call.1} parent=11 // pred_check
        %p187 = pneg %p138
      $region22: #{tpu_custom_call.1} parent=11 // pred_check_branch
        %189 = sbr.rel (%p187) target = $region24
      $region23: #{tpu_custom_call.1} parent=11 // pred_region
        _
      $region24: #{tpu_custom_call.1} parent=11 // pred_fallthru
        _
    $region12: #{tpu_custom_call.1} parent=5 // pred_fallthru
      _
    %p190 = scmp.lt.s32.totalorder %s11, 2
    // Predicated region
    $region25: #{tpu_custom_call.1} parent=5 // pred_check
      %p191 = pneg %p190
    $region26: #{tpu_custom_call.1} parent=5 // pred_check_branch
      %193 = sbr.rel (%p191) target = $region28
    $region27: #{tpu_custom_call.1} parent=5 // pred_region
      // Predicated region
      $region29: #{tpu_custom_call.1} parent=27 // pred_check
        %p194 = pneg %p43
      $region30: #{tpu_custom_call.1} parent=27 // pred_check_branch
        %196 = sbr.rel (%p194) target = $region32
      $region31: #{tpu_custom_call.1} parent=27 // pred_region
        %p197 = scmp.lt.s32.totalorder %s18, 1
        %s198 = scalar_select %p197, %s18, 1
        %s199 = smul.addr %s198, 60
        %s200 = smul.addr %s199, 4
        %s201 = scalar_lea.vmem %s0, %s200
      $region32: #{tpu_custom_call.1} parent=27 // pred_fallthru
        _
      // Predicated region
      $region33: #{tpu_custom_call.1} parent=27 // pred_check
        %p202 = pneg %p69
      $region34: #{tpu_custom_call.1} parent=27 // pred_check_branch
        %204 = sbr.rel (%p202) target = $region36
      $region35: #{tpu_custom_call.1} parent=27 // pred_region
        %p205 = scmp.lt.s32.totalorder %s18, 1
        %s206 = scalar_select %p205, %s18, 1
        %s207 = smul.addr %s206, 54
        %s208 = smul.addr %s207, 4
        %s209 = scalar_lea.vmem %s1, %s208
      $region36: #{tpu_custom_call.1} parent=27 // pred_fallthru
        _
    $region28: #{tpu_custom_call.1} parent=5 // pred_fallthru
      _
    %p210 = scmp.le.s32.totalorder 1, %s11
    %p211 = scmp.lt.s32.totalorder %s11, 3
    %p212 = pnand %p210, %p211
    %p213 = pneg %p212
    // Predicated region
    $region37: #{tpu_custom_call.1} parent=5 // pred_check
      _
    $region38: #{tpu_custom_call.1} parent=5 // pred_check_branch
      %215 = sbr.rel (%p212) target = $region40
    $region39: #{tpu_custom_call.1} parent=5 // pred_region
      %s216 = ssub.s32 %s11, 1
      %p217 = scmp.lt.s32.totalorder %s20, 1
      %s218 = scalar_select %p217, %s20, 1
      %s219 = smul.addr %s218, 60
      %s220 = smul.addr %s219, 4
      %s221 = scalar_lea.vmem %s0, %s220
      %p222 = pneg %p49
      %p223 = pneg %p46
      %p224 = scmp.lt.s32.totalorder %s20, 1
      %s225 = scalar_select %p224, %s20, 1
      %s226 = smul.addr %s225, 54
      %s227 = smul.addr %s226, 4
      %s228 = scalar_lea.vmem %s1, %s227
      %p229 = pneg %p75
      %p230 = pneg %p72
      %p231 = pneg %p96
      %p232 = pneg %p93
      %p233 = pneg %p117
      %p234 = pneg %p114
      %p235 = pneg %p138
      %p236 = pneg %p135
      %p237 = pneg %p166
      %p238 = pneg %p163
      %s239 = sadd.s32 %s20, %s21
      %s240 = smul.u32 32, %s239
      %p241 = scmp.lt.s32.totalorder %s240, 63
      %s242 = scalar_select %p241, %s240, 63
      %s243 = smul.addr %s242, 8
      %s244 = scalar_lea.vmem %s5, %s243
      %p245 = scmp.lt.s32.totalorder %s20, 1
      %s246 = scalar_select %p245, %s20, 1
      %s247 = smul.addr %s246, 60
      %s248 = smul.addr %s247, 4
      %s249 = scalar_lea.vmem %s0, %s248
      %p250 = scmp.lt.s32.totalorder %s20, 1
      %s251 = scalar_select %p250, %s20, 1
      %s252 = smul.addr %s251, 54
      %s253 = smul.addr %s252, 4
      %s254 = scalar_lea.vmem %s1, %s253
      %s255 = sadd.s32 %s20, %s21
      %s256 = smul.u32 32, %s255
      %p257 = scmp.lt.s32.totalorder %s256, 63
      %s258 = scalar_select %p257, %s256, 63
      %s259 = smul.addr %s258, 8
      %s260 = scalar_lea.vmem %s5, %s259
      %s261 = sadd.s32 %s20, %s21
      %s262 = smul.u32 32, %s261
      %s264 = smul.u32 %s21, 16
      %s265 = smul.u32 %s264, 3
      %s266 = smul.addr %s265, 4
      %s267 = scalar_lea.vmem %s249, %s266
      %v268 = vld [vmem:[%s267] sm:$0xf]
      %v269 = vld [vmem:[%s267 + $0x4] sm:$0xf]
      %v270 = vld [vmem:[%s267 + $0xc] sm:$0xf]
      %v271 = vld [vmem:[%s267 + $0x10] sm:$0xf]
      %v272 = vld [vmem:[%s267 + $0x18] sm:$0xf]
      %v273 = vld [vmem:[%s267 + $0x1c] sm:$0xf]
      %v274 = vld [vmem:[%s267 + $0x24] sm:$0xf]
      %v275 = vld [vmem:[%s267 + $0x28] sm:$0xf]
      %v276 = vld [vmem:[%s267 + $0x30] sm:$0xf]
      %v277 = vld [vmem:[%s267 + $0x34] sm:$0xf]
      %v278 = vld [vmem:[%s267 + $0x3c] sm:$0xf]
      %v279 = vld [vmem:[%s267 + $0x40] sm:$0xf]
      %v280 = vld [vmem:[%s267 + $0x48] sm:$0xf]
      %v281 = vld [vmem:[%s267 + $0x4c] sm:$0xf]
      %v282 = vld [vmem:[%s267 + $0x54] sm:$0xf]
      %v283 = vld [vmem:[%s267 + $0x58] sm:$0xf]
      %v284 = vld [vmem:[%s267 + $0x60] sm:$0xf]
      %v285 = vld [vmem:[%s267 + $0x64] sm:$0xf]
      %v286 = vld [vmem:[%s267 + $0x6c] sm:$0xf]
      %v287 = vld [vmem:[%s267 + $0x70] sm:$0xf]
      %v288 = vld [vmem:[%s267 + $0x78] sm:$0xf]
      %v289 = vld [vmem:[%s267 + $0x7c] sm:$0xf]
      %v290 = vld [vmem:[%s267 + $0x84] sm:$0xf]
      %v291 = vld [vmem:[%s267 + $0x88] sm:$0xf]
      %v292 = vld [vmem:[%s267 + $0x90] sm:$0xf]
      %v293 = vld [vmem:[%s267 + $0x94] sm:$0xf]
      %v294 = vld [vmem:[%s267 + $0x9c] sm:$0xf]
      %v295 = vld [vmem:[%s267 + $0xa0] sm:$0xf]
      %v296 = vld [vmem:[%s267 + $0xa8] sm:$0xf]
      %v297 = vld [vmem:[%s267 + $0xac] sm:$0xf]
      %v298 = vld [vmem:[%s267 + $0xb4] sm:$0xf]
      %v299 = vld [vmem:[%s267 + $0xb8] sm:$0xf]
      %v300 = vld [vmem:[%s2] sm:$0x3]
      %v301 = vld [vmem:[%s267] sm:$0xe]
      %v302 = vld [vmem:[%s267 + $0x8] sm:$0x1]
      %v303 = vld [vmem:[%s267 + $0xc] sm:$0xe]
      %v304 = vld [vmem:[%s267 + $0x14] sm:$0x1]
      %v305 = vld [vmem:[%s267 + $0x18] sm:$0xe]
      %v306 = vld [vmem:[%s267 + $0x20] sm:$0x1]
      %v307 = vld [vmem:[%s267 + $0x24] sm:$0xe]
      %v308 = vld [vmem:[%s267 + $0x2c] sm:$0x1]
      %v309 = vld [vmem:[%s267 + $0x30] sm:$0xe]
      %v310 = vld [vmem:[%s267 + $0x38] sm:$0x1]
      %v311 = vld [vmem:[%s267 + $0x3c] sm:$0xe]
      %v312 = vld [vmem:[%s267 + $0x44] sm:$0x1]
      %v313 = vld [vmem:[%s267 + $0x48] sm:$0xe]
      %v314 = vld [vmem:[%s267 + $0x50] sm:$0x1]
      %v315 = vld [vmem:[%s267 + $0x54] sm:$0xe]
      %v316 = vld [vmem:[%s267 + $0x5c] sm:$0x1]
      %v317 = vld [vmem:[%s267 + $0x60] sm:$0xe]
      %v318 = vld [vmem:[%s267 + $0x68] sm:$0x1]
      %v319 = vld [vmem:[%s267 + $0x6c] sm:$0xe]
      %v320 = vld [vmem:[%s267 + $0x74] sm:$0x1]
      %v321 = vld [vmem:[%s267 + $0x78] sm:$0xe]
      %v322 = vld [vmem:[%s267 + $0x80] sm:$0x1]
      %v323 = vld [vmem:[%s267 + $0x84] sm:$0xe]
      %v324 = vld [vmem:[%s267 + $0x8c] sm:$0x1]
      %v325 = vld [vmem:[%s267 + $0x90] sm:$0xe]
      %v326 = vld [vmem:[%s267 + $0x98] sm:$0x1]
      %v327 = vld [vmem:[%s267 + $0x9c] sm:$0xe]
      %v328 = vld [vmem:[%s267 + $0xa4] sm:$0x1]
      %v329 = vld [vmem:[%s267 + $0xa8] sm:$0xe]
      %v330 = vld [vmem:[%s267 + $0xb0] sm:$0x1]
      %v331 = vld [vmem:[%s267 + $0xb4] sm:$0xe]
      %v332 = vld [vmem:[%s267 + $0xbc] sm:$0x1]
      %vm381 = vcmask 1042432
      %vm382 = vcmask 1046532
      %vm383 = vmor %vm381, %vm382
      %v384 = vrot.slane %v301, 5
      %v385 = vrot.slane %v384, 4
      %v386 = vrot.slane %v269, 5
      %v387 = vsel %vm383, %v385, %v386
      %v388 = vrot.slane %v386, 4
      %v389 = vrot.slane %v302, 5
      %v390 = vsel %vm383, %v388, %v389
      %v391 = vrot.slane %v303, 5
      %v392 = vrot.slane %v391, 4
      %v393 = vrot.slane %v271, 5
      %v394 = vsel %vm383, %v392, %v393
      %v395 = vrot.slane %v393, 4
      %v396 = vrot.slane %v304, 5
      %v397 = vsel %vm383, %v395, %v396
      %v398 = vrot.slane %v305, 5
      %v399 = vrot.slane %v398, 4
      %v400 = vrot.slane %v273, 5
      %v401 = vsel %vm383, %v399, %v400
      %v402 = vrot.slane %v400, 4
      %v403 = vrot.slane %v306, 5
      %v404 = vsel %vm383, %v402, %v403
      %v405 = vrot.slane %v307, 5
      %v406 = vrot.slane %v405, 4
      %v407 = vrot.slane %v275, 5
      %v408 = vsel %vm383, %v406, %v407
      %v409 = vrot.slane %v407, 4
      %v410 = vrot.slane %v308, 5
      %v411 = vsel %vm383, %v409, %v410
      %v412 = vrot.slane %v309, 5
      %v413 = vrot.slane %v412, 4
      %v414 = vrot.slane %v277, 5
      %v415 = vsel %vm383, %v413, %v414
      %v416 = vrot.slane %v414, 4
      %v417 = vrot.slane %v310, 5
      %v418 = vsel %vm383, %v416, %v417
      %v419 = vrot.slane %v311, 5
      %v420 = vrot.slane %v419, 4
      %v421 = vrot.slane %v279, 5
      %v422 = vsel %vm383, %v420, %v421
      %v423 = vrot.slane %v421, 4
      %v424 = vrot.slane %v312, 5
      %v425 = vsel %vm383, %v423, %v424
      %v426 = vrot.slane %v313, 5
      %v427 = vrot.slane %v426, 4
      %v428 = vrot.slane %v281, 5
      %v429 = vsel %vm383, %v427, %v428
      %v430 = vrot.slane %v428, 4
      %v431 = vrot.slane %v314, 5
      %v432 = vsel %vm383, %v430, %v431
      %v433 = vrot.slane %v315, 5
      %v434 = vrot.slane %v433, 4
      %v435 = vrot.slane %v283, 5
      %v436 = vsel %vm383, %v434, %v435
      %v437 = vrot.slane %v435, 4
      %v438 = vrot.slane %v316, 5
      %v439 = vsel %vm383, %v437, %v438
      %v440 = vrot.slane %v317, 5
      %v441 = vrot.slane %v440, 4
      %v442 = vrot.slane %v285, 5
      %v443 = vsel %vm383, %v441, %v442
      %v444 = vrot.slane %v442, 4
      %v445 = vrot.slane %v318, 5
      %v446 = vsel %vm383, %v444, %v445
      %v447 = vrot.slane %v319, 5
      %v448 = vrot.slane %v447, 4
      %v449 = vrot.slane %v287, 5
      %v450 = vsel %vm383, %v448, %v449
      %v451 = vrot.slane %v449, 4
      %v452 = vrot.slane %v320, 5
      %v453 = vsel %vm383, %v451, %v452
      %v454 = vrot.slane %v321, 5
      %v455 = vrot.slane %v454, 4
      %v456 = vrot.slane %v289, 5
      %v457 = vsel %vm383, %v455, %v456
      %v458 = vrot.slane %v456, 4
      %v459 = vrot.slane %v322, 5
      %v460 = vsel %vm383, %v458, %v459
      %v461 = vrot.slane %v323, 5
      %v462 = vrot.slane %v461, 4
      %v463 = vrot.slane %v291, 5
      %v464 = vsel %vm383, %v462, %v463
      %v465 = vrot.slane %v463, 4
      %v466 = vrot.slane %v324, 5
      %v467 = vsel %vm383, %v465, %v466
      %v468 = vrot.slane %v325, 5
      %v469 = vrot.slane %v468, 4
      %v470 = vrot.slane %v293, 5
      %v471 = vsel %vm383, %v469, %v470
      %v472 = vrot.slane %v470, 4
      %v473 = vrot.slane %v326, 5
      %v474 = vsel %vm383, %v472, %v473
      %v475 = vrot.slane %v327, 5
      %v476 = vrot.slane %v475, 4
      %v477 = vrot.slane %v295, 5
      %v478 = vsel %vm383, %v476, %v477
      %v479 = vrot.slane %v477, 4
      %v480 = vrot.slane %v328, 5
      %v481 = vsel %vm383, %v479, %v480
      %v482 = vrot.slane %v329, 5
      %v483 = vrot.slane %v482, 4
      %v484 = vrot.slane %v297, 5
      %v485 = vsel %vm383, %v483, %v484
      %v486 = vrot.slane %v484, 4
      %v487 = vrot.slane %v330, 5
      %v488 = vsel %vm383, %v486, %v487
      %v489 = vrot.slane %v331, 5
      %v490 = vrot.slane %v489, 4
      %v491 = vrot.slane %v299, 5
      %v492 = vsel %vm383, %v490, %v491
      %v493 = vrot.slane %v491, 4
      %v494 = vrot.slane %v332, 5
      %v495 = vsel %vm383, %v493, %v494
      %v496 = vld [vmem:[%s2] sm:$0xc]
      %v497 = vunpack.c.l.b16 %v387
      %v498 = vunpack.c.l.b16 %v390
      %v499 = vunpack.c.l.b16 %v394
      %v500 = vunpack.c.l.b16 %v397
      %v501 = vunpack.c.l.b16 %v401
      %v502 = vunpack.c.l.b16 %v404
      %v503 = vunpack.c.l.b16 %v408
      %v504 = vunpack.c.l.b16 %v411
      %v505 = vunpack.c.l.b16 %v415
      %v506 = vunpack.c.l.b16 %v418
      %v507 = vunpack.c.l.b16 %v422
      %v508 = vunpack.c.l.b16 %v425
      %v509 = vunpack.c.l.b16 %v429
      %v510 = vunpack.c.l.b16 %v432
      %v511 = vunpack.c.l.b16 %v436
      %v512 = vunpack.c.l.b16 %v439
      %v513 = vunpack.c.l.b16 %v443
      %v514 = vunpack.c.l.b16 %v446
      %v515 = vunpack.c.l.b16 %v450
      %v516 = vunpack.c.l.b16 %v453
      %v517 = vunpack.c.l.b16 %v457
      %v518 = vunpack.c.l.b16 %v460
      %v519 = vunpack.c.l.b16 %v464
      %v520 = vunpack.c.l.b16 %v467
      %v521 = vunpack.c.l.b16 %v471
      %v522 = vunpack.c.l.b16 %v474
      %v523 = vunpack.c.l.b16 %v478
      %v524 = vunpack.c.l.b16 %v481
      %v525 = vunpack.c.l.b16 %v485
      %v526 = vunpack.c.l.b16 %v488
      %v527 = vunpack.c.l.b16 %v492
      %v528 = vunpack.c.l.b16 %v495
      %v529 = vpack.c.b16 %v498, %v497
      %v530 = vpack.c.b16 %v500, %v499
      %v531 = vpack.c.b16 %v502, %v501
      %v532 = vpack.c.b16 %v504, %v503
      %v533 = vpack.c.b16 %v506, %v505
      %v534 = vpack.c.b16 %v508, %v507
      %v535 = vpack.c.b16 %v510, %v509
      %v536 = vpack.c.b16 %v512, %v511
      %v537 = vpack.c.b16 %v514, %v513
      %v538 = vpack.c.b16 %v516, %v515
      %v539 = vpack.c.b16 %v518, %v517
      %v540 = vpack.c.b16 %v520, %v519
      %v541 = vpack.c.b16 %v522, %v521
      %v542 = vpack.c.b16 %v524, %v523
      %v543 = vpack.c.b16 %v526, %v525
      %v544 = vpack.c.b16 %v528, %v527
      %v546 = vunpack.c.l.b16 %v496
      %v547 = vpack.c.b16 %v546, %v546
      %v548 = vrot.slane %v547, 2
      %vm549 = vcmask 31744
      %v551 = vsel %vm549, %v529, 0
      %v554 = vsel %vm549, %v530, 0
      %v557 = vsel %vm549, %v531, 0
      %v560 = vsel %vm549, %v532, 0
      %v563 = vsel %vm549, %v533, 0
      %v566 = vsel %vm549, %v534, 0
      %v569 = vsel %vm549, %v535, 0
      %v572 = vsel %vm549, %v536, 0
      %v575 = vsel %vm549, %v537, 0
      %v578 = vsel %vm549, %v538, 0
      %v581 = vsel %vm549, %v539, 0
      %v584 = vsel %vm549, %v540, 0
      %v587 = vsel %vm549, %v541, 0
      %v590 = vsel %vm549, %v542, 0
      %v593 = vsel %vm549, %v543, 0
      %v596 = vsel %vm549, %v544, 0
      %vm598 = vcmask 1041408
      %v600 = vsel %vm598, %v548, 0
      %602 = vmatprep.subr.bf16.mxu0 0
      %603 = vmatpush1.bf16.msra.mxu0 %v600
      %604 = vmatprep.subr.bf16.mxu0 0
      %605 = vmatpush1.bf16.msra.mxu0 0
      %606 = vmatprep.subr.bf16.mxu0 0
      %607 = vmatpush1.bf16.msra.mxu0 0
      %608 = vmatprep.subr.bf16.mxu0 0
      %609 = vmatpush1.bf16.msra.mxu0 0
      %610 = vmatprep.subr.bf16.mxu0 0
      %611 = vmatpush1.bf16.msra.mxu0 0
      %612 = vmatprep.subr.bf16.mxu0 0
      %613 = vmatpush1.bf16.msra.mxu0 0
      %614 = vmatprep.subr.bf16.mxu0 0
      %615 = vmatpush1.bf16.msra.mxu0 0
      %616 = vmatprep.subr.bf16.mxu0 0
      %617 = vmatpush1.bf16.msra.mxu0 0
      %618 = vmatprep.subr.bf16.mxu0 0
      %619 = vmatpush1.bf16.msra.mxu0 0
      %620 = vmatprep.subr.bf16.mxu0 0
      %621 = vmatpush1.bf16.msra.mxu0 0
      %622 = vmatprep.subr.bf16.mxu0 0
      %623 = vmatpush1.bf16.msra.mxu0 0
      %624 = vmatprep.subr.bf16.mxu0 0
      %625 = vmatpush1.bf16.msra.mxu0 0
      %626 = vmatprep.subr.bf16.mxu0 0
      %627 = vmatpush1.bf16.msra.mxu0 0
      %628 = vmatprep.subr.bf16.mxu0 0
      %629 = vmatpush1.bf16.msra.mxu0 0
      %630 = vmatprep.subr.bf16.mxu0 0
      %631 = vmatpush1.bf16.msra.mxu0 0
      %632 = vmatprep.subr.bf16.mxu0 0
      %633 = vmatpush1.bf16.msra.mxu0 0
      %634 = vmatprep.mubr.bf16.mxu0 0
      %635 = vmatmul.mubr.bf16.gmra.mrb[0].mxu0 %v551
      %v636 = vpop.f32.mrb[0].mxu0
      %v637 = vadd.f32 0.0, %v636
      %v638 = vpop.f32.mrb[0].mxu0
      %v639 = vpop.f32.mrb[0].mxu0
      %v640 = vadd.f32 0.0, %v639
      %v641 = vpop.f32.mrb[0].mxu0
      %642 = vmatprep.mubr.bf16.mxu0 0
      %643 = vmatmul.mubr.bf16.gmra.mrb[0].mxu0 %v554
      %v644 = vpop.f32.mrb[0].mxu0
      %v645 = vadd.f32 0.0, %v644
      %v646 = vpop.f32.mrb[0].mxu0
      %v647 = vpop.f32.mrb[0].mxu0
      %v648 = vadd.f32 0.0, %v647
      %v649 = vpop.f32.mrb[0].mxu0
      %650 = vmatprep.mubr.bf16.mxu0 0
      %651 = vmatmul.mubr.bf16.gmra.mrb[0].mxu0 %v557
      %v652 = vpop.f32.mrb[0].mxu0
      %v653 = vadd.f32 0.0, %v652
      %v654 = vpop.f32.mrb[0].mxu0
      %v655 = vpop.f32.mrb[0].mxu0
      %v656 = vadd.f32 0.0, %v655
      %v657 = vpop.f32.mrb[0].mxu0
      %658 = vmatprep.mubr.bf16.mxu0 0
      %659 = vmatmul.mubr.bf16.gmra.mrb[0].mxu0 %v560
      %v660 = vpop.f32.mrb[0].mxu0
      %v661 = vadd.f32 0.0, %v660
      %v662 = vpop.f32.mrb[0].mxu0
      %v663 = vpop.f32.mrb[0].mxu0
      %v664 = vadd.f32 0.0, %v663
      %v665 = vpop.f32.mrb[0].mxu0
      %666 = vmatprep.mubr.bf16.mxu0 0
      %667 = vmatmul.mubr.bf16.gmra.mrb[0].mxu0 %v563
      %v668 = vpop.f32.mrb[0].mxu0
      %v669 = vadd.f32 0.0, %v668
      %v670 = vpop.f32.mrb[0].mxu0
      %v671 = vpop.f32.mrb[0].mxu0
      %v672 = vadd.f32 0.0, %v671
      %v673 = vpop.f32.mrb[0].mxu0
      %674 = vmatprep.mubr.bf16.mxu0 0
      %675 = vmatmul.mubr.bf16.gmra.mrb[0].mxu0 %v566
      %v676 = vpop.f32.mrb[0].mxu0
      %v677 = vadd.f32 0.0, %v676
      %v678 = vpop.f32.mrb[0].mxu0
      %v679 = vpop.f32.mrb[0].mxu0
      %v680 = vadd.f32 0.0, %v679
      %v681 = vpop.f32.mrb[0].mxu0
      %682 = vmatprep.mubr.bf16.mxu0 0
      %683 = vmatmul.mubr.bf16.gmra.mrb[0].mxu0 %v569
      %v684 = vpop.f32.mrb[0].mxu0
      %v685 = vadd.f32 0.0, %v684
      %v686 = vpop.f32.mrb[0].mxu0
      %v687 = vpop.f32.mrb[0].mxu0
      %v688 = vadd.f32 0.0, %v687
      %v689 = vpop.f32.mrb[0].mxu0
      %690 = vmatprep.mubr.bf16.mxu0 0
      %691 = vmatmul.mubr.bf16.gmra.mrb[0].mxu0 %v572
      %v692 = vpop.f32.mrb[0].mxu0
      %v693 = vadd.f32 0.0, %v692
      %v694 = vpop.f32.mrb[0].mxu0
      %v695 = vpop.f32.mrb[0].mxu0
      %v696 = vadd.f32 0.0, %v695
      %v697 = vpop.f32.mrb[0].mxu0
      %698 = vmatprep.mubr.bf16.mxu0 0
      %699 = vmatmul.mubr.bf16.gmra.mrb[0].mxu0 %v575
      %v700 = vpop.f32.mrb[0].mxu0
      %v701 = vadd.f32 0.0, %v700
      %v702 = vpop.f32.mrb[0].mxu0
      %v703 = vpop.f32.mrb[0].mxu0
      %v704 = vadd.f32 0.0, %v703
      %v705 = vpop.f32.mrb[0].mxu0
      %706 = vmatprep.mubr.bf16.mxu0 0
      %707 = vmatmul.mubr.bf16.gmra.mrb[0].mxu0 %v578
      %v708 = vpop.f32.mrb[0].mxu0
      %v709 = vadd.f32 0.0, %v708
      %v710 = vpop.f32.mrb[0].mxu0
      %v711 = vpop.f32.mrb[0].mxu0
      %v712 = vadd.f32 0.0, %v711
      %v713 = vpop.f32.mrb[0].mxu0
      %714 = vmatprep.mubr.bf16.mxu0 0
      %715 = vmatmul.mubr.bf16.gmra.mrb[0].mxu0 %v581
      %v716 = vpop.f32.mrb[0].mxu0
      %v717 = vadd.f32 0.0, %v716
      %v718 = vpop.f32.mrb[0].mxu0
      %v719 = vpop.f32.mrb[0].mxu0
      %v720 = vadd.f32 0.0, %v719
      %v721 = vpop.f32.mrb[0].mxu0
      %722 = vmatprep.mubr.bf16.mxu0 0
      %723 = vmatmul.mubr.bf16.gmra.mrb[0].mxu0 %v584
      %v724 = vpop.f32.mrb[0].mxu0
      %v725 = vadd.f32 0.0, %v724
      %v726 = vpop.f32.mrb[0].mxu0
      %v727 = vpop.f32.mrb[0].mxu0
      %v728 = vadd.f32 0.0, %v727
      %v729 = vpop.f32.mrb[0].mxu0
      %730 = vmatprep.mubr.bf16.mxu0 0
      %731 = vmatmul.mubr.bf16.gmra.mrb[0].mxu0 %v587
      %v732 = vpop.f32.mrb[0].mxu0
      %v733 = vadd.f32 0.0, %v732
      %v734 = vpop.f32.mrb[0].mxu0
      %v735 = vpop.f32.mrb[0].mxu0
      %v736 = vadd.f32 0.0, %v735
      %v737 = vpop.f32.mrb[0].mxu0
      %738 = vmatprep.mubr.bf16.mxu0 0
      %739 = vmatmul.mubr.bf16.gmra.mrb[0].mxu0 %v590
      %v740 = vpop.f32.mrb[0].mxu0
      %v741 = vadd.f32 0.0, %v740
      %v742 = vpop.f32.mrb[0].mxu0
      %v743 = vpop.f32.mrb[0].mxu0
      %v744 = vadd.f32 0.0, %v743
      %v745 = vpop.f32.mrb[0].mxu0
      %746 = vmatprep.mubr.bf16.mxu0 0
      %747 = vmatmul.mubr.bf16.gmra.mrb[0].mxu0 %v593
      %v748 = vpop.f32.mrb[0].mxu0
      %v749 = vadd.f32 0.0, %v748
      %v750 = vpop.f32.mrb[0].mxu0
      %v751 = vpop.f32.mrb[0].mxu0
      %v752 = vadd.f32 0.0, %v751
      %v753 = vpop.f32.mrb[0].mxu0
      %754 = vmatprep.mubr.bf16.mxu0 0
      %755 = vmatmul.mubr.bf16.gmra.mrb[0].mxu0 %v596
      %v756 = vpop.f32.mrb[0].mxu0
      %v757 = vadd.f32 0.0, %v756
      %v758 = vpop.f32.mrb[0].mxu0
      %v759 = vpop.f32.mrb[0].mxu0
      %v760 = vadd.f32 0.0, %v759
      %v761 = vpop.f32.mrb[0].mxu0
      %762 = vdwg.mxu0
      %v779 = vunpack.c.l.b16 %v268
      %v780 = vunpack.c.l.b16 %v269
      %v781 = vunpack.c.l.b16 %v270
      %v782 = vunpack.c.l.b16 %v271
      %v783 = vunpack.c.l.b16 %v272
      %v784 = vunpack.c.l.b16 %v273
      %v785 = vunpack.c.l.b16 %v274
      %v786 = vunpack.c.l.b16 %v275
      %v787 = vunpack.c.l.b16 %v276
      %v788 = vunpack.c.l.b16 %v277
      %v789 = vunpack.c.l.b16 %v278
      %v790 = vunpack.c.l.b16 %v279
      %v791 = vunpack.c.l.b16 %v280
      %v792 = vunpack.c.l.b16 %v281
      %v793 = vunpack.c.l.b16 %v282
      %v794 = vunpack.c.l.b16 %v283
      %v795 = vunpack.c.l.b16 %v284
      %v796 = vunpack.c.l.b16 %v285
      %v797 = vunpack.c.l.b16 %v286
      %v798 = vunpack.c.l.b16 %v287
      %v799 = vunpack.c.l.b16 %v288
      %v800 = vunpack.c.l.b16 %v289
      %v801 = vunpack.c.l.b16 %v290
      %v802 = vunpack.c.l.b16 %v291
      %v803 = vunpack.c.l.b16 %v292
      %v804 = vunpack.c.l.b16 %v293
      %v805 = vunpack.c.l.b16 %v294
      %v806 = vunpack.c.l.b16 %v295
      %v807 = vunpack.c.l.b16 %v296
      %v808 = vunpack.c.l.b16 %v297
      %v809 = vunpack.c.l.b16 %v298
      %v810 = vunpack.c.l.b16 %v299
      %v811 = vpack.c.b16 %v780, %v779
      %v812 = vpack.c.b16 %v782, %v781
      %v813 = vpack.c.b16 %v784, %v783
      %v814 = vpack.c.b16 %v786, %v785
      %v815 = vpack.c.b16 %v788, %v787
      %v816 = vpack.c.b16 %v790, %v789
      %v817 = vpack.c.b16 %v792, %v791
      %v818 = vpack.c.b16 %v794, %v793
      %v819 = vpack.c.b16 %v796, %v795
      %v820 = vpack.c.b16 %v798, %v797
      %v821 = vpack.c.b16 %v800, %v799
      %v822 = vpack.c.b16 %v802, %v801
      %v823 = vpack.c.b16 %v804, %v803
      %v824 = vpack.c.b16 %v806, %v805
      %v825 = vpack.c.b16 %v808, %v807
      %v826 = vpack.c.b16 %v810, %v809
      %v828 = vsel %vm549, %v811, 0
      %v831 = vsel %vm549, %v812, 0
      %v834 = vsel %vm549, %v813, 0
      %v837 = vsel %vm549, %v814, 0
      %v840 = vsel %vm549, %v815, 0
      %v843 = vsel %vm549, %v816, 0
      %v846 = vsel %vm549, %v817, 0
      %v849 = vsel %vm549, %v818, 0
      %v852 = vsel %vm549, %v819, 0
      %v855 = vsel %vm549, %v820, 0
      %v858 = vsel %vm549, %v821, 0
      %v861 = vsel %vm549, %v822, 0
      %v864 = vsel %vm549, %v823, 0
      %v867 = vsel %vm549, %v824, 0
      %v870 = vsel %vm549, %v825, 0
      %v873 = vsel %vm549, %v826, 0
      %v876 = vsel %vm598, %v300, 0
      %878 = vmatprep.subr.bf16.mxu0 0
      %879 = vmatpush1.bf16.msra.mxu0 %v876
      %880 = vmatprep.subr.bf16.mxu0 0
      %881 = vmatpush1.bf16.msra.mxu0 0
      %882 = vmatprep.subr.bf16.mxu0 0
      %883 = vmatpush1.bf16.msra.mxu0 0
      %884 = vmatprep.subr.bf16.mxu0 0
      %885 = vmatpush1.bf16.msra.mxu0 0
      %886 = vmatprep.subr.bf16.mxu0 0
      %887 = vmatpush1.bf16.msra.mxu0 0
      %888 = vmatprep.subr.bf16.mxu0 0
      %889 = vmatpush1.bf16.msra.mxu0 0
      %890 = vmatprep.subr.bf16.mxu0 0
      %891 = vmatpush1.bf16.msra.mxu0 0
      %892 = vmatprep.subr.bf16.mxu0 0
      %893 = vmatpush1.bf16.msra.mxu0 0
      %894 = vmatprep.subr.bf16.mxu0 0
      %895 = vmatpush1.bf16.msra.mxu0 0
      %896 = vmatprep.subr.bf16.mxu0 0
      %897 = vmatpush1.bf16.msra.mxu0 0
      %898 = vmatprep.subr.bf16.mxu0 0
      %899 = vmatpush1.bf16.msra.mxu0 0
      %900 = vmatprep.subr.bf16.mxu0 0
      %901 = vmatpush1.bf16.msra.mxu0 0
      %902 = vmatprep.subr.bf16.mxu0 0
      %903 = vmatpush1.bf16.msra.mxu0 0
      %904 = vmatprep.subr.bf16.mxu0 0
      %905 = vmatpush1.bf16.msra.mxu0 0
      %906 = vmatprep.subr.bf16.mxu0 0
      %907 = vmatpush1.bf16.msra.mxu0 0
      %908 = vmatprep.subr.bf16.mxu0 0
      %909 = vmatpush1.bf16.msra.mxu0 0
      %910 = vmatprep.mubr.bf16.mxu0 0
      %911 = vmatmul.mubr.bf16.gmra.mrb[0].mxu0 %v828
      %v912 = vpop.f32.mrb[0].mxu0
      %v913 = vadd.f32 %v637, %v912
      %v914 = vpop.f32.mrb[0].mxu0
      %v915 = vpop.f32.mrb[0].mxu0
      %v916 = vadd.f32 %v640, %v915
      %v917 = vpop.f32.mrb[0].mxu0
      %918 = vmatprep.mubr.bf16.mxu0 0
      %919 = vmatmul.mubr.bf16.gmra.mrb[0].mxu0 %v831
      %v920 = vpop.f32.mrb[0].mxu0
      %v921 = vadd.f32 %v645, %v920
      %v922 = vpop.f32.mrb[0].mxu0
      %v923 = vpop.f32.mrb[0].mxu0
      %v924 = vadd.f32 %v648, %v923
      %v925 = vpop.f32.mrb[0].mxu0
      %926 = vmatprep.mubr.bf16.mxu0 0
      %927 = vmatmul.mubr.bf16.gmra.mrb[0].mxu0 %v834
      %v928 = vpop.f32.mrb[0].mxu0
      %v929 = vadd.f32 %v653, %v928
      %v930 = vpop.f32.mrb[0].mxu0
      %v931 = vpop.f32.mrb[0].mxu0
      %v932 = vadd.f32 %v656, %v931
      %v933 = vpop.f32.mrb[0].mxu0
      %934 = vmatprep.mubr.bf16.mxu0 0
      %935 = vmatmul.mubr.bf16.gmra.mrb[0].mxu0 %v837
      %v936 = vpop.f32.mrb[0].mxu0
      %v937 = vadd.f32 %v661, %v936
      %v938 = vpop.f32.mrb[0].mxu0
      %v939 = vpop.f32.mrb[0].mxu0
      %v940 = vadd.f32 %v664, %v939
      %v941 = vpop.f32.mrb[0].mxu0
      %942 = vmatprep.mubr.bf16.mxu0 0
      %943 = vmatmul.mubr.bf16.gmra.mrb[0].mxu0 %v840
      %v944 = vpop.f32.mrb[0].mxu0
      %v945 = vadd.f32 %v669, %v944
      %v946 = vpop.f32.mrb[0].mxu0
      %v947 = vpop.f32.mrb[0].mxu0
      %v948 = vadd.f32 %v672, %v947
      %v949 = vpop.f32.mrb[0].mxu0
      %950 = vmatprep.mubr.bf16.mxu0 0
      %951 = vmatmul.mubr.bf16.gmra.mrb[0].mxu0 %v843
      %v952 = vpop.f32.mrb[0].mxu0
      %v953 = vadd.f32 %v677, %v952
      %v954 = vpop.f32.mrb[0].mxu0
      %v955 = vpop.f32.mrb[0].mxu0
      %v956 = vadd.f32 %v680, %v955
      %v957 = vpop.f32.mrb[0].mxu0
      %958 = vmatprep.mubr.bf16.mxu0 0
      %959 = vmatmul.mubr.bf16.gmra.mrb[0].mxu0 %v846
      %v960 = vpop.f32.mrb[0].mxu0
      %v961 = vadd.f32 %v685, %v960
      %v962 = vpop.f32.mrb[0].mxu0
      %v963 = vpop.f32.mrb[0].mxu0
      %v964 = vadd.f32 %v688, %v963
      %v965 = vpop.f32.mrb[0].mxu0
      %966 = vmatprep.mubr.bf16.mxu0 0
      %967 = vmatmul.mubr.bf16.gmra.mrb[0].mxu0 %v849
      %v968 = vpop.f32.mrb[0].mxu0
      %v969 = vadd.f32 %v693, %v968
      %v970 = vpop.f32.mrb[0].mxu0
      %v971 = vpop.f32.mrb[0].mxu0
      %v972 = vadd.f32 %v696, %v971
      %v973 = vpop.f32.mrb[0].mxu0
      %974 = vmatprep.mubr.bf16.mxu0 0
      %975 = vmatmul.mubr.bf16.gmra.mrb[0].mxu0 %v852
      %v976 = vpop.f32.mrb[0].mxu0
      %v977 = vadd.f32 %v701, %v976
      %v978 = vpop.f32.mrb[0].mxu0
      %v979 = vpop.f32.mrb[0].mxu0
      %v980 = vadd.f32 %v704, %v979
      %v981 = vpop.f32.mrb[0].mxu0
      %982 = vmatprep.mubr.bf16.mxu0 0
      %983 = vmatmul.mubr.bf16.gmra.mrb[0].mxu0 %v855
      %v984 = vpop.f32.mrb[0].mxu0
      %v985 = vadd.f32 %v709, %v984
      %v986 = vpop.f32.mrb[0].mxu0
      %v987 = vpop.f32.mrb[0].mxu0
      %v988 = vadd.f32 %v712, %v987
      %v989 = vpop.f32.mrb[0].mxu0
      %990 = vmatprep.mubr.bf16.mxu0 0
      %991 = vmatmul.mubr.bf16.gmra.mrb[0].mxu0 %v858
      %v992 = vpop.f32.mrb[0].mxu0
      %v993 = vadd.f32 %v717, %v992
      %v994 = vpop.f32.mrb[0].mxu0
      %v995 = vpop.f32.mrb[0].mxu0
      %v996 = vadd.f32 %v720, %v995
      %v997 = vpop.f32.mrb[0].mxu0
      %998 = vmatprep.mubr.bf16.mxu0 0
      %999 = vmatmul.mubr.bf16.gmra.mrb[0].mxu0 %v861
      %v1000 = vpop.f32.mrb[0].mxu0
      %v1001 = vadd.f32 %v725, %v1000
      %v1002 = vpop.f32.mrb[0].mxu0
      %v1003 = vpop.f32.mrb[0].mxu0
      %v1004 = vadd.f32 %v728, %v1003
      %v1005 = vpop.f32.mrb[0].mxu0
      %1006 = vmatprep.mubr.bf16.mxu0 0
      %1007 = vmatmul.mubr.bf16.gmra.mrb[0].mxu0 %v864
      %v1008 = vpop.f32.mrb[0].mxu0
      %v1009 = vadd.f32 %v733, %v1008
      %v1010 = vpop.f32.mrb[0].mxu0
      %v1011 = vpop.f32.mrb[0].mxu0
      %v1012 = vadd.f32 %v736, %v1011
      %v1013 = vpop.f32.mrb[0].mxu0
      %1014 = vmatprep.mubr.bf16.mxu0 0
      %1015 = vmatmul.mubr.bf16.gmra.mrb[0].mxu0 %v867
      %v1016 = vpop.f32.mrb[0].mxu0
      %v1017 = vadd.f32 %v741, %v1016
      %v1018 = vpop.f32.mrb[0].mxu0
      %v1019 = vpop.f32.mrb[0].mxu0
      %v1020 = vadd.f32 %v744, %v1019
      %v1021 = vpop.f32.mrb[0].mxu0
      %1022 = vmatprep.mubr.bf16.mxu0 0
      %1023 = vmatmul.mubr.bf16.gmra.mrb[0].mxu0 %v870
      %v1024 = vpop.f32.mrb[0].mxu0
      %v1025 = vadd.f32 %v749, %v1024
      %v1026 = vpop.f32.mrb[0].mxu0
      %v1027 = vpop.f32.mrb[0].mxu0
      %v1028 = vadd.f32 %v752, %v1027
      %v1029 = vpop.f32.mrb[0].mxu0
      %1030 = vmatprep.mubr.bf16.mxu0 0
      %1031 = vmatmul.mubr.bf16.gmra.mrb[0].mxu0 %v873
      %v1032 = vpop.f32.mrb[0].mxu0
      %v1033 = vadd.f32 %v757, %v1032
      %v1034 = vpop.f32.mrb[0].mxu0
      %v1035 = vpop.f32.mrb[0].mxu0
      %v1036 = vadd.f32 %v760, %v1035
      %v1037 = vpop.f32.mrb[0].mxu0
      %1038 = vdwg.mxu0
      %v1039 = vld [vmem:[%s267] sm:$0xc]
      %v1040 = vld [vmem:[%s267 + $0x8] sm:$0x3]
      %v1041 = vld [vmem:[%s267 + $0xc] sm:$0xc]
      %v1042 = vld [vmem:[%s267 + $0x14] sm:$0x3]
      %v1043 = vld [vmem:[%s267 + $0x18] sm:$0xc]
      %v1044 = vld [vmem:[%s267 + $0x20] sm:$0x3]
      %v1045 = vld [vmem:[%s267 + $0x24] sm:$0xc]
      %v1046 = vld [vmem:[%s267 + $0x2c] sm:$0x3]
      %v1047 = vld [vmem:[%s267 + $0x30] sm:$0xc]
      %v1048 = vld [vmem:[%s267 + $0x38] sm:$0x3]
      %v1049 = vld [vmem:[%s267 + $0x3c] sm:$0xc]
      %v1050 = vld [vmem:[%s267 + $0x44] sm:$0x3]
      %v1051 = vld [vmem:[%s267 + $0x48] sm:$0xc]
      %v1052 = vld [vmem:[%s267 + $0x50] sm:$0x3]
      %v1053 = vld [vmem:[%s267 + $0x54] sm:$0xc]
      %v1054 = vld [vmem:[%s267 + $0x5c] sm:$0x3]
      %v1055 = vld [vmem:[%s267 + $0x60] sm:$0xc]
      %v1056 = vld [vmem:[%s267 + $0x68] sm:$0x3]
      %v1057 = vld [vmem:[%s267 + $0x6c] sm:$0xc]
      %v1058 = vld [vmem:[%s267 + $0x74] sm:$0x3]
      %v1059 = vld [vmem:[%s267 + $0x78] sm:$0xc]
      %v1060 = vld [vmem:[%s267 + $0x80] sm:$0x3]
      %v1061 = vld [vmem:[%s267 + $0x84] sm:$0xc]
      %v1062 = vld [vmem:[%s267 + $0x8c] sm:$0x3]
      %v1063 = vld [vmem:[%s267 + $0x90] sm:$0xc]
      %v1064 = vld [vmem:[%s267 + $0x98] sm:$0x3]
      %v1065 = vld [vmem:[%s267 + $0x9c] sm:$0xc]
      %v1066 = vld [vmem:[%s267 + $0xa4] sm:$0x3]
      %v1067 = vld [vmem:[%s267 + $0xa8] sm:$0xc]
      %v1068 = vld [vmem:[%s267 + $0xb0] sm:$0x3]
      %v1069 = vld [vmem:[%s267 + $0xb4] sm:$0xc]
      %v1070 = vld [vmem:[%s267 + $0xbc] sm:$0x3]
      %vm1103 = vcmask 1041408
      %vm1104 = vcmask 1045508
      %vm1105 = vmor %vm1103, %vm1104
      %v1106 = vrot.slane %v1039, 6
      %v1107 = vrot.slane %v1106, 4
      %v1108 = vrot.slane %v269, 6
      %v1109 = vsel %vm1105, %v1107, %v1108
      %v1110 = vrot.slane %v1108, 4
      %v1111 = vrot.slane %v1040, 6
      %v1112 = vsel %vm1105, %v1110, %v1111
      %v1113 = vrot.slane %v1041, 6
      %v1114 = vrot.slane %v1113, 4
      %v1115 = vrot.slane %v271, 6
      %v1116 = vsel %vm1105, %v1114, %v1115
      %v1117 = vrot.slane %v1115, 4
      %v1118 = vrot.slane %v1042, 6
      %v1119 = vsel %vm1105, %v1117, %v1118
      %v1120 = vrot.slane %v1043, 6
      %v1121 = vrot.slane %v1120, 4
      %v1122 = vrot.slane %v273, 6
      %v1123 = vsel %vm1105, %v1121, %v1122
      %v1124 = vrot.slane %v1122, 4
      %v1125 = vrot.slane %v1044, 6
      %v1126 = vsel %vm1105, %v1124, %v1125
      %v1127 = vrot.slane %v1045, 6
      %v1128 = vrot.slane %v1127, 4
      %v1129 = vrot.slane %v275, 6
      %v1130 = vsel %vm1105, %v1128, %v1129
      %v1131 = vrot.slane %v1129, 4
      %v1132 = vrot.slane %v1046, 6
      %v1133 = vsel %vm1105, %v1131, %v1132
      %v1134 = vrot.slane %v1047, 6
      %v1135 = vrot.slane %v1134, 4
      %v1136 = vrot.slane %v277, 6
      %v1137 = vsel %vm1105, %v1135, %v1136
      %v1138 = vrot.slane %v1136, 4
      %v1139 = vrot.slane %v1048, 6
      %v1140 = vsel %vm1105, %v1138, %v1139
      %v1141 = vrot.slane %v1049, 6
      %v1142 = vrot.slane %v1141, 4
      %v1143 = vrot.slane %v279, 6
      %v1144 = vsel %vm1105, %v1142, %v1143
      %v1145 = vrot.slane %v1143, 4
      %v1146 = vrot.slane %v1050, 6
      %v1147 = vsel %vm1105, %v1145, %v1146
      %v1148 = vrot.slane %v1051, 6
      %v1149 = vrot.slane %v1148, 4
      %v1150 = vrot.slane %v281, 6
      %v1151 = vsel %vm1105, %v1149, %v1150
      %v1152 = vrot.slane %v1150, 4
      %v1153 = vrot.slane %v1052, 6
      %v1154 = vsel %vm1105, %v1152, %v1153
      %v1155 = vrot.slane %v1053, 6
      %v1156 = vrot.slane %v1155, 4
      %v1157 = vrot.slane %v283, 6
      %v1158 = vsel %vm1105, %v1156, %v1157
      %v1159 = vrot.slane %v1157, 4
      %v1160 = vrot.slane %v1054, 6
      %v1161 = vsel %vm1105, %v1159, %v1160
      %v1162 = vrot.slane %v1055, 6
      %v1163 = vrot.slane %v1162, 4
      %v1164 = vrot.slane %v285, 6
      %v1165 = vsel %vm1105, %v1163, %v1164
      %v1166 = vrot.slane %v1164, 4
      %v1167 = vrot.slane %v1056, 6
      %v1168 = vsel %vm1105, %v1166, %v1167
      %v1169 = vrot.slane %v1057, 6
      %v1170 = vrot.slane %v1169, 4
      %v1171 = vrot.slane %v287, 6
      %v1172 = vsel %vm1105, %v1170, %v1171
      %v1173 = vrot.slane %v1171, 4
      %v1174 = vrot.slane %v1058, 6
      %v1175 = vsel %vm1105, %v1173, %v1174
      %v1176 = vrot.slane %v1059, 6
      %v1177 = vrot.slane %v1176, 4
      %v1178 = vrot.slane %v289, 6
      %v1179 = vsel %vm1105, %v1177, %v1178
      %v1180 = vrot.slane %v1178, 4
      %v1181 = vrot.slane %v1060, 6
      %v1182 = vsel %vm1105, %v1180, %v1181
      %v1183 = vrot.slane %v1061, 6
      %v1184 = vrot.slane %v1183, 4
      %v1185 = vrot.slane %v291, 6
      %v1186 = vsel %vm1105, %v1184, %v1185
      %v1187 = vrot.slane %v1185, 4
      %v1188 = vrot.slane %v1062, 6
      %v1189 = vsel %vm1105, %v1187, %v1188
      %v1190 = vrot.slane %v1063, 6
      %v1191 = vrot.slane %v1190, 4
      %v1192 = vrot.slane %v293, 6
      %v1193 = vsel %vm1105, %v1191, %v1192
      %v1194 = vrot.slane %v1192, 4
      %v1195 = vrot.slane %v1064, 6
      %v1196 = vsel %vm1105, %v1194, %v1195
      %v1197 = vrot.slane %v1065, 6
      %v1198 = vrot.slane %v1197, 4
      %v1199 = vrot.slane %v295, 6
      %v1200 = vsel %vm1105, %v1198, %v1199
      %v1201 = vrot.slane %v1199, 4
      %v1202 = vrot.slane %v1066, 6
      %v1203 = vsel %vm1105, %v1201, %v1202
      %v1204 = vrot.slane %v1067, 6
      %v1205 = vrot.slane %v1204, 4
      %v1206 = vrot.slane %v297, 6
      %v1207 = vsel %vm1105, %v1205, %v1206
      %v1208 = vrot.slane %v1206, 4
      %v1209 = vrot.slane %v1068, 6
      %v1210 = vsel %vm1105, %v1208, %v1209
      %v1211 = vrot.slane %v1069, 6
      %v1212 = vrot.slane %v1211, 4
      %v1213 = vrot.slane %v299, 6
      %v1214 = vsel %vm1105, %v1212, %v1213
      %v1215 = vrot.slane %v1213, 4
      %v1216 = vrot.slane %v1070, 6
      %v1217 = vsel %vm1105, %v1215, %v1216
      %v1218 = vld [vmem:[%s2 + $0x4] sm:$0x3]
      %v1219 = vunpack.c.l.b16 %v1109
      %v1220 = vunpack.c.l.b16 %v1112
      %v1221 = vunpack.c.l.b16 %v1116
      %v1222 = vunpack.c.l.b16 %v1119
      %v1223 = vunpack.c.l.b16 %v1123
      %v1224 = vunpack.c.l.b16 %v1126
      %v1225 = vunpack.c.l.b16 %v1130
      %v1226 = vunpack.c.l.b16 %v1133
      %v1227 = vunpack.c.l.b16 %v1137
      %v1228 = vunpack.c.l.b16 %v1140
      %v1229 = vunpack.c.l.b16 %v1144
      %v1230 = vunpack.c.l.b16 %v1147
      %v1231 = vunpack.c.l.b16 %v1151
      %v1232 = vunpack.c.l.b16 %v1154
      %v1233 = vunpack.c.l.b16 %v1158
      %v1234 = vunpack.c.l.b16 %v1161
      %v1235 = vunpack.c.l.b16 %v1165
      %v1236 = vunpack.c.l.b16 %v1168
      %v1237 = vunpack.c.l.b16 %v1172
      %v1238 = vunpack.c.l.b16 %v1175
      %v1239 = vunpack.c.l.b16 %v1179
      %v1240 = vunpack.c.l.b16 %v1182
      %v1241 = vunpack.c.l.b16 %v1186
      %v1242 = vunpack.c.l.b16 %v1189
      %v1243 = vunpack.c.l.b16 %v1193
      %v1244 = vunpack.c.l.b16 %v1196
      %v1245 = vunpack.c.l.b16 %v1200
      %v1246 = vunpack.c.l.b16 %v1203
      %v1247 = vunpack.c.l.b16 %v1207
      %v1248 = vunpack.c.l.b16 %v1210
      %v1249 = vunpack.c.l.b16 %v1214
      %v1250 = vunpack.c.l.b16 %v1217
      %v1251 = vpack.c.b16 %v1220, %v1219
      %v1252 = vpack.c.b16 %v1222, %v1221
      %v1253 = vpack.c.b16 %v1224, %v1223
      %v1254 = vpack.c.b16 %v1226, %v1225
      %v1255 = vpack.c.b16 %v1228, %v1227
      %v1256 = vpack.c.b16 %v1230, %v1229
      %v1257 = vpack.c.b16 %v1232, %v1231
      %v1258 = vpack.c.b16 %v1234, %v1233
      %v1259 = vpack.c.b16 %v1236, %v1235
      %v1260 = vpack.c.b16 %v1238, %v1237
      %v1261 = vpack.c.b16 %v1240, %v1239
      %v1262 = vpack.c.b16 %v1242, %v1241
      %v1263 = vpack.c.b16 %v1244, %v1243
      %v1264 = vpack.c.b16 %v1246, %v1245
      %v1265 = vpack.c.b16 %v1248, %v1247
      %v1266 = vpack.c.b16 %v1250, %v1249
      %v1268 = vsel %vm549, %v1251, 0
      %v1271 = vsel %vm549, %v1252, 0
      %v1274 = vsel %vm549, %v1253, 0
      %v1277 = vsel %vm549, %v1254, 0
      %v1280 = vsel %vm549, %v1255, 0
      %v1283 = vsel %vm549, %v1256, 0
      %v1286 = vsel %vm549, %v1257, 0
      %v1289 = vsel %vm549, %v1258, 0
      %v1292 = vsel %vm549, %v1259, 0
      %v1295 = vsel %vm549, %v1260, 0
      %v1298 = vsel %vm549, %v1261, 0
      %v1301 = vsel %vm549, %v1262, 0
      %v1304 = vsel %vm549, %v1263, 0
      %v1307 = vsel %vm549, %v1264, 0
      %v1310 = vsel %vm549, %v1265, 0
      %v1313 = vsel %vm549, %v1266, 0
      %v1316 = vsel %vm598, %v1218, 0
      %1318 = vmatprep.subr.bf16.mxu0 0
      %1319 = vmatpush1.bf16.msra.mxu0 %v1316
      %1320 = vmatprep.subr.bf16.mxu0 0
      %1321 = vmatpush1.bf16.msra.mxu0 0
      %1322 = vmatprep.subr.bf16.mxu0 0
      %1323 = vmatpush1.bf16.msra.mxu0 0
      %1324 = vmatprep.subr.bf16.mxu0 0
      %1325 = vmatpush1.bf16.msra.mxu0 0
      %1326 = vmatprep.subr.bf16.mxu0 0
      %1327 = vmatpush1.bf16.msra.mxu0 0
      %1328 = vmatprep.subr.bf16.mxu0 0
      %1329 = vmatpush1.bf16.msra.mxu0 0
      %1330 = vmatprep.subr.bf16.mxu0 0
      %1331 = vmatpush1.bf16.msra.mxu0 0
      %1332 = vmatprep.subr.bf16.mxu0 0
      %1333 = vmatpush1.bf16.msra.mxu0 0
      %1334 = vmatprep.subr.bf16.mxu0 0
      %1335 = vmatpush1.bf16.msra.mxu0 0
      %1336 = vmatprep.subr.bf16.mxu0 0
      %1337 = vmatpush1.bf16.msra.mxu0 0
      %1338 = vmatprep.subr.bf16.mxu0 0
      %1339 = vmatpush1.bf16.msra.mxu0 0
      %1340 = vmatprep.subr.bf16.mxu0 0
      %1341 = vmatpush1.bf16.msra.mxu0 0
      %1342 = vmatprep.subr.bf16.mxu0 0
      %1343 = vmatpush1.bf16.msra.mxu0 0
      %1344 = vmatprep.subr.bf16.mxu0 0
      %1345 = vmatpush1.bf16.msra.mxu0 0
      %1346 = vmatprep.subr.bf16.mxu0 0
      %1347 = vmatpush1.bf16.msra.mxu0 0
      %1348 = vmatprep.subr.bf16.mxu0 0
      %1349 = vmatpush1.bf16.msra.mxu0 0
      %1350 = vmatprep.mubr.bf16.mxu0 0
      %1351 = vmatmul.mubr.bf16.gmra.mrb[0].mxu0 %v1268
      %v1352 = vpop.f32.mrb[0].mxu0
      %v1353 = vadd.f32 0.0, %v1352
      %v1354 = vpop.f32.mrb[0].mxu0
      %v1355 = vpop.f32.mrb[0].mxu0
      %v1356 = vadd.f32 0.0, %v1355
      %v1357 = vpop.f32.mrb[0].mxu0
      %1358 = vmatprep.mubr.bf16.mxu0 0
      %1359 = vmatmul.mubr.bf16.gmra.mrb[0].mxu0 %v1271
      %v1360 = vpop.f32.mrb[0].mxu0
      %v1361 = vadd.f32 0.0, %v1360
      %v1362 = vpop.f32.mrb[0].mxu0
      %v1363 = vpop.f32.mrb[0].mxu0
      %v1364 = vadd.f32 0.0, %v1363
      %v1365 = vpop.f32.mrb[0].mxu0
      %1366 = vmatprep.mubr.bf16.mxu0 0
      %1367 = vmatmul.mubr.bf16.gmra.mrb[0].mxu0 %v1274
      %v1368 = vpop.f32.mrb[0].mxu0
      %v1369 = vadd.f32 0.0, %v1368
      %v1370 = vpop.f32.mrb[0].mxu0
      %v1371 = vpop.f32.mrb[0].mxu0
      %v1372 = vadd.f32 0.0, %v1371
      %v1373 = vpop.f32.mrb[0].mxu0
      %1374 = vmatprep.mubr.bf16.mxu0 0
      %1375 = vmatmul.mubr.bf16.gmra.mrb[0].mxu0 %v1277
      %v1376 = vpop.f32.mrb[0].mxu0
      %v1377 = vadd.f32 0.0, %v1376
      %v1378 = vpop.f32.mrb[0].mxu0
      %v1379 = vpop.f32.mrb[0].mxu0
      %v1380 = vadd.f32 0.0, %v1379
      %v1381 = vpop.f32.mrb[0].mxu0
      %1382 = vmatprep.mubr.bf16.mxu0 0
      %1383 = vmatmul.mubr.bf16.gmra.mrb[0].mxu0 %v1280
      %v1384 = vpop.f32.mrb[0].mxu0
      %v1385 = vadd.f32 0.0, %v1384
      %v1386 = vpop.f32.mrb[0].mxu0
      %v1387 = vpop.f32.mrb[0].mxu0
      %v1388 = vadd.f32 0.0, %v1387
      %v1389 = vpop.f32.mrb[0].mxu0
      %1390 = vmatprep.mubr.bf16.mxu0 0
      %1391 = vmatmul.mubr.bf16.gmra.mrb[0].mxu0 %v1283
      %v1392 = vpop.f32.mrb[0].mxu0
      %v1393 = vadd.f32 0.0, %v1392
      %v1394 = vpop.f32.mrb[0].mxu0
      %v1395 = vpop.f32.mrb[0].mxu0
      %v1396 = vadd.f32 0.0, %v1395
      %v1397 = vpop.f32.mrb[0].mxu0
      %1398 = vmatprep.mubr.bf16.mxu0 0
      %1399 = vmatmul.mubr.bf16.gmra.mrb[0].mxu0 %v1286
      %v1400 = vpop.f32.mrb[0].mxu0
      %v1401 = vadd.f32 0.0, %v1400
      %v1402 = vpop.f32.mrb[0].mxu0
      %v1403 = vpop.f32.mrb[0].mxu0
      %v1404 = vadd.f32 0.0, %v1403
      %v1405 = vpop.f32.mrb[0].mxu0
      %1406 = vmatprep.mubr.bf16.mxu0 0
      %1407 = vmatmul.mubr.bf16.gmra.mrb[0].mxu0 %v1289
      %v1408 = vpop.f32.mrb[0].mxu0
      %v1409 = vadd.f32 0.0, %v1408
      %v1410 = vpop.f32.mrb[0].mxu0
      %v1411 = vpop.f32.mrb[0].mxu0
      %v1412 = vadd.f32 0.0, %v1411
      %v1413 = vpop.f32.mrb[0].mxu0
      %1414 = vmatprep.mubr.bf16.mxu0 0
      %1415 = vmatmul.mubr.bf16.gmra.mrb[0].mxu0 %v1292
      %v1416 = vpop.f32.mrb[0].mxu0
      %v1417 = vadd.f32 0.0, %v1416
      %v1418 = vpop.f32.mrb[0].mxu0
      %v1419 = vpop.f32.mrb[0].mxu0
      %v1420 = vadd.f32 0.0, %v1419
      %v1421 = vpop.f32.mrb[0].mxu0
      %1422 = vmatprep.mubr.bf16.mxu0 0
      %1423 = vmatmul.mubr.bf16.gmra.mrb[0].mxu0 %v1295
      %v1424 = vpop.f32.mrb[0].mxu0
      %v1425 = vadd.f32 0.0, %v1424
      %v1426 = vpop.f32.mrb[0].mxu0
      %v1427 = vpop.f32.mrb[0].mxu0
      %v1428 = vadd.f32 0.0, %v1427
      %v1429 = vpop.f32.mrb[0].mxu0
      %1430 = vmatprep.mubr.bf16.mxu0 0
      %1431 = vmatmul.mubr.bf16.gmra.mrb[0].mxu0 %v1298
      %v1432 = vpop.f32.mrb[0].mxu0
      %v1433 = vadd.f32 0.0, %v1432
      %v1434 = vpop.f32.mrb[0].mxu0
      %v1435 = vpop.f32.mrb[0].mxu0
      %v1436 = vadd.f32 0.0, %v1435
      %v1437 = vpop.f32.mrb[0].mxu0
      %1438 = vmatprep.mubr.bf16.mxu0 0
      %1439 = vmatmul.mubr.bf16.gmra.mrb[0].mxu0 %v1301
      %v1440 = vpop.f32.mrb[0].mxu0
      %v1441 = vadd.f32 0.0, %v1440
      %v1442 = vpop.f32.mrb[0].mxu0
      %v1443 = vpop.f32.mrb[0].mxu0
      %v1444 = vadd.f32 0.0, %v1443
      %v1445 = vpop.f32.mrb[0].mxu0
      %1446 = vmatprep.mubr.bf16.mxu0 0
      %1447 = vmatmul.mubr.bf16.gmra.mrb[0].mxu0 %v1304
      %v1448 = vpop.f32.mrb[0].mxu0
      %v1449 = vadd.f32 0.0, %v1448
      %v1450 = vpop.f32.mrb[0].mxu0
      %v1451 = vpop.f32.mrb[0].mxu0
      %v1452 = vadd.f32 0.0, %v1451
      %v1453 = vpop.f32.mrb[0].mxu0
      %1454 = vmatprep.mubr.bf16.mxu0 0
      %1455 = vmatmul.mubr.bf16.gmra.mrb[0].mxu0 %v1307
      %v1456 = vpop.f32.mrb[0].mxu0
      %v1457 = vadd.f32 0.0, %v1456
      %v1458 = vpop.f32.mrb[0].mxu0
      %v1459 = vpop.f32.mrb[0].mxu0
      %v1460 = vadd.f32 0.0, %v1459
      %v1461 = vpop.f32.mrb[0].mxu0
      %1462 = vmatprep.mubr.bf16.mxu0 0
      %1463 = vmatmul.mubr.bf16.gmra.mrb[0].mxu0 %v1310
      %v1464 = vpop.f32.mrb[0].mxu0
      %v1465 = vadd.f32 0.0, %v1464
      %v1466 = vpop.f32.mrb[0].mxu0
      %v1467 = vpop.f32.mrb[0].mxu0
      %v1468 = vadd.f32 0.0, %v1467
      %v1469 = vpop.f32.mrb[0].mxu0
      %1470 = vmatprep.mubr.bf16.mxu0 0
      %1471 = vmatmul.mubr.bf16.gmra.mrb[0].mxu0 %v1313
      %v1472 = vpop.f32.mrb[0].mxu0
      %v1473 = vadd.f32 0.0, %v1472
      %v1474 = vpop.f32.mrb[0].mxu0
      %v1475 = vpop.f32.mrb[0].mxu0
      %v1476 = vadd.f32 0.0, %v1475
      %v1477 = vpop.f32.mrb[0].mxu0
      %1478 = vdwg.mxu0
      %v1479 = vadd.f32 %v913, %v1353
      %v1480 = vadd.f32 %v916, %v1356
      %v1481 = vadd.f32 %v921, %v1361
      %v1482 = vadd.f32 %v924, %v1364
      %v1483 = vadd.f32 %v929, %v1369
      %v1484 = vadd.f32 %v932, %v1372
      %v1485 = vadd.f32 %v937, %v1377
      %v1486 = vadd.f32 %v940, %v1380
      %v1487 = vadd.f32 %v945, %v1385
      %v1488 = vadd.f32 %v948, %v1388
      %v1489 = vadd.f32 %v953, %v1393
      %v1490 = vadd.f32 %v956, %v1396
      %v1491 = vadd.f32 %v961, %v1401
      %v1492 = vadd.f32 %v964, %v1404
      %v1493 = vadd.f32 %v969, %v1409
      %v1494 = vadd.f32 %v972, %v1412
      %v1495 = vadd.f32 %v977, %v1417
      %v1496 = vadd.f32 %v980, %v1420
      %v1497 = vadd.f32 %v985, %v1425
      %v1498 = vadd.f32 %v988, %v1428
      %v1499 = vadd.f32 %v993, %v1433
      %v1500 = vadd.f32 %v996, %v1436
      %v1501 = vadd.f32 %v1001, %v1441
      %v1502 = vadd.f32 %v1004, %v1444
      %v1503 = vadd.f32 %v1009, %v1449
      %v1504 = vadd.f32 %v1012, %v1452
      %v1505 = vadd.f32 %v1017, %v1457
      %v1506 = vadd.f32 %v1020, %v1460
      %v1507 = vadd.f32 %v1025, %v1465
      %v1508 = vadd.f32 %v1028, %v1468
      %v1509 = vadd.f32 %v1033, %v1473
      %v1510 = vadd.f32 %v1036, %v1476
      %s1511 = sadd.s32 %s264, 2
      %s1512 = smul.u32 %s1511, 3
      %s1513 = smul.addr %s1512, 4
      %s1514 = scalar_lea.vmem %s249, %s1513
      %v1515 = vld [vmem:[%s1514] sm:$0xf]
      %v1516 = vld [vmem:[%s1514 + $0x4] sm:$0xf]
      %v1517 = vld [vmem:[%s1514 + $0xc] sm:$0xf]
      %v1518 = vld [vmem:[%s1514 + $0x10] sm:$0xf]
      %v1519 = vld [vmem:[%s1514 + $0x18] sm:$0xf]
      %v1520 = vld [vmem:[%s1514 + $0x1c] sm:$0xf]
      %v1521 = vld [vmem:[%s1514 + $0x24] sm:$0xf]
      %v1522 = vld [vmem:[%s1514 + $0x28] sm:$0xf]
      %v1523 = vld [vmem:[%s1514 + $0x30] sm:$0xf]
      %v1524 = vld [vmem:[%s1514 + $0x34] sm:$0xf]
      %v1525 = vld [vmem:[%s1514 + $0x3c] sm:$0xf]
      %v1526 = vld [vmem:[%s1514 + $0x40] sm:$0xf]
      %v1527 = vld [vmem:[%s1514 + $0x48] sm:$0xf]
      %v1528 = vld [vmem:[%s1514 + $0x4c] sm:$0xf]
      %v1529 = vld [vmem:[%s1514 + $0x54] sm:$0xf]
      %v1530 = vld [vmem:[%s1514 + $0x58] sm:$0xf]
      %v1531 = vld [vmem:[%s1514 + $0x60] sm:$0xf]
      %v1532 = vld [vmem:[%s1514 + $0x64] sm:$0xf]
      %v1533 = vld [vmem:[%s1514 + $0x6c] sm:$0xf]
      %v1534 = vld [vmem:[%s1514 + $0x70] sm:$0xf]
      %v1535 = vld [vmem:[%s1514 + $0x78] sm:$0xf]
      %v1536 = vld [vmem:[%s1514 + $0x7c] sm:$0xf]
      %v1537 = vld [vmem:[%s1514 + $0x84] sm:$0xf]
      %v1538 = vld [vmem:[%s1514 + $0x88] sm:$0xf]
      %v1539 = vld [vmem:[%s1514 + $0x90] sm:$0xf]
      %v1540 = vld [vmem:[%s1514 + $0x94] sm:$0xf]
      %v1541 = vld [vmem:[%s1514 + $0x9c] sm:$0xf]
      %v1542 = vld [vmem:[%s1514 + $0xa0] sm:$0xf]
      %v1543 = vld [vmem:[%s1514 + $0xa8] sm:$0xf]
      %v1544 = vld [vmem:[%s1514 + $0xac] sm:$0xf]
      %v1545 = vld [vmem:[%s1514 + $0xb4] sm:$0xf]
      %v1546 = vld [vmem:[%s1514 + $0xb8] sm:$0xf]
      %v1547 = vld [vmem:[%s2 + $0x4] sm:$0xc]
      %v1580 = vunpack.c.l.b16 %v1515
      %v1581 = vunpack.c.l.b16 %v1516
      %v1582 = vunpack.c.l.b16 %v1517
      %v1583 = vunpack.c.l.b16 %v1518
      %v1584 = vunpack.c.l.b16 %v1519
      %v1585 = vunpack.c.l.b16 %v1520
      %v1586 = vunpack.c.l.b16 %v1521
      %v1587 = vunpack.c.l.b16 %v1522
      %v1588 = vunpack.c.l.b16 %v1523
      %v1589 = vunpack.c.l.b16 %v1524
      %v1590 = vunpack.c.l.b16 %v1525
      %v1591 = vunpack.c.l.b16 %v1526
      %v1592 = vunpack.c.l.b16 %v1527
      %v1593 = vunpack.c.l.b16 %v1528
      %v1594 = vunpack.c.l.b16 %v1529
      %v1595 = vunpack.c.l.b16 %v1530
      %v1596 = vunpack.c.l.b16 %v1531
      %v1597 = vunpack.c.l.b16 %v1532
      %v1598 = vunpack.c.l.b16 %v1533
      %v1599 = vunpack.c.l.b16 %v1534
      %v1600 = vunpack.c.l.b16 %v1535
      %v1601 = vunpack.c.l.b16 %v1536
      %v1602 = vunpack.c.l.b16 %v1537
      %v1603 = vunpack.c.l.b16 %v1538
      %v1604 = vunpack.c.l.b16 %v1539
      %v1605 = vunpack.c.l.b16 %v1540
      %v1606 = vunpack.c.l.b16 %v1541
      %v1607 = vunpack.c.l.b16 %v1542
      %v1608 = vunpack.c.l.b16 %v1543
      %v1609 = vunpack.c.l.b16 %v1544
      %v1610 = vunpack.c.l.b16 %v1545
      %v1611 = vunpack.c.l.b16 %v1546
      %v1612 = vpack.c.b16 %v1581, %v1580
      %v1613 = vpack.c.b16 %v1583, %v1582
      %v1614 = vpack.c.b16 %v1585, %v1584
      %v1615 = vpack.c.b16 %v1587, %v1586
      %v1616 = vpack.c.b16 %v1589, %v1588
      %v1617 = vpack.c.b16 %v1591, %v1590
      %v1618 = vpack.c.b16 %v1593, %v1592
      %v1619 = vpack.c.b16 %v1595, %v1594
      %v1620 = vpack.c.b16 %v1597, %v1596
      %v1621 = vpack.c.b16 %v1599, %v1598
      %v1622 = vpack.c.b16 %v1601, %v1600
      %v1623 = vpack.c.b16 %v1603, %v1602
      %v1624 = vpack.c.b16 %v1605, %v1604
      %v1625 = vpack.c.b16 %v1607, %v1606
      %v1626 = vpack.c.b16 %v1609, %v1608
      %v1627 = vpack.c.b16 %v1611, %v1610
      %v1629 = vunpack.c.l.b16 %v1547
      %v1630 = vpack.c.b16 %v1629, %v1629
      %v1631 = vrot.slane %v1630, 2
      %v1633 = vsel %vm549, %v1612, 0
      %v1636 = vsel %vm549, %v1613, 0
      %v1639 = vsel %vm549, %v1614, 0
      %v1642 = vsel %vm549, %v1615, 0
      %v1645 = vsel %vm549, %v1616, 0
      %v1648 = vsel %vm549, %v1617, 0
      %v1651 = vsel %vm549, %v1618, 0
      %v1654 = vsel %vm549, %v1619, 0
      %v1657 = vsel %vm549, %v1620, 0
      %v1660 = vsel %vm549, %v1621, 0
      %v1663 = vsel %vm549, %v1622, 0
      %v1666 = vsel %vm549, %v1623, 0
      %v1669 = vsel %vm549, %v1624, 0
      %v1672 = vsel %vm549, %v1625, 0
      %v1675 = vsel %vm549, %v1626, 0
      %v1678 = vsel %vm549, %v1627, 0
      %v1681 = vsel %vm598, %v1631, 0
      %1683 = vmatprep.subr.bf16.mxu0 0
      %1684 = vmatpush1.bf16.msra.mxu0 %v1681
      %1685 = vmatprep.subr.bf16.mxu0 0
      %1686 = vmatpush1.bf16.msra.mxu0 0
      %1687 = vmatprep.subr.bf16.mxu0 0
      %1688 = vmatpush1.bf16.msra.mxu0 0
      %1689 = vmatprep.subr.bf16.mxu0 0
      %1690 = vmatpush1.bf16.msra.mxu0 0
      %1691 = vmatprep.subr.bf16.mxu0 0
      %1692 = vmatpush1.bf16.msra.mxu0 0
      %1693 = vmatprep.subr.bf16.mxu0 0
      %1694 = vmatpush1.bf16.msra.mxu0 0
      %1695 = vmatprep.subr.bf16.mxu0 0
      %1696 = vmatpush1.bf16.msra.mxu0 0
      %1697 = vmatprep.subr.bf16.mxu0 0
      %1698 = vmatpush1.bf16.msra.mxu0 0
      %1699 = vmatprep.subr.bf16.mxu0 0
      %1700 = vmatpush1.bf16.msra.mxu0 0
      %1701 = vmatprep.subr.bf16.mxu0 0
      %1702 = vmatpush1.bf16.msra.mxu0 0
      %1703 = vmatprep.subr.bf16.mxu0 0
      %1704 = vmatpush1.bf16.msra.mxu0 0
      %1705 = vmatprep.subr.bf16.mxu0 0
      %1706 = vmatpush1.bf16.msra.mxu0 0
      %1707 = vmatprep.subr.bf16.mxu0 0
      %1708 = vmatpush1.bf16.msra.mxu0 0
      %1709 = vmatprep.subr.bf16.mxu0 0
      %1710 = vmatpush1.bf16.msra.mxu0 0
      %1711 = vmatprep.subr.bf16.mxu0 0
      %1712 = vmatpush1.bf16.msra.mxu0 0
      %1713 = vmatprep.subr.bf16.mxu0 0
      %1714 = vmatpush1.bf16.msra.mxu0 0
      %1715 = vmatprep.mubr.bf16.mxu0 0
      %1716 = vmatmul.mubr.bf16.gmra.mrb[0].mxu0 %v1633
      %v1717 = vpop.f32.mrb[0].mxu0
      %v1718 = vadd.f32 0.0, %v1717
      %v1719 = vpop.f32.mrb[0].mxu0
      %v1720 = vpop.f32.mrb[0].mxu0
      %v1721 = vadd.f32 0.0, %v1720
      %v1722 = vpop.f32.mrb[0].mxu0
      %1723 = vmatprep.mubr.bf16.mxu0 0
      %1724 = vmatmul.mubr.bf16.gmra.mrb[0].mxu0 %v1636
      %v1725 = vpop.f32.mrb[0].mxu0
      %v1726 = vadd.f32 0.0, %v1725
      %v1727 = vpop.f32.mrb[0].mxu0
      %v1728 = vpop.f32.mrb[0].mxu0
      %v1729 = vadd.f32 0.0, %v1728
      %v1730 = vpop.f32.mrb[0].mxu0
      %1731 = vmatprep.mubr.bf16.mxu0 0
      %1732 = vmatmul.mubr.bf16.gmra.mrb[0].mxu0 %v1639
      %v1733 = vpop.f32.mrb[0].mxu0
      %v1734 = vadd.f32 0.0, %v1733
      %v1735 = vpop.f32.mrb[0].mxu0
      %v1736 = vpop.f32.mrb[0].mxu0
      %v1737 = vadd.f32 0.0, %v1736
      %v1738 = vpop.f32.mrb[0].mxu0
      %1739 = vmatprep.mubr.bf16.mxu0 0
      %1740 = vmatmul.mubr.bf16.gmra.mrb[0].mxu0 %v1642
      %v1741 = vpop.f32.mrb[0].mxu0
      %v1742 = vadd.f32 0.0, %v1741
      %v1743 = vpop.f32.mrb[0].mxu0
      %v1744 = vpop.f32.mrb[0].mxu0
      %v1745 = vadd.f32 0.0, %v1744
      %v1746 = vpop.f32.mrb[0].mxu0
      %1747 = vmatprep.mubr.bf16.mxu0 0
      %1748 = vmatmul.mubr.bf16.gmra.mrb[0].mxu0 %v1645
      %v1749 = vpop.f32.mrb[0].mxu0
      %v1750 = vadd.f32 0.0, %v1749
      %v1751 = vpop.f32.mrb[0].mxu0
      %v1752 = vpop.f32.mrb[0].mxu0
      %v1753 = vadd.f32 0.0, %v1752
      %v1754 = vpop.f32.mrb[0].mxu0
      %1755 = vmatprep.mubr.bf16.mxu0 0
      %1756 = vmatmul.mubr.bf16.gmra.mrb[0].mxu0 %v1648
      %v1757 = vpop.f32.mrb[0].mxu0
      %v1758 = vadd.f32 0.0, %v1757
      %v1759 = vpop.f32.mrb[0].mxu0
      %v1760 = vpop.f32.mrb[0].mxu0
      %v1761 = vadd.f32 0.0, %v1760
      %v1762 = vpop.f32.mrb[0].mxu0
      %1763 = vmatprep.mubr.bf16.mxu0 0
      %1764 = vmatmul.mubr.bf16.gmra.mrb[0].mxu0 %v1651
      %v1765 = vpop.f32.mrb[0].mxu0
      %v1766 = vadd.f32 0.0, %v1765
      %v1767 = vpop.f32.mrb[0].mxu0
      %v1768 = vpop.f32.mrb[0].mxu0
      %v1769 = vadd.f32 0.0, %v1768
      %v1770 = vpop.f32.mrb[0].mxu0
      %1771 = vmatprep.mubr.bf16.mxu0 0
      %1772 = vmatmul.mubr.bf16.gmra.mrb[0].mxu0 %v1654
      %v1773 = vpop.f32.mrb[0].mxu0
      %v1774 = vadd.f32 0.0, %v1773
      %v1775 = vpop.f32.mrb[0].mxu0
      %v1776 = vpop.f32.mrb[0].mxu0
      %v1777 = vadd.f32 0.0, %v1776
      %v1778 = vpop.f32.mrb[0].mxu0
      %1779 = vmatprep.mubr.bf16.mxu0 0
      %1780 = vmatmul.mubr.bf16.gmra.mrb[0].mxu0 %v1657
      %v1781 = vpop.f32.mrb[0].mxu0
      %v1782 = vadd.f32 0.0, %v1781
      %v1783 = vpop.f32.mrb[0].mxu0
      %v1784 = vpop.f32.mrb[0].mxu0
      %v1785 = vadd.f32 0.0, %v1784
      %v1786 = vpop.f32.mrb[0].mxu0
      %1787 = vmatprep.mubr.bf16.mxu0 0
      %1788 = vmatmul.mubr.bf16.gmra.mrb[0].mxu0 %v1660
      %v1789 = vpop.f32.mrb[0].mxu0
      %v1790 = vadd.f32 0.0, %v1789
      %v1791 = vpop.f32.mrb[0].mxu0
      %v1792 = vpop.f32.mrb[0].mxu0
      %v1793 = vadd.f32 0.0, %v1792
      %v1794 = vpop.f32.mrb[0].mxu0
      %1795 = vmatprep.mubr.bf16.mxu0 0
      %1796 = vmatmul.mubr.bf16.gmra.mrb[0].mxu0 %v1663
      %v1797 = vpop.f32.mrb[0].mxu0
      %v1798 = vadd.f32 0.0, %v1797
      %v1799 = vpop.f32.mrb[0].mxu0
      %v1800 = vpop.f32.mrb[0].mxu0
      %v1801 = vadd.f32 0.0, %v1800
      %v1802 = vpop.f32.mrb[0].mxu0
      %1803 = vmatprep.mubr.bf16.mxu0 0
      %1804 = vmatmul.mubr.bf16.gmra.mrb[0].mxu0 %v1666
      %v1805 = vpop.f32.mrb[0].mxu0
      %v1806 = vadd.f32 0.0, %v1805
      %v1807 = vpop.f32.mrb[0].mxu0
      %v1808 = vpop.f32.mrb[0].mxu0
      %v1809 = vadd.f32 0.0, %v1808
      %v1810 = vpop.f32.mrb[0].mxu0
      %1811 = vmatprep.mubr.bf16.mxu0 0
      %1812 = vmatmul.mubr.bf16.gmra.mrb[0].mxu0 %v1669
      %v1813 = vpop.f32.mrb[0].mxu0
      %v1814 = vadd.f32 0.0, %v1813
      %v1815 = vpop.f32.mrb[0].mxu0
      %v1816 = vpop.f32.mrb[0].mxu0
      %v1817 = vadd.f32 0.0, %v1816
      %v1818 = vpop.f32.mrb[0].mxu0
      %1819 = vmatprep.mubr.bf16.mxu0 0
      %1820 = vmatmul.mubr.bf16.gmra.mrb[0].mxu0 %v1672
      %v1821 = vpop.f32.mrb[0].mxu0
      %v1822 = vadd.f32 0.0, %v1821
      %v1823 = vpop.f32.mrb[0].mxu0
      %v1824 = vpop.f32.mrb[0].mxu0
      %v1825 = vadd.f32 0.0, %v1824
      %v1826 = vpop.f32.mrb[0].mxu0
      %1827 = vmatprep.mubr.bf16.mxu0 0
      %1828 = vmatmul.mubr.bf16.gmra.mrb[0].mxu0 %v1675
      %v1829 = vpop.f32.mrb[0].mxu0
      %v1830 = vadd.f32 0.0, %v1829
      %v1831 = vpop.f32.mrb[0].mxu0
      %v1832 = vpop.f32.mrb[0].mxu0
      %v1833 = vadd.f32 0.0, %v1832
      %v1834 = vpop.f32.mrb[0].mxu0
      %1835 = vmatprep.mubr.bf16.mxu0 0
      %1836 = vmatmul.mubr.bf16.gmra.mrb[0].mxu0 %v1678
      %v1837 = vpop.f32.mrb[0].mxu0
      %v1838 = vadd.f32 0.0, %v1837
      %v1839 = vpop.f32.mrb[0].mxu0
      %v1840 = vpop.f32.mrb[0].mxu0
      %v1841 = vadd.f32 0.0, %v1840
      %v1842 = vpop.f32.mrb[0].mxu0
      %1843 = vdwg.mxu0
      %v1844 = vadd.f32 %v1479, %v1718
      %v1845 = vadd.f32 %v1480, %v1721
      %v1846 = vadd.f32 %v1481, %v1726
      %v1847 = vadd.f32 %v1482, %v1729
      %v1848 = vadd.f32 %v1483, %v1734
      %v1849 = vadd.f32 %v1484, %v1737
      %v1850 = vadd.f32 %v1485, %v1742
      %v1851 = vadd.f32 %v1486, %v1745
      %v1852 = vadd.f32 %v1487, %v1750
      %v1853 = vadd.f32 %v1488, %v1753
      %v1854 = vadd.f32 %v1489, %v1758
      %v1855 = vadd.f32 %v1490, %v1761
      %v1856 = vadd.f32 %v1491, %v1766
      %v1857 = vadd.f32 %v1492, %v1769
      %v1858 = vadd.f32 %v1493, %v1774
      %v1859 = vadd.f32 %v1494, %v1777
      %v1860 = vadd.f32 %v1495, %v1782
      %v1861 = vadd.f32 %v1496, %v1785
      %v1862 = vadd.f32 %v1497, %v1790
      %v1863 = vadd.f32 %v1498, %v1793
      %v1864 = vadd.f32 %v1499, %v1798
      %v1865 = vadd.f32 %v1500, %v1801
      %v1866 = vadd.f32 %v1501, %v1806
      %v1867 = vadd.f32 %v1502, %v1809
      %v1868 = vadd.f32 %v1503, %v1814
      %v1869 = vadd.f32 %v1504, %v1817
      %v1870 = vadd.f32 %v1505, %v1822
      %v1871 = vadd.f32 %v1506, %v1825
      %v1872 = vadd.f32 %v1507, %v1830
      %v1873 = vadd.f32 %v1508, %v1833
      %v1874 = vadd.f32 %v1509, %v1838
      %v1875 = vadd.f32 %v1510, %v1841
      %v1876 = vld [vmem:[%s1514] sm:$0xe]
      %v1877 = vld [vmem:[%s1514 + $0x4] sm:$0xf]
      %v1878 = vld [vmem:[%s1514 + $0x8] sm:$0x1]
      %v1879 = vld [vmem:[%s1514 + $0xc] sm:$0xe]
      %v1880 = vld [vmem:[%s1514 + $0x10] sm:$0xf]
      %v1881 = vld [vmem:[%s1514 + $0x14] sm:$0x1]
      %v1882 = vld [vmem:[%s1514 + $0x18] sm:$0xe]
      %v1883 = vld [vmem:[%s1514 + $0x1c] sm:$0xf]
      %v1884 = vld [vmem:[%s1514 + $0x20] sm:$0x1]
      %v1885 = vld [vmem:[%s1514 + $0x24] sm:$0xe]
      %v1886 = vld [vmem:[%s1514 + $0x28] sm:$0xf]
      %v1887 = vld [vmem:[%s1514 + $0x2c] sm:$0x1]
      %v1888 = vld [vmem:[%s1514 + $0x30] sm:$0xe]
      %v1889 = vld [vmem:[%s1514 + $0x34] sm:$0xf]
      %v1890 = vld [vmem:[%s1514 + $0x38] sm:$0x1]
      %v1891 = vld [vmem:[%s1514 + $0x3c] sm:$0xe]
      %v1892 = vld [vmem:[%s1514 + $0x40] sm:$0xf]
      %v1893 = vld [vmem:[%s1514 + $0x44] sm:$0x1]
      %v1894 = vld [vmem:[%s1514 + $0x48] sm:$0xe]
      %v1895 = vld [vmem:[%s1514 + $0x4c] sm:$0xf]
      %v1896 = vld [vmem:[%s1514 + $0x50] sm:$0x1]
      %v1897 = vld [vmem:[%s1514 + $0x54] sm:$0xe]
      %v1898 = vld [vmem:[%s1514 + $0x58] sm:$0xf]
      %v1899 = vld [vmem:[%s1514 + $0x5c] sm:$0x1]
      %v1900 = vld [vmem:[%s1514 + $0x60] sm:$0xe]
      %v1901 = vld [vmem:[%s1514 + $0x64] sm:$0xf]
      %v1902 = vld [vmem:[%s1514 + $0x68] sm:$0x1]
      %v1903 = vld [vmem:[%s1514 + $0x6c] sm:$0xe]
      %v1904 = vld [vmem:[%s1514 + $0x70] sm:$0xf]
      %v1905 = vld [vmem:[%s1514 + $0x74] sm:$0x1]
      %v1906 = vld [vmem:[%s1514 + $0x78] sm:$0xe]
      %v1907 = vld [vmem:[%s1514 + $0x7c] sm:$0xf]
      %v1908 = vld [vmem:[%s1514 + $0x80] sm:$0x1]
      %v1909 = vld [vmem:[%s1514 + $0x84] sm:$0xe]
      %v1910 = vld [vmem:[%s1514 + $0x88] sm:$0xf]
      %v1911 = vld [vmem:[%s1514 + $0x8c] sm:$0x1]
      %v1912 = vld [vmem:[%s1514 + $0x90] sm:$0xe]
      %v1913 = vld [vmem:[%s1514 + $0x94] sm:$0xf]
      %v1914 = vld [vmem:[%s1514 + $0x98] sm:$0x1]
      %v1915 = vld [vmem:[%s1514 + $0x9c] sm:$0xe]
      %v1916 = vld [vmem:[%s1514 + $0xa0] sm:$0xf]
      %v1917 = vld [vmem:[%s1514 + $0xa4] sm:$0x1]
      %v1918 = vld [vmem:[%s1514 + $0xa8] sm:$0xe]
      %v1919 = vld [vmem:[%s1514 + $0xac] sm:$0xf]
      %v1920 = vld [vmem:[%s1514 + $0xb0] sm:$0x1]
      %v1921 = vld [vmem:[%s1514 + $0xb4] sm:$0xe]
      %v1922 = vld [vmem:[%s1514 + $0xb8] sm:$0xf]
      %v1923 = vld [vmem:[%s1514 + $0xbc] sm:$0x1]
      %v1972 = vrot.slane %v1876, 5
      %v1973 = vrot.slane %v1972, 4
      %v1974 = vrot.slane %v1877, 5
      %v1975 = vsel %vm383, %v1973, %v1974
      %v1976 = vrot.slane %v1974, 4
      %v1977 = vrot.slane %v1878, 5
      %v1978 = vsel %vm383, %v1976, %v1977
      %v1979 = vrot.slane %v1879, 5
      %v1980 = vrot.slane %v1979, 4
      %v1981 = vrot.slane %v1880, 5
      %v1982 = vsel %vm383, %v1980, %v1981
      %v1983 = vrot.slane %v1981, 4
      %v1984 = vrot.slane %v1881, 5
      %v1985 = vsel %vm383, %v1983, %v1984
      %v1986 = vrot.slane %v1882, 5
      %v1987 = vrot.slane %v1986, 4
      %v1988 = vrot.slane %v1883, 5
      %v1989 = vsel %vm383, %v1987, %v1988
      %v1990 = vrot.slane %v1988, 4
      %v1991 = vrot.slane %v1884, 5
      %v1992 = vsel %vm383, %v1990, %v1991
      %v1993 = vrot.slane %v1885, 5
      %v1994 = vrot.slane %v1993, 4
      %v1995 = vrot.slane %v1886, 5
      %v1996 = vsel %vm383, %v1994, %v1995
      %v1997 = vrot.slane %v1995, 4
      %v1998 = vrot.slane %v1887, 5
      %v1999 = vsel %vm383, %v1997, %v1998
      %v2000 = vrot.slane %v1888, 5
      %v2001 = vrot.slane %v2000, 4
      %v2002 = vrot.slane %v1889, 5
      %v2003 = vsel %vm383, %v2001, %v2002
      %v2004 = vrot.slane %v2002, 4
      %v2005 = vrot.slane %v1890, 5
      %v2006 = vsel %vm383, %v2004, %v2005
      %v2007 = vrot.slane %v1891, 5
      %v2008 = vrot.slane %v2007, 4
      %v2009 = vrot.slane %v1892, 5
      %v2010 = vsel %vm383, %v2008, %v2009
      %v2011 = vrot.slane %v2009, 4
      %v2012 = vrot.slane %v1893, 5
      %v2013 = vsel %vm383, %v2011, %v2012
      %v2014 = vrot.slane %v1894, 5
      %v2015 = vrot.slane %v2014, 4
      %v2016 = vrot.slane %v1895, 5
      %v2017 = vsel %vm383, %v2015, %v2016
      %v2018 = vrot.slane %v2016, 4
      %v2019 = vrot.slane %v1896, 5
      %v2020 = vsel %vm383, %v2018, %v2019
      %v2021 = vrot.slane %v1897, 5
      %v2022 = vrot.slane %v2021, 4
      %v2023 = vrot.slane %v1898, 5
      %v2024 = vsel %vm383, %v2022, %v2023
      %v2025 = vrot.slane %v2023, 4
      %v2026 = vrot.slane %v1899, 5
      %v2027 = vsel %vm383, %v2025, %v2026
      %v2028 = vrot.slane %v1900, 5
      %v2029 = vrot.slane %v2028, 4
      %v2030 = vrot.slane %v1901, 5
      %v2031 = vsel %vm383, %v2029, %v2030
      %v2032 = vrot.slane %v2030, 4
      %v2033 = vrot.slane %v1902, 5
      %v2034 = vsel %vm383, %v2032, %v2033
      %v2035 = vrot.slane %v1903, 5
      %v2036 = vrot.slane %v2035, 4
      %v2037 = vrot.slane %v1904, 5
      %v2038 = vsel %vm383, %v2036, %v2037
      %v2039 = vrot.slane %v2037, 4
      %v2040 = vrot.slane %v1905, 5
      %v2041 = vsel %vm383, %v2039, %v2040
      %v2042 = vrot.slane %v1906, 5
      %v2043 = vrot.slane %v2042, 4
      %v2044 = vrot.slane %v1907, 5
      %v2045 = vsel %vm383, %v2043, %v2044
      %v2046 = vrot.slane %v2044, 4
      %v2047 = vrot.slane %v1908, 5
      %v2048 = vsel %vm383, %v2046, %v2047
      %v2049 = vrot.slane %v1909, 5
      %v2050 = vrot.slane %v2049, 4
      %v2051 = vrot.slane %v1910, 5
      %v2052 = vsel %vm383, %v2050, %v2051
      %v2053 = vrot.slane %v2051, 4
      %v2054 = vrot.slane %v1911, 5
      %v2055 = vsel %vm383, %v2053, %v2054
      %v2056 = vrot.slane %v1912, 5
      %v2057 = vrot.slane %v2056, 4
      %v2058 = vrot.slane %v1913, 5
      %v2059 = vsel %vm383, %v2057, %v2058
      %v2060 = vrot.slane %v2058, 4
      %v2061 = vrot.slane %v1914, 5
      %v2062 = vsel %vm383, %v2060, %v2061
      %v2063 = vrot.slane %v1915, 5
      %v2064 = vrot.slane %v2063, 4
      %v2065 = vrot.slane %v1916, 5
      %v2066 = vsel %vm383, %v2064, %v2065
      %v2067 = vrot.slane %v2065, 4
      %v2068 = vrot.slane %v1917, 5
      %v2069 = vsel %vm383, %v2067, %v2068
      %v2070 = vrot.slane %v1918, 5
      %v2071 = vrot.slane %v2070, 4
      %v2072 = vrot.slane %v1919, 5
      %v2073 = vsel %vm383, %v2071, %v2072
      %v2074 = vrot.slane %v2072, 4
      %v2075 = vrot.slane %v1920, 5
      %v2076 = vsel %vm383, %v2074, %v2075
      %v2077 = vrot.slane %v1921, 5
      %v2078 = vrot.slane %v2077, 4
      %v2079 = vrot.slane %v1922, 5
      %v2080 = vsel %vm383, %v2078, %v2079
      %v2081 = vrot.slane %v2079, 4
      %v2082 = vrot.slane %v1923, 5
      %v2083 = vsel %vm383, %v2081, %v2082
      %v2084 = vld [vmem:[%s2 + $0x8] sm:$0x3]
      %v2085 = vunpack.c.l.b16 %v1975
      %v2086 = vunpack.c.l.b16 %v1978
      %v2087 = vunpack.c.l.b16 %v1982
      %v2088 = vunpack.c.l.b16 %v1985
      %v2089 = vunpack.c.l.b16 %v1989
      %v2090 = vunpack.c.l.b16 %v1992
      %v2091 = vunpack.c.l.b16 %v1996
      %v2092 = vunpack.c.l.b16 %v1999
      %v2093 = vunpack.c.l.b16 %v2003
      %v2094 = vunpack.c.l.b16 %v2006
      %v2095 = vunpack.c.l.b16 %v2010
      %v2096 = vunpack.c.l.b16 %v2013
      %v2097 = vunpack.c.l.b16 %v2017
      %v2098 = vunpack.c.l.b16 %v2020
      %v2099 = vunpack.c.l.b16 %v2024
      %v2100 = vunpack.c.l.b16 %v2027
      %v2101 = vunpack.c.l.b16 %v2031
      %v2102 = vunpack.c.l.b16 %v2034
      %v2103 = vunpack.c.l.b16 %v2038
      %v2104 = vunpack.c.l.b16 %v2041
      %v2105 = vunpack.c.l.b16 %v2045
      %v2106 = vunpack.c.l.b16 %v2048
      %v2107 = vunpack.c.l.b16 %v2052
      %v2108 = vunpack.c.l.b16 %v2055
      %v2109 = vunpack.c.l.b16 %v2059
      %v2110 = vunpack.c.l.b16 %v2062
      %v2111 = vunpack.c.l.b16 %v2066
      %v2112 = vunpack.c.l.b16 %v2069
      %v2113 = vunpack.c.l.b16 %v2073
      %v2114 = vunpack.c.l.b16 %v2076
      %v2115 = vunpack.c.l.b16 %v2080
      %v2116 = vunpack.c.l.b16 %v2083
      %v2117 = vpack.c.b16 %v2086, %v2085
      %v2118 = vpack.c.b16 %v2088, %v2087
      %v2119 = vpack.c.b16 %v2090, %v2089
      %v2120 = vpack.c.b16 %v2092, %v2091
      %v2121 = vpack.c.b16 %v2094, %v2093
      %v2122 = vpack.c.b16 %v2096, %v2095
      %v2123 = vpack.c.b16 %v2098, %v2097
      %v2124 = vpack.c.b16 %v2100, %v2099
      %v2125 = vpack.c.b16 %v2102, %v2101
      %v2126 = vpack.c.b16 %v2104, %v2103
      %v2127 = vpack.c.b16 %v2106, %v2105
      %v2128 = vpack.c.b16 %v2108, %v2107
      %v2129 = vpack.c.b16 %v2110, %v2109
      %v2130 = vpack.c.b16 %v2112, %v2111
      %v2131 = vpack.c.b16 %v2114, %v2113
      %v2132 = vpack.c.b16 %v2116, %v2115
      %v2134 = vsel %vm549, %v2117, 0
      %v2137 = vsel %vm549, %v2118, 0
      %v2140 = vsel %vm549, %v2119, 0
      %v2143 = vsel %vm549, %v2120, 0
      %v2146 = vsel %vm549, %v2121, 0
      %v2149 = vsel %vm549, %v2122, 0
      %v2152 = vsel %vm549, %v2123, 0
      %v2155 = vsel %vm549, %v2124, 0
      %v2158 = vsel %vm549, %v2125, 0
      %v2161 = vsel %vm549, %v2126, 0
      %v2164 = vsel %vm549, %v2127, 0
      %v2167 = vsel %vm549, %v2128, 0
      %v2170 = vsel %vm549, %v2129, 0
      %v2173 = vsel %vm549, %v2130, 0
      %v2176 = vsel %vm549, %v2131, 0
      %v2179 = vsel %vm549, %v2132, 0
      %v2182 = vsel %vm598, %v2084, 0
      %2184 = vmatprep.subr.bf16.mxu0 0
      %2185 = vmatpush1.bf16.msra.mxu0 %v2182
      %2186 = vmatprep.subr.bf16.mxu0 0
      %2187 = vmatpush1.bf16.msra.mxu0 0
      %2188 = vmatprep.subr.bf16.mxu0 0
      %2189 = vmatpush1.bf16.msra.mxu0 0
      %2190 = vmatprep.subr.bf16.mxu0 0
      %2191 = vmatpush1.bf16.msra.mxu0 0
      %2192 = vmatprep.subr.bf16.mxu0 0
      %2193 = vmatpush1.bf16.msra.mxu0 0
      %2194 = vmatprep.subr.bf16.mxu0 0
      %2195 = vmatpush1.bf16.msra.mxu0 0
      %2196 = vmatprep.subr.bf16.mxu0 0
      %2197 = vmatpush1.bf16.msra.mxu0 0
      %2198 = vmatprep.subr.bf16.mxu0 0
      %2199 = vmatpush1.bf16.msra.mxu0 0
      %2200 = vmatprep.subr.bf16.mxu0 0
      %2201 = vmatpush1.bf16.msra.mxu0 0
      %2202 = vmatprep.subr.bf16.mxu0 0
      %2203 = vmatpush1.bf16.msra.mxu0 0
      %2204 = vmatprep.subr.bf16.mxu0 0
      %2205 = vmatpush1.bf16.msra.mxu0 0
      %2206 = vmatprep.subr.bf16.mxu0 0
      %2207 = vmatpush1.bf16.msra.mxu0 0
      %2208 = vmatprep.subr.bf16.mxu0 0
      %2209 = vmatpush1.bf16.msra.mxu0 0
      %2210 = vmatprep.subr.bf16.mxu0 0
      %2211 = vmatpush1.bf16.msra.mxu0 0
      %2212 = vmatprep.subr.bf16.mxu0 0
      %2213 = vmatpush1.bf16.msra.mxu0 0
      %2214 = vmatprep.subr.bf16.mxu0 0
      %2215 = vmatpush1.bf16.msra.mxu0 0
      %2216 = vmatprep.mubr.bf16.mxu0 0
      %2217 = vmatmul.mubr.bf16.gmra.mrb[0].mxu0 %v2134
      %v2218 = vpop.f32.mrb[0].mxu0
      %v2219 = vadd.f32 0.0, %v2218
      %v2220 = vpop.f32.mrb[0].mxu0
      %v2221 = vpop.f32.mrb[0].mxu0
      %v2222 = vadd.f32 0.0, %v2221
      %v2223 = vpop.f32.mrb[0].mxu0
      %2224 = vmatprep.mubr.bf16.mxu0 0
      %2225 = vmatmul.mubr.bf16.gmra.mrb[0].mxu0 %v2137
      %v2226 = vpop.f32.mrb[0].mxu0
      %v2227 = vadd.f32 0.0, %v2226
      %v2228 = vpop.f32.mrb[0].mxu0
      %v2229 = vpop.f32.mrb[0].mxu0
      %v2230 = vadd.f32 0.0, %v2229
      %v2231 = vpop.f32.mrb[0].mxu0
      %2232 = vmatprep.mubr.bf16.mxu0 0
      %2233 = vmatmul.mubr.bf16.gmra.mrb[0].mxu0 %v2140
      %v2234 = vpop.f32.mrb[0].mxu0
      %v2235 = vadd.f32 0.0, %v2234
      %v2236 = vpop.f32.mrb[0].mxu0
      %v2237 = vpop.f32.mrb[0].mxu0
      %v2238 = vadd.f32 0.0, %v2237
      %v2239 = vpop.f32.mrb[0].mxu0
      %2240 = vmatprep.mubr.bf16.mxu0 0
      %2241 = vmatmul.mubr.bf16.gmra.mrb[0].mxu0 %v2143
      %v2242 = vpop.f32.mrb[0].mxu0
      %v2243 = vadd.f32 0.0, %v2242
      %v2244 = vpop.f32.mrb[0].mxu0
      %v2245 = vpop.f32.mrb[0].mxu0
      %v2246 = vadd.f32 0.0, %v2245
      %v2247 = vpop.f32.mrb[0].mxu0
      %2248 = vmatprep.mubr.bf16.mxu0 0
      %2249 = vmatmul.mubr.bf16.gmra.mrb[0].mxu0 %v2146
      %v2250 = vpop.f32.mrb[0].mxu0
      %v2251 = vadd.f32 0.0, %v2250
      %v2252 = vpop.f32.mrb[0].mxu0
      %v2253 = vpop.f32.mrb[0].mxu0
      %v2254 = vadd.f32 0.0, %v2253
      %v2255 = vpop.f32.mrb[0].mxu0
      %2256 = vmatprep.mubr.bf16.mxu0 0
      %2257 = vmatmul.mubr.bf16.gmra.mrb[0].mxu0 %v2149
      %v2258 = vpop.f32.mrb[0].mxu0
      %v2259 = vadd.f32 0.0, %v2258
      %v2260 = vpop.f32.mrb[0].mxu0
      %v2261 = vpop.f32.mrb[0].mxu0
      %v2262 = vadd.f32 0.0, %v2261
      %v2263 = vpop.f32.mrb[0].mxu0
      %2264 = vmatprep.mubr.bf16.mxu0 0
      %2265 = vmatmul.mubr.bf16.gmra.mrb[0].mxu0 %v2152
      %v2266 = vpop.f32.mrb[0].mxu0
      %v2267 = vadd.f32 0.0, %v2266
      %v2268 = vpop.f32.mrb[0].mxu0
      %v2269 = vpop.f32.mrb[0].mxu0
      %v2270 = vadd.f32 0.0, %v2269
      %v2271 = vpop.f32.mrb[0].mxu0
      %2272 = vmatprep.mubr.bf16.mxu0 0
      %2273 = vmatmul.mubr.bf16.gmra.mrb[0].mxu0 %v2155
      %v2274 = vpop.f32.mrb[0].mxu0
      %v2275 = vadd.f32 0.0, %v2274
      %v2276 = vpop.f32.mrb[0].mxu0
      %v2277 = vpop.f32.mrb[0].mxu0
      %v2278 = vadd.f32 0.0, %v2277
      %v2279 = vpop.f32.mrb[0].mxu0
      %2280 = vmatprep.mubr.bf16.mxu0 0
      %2281 = vmatmul.mubr.bf16.gmra.mrb[0].mxu0 %v2158
      %v2282 = vpop.f32.mrb[0].mxu0
      %v2283 = vadd.f32 0.0, %v2282
      %v2284 = vpop.f32.mrb[0].mxu0
      %v2285 = vpop.f32.mrb[0].mxu0
      %v2286 = vadd.f32 0.0, %v2285
      %v2287 = vpop.f32.mrb[0].mxu0
      %2288 = vmatprep.mubr.bf16.mxu0 0
      %2289 = vmatmul.mubr.bf16.gmra.mrb[0].mxu0 %v2161
      %v2290 = vpop.f32.mrb[0].mxu0
      %v2291 = vadd.f32 0.0, %v2290
      %v2292 = vpop.f32.mrb[0].mxu0
      %v2293 = vpop.f32.mrb[0].mxu0
      %v2294 = vadd.f32 0.0, %v2293
      %v2295 = vpop.f32.mrb[0].mxu0
      %2296 = vmatprep.mubr.bf16.mxu0 0
      %2297 = vmatmul.mubr.bf16.gmra.mrb[0].mxu0 %v2164
      %v2298 = vpop.f32.mrb[0].mxu0
      %v2299 = vadd.f32 0.0, %v2298
      %v2300 = vpop.f32.mrb[0].mxu0
      %v2301 = vpop.f32.mrb[0].mxu0
      %v2302 = vadd.f32 0.0, %v2301
      %v2303 = vpop.f32.mrb[0].mxu0
      %2304 = vmatprep.mubr.bf16.mxu0 0
      %2305 = vmatmul.mubr.bf16.gmra.mrb[0].mxu0 %v2167
      %v2306 = vpop.f32.mrb[0].mxu0
      %v2307 = vadd.f32 0.0, %v2306
      %v2308 = vpop.f32.mrb[0].mxu0
      %v2309 = vpop.f32.mrb[0].mxu0
      %v2310 = vadd.f32 0.0, %v2309
      %v2311 = vpop.f32.mrb[0].mxu0
      %2312 = vmatprep.mubr.bf16.mxu0 0
      %2313 = vmatmul.mubr.bf16.gmra.mrb[0].mxu0 %v2170
      %v2314 = vpop.f32.mrb[0].mxu0
      %v2315 = vadd.f32 0.0, %v2314
      %v2316 = vpop.f32.mrb[0].mxu0
      %v2317 = vpop.f32.mrb[0].mxu0
      %v2318 = vadd.f32 0.0, %v2317
      %v2319 = vpop.f32.mrb[0].mxu0
      %2320 = vmatprep.mubr.bf16.mxu0 0
      %2321 = vmatmul.mubr.bf16.gmra.mrb[0].mxu0 %v2173
      %v2322 = vpop.f32.mrb[0].mxu0
      %v2323 = vadd.f32 0.0, %v2322
      %v2324 = vpop.f32.mrb[0].mxu0
      %v2325 = vpop.f32.mrb[0].mxu0
      %v2326 = vadd.f32 0.0, %v2325
      %v2327 = vpop.f32.mrb[0].mxu0
      %2328 = vmatprep.mubr.bf16.mxu0 0
      %2329 = vmatmul.mubr.bf16.gmra.mrb[0].mxu0 %v2176
      %v2330 = vpop.f32.mrb[0].mxu0
      %v2331 = vadd.f32 0.0, %v2330
      %v2332 = vpop.f32.mrb[0].mxu0
      %v2333 = vpop.f32.mrb[0].mxu0
      %v2334 = vadd.f32 0.0, %v2333
      %v2335 = vpop.f32.mrb[0].mxu0
      %2336 = vmatprep.mubr.bf16.mxu0 0
      %2337 = vmatmul.mubr.bf16.gmra.mrb[0].mxu0 %v2179
      %v2338 = vpop.f32.mrb[0].mxu0
      %v2339 = vadd.f32 0.0, %v2338
      %v2340 = vpop.f32.mrb[0].mxu0
      %v2341 = vpop.f32.mrb[0].mxu0
      %v2342 = vadd.f32 0.0, %v2341
      %v2343 = vpop.f32.mrb[0].mxu0
      %2344 = vdwg.mxu0
      %v2345 = vadd.f32 %v1844, %v2219
      %v2346 = vadd.f32 %v1845, %v2222
      %v2347 = vadd.f32 %v1846, %v2227
      %v2348 = vadd.f32 %v1847, %v2230
      %v2349 = vadd.f32 %v1848, %v2235
      %v2350 = vadd.f32 %v1849, %v2238
      %v2351 = vadd.f32 %v1850, %v2243
      %v2352 = vadd.f32 %v1851, %v2246
      %v2353 = vadd.f32 %v1852, %v2251
      %v2354 = vadd.f32 %v1853, %v2254
      %v2355 = vadd.f32 %v1854, %v2259
      %v2356 = vadd.f32 %v1855, %v2262
      %v2357 = vadd.f32 %v1856, %v2267
      %v2358 = vadd.f32 %v1857, %v2270
      %v2359 = vadd.f32 %v1858, %v2275
      %v2360 = vadd.f32 %v1859, %v2278
      %v2361 = vadd.f32 %v1860, %v2283
      %v2362 = vadd.f32 %v1861, %v2286
      %v2363 = vadd.f32 %v1862, %v2291
      %v2364 = vadd.f32 %v1863, %v2294
      %v2365 = vadd.f32 %v1864, %v2299
      %v2366 = vadd.f32 %v1865, %v2302
      %v2367 = vadd.f32 %v1866, %v2307
      %v2368 = vadd.f32 %v1867, %v2310
      %v2369 = vadd.f32 %v1868, %v2315
      %v2370 = vadd.f32 %v1869, %v2318
      %v2371 = vadd.f32 %v1870, %v2323
      %v2372 = vadd.f32 %v1871, %v2326
      %v2373 = vadd.f32 %v1872, %v2331
      %v2374 = vadd.f32 %v1873, %v2334
      %v2375 = vadd.f32 %v1874, %v2339
      %v2376 = vadd.f32 %v1875, %v2342
      %v2377 = vld [vmem:[%s1514] sm:$0xc]
      %v2378 = vld [vmem:[%s1514 + $0x8] sm:$0x3]
      %v2379 = vld [vmem:[%s1514 + $0xc] sm:$0xc]
      %v2380 = vld [vmem:[%s1514 + $0x14] sm:$0x3]
      %v2381 = vld [vmem:[%s1514 + $0x18] sm:$0xc]
      %v2382 = vld [vmem:[%s1514 + $0x20] sm:$0x3]
      %v2383 = vld [vmem:[%s1514 + $0x24] sm:$0xc]
      %v2384 = vld [vmem:[%s1514 + $0x2c] sm:$0x3]
      %v2385 = vld [vmem:[%s1514 + $0x30] sm:$0xc]
      %v2386 = vld [vmem:[%s1514 + $0x38] sm:$0x3]
      %v2387 = vld [vmem:[%s1514 + $0x3c] sm:$0xc]
      %v2388 = vld [vmem:[%s1514 + $0x44] sm:$0x3]
      %v2389 = vld [vmem:[%s1514 + $0x48] sm:$0xc]
      %v2390 = vld [vmem:[%s1514 + $0x50] sm:$0x3]
      %v2391 = vld [vmem:[%s1514 + $0x54] sm:$0xc]
      %v2392 = vld [vmem:[%s1514 + $0x5c] sm:$0x3]
      %v2393 = vld [vmem:[%s1514 + $0x60] sm:$0xc]
      %v2394 = vld [vmem:[%s1514 + $0x68] sm:$0x3]
      %v2395 = vld [vmem:[%s1514 + $0x6c] sm:$0xc]
      %v2396 = vld [vmem:[%s1514 + $0x74] sm:$0x3]
      %v2397 = vld [vmem:[%s1514 + $0x78] sm:$0xc]
      %v2398 = vld [vmem:[%s1514 + $0x80] sm:$0x3]
      %v2399 = vld [vmem:[%s1514 + $0x84] sm:$0xc]
      %v2400 = vld [vmem:[%s1514 + $0x8c] sm:$0x3]
      %v2401 = vld [vmem:[%s1514 + $0x90] sm:$0xc]
      %v2402 = vld [vmem:[%s1514 + $0x98] sm:$0x3]
      %v2403 = vld [vmem:[%s1514 + $0x9c] sm:$0xc]
      %v2404 = vld [vmem:[%s1514 + $0xa4] sm:$0x3]
      %v2405 = vld [vmem:[%s1514 + $0xa8] sm:$0xc]
      %v2406 = vld [vmem:[%s1514 + $0xb0] sm:$0x3]
      %v2407 = vld [vmem:[%s1514 + $0xb4] sm:$0xc]
      %v2408 = vld [vmem:[%s1514 + $0xbc] sm:$0x3]
      %v2441 = vrot.slane %v2377, 6
      %v2442 = vrot.slane %v2441, 4
      %v2443 = vrot.slane %v1877, 6
      %v2444 = vsel %vm1105, %v2442, %v2443
      %v2445 = vrot.slane %v2443, 4
      %v2446 = vrot.slane %v2378, 6
      %v2447 = vsel %vm1105, %v2445, %v2446
      %v2448 = vrot.slane %v2379, 6
      %v2449 = vrot.slane %v2448, 4
      %v2450 = vrot.slane %v1880, 6
      %v2451 = vsel %vm1105, %v2449, %v2450
      %v2452 = vrot.slane %v2450, 4
      %v2453 = vrot.slane %v2380, 6
      %v2454 = vsel %vm1105, %v2452, %v2453
      %v2455 = vrot.slane %v2381, 6
      %v2456 = vrot.slane %v2455, 4
      %v2457 = vrot.slane %v1883, 6
      %v2458 = vsel %vm1105, %v2456, %v2457
      %v2459 = vrot.slane %v2457, 4
      %v2460 = vrot.slane %v2382, 6
      %v2461 = vsel %vm1105, %v2459, %v2460
      %v2462 = vrot.slane %v2383, 6
      %v2463 = vrot.slane %v2462, 4
      %v2464 = vrot.slane %v1886, 6
      %v2465 = vsel %vm1105, %v2463, %v2464
      %v2466 = vrot.slane %v2464, 4
      %v2467 = vrot.slane %v2384, 6
      %v2468 = vsel %vm1105, %v2466, %v2467
      %v2469 = vrot.slane %v2385, 6
      %v2470 = vrot.slane %v2469, 4
      %v2471 = vrot.slane %v1889, 6
      %v2472 = vsel %vm1105, %v2470, %v2471
      %v2473 = vrot.slane %v2471, 4
      %v2474 = vrot.slane %v2386, 6
      %v2475 = vsel %vm1105, %v2473, %v2474
      %v2476 = vrot.slane %v2387, 6
      %v2477 = vrot.slane %v2476, 4
      %v2478 = vrot.slane %v1892, 6
      %v2479 = vsel %vm1105, %v2477, %v2478
      %v2480 = vrot.slane %v2478, 4
      %v2481 = vrot.slane %v2388, 6
      %v2482 = vsel %vm1105, %v2480, %v2481
      %v2483 = vrot.slane %v2389, 6
      %v2484 = vrot.slane %v2483, 4
      %v2485 = vrot.slane %v1895, 6
      %v2486 = vsel %vm1105, %v2484, %v2485
      %v2487 = vrot.slane %v2485, 4
      %v2488 = vrot.slane %v2390, 6
      %v2489 = vsel %vm1105, %v2487, %v2488
      %v2490 = vrot.slane %v2391, 6
      %v2491 = vrot.slane %v2490, 4
      %v2492 = vrot.slane %v1898, 6
      %v2493 = vsel %vm1105, %v2491, %v2492
      %v2494 = vrot.slane %v2492, 4
      %v2495 = vrot.slane %v2392, 6
      %v2496 = vsel %vm1105, %v2494, %v2495
      %v2497 = vrot.slane %v2393, 6
      %v2498 = vrot.slane %v2497, 4
      %v2499 = vrot.slane %v1901, 6
      %v2500 = vsel %vm1105, %v2498, %v2499
      %v2501 = vrot.slane %v2499, 4
      %v2502 = vrot.slane %v2394, 6
      %v2503 = vsel %vm1105, %v2501, %v2502
      %v2504 = vrot.slane %v2395, 6
      %v2505 = vrot.slane %v2504, 4
      %v2506 = vrot.slane %v1904, 6
      %v2507 = vsel %vm1105, %v2505, %v2506
      %v2508 = vrot.slane %v2506, 4
      %v2509 = vrot.slane %v2396, 6
      %v2510 = vsel %vm1105, %v2508, %v2509
      %v2511 = vrot.slane %v2397, 6
      %v2512 = vrot.slane %v2511, 4
      %v2513 = vrot.slane %v1907, 6
      %v2514 = vsel %vm1105, %v2512, %v2513
      %v2515 = vrot.slane %v2513, 4
      %v2516 = vrot.slane %v2398, 6
      %v2517 = vsel %vm1105, %v2515, %v2516
      %v2518 = vrot.slane %v2399, 6
      %v2519 = vrot.slane %v2518, 4
      %v2520 = vrot.slane %v1910, 6
      %v2521 = vsel %vm1105, %v2519, %v2520
      %v2522 = vrot.slane %v2520, 4
      %v2523 = vrot.slane %v2400, 6
      %v2524 = vsel %vm1105, %v2522, %v2523
      %v2525 = vrot.slane %v2401, 6
      %v2526 = vrot.slane %v2525, 4
      %v2527 = vrot.slane %v1913, 6
      %v2528 = vsel %vm1105, %v2526, %v2527
      %v2529 = vrot.slane %v2527, 4
      %v2530 = vrot.slane %v2402, 6
      %v2531 = vsel %vm1105, %v2529, %v2530
      %v2532 = vrot.slane %v2403, 6
      %v2533 = vrot.slane %v2532, 4
      %v2534 = vrot.slane %v1916, 6
      %v2535 = vsel %vm1105, %v2533, %v2534
      %v2536 = vrot.slane %v2534, 4
      %v2537 = vrot.slane %v2404, 6
      %v2538 = vsel %vm1105, %v2536, %v2537
      %v2539 = vrot.slane %v2405, 6
      %v2540 = vrot.slane %v2539, 4
      %v2541 = vrot.slane %v1919, 6
      %v2542 = vsel %vm1105, %v2540, %v2541
      %v2543 = vrot.slane %v2541, 4
      %v2544 = vrot.slane %v2406, 6
      %v2545 = vsel %vm1105, %v2543, %v2544
      %v2546 = vrot.slane %v2407, 6
      %v2547 = vrot.slane %v2546, 4
      %v2548 = vrot.slane %v1922, 6
      %v2549 = vsel %vm1105, %v2547, %v2548
      %v2550 = vrot.slane %v2548, 4
      %v2551 = vrot.slane %v2408, 6
      %v2552 = vsel %vm1105, %v2550, %v2551
      %v2553 = vld [vmem:[%s2 + $0x8] sm:$0xc]
      %v2554 = vunpack.c.l.b16 %v2444
      %v2555 = vunpack.c.l.b16 %v2447
      %v2556 = vunpack.c.l.b16 %v2451
      %v2557 = vunpack.c.l.b16 %v2454
      %v2558 = vunpack.c.l.b16 %v2458
      %v2559 = vunpack.c.l.b16 %v2461
      %v2560 = vunpack.c.l.b16 %v2465
      %v2561 = vunpack.c.l.b16 %v2468
      %v2562 = vunpack.c.l.b16 %v2472
      %v2563 = vunpack.c.l.b16 %v2475
      %v2564 = vunpack.c.l.b16 %v2479
      %v2565 = vunpack.c.l.b16 %v2482
      %v2566 = vunpack.c.l.b16 %v2486
      %v2567 = vunpack.c.l.b16 %v2489
      %v2568 = vunpack.c.l.b16 %v2493
      %v2569 = vunpack.c.l.b16 %v2496
      %v2570 = vunpack.c.l.b16 %v2500
      %v2571 = vunpack.c.l.b16 %v2503
      %v2572 = vunpack.c.l.b16 %v2507
      %v2573 = vunpack.c.l.b16 %v2510
      %v2574 = vunpack.c.l.b16 %v2514
      %v2575 = vunpack.c.l.b16 %v2517
      %v2576 = vunpack.c.l.b16 %v2521
      %v2577 = vunpack.c.l.b16 %v2524
      %v2578 = vunpack.c.l.b16 %v2528
      %v2579 = vunpack.c.l.b16 %v2531
      %v2580 = vunpack.c.l.b16 %v2535
      %v2581 = vunpack.c.l.b16 %v2538
      %v2582 = vunpack.c.l.b16 %v2542
      %v2583 = vunpack.c.l.b16 %v2545
      %v2584 = vunpack.c.l.b16 %v2549
      %v2585 = vunpack.c.l.b16 %v2552
      %v2586 = vpack.c.b16 %v2555, %v2554
      %v2587 = vpack.c.b16 %v2557, %v2556
      %v2588 = vpack.c.b16 %v2559, %v2558
      %v2589 = vpack.c.b16 %v2561, %v2560
      %v2590 = vpack.c.b16 %v2563, %v2562
      %v2591 = vpack.c.b16 %v2565, %v2564
      %v2592 = vpack.c.b16 %v2567, %v2566
      %v2593 = vpack.c.b16 %v2569, %v2568
      %v2594 = vpack.c.b16 %v2571, %v2570
      %v2595 = vpack.c.b16 %v2573, %v2572
      %v2596 = vpack.c.b16 %v2575, %v2574
      %v2597 = vpack.c.b16 %v2577, %v2576
      %v2598 = vpack.c.b16 %v2579, %v2578
      %v2599 = vpack.c.b16 %v2581, %v2580
      %v2600 = vpack.c.b16 %v2583, %v2582
      %v2601 = vpack.c.b16 %v2585, %v2584
      %v2603 = vunpack.c.l.b16 %v2553
      %v2604 = vpack.c.b16 %v2603, %v2603
      %v2605 = vrot.slane %v2604, 2
      %v2607 = vsel %vm549, %v2586, 0
      %v2610 = vsel %vm549, %v2587, 0
      %v2613 = vsel %vm549, %v2588, 0
      %v2616 = vsel %vm549, %v2589, 0
      %v2619 = vsel %vm549, %v2590, 0
      %v2622 = vsel %vm549, %v2591, 0
      %v2625 = vsel %vm549, %v2592, 0
      %v2628 = vsel %vm549, %v2593, 0
      %v2631 = vsel %vm549, %v2594, 0
      %v2634 = vsel %vm549, %v2595, 0
      %v2637 = vsel %vm549, %v2596, 0
      %v2640 = vsel %vm549, %v2597, 0
      %v2643 = vsel %vm549, %v2598, 0
      %v2646 = vsel %vm549, %v2599, 0
      %v2649 = vsel %vm549, %v2600, 0
      %v2652 = vsel %vm549, %v2601, 0
      %v2655 = vsel %vm598, %v2605, 0
      %2657 = vmatprep.subr.bf16.mxu0 0
      %2658 = vmatpush1.bf16.msra.mxu0 %v2655
      %2659 = vmatprep.subr.bf16.mxu0 0
      %2660 = vmatpush1.bf16.msra.mxu0 0
      %2661 = vmatprep.subr.bf16.mxu0 0
      %2662 = vmatpush1.bf16.msra.mxu0 0
      %2663 = vmatprep.subr.bf16.mxu0 0
      %2664 = vmatpush1.bf16.msra.mxu0 0
      %2665 = vmatprep.subr.bf16.mxu0 0
      %2666 = vmatpush1.bf16.msra.mxu0 0
      %2667 = vmatprep.subr.bf16.mxu0 0
      %2668 = vmatpush1.bf16.msra.mxu0 0
      %2669 = vmatprep.subr.bf16.mxu0 0
      %2670 = vmatpush1.bf16.msra.mxu0 0
      %2671 = vmatprep.subr.bf16.mxu0 0
      %2672 = vmatpush1.bf16.msra.mxu0 0
      %2673 = vmatprep.subr.bf16.mxu0 0
      %2674 = vmatpush1.bf16.msra.mxu0 0
      %2675 = vmatprep.subr.bf16.mxu0 0
      %2676 = vmatpush1.bf16.msra.mxu0 0
      %2677 = vmatprep.subr.bf16.mxu0 0
      %2678 = vmatpush1.bf16.msra.mxu0 0
      %2679 = vmatprep.subr.bf16.mxu0 0
      %2680 = vmatpush1.bf16.msra.mxu0 0
      %2681 = vmatprep.subr.bf16.mxu0 0
      %2682 = vmatpush1.bf16.msra.mxu0 0
      %2683 = vmatprep.subr.bf16.mxu0 0
      %2684 = vmatpush1.bf16.msra.mxu0 0
      %2685 = vmatprep.subr.bf16.mxu0 0
      %2686 = vmatpush1.bf16.msra.mxu0 0
      %2687 = vmatprep.subr.bf16.mxu0 0
      %2688 = vmatpush1.bf16.msra.mxu0 0
      %2689 = vmatprep.mubr.bf16.mxu0 0
      %2690 = vmatmul.mubr.bf16.gmra.mrb[0].mxu0 %v2607
      %v2691 = vpop.f32.mrb[0].mxu0
      %v2692 = vadd.f32 0.0, %v2691
      %v2693 = vpop.f32.mrb[0].mxu0
      %v2694 = vpop.f32.mrb[0].mxu0
      %v2695 = vadd.f32 0.0, %v2694
      %v2696 = vpop.f32.mrb[0].mxu0
      %2697 = vmatprep.mubr.bf16.mxu0 0
      %2698 = vmatmul.mubr.bf16.gmra.mrb[0].mxu0 %v2610
      %v2699 = vpop.f32.mrb[0].mxu0
      %v2700 = vadd.f32 0.0, %v2699
      %v2701 = vpop.f32.mrb[0].mxu0
      %v2702 = vpop.f32.mrb[0].mxu0
      %v2703 = vadd.f32 0.0, %v2702
      %v2704 = vpop.f32.mrb[0].mxu0
      %2705 = vmatprep.mubr.bf16.mxu0 0
      %2706 = vmatmul.mubr.bf16.gmra.mrb[0].mxu0 %v2613
      %v2707 = vpop.f32.mrb[0].mxu0
      %v2708 = vadd.f32 0.0, %v2707
      %v2709 = vpop.f32.mrb[0].mxu0
      %v2710 = vpop.f32.mrb[0].mxu0
      %v2711 = vadd.f32 0.0, %v2710
      %v2712 = vpop.f32.mrb[0].mxu0
      %2713 = vmatprep.mubr.bf16.mxu0 0
      %2714 = vmatmul.mubr.bf16.gmra.mrb[0].mxu0 %v2616
      %v2715 = vpop.f32.mrb[0].mxu0
      %v2716 = vadd.f32 0.0, %v2715
      %v2717 = vpop.f32.mrb[0].mxu0
      %v2718 = vpop.f32.mrb[0].mxu0
      %v2719 = vadd.f32 0.0, %v2718
      %v2720 = vpop.f32.mrb[0].mxu0
      %2721 = vmatprep.mubr.bf16.mxu0 0
      %2722 = vmatmul.mubr.bf16.gmra.mrb[0].mxu0 %v2619
      %v2723 = vpop.f32.mrb[0].mxu0
      %v2724 = vadd.f32 0.0, %v2723
      %v2725 = vpop.f32.mrb[0].mxu0
      %v2726 = vpop.f32.mrb[0].mxu0
      %v2727 = vadd.f32 0.0, %v2726
      %v2728 = vpop.f32.mrb[0].mxu0
      %2729 = vmatprep.mubr.bf16.mxu0 0
      %2730 = vmatmul.mubr.bf16.gmra.mrb[0].mxu0 %v2622
      %v2731 = vpop.f32.mrb[0].mxu0
      %v2732 = vadd.f32 0.0, %v2731
      %v2733 = vpop.f32.mrb[0].mxu0
      %v2734 = vpop.f32.mrb[0].mxu0
      %v2735 = vadd.f32 0.0, %v2734
      %v2736 = vpop.f32.mrb[0].mxu0
      %2737 = vmatprep.mubr.bf16.mxu0 0
      %2738 = vmatmul.mubr.bf16.gmra.mrb[0].mxu0 %v2625
      %v2739 = vpop.f32.mrb[0].mxu0
      %v2740 = vadd.f32 0.0, %v2739
      %v2741 = vpop.f32.mrb[0].mxu0
      %v2742 = vpop.f32.mrb[0].mxu0
      %v2743 = vadd.f32 0.0, %v2742
      %v2744 = vpop.f32.mrb[0].mxu0
      %2745 = vmatprep.mubr.bf16.mxu0 0
      %2746 = vmatmul.mubr.bf16.gmra.mrb[0].mxu0 %v2628
      %v2747 = vpop.f32.mrb[0].mxu0
      %v2748 = vadd.f32 0.0, %v2747
      %v2749 = vpop.f32.mrb[0].mxu0
      %v2750 = vpop.f32.mrb[0].mxu0
      %v2751 = vadd.f32 0.0, %v2750
      %v2752 = vpop.f32.mrb[0].mxu0
      %2753 = vmatprep.mubr.bf16.mxu0 0
      %2754 = vmatmul.mubr.bf16.gmra.mrb[0].mxu0 %v2631
      %v2755 = vpop.f32.mrb[0].mxu0
      %v2756 = vadd.f32 0.0, %v2755
      %v2757 = vpop.f32.mrb[0].mxu0
      %v2758 = vpop.f32.mrb[0].mxu0
      %v2759 = vadd.f32 0.0, %v2758
      %v2760 = vpop.f32.mrb[0].mxu0
      %2761 = vmatprep.mubr.bf16.mxu0 0
      %2762 = vmatmul.mubr.bf16.gmra.mrb[0].mxu0 %v2634
      %v2763 = vpop.f32.mrb[0].mxu0
      %v2764 = vadd.f32 0.0, %v2763
      %v2765 = vpop.f32.mrb[0].mxu0
      %v2766 = vpop.f32.mrb[0].mxu0
      %v2767 = vadd.f32 0.0, %v2766
      %v2768 = vpop.f32.mrb[0].mxu0
      %2769 = vmatprep.mubr.bf16.mxu0 0
      %2770 = vmatmul.mubr.bf16.gmra.mrb[0].mxu0 %v2637
      %v2771 = vpop.f32.mrb[0].mxu0
      %v2772 = vadd.f32 0.0, %v2771
      %v2773 = vpop.f32.mrb[0].mxu0
      %v2774 = vpop.f32.mrb[0].mxu0
      %v2775 = vadd.f32 0.0, %v2774
      %v2776 = vpop.f32.mrb[0].mxu0
      %2777 = vmatprep.mubr.bf16.mxu0 0
      %2778 = vmatmul.mubr.bf16.gmra.mrb[0].mxu0 %v2640
      %v2779 = vpop.f32.mrb[0].mxu0
      %v2780 = vadd.f32 0.0, %v2779
      %v2781 = vpop.f32.mrb[0].mxu0
      %v2782 = vpop.f32.mrb[0].mxu0
      %v2783 = vadd.f32 0.0, %v2782
      %v2784 = vpop.f32.mrb[0].mxu0
      %2785 = vmatprep.mubr.bf16.mxu0 0
      %2786 = vmatmul.mubr.bf16.gmra.mrb[0].mxu0 %v2643
      %v2787 = vpop.f32.mrb[0].mxu0
      %v2788 = vadd.f32 0.0, %v2787
      %v2789 = vpop.f32.mrb[0].mxu0
      %v2790 = vpop.f32.mrb[0].mxu0
      %v2791 = vadd.f32 0.0, %v2790
      %v2792 = vpop.f32.mrb[0].mxu0
      %2793 = vmatprep.mubr.bf16.mxu0 0
      %2794 = vmatmul.mubr.bf16.gmra.mrb[0].mxu0 %v2646
      %v2795 = vpop.f32.mrb[0].mxu0
      %v2796 = vadd.f32 0.0, %v2795
      %v2797 = vpop.f32.mrb[0].mxu0
      %v2798 = vpop.f32.mrb[0].mxu0
      %v2799 = vadd.f32 0.0, %v2798
      %v2800 = vpop.f32.mrb[0].mxu0
      %2801 = vmatprep.mubr.bf16.mxu0 0
      %2802 = vmatmul.mubr.bf16.gmra.mrb[0].mxu0 %v2649
      %v2803 = vpop.f32.mrb[0].mxu0
      %v2804 = vadd.f32 0.0, %v2803
      %v2805 = vpop.f32.mrb[0].mxu0
      %v2806 = vpop.f32.mrb[0].mxu0
      %v2807 = vadd.f32 0.0, %v2806
      %v2808 = vpop.f32.mrb[0].mxu0
      %2809 = vmatprep.mubr.bf16.mxu0 0
      %2810 = vmatmul.mubr.bf16.gmra.mrb[0].mxu0 %v2652
      %v2811 = vpop.f32.mrb[0].mxu0
      %v2812 = vadd.f32 0.0, %v2811
      %v2813 = vpop.f32.mrb[0].mxu0
      %v2814 = vpop.f32.mrb[0].mxu0
      %v2815 = vadd.f32 0.0, %v2814
      %v2816 = vpop.f32.mrb[0].mxu0
      %2817 = vdwg.mxu0
      %v2818 = vadd.f32 %v2345, %v2692
      %v2819 = vadd.f32 %v2346, %v2695
      %v2820 = vadd.f32 %v2347, %v2700
      %v2821 = vadd.f32 %v2348, %v2703
      %v2822 = vadd.f32 %v2349, %v2708
      %v2823 = vadd.f32 %v2350, %v2711
      %v2824 = vadd.f32 %v2351, %v2716
      %v2825 = vadd.f32 %v2352, %v2719
      %v2826 = vadd.f32 %v2353, %v2724
      %v2827 = vadd.f32 %v2354, %v2727
      %v2828 = vadd.f32 %v2355, %v2732
      %v2829 = vadd.f32 %v2356, %v2735
      %v2830 = vadd.f32 %v2357, %v2740
      %v2831 = vadd.f32 %v2358, %v2743
      %v2832 = vadd.f32 %v2359, %v2748
      %v2833 = vadd.f32 %v2360, %v2751
      %v2834 = vadd.f32 %v2361, %v2756
      %v2835 = vadd.f32 %v2362, %v2759
      %v2836 = vadd.f32 %v2363, %v2764
      %v2837 = vadd.f32 %v2364, %v2767
      %v2838 = vadd.f32 %v2365, %v2772
      %v2839 = vadd.f32 %v2366, %v2775
      %v2840 = vadd.f32 %v2367, %v2780
      %v2841 = vadd.f32 %v2368, %v2783
      %v2842 = vadd.f32 %v2369, %v2788
      %v2843 = vadd.f32 %v2370, %v2791
      %v2844 = vadd.f32 %v2371, %v2796
      %v2845 = vadd.f32 %v2372, %v2799
      %v2846 = vadd.f32 %v2373, %v2804
      %v2847 = vadd.f32 %v2374, %v2807
      %v2848 = vadd.f32 %v2375, %v2812
      %v2849 = vadd.f32 %v2376, %v2815
      %s2850 = sadd.s32 %s264, 4
      %s2851 = smul.u32 %s2850, 3
      %s2852 = smul.addr %s2851, 4
      %s2853 = scalar_lea.vmem %s249, %s2852
      %v2854 = vld [vmem:[%s2853] sm:$0xf]
      %v2855 = vld [vmem:[%s2853 + $0x4] sm:$0xf]
      %v2856 = vld [vmem:[%s2853 + $0xc] sm:$0xf]
      %v2857 = vld [vmem:[%s2853 + $0x10] sm:$0xf]
      %v2858 = vld [vmem:[%s2853 + $0x18] sm:$0xf]
      %v2859 = vld [vmem:[%s2853 + $0x1c] sm:$0xf]
      %v2860 = vld [vmem:[%s2853 + $0x24] sm:$0xf]
      %v2861 = vld [vmem:[%s2853 + $0x28] sm:$0xf]
      %v2862 = vld [vmem:[%s2853 + $0x30] sm:$0xf]
      %v2863 = vld [vmem:[%s2853 + $0x34] sm:$0xf]
      %v2864 = vld [vmem:[%s2853 + $0x3c] sm:$0xf]
      %v2865 = vld [vmem:[%s2853 + $0x40] sm:$0xf]
      %v2866 = vld [vmem:[%s2853 + $0x48] sm:$0xf]
      %v2867 = vld [vmem:[%s2853 + $0x4c] sm:$0xf]
      %v2868 = vld [vmem:[%s2853 + $0x54] sm:$0xf]
      %v2869 = vld [vmem:[%s2853 + $0x58] sm:$0xf]
      %v2870 = vld [vmem:[%s2853 + $0x60] sm:$0xf]
      %v2871 = vld [vmem:[%s2853 + $0x64] sm:$0xf]
      %v2872 = vld [vmem:[%s2853 + $0x6c] sm:$0xf]
      %v2873 = vld [vmem:[%s2853 + $0x70] sm:$0xf]
      %v2874 = vld [vmem:[%s2853 + $0x78] sm:$0xf]
      %v2875 = vld [vmem:[%s2853 + $0x7c] sm:$0xf]
      %v2876 = vld [vmem:[%s2853 + $0x84] sm:$0xf]
      %v2877 = vld [vmem:[%s2853 + $0x88] sm:$0xf]
      %v2878 = vld [vmem:[%s2853 + $0x90] sm:$0xf]
      %v2879 = vld [vmem:[%s2853 + $0x94] sm:$0xf]
      %v2880 = vld [vmem:[%s2853 + $0x9c] sm:$0xf]
      %v2881 = vld [vmem:[%s2853 + $0xa0] sm:$0xf]
      %v2882 = vld [vmem:[%s2853 + $0xa8] sm:$0xf]
      %v2883 = vld [vmem:[%s2853 + $0xac] sm:$0xf]
      %v2884 = vld [vmem:[%s2853 + $0xb4] sm:$0xf]
      %v2885 = vld [vmem:[%s2853 + $0xb8] sm:$0xf]
      %v2886 = vld [vmem:[%s2 + $0xc] sm:$0x3]
      %v2919 = vunpack.c.l.b16 %v2854
      %v2920 = vunpack.c.l.b16 %v2855
      %v2921 = vunpack.c.l.b16 %v2856
      %v2922 = vunpack.c.l.b16 %v2857
      %v2923 = vunpack.c.l.b16 %v2858
      %v2924 = vunpack.c.l.b16 %v2859
      %v2925 = vunpack.c.l.b16 %v2860
      %v2926 = vunpack.c.l.b16 %v2861
      %v2927 = vunpack.c.l.b16 %v2862
      %v2928 = vunpack.c.l.b16 %v2863
      %v2929 = vunpack.c.l.b16 %v2864
      %v2930 = vunpack.c.l.b16 %v2865
      %v2931 = vunpack.c.l.b16 %v2866
      %v2932 = vunpack.c.l.b16 %v2867
      %v2933 = vunpack.c.l.b16 %v2868
      %v2934 = vunpack.c.l.b16 %v2869
      %v2935 = vunpack.c.l.b16 %v2870
      %v2936 = vunpack.c.l.b16 %v2871
      %v2937 = vunpack.c.l.b16 %v2872
      %v2938 = vunpack.c.l.b16 %v2873
      %v2939 = vunpack.c.l.b16 %v2874
      %v2940 = vunpack.c.l.b16 %v2875
      %v2941 = vunpack.c.l.b16 %v2876
      %v2942 = vunpack.c.l.b16 %v2877
      %v2943 = vunpack.c.l.b16 %v2878
      %v2944 = vunpack.c.l.b16 %v2879
      %v2945 = vunpack.c.l.b16 %v2880
      %v2946 = vunpack.c.l.b16 %v2881
      %v2947 = vunpack.c.l.b16 %v2882
      %v2948 = vunpack.c.l.b16 %v2883
      %v2949 = vunpack.c.l.b16 %v2884
      %v2950 = vunpack.c.l.b16 %v2885
      %v2951 = vpack.c.b16 %v2920, %v2919
      %v2952 = vpack.c.b16 %v2922, %v2921
      %v2953 = vpack.c.b16 %v2924, %v2923
      %v2954 = vpack.c.b16 %v2926, %v2925
      %v2955 = vpack.c.b16 %v2928, %v2927
      %v2956 = vpack.c.b16 %v2930, %v2929
      %v2957 = vpack.c.b16 %v2932, %v2931
      %v2958 = vpack.c.b16 %v2934, %v2933
      %v2959 = vpack.c.b16 %v2936, %v2935
      %v2960 = vpack.c.b16 %v2938, %v2937
      %v2961 = vpack.c.b16 %v2940, %v2939
      %v2962 = vpack.c.b16 %v2942, %v2941
      %v2963 = vpack.c.b16 %v2944, %v2943
      %v2964 = vpack.c.b16 %v2946, %v2945
      %v2965 = vpack.c.b16 %v2948, %v2947
      %v2966 = vpack.c.b16 %v2950, %v2949
      %v2968 = vsel %vm549, %v2951, 0
      %v2971 = vsel %vm549, %v2952, 0
      %v2974 = vsel %vm549, %v2953, 0
      %v2977 = vsel %vm549, %v2954, 0
      %v2980 = vsel %vm549, %v2955, 0
      %v2983 = vsel %vm549, %v2956, 0
      %v2986 = vsel %vm549, %v2957, 0
      %v2989 = vsel %vm549, %v2958, 0
      %v2992 = vsel %vm549, %v2959, 0
      %v2995 = vsel %vm549, %v2960, 0
      %v2998 = vsel %vm549, %v2961, 0
      %v3001 = vsel %vm549, %v2962, 0
      %v3004 = vsel %vm549, %v2963, 0
      %v3007 = vsel %vm549, %v2964, 0
      %v3010 = vsel %vm549, %v2965, 0
      %v3013 = vsel %vm549, %v2966, 0
      %v3016 = vsel %vm598, %v2886, 0
      %3018 = vmatprep.subr.bf16.mxu0 0
      %3019 = vmatpush1.bf16.msra.mxu0 %v3016
      %3020 = vmatprep.subr.bf16.mxu0 0
      %3021 = vmatpush1.bf16.msra.mxu0 0
      %3022 = vmatprep.subr.bf16.mxu0 0
      %3023 = vmatpush1.bf16.msra.mxu0 0
      %3024 = vmatprep.subr.bf16.mxu0 0
      %3025 = vmatpush1.bf16.msra.mxu0 0
      %3026 = vmatprep.subr.bf16.mxu0 0
      %3027 = vmatpush1.bf16.msra.mxu0 0
      %3028 = vmatprep.subr.bf16.mxu0 0
      %3029 = vmatpush1.bf16.msra.mxu0 0
      %3030 = vmatprep.subr.bf16.mxu0 0
      %3031 = vmatpush1.bf16.msra.mxu0 0
      %3032 = vmatprep.subr.bf16.mxu0 0
      %3033 = vmatpush1.bf16.msra.mxu0 0
      %3034 = vmatprep.subr.bf16.mxu0 0
      %3035 = vmatpush1.bf16.msra.mxu0 0
      %3036 = vmatprep.subr.bf16.mxu0 0
      %3037 = vmatpush1.bf16.msra.mxu0 0
      %3038 = vmatprep.subr.bf16.mxu0 0
      %3039 = vmatpush1.bf16.msra.mxu0 0
      %3040 = vmatprep.subr.bf16.mxu0 0
      %3041 = vmatpush1.bf16.msra.mxu0 0
      %3042 = vmatprep.subr.bf16.mxu0 0
      %3043 = vmatpush1.bf16.msra.mxu0 0
      %3044 = vmatprep.subr.bf16.mxu0 0
      %3045 = vmatpush1.bf16.msra.mxu0 0
      %3046 = vmatprep.subr.bf16.mxu0 0
      %3047 = vmatpush1.bf16.msra.mxu0 0
      %3048 = vmatprep.subr.bf16.mxu0 0
      %3049 = vmatpush1.bf16.msra.mxu0 0
      %3050 = vmatprep.mubr.bf16.mxu0 0
      %3051 = vmatmul.mubr.bf16.gmra.mrb[0].mxu0 %v2968
      %v3052 = vpop.f32.mrb[0].mxu0
      %v3053 = vadd.f32 0.0, %v3052
      %v3054 = vpop.f32.mrb[0].mxu0
      %v3055 = vpop.f32.mrb[0].mxu0
      %v3056 = vadd.f32 0.0, %v3055
      %v3057 = vpop.f32.mrb[0].mxu0
      %3058 = vmatprep.mubr.bf16.mxu0 0
      %3059 = vmatmul.mubr.bf16.gmra.mrb[0].mxu0 %v2971
      %v3060 = vpop.f32.mrb[0].mxu0
      %v3061 = vadd.f32 0.0, %v3060
      %v3062 = vpop.f32.mrb[0].mxu0
      %v3063 = vpop.f32.mrb[0].mxu0
      %v3064 = vadd.f32 0.0, %v3063
      %v3065 = vpop.f32.mrb[0].mxu0
      %3066 = vmatprep.mubr.bf16.mxu0 0
      %3067 = vmatmul.mubr.bf16.gmra.mrb[0].mxu0 %v2974
      %v3068 = vpop.f32.mrb[0].mxu0
      %v3069 = vadd.f32 0.0, %v3068
      %v3070 = vpop.f32.mrb[0].mxu0
      %v3071 = vpop.f32.mrb[0].mxu0
      %v3072 = vadd.f32 0.0, %v3071
      %v3073 = vpop.f32.mrb[0].mxu0
      %3074 = vmatprep.mubr.bf16.mxu0 0
      %3075 = vmatmul.mubr.bf16.gmra.mrb[0].mxu0 %v2977
      %v3076 = vpop.f32.mrb[0].mxu0
      %v3077 = vadd.f32 0.0, %v3076
      %v3078 = vpop.f32.mrb[0].mxu0
      %v3079 = vpop.f32.mrb[0].mxu0
      %v3080 = vadd.f32 0.0, %v3079
      %v3081 = vpop.f32.mrb[0].mxu0
      %3082 = vmatprep.mubr.bf16.mxu0 0
      %3083 = vmatmul.mubr.bf16.gmra.mrb[0].mxu0 %v2980
      %v3084 = vpop.f32.mrb[0].mxu0
      %v3085 = vadd.f32 0.0, %v3084
      %v3086 = vpop.f32.mrb[0].mxu0
      %v3087 = vpop.f32.mrb[0].mxu0
      %v3088 = vadd.f32 0.0, %v3087
      %v3089 = vpop.f32.mrb[0].mxu0
      %3090 = vmatprep.mubr.bf16.mxu0 0
      %3091 = vmatmul.mubr.bf16.gmra.mrb[0].mxu0 %v2983
      %v3092 = vpop.f32.mrb[0].mxu0
      %v3093 = vadd.f32 0.0, %v3092
      %v3094 = vpop.f32.mrb[0].mxu0
      %v3095 = vpop.f32.mrb[0].mxu0
      %v3096 = vadd.f32 0.0, %v3095
      %v3097 = vpop.f32.mrb[0].mxu0
      %3098 = vmatprep.mubr.bf16.mxu0 0
      %3099 = vmatmul.mubr.bf16.gmra.mrb[0].mxu0 %v2986
      %v3100 = vpop.f32.mrb[0].mxu0
      %v3101 = vadd.f32 0.0, %v3100
      %v3102 = vpop.f32.mrb[0].mxu0
      %v3103 = vpop.f32.mrb[0].mxu0
      %v3104 = vadd.f32 0.0, %v3103
      %v3105 = vpop.f32.mrb[0].mxu0
      %3106 = vmatprep.mubr.bf16.mxu0 0
      %3107 = vmatmul.mubr.bf16.gmra.mrb[0].mxu0 %v2989
      %v3108 = vpop.f32.mrb[0].mxu0
      %v3109 = vadd.f32 0.0, %v3108
      %v3110 = vpop.f32.mrb[0].mxu0
      %v3111 = vpop.f32.mrb[0].mxu0
      %v3112 = vadd.f32 0.0, %v3111
      %v3113 = vpop.f32.mrb[0].mxu0
      %3114 = vmatprep.mubr.bf16.mxu0 0
      %3115 = vmatmul.mubr.bf16.gmra.mrb[0].mxu0 %v2992
      %v3116 = vpop.f32.mrb[0].mxu0
      %v3117 = vadd.f32 0.0, %v3116
      %v3118 = vpop.f32.mrb[0].mxu0
      %v3119 = vpop.f32.mrb[0].mxu0
      %v3120 = vadd.f32 0.0, %v3119
      %v3121 = vpop.f32.mrb[0].mxu0
      %3122 = vmatprep.mubr.bf16.mxu0 0
      %3123 = vmatmul.mubr.bf16.gmra.mrb[0].mxu0 %v2995
      %v3124 = vpop.f32.mrb[0].mxu0
      %v3125 = vadd.f32 0.0, %v3124
      %v3126 = vpop.f32.mrb[0].mxu0
      %v3127 = vpop.f32.mrb[0].mxu0
      %v3128 = vadd.f32 0.0, %v3127
      %v3129 = vpop.f32.mrb[0].mxu0
      %3130 = vmatprep.mubr.bf16.mxu0 0
      %3131 = vmatmul.mubr.bf16.gmra.mrb[0].mxu0 %v2998
      %v3132 = vpop.f32.mrb[0].mxu0
      %v3133 = vadd.f32 0.0, %v3132
      %v3134 = vpop.f32.mrb[0].mxu0
      %v3135 = vpop.f32.mrb[0].mxu0
      %v3136 = vadd.f32 0.0, %v3135
      %v3137 = vpop.f32.mrb[0].mxu0
      %3138 = vmatprep.mubr.bf16.mxu0 0
      %3139 = vmatmul.mubr.bf16.gmra.mrb[0].mxu0 %v3001
      %v3140 = vpop.f32.mrb[0].mxu0
      %v3141 = vadd.f32 0.0, %v3140
      %v3142 = vpop.f32.mrb[0].mxu0
      %v3143 = vpop.f32.mrb[0].mxu0
      %v3144 = vadd.f32 0.0, %v3143
      %v3145 = vpop.f32.mrb[0].mxu0
      %3146 = vmatprep.mubr.bf16.mxu0 0
      %3147 = vmatmul.mubr.bf16.gmra.mrb[0].mxu0 %v3004
      %v3148 = vpop.f32.mrb[0].mxu0
      %v3149 = vadd.f32 0.0, %v3148
      %v3150 = vpop.f32.mrb[0].mxu0
      %v3151 = vpop.f32.mrb[0].mxu0
      %v3152 = vadd.f32 0.0, %v3151
      %v3153 = vpop.f32.mrb[0].mxu0
      %3154 = vmatprep.mubr.bf16.mxu0 0
      %3155 = vmatmul.mubr.bf16.gmra.mrb[0].mxu0 %v3007
      %v3156 = vpop.f32.mrb[0].mxu0
      %v3157 = vadd.f32 0.0, %v3156
      %v3158 = vpop.f32.mrb[0].mxu0
      %v3159 = vpop.f32.mrb[0].mxu0
      %v3160 = vadd.f32 0.0, %v3159
      %v3161 = vpop.f32.mrb[0].mxu0
      %3162 = vmatprep.mubr.bf16.mxu0 0
      %3163 = vmatmul.mubr.bf16.gmra.mrb[0].mxu0 %v3010
      %v3164 = vpop.f32.mrb[0].mxu0
      %v3165 = vadd.f32 0.0, %v3164
      %v3166 = vpop.f32.mrb[0].mxu0
      %v3167 = vpop.f32.mrb[0].mxu0
      %v3168 = vadd.f32 0.0, %v3167
      %v3169 = vpop.f32.mrb[0].mxu0
      %3170 = vmatprep.mubr.bf16.mxu0 0
      %3171 = vmatmul.mubr.bf16.gmra.mrb[0].mxu0 %v3013
      %v3172 = vpop.f32.mrb[0].mxu0
      %v3173 = vadd.f32 0.0, %v3172
      %v3174 = vpop.f32.mrb[0].mxu0
      %v3175 = vpop.f32.mrb[0].mxu0
      %v3176 = vadd.f32 0.0, %v3175
      %v3177 = vpop.f32.mrb[0].mxu0
      %3178 = vdwg.mxu0
      %v3179 = vadd.f32 %v2818, %v3053
      %v3180 = vadd.f32 %v2819, %v3056
      %v3181 = vadd.f32 %v2820, %v3061
      %v3182 = vadd.f32 %v2821, %v3064
      %v3183 = vadd.f32 %v2822, %v3069
      %v3184 = vadd.f32 %v2823, %v3072
      %v3185 = vadd.f32 %v2824, %v3077
      %v3186 = vadd.f32 %v2825, %v3080
      %v3187 = vadd.f32 %v2826, %v3085
      %v3188 = vadd.f32 %v2827, %v3088
      %v3189 = vadd.f32 %v2828, %v3093
      %v3190 = vadd.f32 %v2829, %v3096
      %v3191 = vadd.f32 %v2830, %v3101
      %v3192 = vadd.f32 %v2831, %v3104
      %v3193 = vadd.f32 %v2832, %v3109
      %v3194 = vadd.f32 %v2833, %v3112
      %v3195 = vadd.f32 %v2834, %v3117
      %v3196 = vadd.f32 %v2835, %v3120
      %v3197 = vadd.f32 %v2836, %v3125
      %v3198 = vadd.f32 %v2837, %v3128
      %v3199 = vadd.f32 %v2838, %v3133
      %v3200 = vadd.f32 %v2839, %v3136
      %v3201 = vadd.f32 %v2840, %v3141
      %v3202 = vadd.f32 %v2841, %v3144
      %v3203 = vadd.f32 %v2842, %v3149
      %v3204 = vadd.f32 %v2843, %v3152
      %v3205 = vadd.f32 %v2844, %v3157
      %v3206 = vadd.f32 %v2845, %v3160
      %v3207 = vadd.f32 %v2846, %v3165
      %v3208 = vadd.f32 %v2847, %v3168
      %v3209 = vadd.f32 %v2848, %v3173
      %v3210 = vadd.f32 %v2849, %v3176
      %v3211 = vld [vmem:[%s2853] sm:$0xe]
      %v3212 = vld [vmem:[%s2853 + $0x4] sm:$0xf]
      %v3213 = vld [vmem:[%s2853 + $0x8] sm:$0x1]
      %v3214 = vld [vmem:[%s2853 + $0xc] sm:$0xe]
      %v3215 = vld [vmem:[%s2853 + $0x10] sm:$0xf]
      %v3216 = vld [vmem:[%s2853 + $0x14] sm:$0x1]
      %v3217 = vld [vmem:[%s2853 + $0x18] sm:$0xe]
      %v3218 = vld [vmem:[%s2853 + $0x1c] sm:$0xf]
      %v3219 = vld [vmem:[%s2853 + $0x20] sm:$0x1]
      %v3220 = vld [vmem:[%s2853 + $0x24] sm:$0xe]
      %v3221 = vld [vmem:[%s2853 + $0x28] sm:$0xf]
      %v3222 = vld [vmem:[%s2853 + $0x2c] sm:$0x1]
      %v3223 = vld [vmem:[%s2853 + $0x30] sm:$0xe]
      %v3224 = vld [vmem:[%s2853 + $0x34] sm:$0xf]
      %v3225 = vld [vmem:[%s2853 + $0x38] sm:$0x1]
      %v3226 = vld [vmem:[%s2853 + $0x3c] sm:$0xe]
      %v3227 = vld [vmem:[%s2853 + $0x40] sm:$0xf]
      %v3228 = vld [vmem:[%s2853 + $0x44] sm:$0x1]
      %v3229 = vld [vmem:[%s2853 + $0x48] sm:$0xe]
      %v3230 = vld [vmem:[%s2853 + $0x4c] sm:$0xf]
      %v3231 = vld [vmem:[%s2853 + $0x50] sm:$0x1]
      %v3232 = vld [vmem:[%s2853 + $0x54] sm:$0xe]
      %v3233 = vld [vmem:[%s2853 + $0x58] sm:$0xf]
      %v3234 = vld [vmem:[%s2853 + $0x5c] sm:$0x1]
      %v3235 = vld [vmem:[%s2853 + $0x60] sm:$0xe]
      %v3236 = vld [vmem:[%s2853 + $0x64] sm:$0xf]
      %v3237 = vld [vmem:[%s2853 + $0x68] sm:$0x1]
      %v3238 = vld [vmem:[%s2853 + $0x6c] sm:$0xe]
      %v3239 = vld [vmem:[%s2853 + $0x70] sm:$0xf]
      %v3240 = vld [vmem:[%s2853 + $0x74] sm:$0x1]
      %v3241 = vld [vmem:[%s2853 + $0x78] sm:$0xe]
      %v3242 = vld [vmem:[%s2853 + $0x7c] sm:$0xf]
      %v3243 = vld [vmem:[%s2853 + $0x80] sm:$0x1]
      %v3244 = vld [vmem:[%s2853 + $0x84] sm:$0xe]
      %v3245 = vld [vmem:[%s2853 + $0x88] sm:$0xf]
      %v3246 = vld [vmem:[%s2853 + $0x8c] sm:$0x1]
      %v3247 = vld [vmem:[%s2853 + $0x90] sm:$0xe]
      %v3248 = vld [vmem:[%s2853 + $0x94] sm:$0xf]
      %v3249 = vld [vmem:[%s2853 + $0x98] sm:$0x1]
      %v3250 = vld [vmem:[%s2853 + $0x9c] sm:$0xe]
      %v3251 = vld [vmem:[%s2853 + $0xa0] sm:$0xf]
      %v3252 = vld [vmem:[%s2853 + $0xa4] sm:$0x1]
      %v3253 = vld [vmem:[%s2853 + $0xa8] sm:$0xe]
      %v3254 = vld [vmem:[%s2853 + $0xac] sm:$0xf]
      %v3255 = vld [vmem:[%s2853 + $0xb0] sm:$0x1]
      %v3256 = vld [vmem:[%s2853 + $0xb4] sm:$0xe]
      %v3257 = vld [vmem:[%s2853 + $0xb8] sm:$0xf]
      %v3258 = vld [vmem:[%s2853 + $0xbc] sm:$0x1]
      %v3307 = vrot.slane %v3211, 5
      %v3308 = vrot.slane %v3307, 4
      %v3309 = vrot.slane %v3212, 5
      %v3310 = vsel %vm383, %v3308, %v3309
      %v3311 = vrot.slane %v3309, 4
      %v3312 = vrot.slane %v3213, 5
      %v3313 = vsel %vm383, %v3311, %v3312
      %v3314 = vrot.slane %v3214, 5
      %v3315 = vrot.slane %v3314, 4
      %v3316 = vrot.slane %v3215, 5
      %v3317 = vsel %vm383, %v3315, %v3316
      %v3318 = vrot.slane %v3316, 4
      %v3319 = vrot.slane %v3216, 5
      %v3320 = vsel %vm383, %v3318, %v3319
      %v3321 = vrot.slane %v3217, 5
      %v3322 = vrot.slane %v3321, 4
      %v3323 = vrot.slane %v3218, 5
      %v3324 = vsel %vm383, %v3322, %v3323
      %v3325 = vrot.slane %v3323, 4
      %v3326 = vrot.slane %v3219, 5
      %v3327 = vsel %vm383, %v3325, %v3326
      %v3328 = vrot.slane %v3220, 5
      %v3329 = vrot.slane %v3328, 4
      %v3330 = vrot.slane %v3221, 5
      %v3331 = vsel %vm383, %v3329, %v3330
      %v3332 = vrot.slane %v3330, 4
      %v3333 = vrot.slane %v3222, 5
      %v3334 = vsel %vm383, %v3332, %v3333
      %v3335 = vrot.slane %v3223, 5
      %v3336 = vrot.slane %v3335, 4
      %v3337 = vrot.slane %v3224, 5
      %v3338 = vsel %vm383, %v3336, %v3337
      %v3339 = vrot.slane %v3337, 4
      %v3340 = vrot.slane %v3225, 5
      %v3341 = vsel %vm383, %v3339, %v3340
      %v3342 = vrot.slane %v3226, 5
      %v3343 = vrot.slane %v3342, 4
      %v3344 = vrot.slane %v3227, 5
      %v3345 = vsel %vm383, %v3343, %v3344
      %v3346 = vrot.slane %v3344, 4
      %v3347 = vrot.slane %v3228, 5
      %v3348 = vsel %vm383, %v3346, %v3347
      %v3349 = vrot.slane %v3229, 5
      %v3350 = vrot.slane %v3349, 4
      %v3351 = vrot.slane %v3230, 5
      %v3352 = vsel %vm383, %v3350, %v3351
      %v3353 = vrot.slane %v3351, 4
      %v3354 = vrot.slane %v3231, 5
      %v3355 = vsel %vm383, %v3353, %v3354
      %v3356 = vrot.slane %v3232, 5
      %v3357 = vrot.slane %v3356, 4
      %v3358 = vrot.slane %v3233, 5
      %v3359 = vsel %vm383, %v3357, %v3358
      %v3360 = vrot.slane %v3358, 4
      %v3361 = vrot.slane %v3234, 5
      %v3362 = vsel %vm383, %v3360, %v3361
      %v3363 = vrot.slane %v3235, 5
      %v3364 = vrot.slane %v3363, 4
      %v3365 = vrot.slane %v3236, 5
      %v3366 = vsel %vm383, %v3364, %v3365
      %v3367 = vrot.slane %v3365, 4
      %v3368 = vrot.slane %v3237, 5
      %v3369 = vsel %vm383, %v3367, %v3368
      %v3370 = vrot.slane %v3238, 5
      %v3371 = vrot.slane %v3370, 4
      %v3372 = vrot.slane %v3239, 5
      %v3373 = vsel %vm383, %v3371, %v3372
      %v3374 = vrot.slane %v3372, 4
      %v3375 = vrot.slane %v3240, 5
      %v3376 = vsel %vm383, %v3374, %v3375
      %v3377 = vrot.slane %v3241, 5
      %v3378 = vrot.slane %v3377, 4
      %v3379 = vrot.slane %v3242, 5
      %v3380 = vsel %vm383, %v3378, %v3379
      %v3381 = vrot.slane %v3379, 4
      %v3382 = vrot.slane %v3243, 5
      %v3383 = vsel %vm383, %v3381, %v3382
      %v3384 = vrot.slane %v3244, 5
      %v3385 = vrot.slane %v3384, 4
      %v3386 = vrot.slane %v3245, 5
      %v3387 = vsel %vm383, %v3385, %v3386
      %v3388 = vrot.slane %v3386, 4
      %v3389 = vrot.slane %v3246, 5
      %v3390 = vsel %vm383, %v3388, %v3389
      %v3391 = vrot.slane %v3247, 5
      %v3392 = vrot.slane %v3391, 4
      %v3393 = vrot.slane %v3248, 5
      %v3394 = vsel %vm383, %v3392, %v3393
      %v3395 = vrot.slane %v3393, 4
      %v3396 = vrot.slane %v3249, 5
      %v3397 = vsel %vm383, %v3395, %v3396
      %v3398 = vrot.slane %v3250, 5
      %v3399 = vrot.slane %v3398, 4
      %v3400 = vrot.slane %v3251, 5
      %v3401 = vsel %vm383, %v3399, %v3400
      %v3402 = vrot.slane %v3400, 4
      %v3403 = vrot.slane %v3252, 5
      %v3404 = vsel %vm383, %v3402, %v3403
      %v3405 = vrot.slane %v3253, 5
      %v3406 = vrot.slane %v3405, 4
      %v3407 = vrot.slane %v3254, 5
      %v3408 = vsel %vm383, %v3406, %v3407
      %v3409 = vrot.slane %v3407, 4
      %v3410 = vrot.slane %v3255, 5
      %v3411 = vsel %vm383, %v3409, %v3410
      %v3412 = vrot.slane %v3256, 5
      %v3413 = vrot.slane %v3412, 4
      %v3414 = vrot.slane %v3257, 5
      %v3415 = vsel %vm383, %v3413, %v3414
      %v3416 = vrot.slane %v3414, 4
      %v3417 = vrot.slane %v3258, 5
      %v3418 = vsel %vm383, %v3416, %v3417
      %v3419 = vld [vmem:[%s2 + $0xc] sm:$0xc]
      %v3420 = vunpack.c.l.b16 %v3310
      %v3421 = vunpack.c.l.b16 %v3313
      %v3422 = vunpack.c.l.b16 %v3317
      %v3423 = vunpack.c.l.b16 %v3320
      %v3424 = vunpack.c.l.b16 %v3324
      %v3425 = vunpack.c.l.b16 %v3327
      %v3426 = vunpack.c.l.b16 %v3331
      %v3427 = vunpack.c.l.b16 %v3334
      %v3428 = vunpack.c.l.b16 %v3338
      %v3429 = vunpack.c.l.b16 %v3341
      %v3430 = vunpack.c.l.b16 %v3345
      %v3431 = vunpack.c.l.b16 %v3348
      %v3432 = vunpack.c.l.b16 %v3352
      %v3433 = vunpack.c.l.b16 %v3355
      %v3434 = vunpack.c.l.b16 %v3359
      %v3435 = vunpack.c.l.b16 %v3362
      %v3436 = vunpack.c.l.b16 %v3366
      %v3437 = vunpack.c.l.b16 %v3369
      %v3438 = vunpack.c.l.b16 %v3373
      %v3439 = vunpack.c.l.b16 %v3376
      %v3440 = vunpack.c.l.b16 %v3380
      %v3441 = vunpack.c.l.b16 %v3383
      %v3442 = vunpack.c.l.b16 %v3387
      %v3443 = vunpack.c.l.b16 %v3390
      %v3444 = vunpack.c.l.b16 %v3394
      %v3445 = vunpack.c.l.b16 %v3397
      %v3446 = vunpack.c.l.b16 %v3401
      %v3447 = vunpack.c.l.b16 %v3404
      %v3448 = vunpack.c.l.b16 %v3408
      %v3449 = vunpack.c.l.b16 %v3411
      %v3450 = vunpack.c.l.b16 %v3415
      %v3451 = vunpack.c.l.b16 %v3418
      %v3452 = vpack.c.b16 %v3421, %v3420
      %v3453 = vpack.c.b16 %v3423, %v3422
      %v3454 = vpack.c.b16 %v3425, %v3424
      %v3455 = vpack.c.b16 %v3427, %v3426
      %v3456 = vpack.c.b16 %v3429, %v3428
      %v3457 = vpack.c.b16 %v3431, %v3430
      %v3458 = vpack.c.b16 %v3433, %v3432
      %v3459 = vpack.c.b16 %v3435, %v3434
      %v3460 = vpack.c.b16 %v3437, %v3436
      %v3461 = vpack.c.b16 %v3439, %v3438
      %v3462 = vpack.c.b16 %v3441, %v3440
      %v3463 = vpack.c.b16 %v3443, %v3442
      %v3464 = vpack.c.b16 %v3445, %v3444
      %v3465 = vpack.c.b16 %v3447, %v3446
      %v3466 = vpack.c.b16 %v3449, %v3448
      %v3467 = vpack.c.b16 %v3451, %v3450
      %v3469 = vunpack.c.l.b16 %v3419
      %v3470 = vpack.c.b16 %v3469, %v3469
      %v3471 = vrot.slane %v3470, 2
      %v3473 = vsel %vm549, %v3452, 0
      %v3476 = vsel %vm549, %v3453, 0
      %v3479 = vsel %vm549, %v3454, 0
      %v3482 = vsel %vm549, %v3455, 0
      %v3485 = vsel %vm549, %v3456, 0
      %v3488 = vsel %vm549, %v3457, 0
      %v3491 = vsel %vm549, %v3458, 0
      %v3494 = vsel %vm549, %v3459, 0
      %v3497 = vsel %vm549, %v3460, 0
      %v3500 = vsel %vm549, %v3461, 0
      %v3503 = vsel %vm549, %v3462, 0
      %v3506 = vsel %vm549, %v3463, 0
      %v3509 = vsel %vm549, %v3464, 0
      %v3512 = vsel %vm549, %v3465, 0
      %v3515 = vsel %vm549, %v3466, 0
      %v3518 = vsel %vm549, %v3467, 0
      %v3521 = vsel %vm598, %v3471, 0
      %3523 = vmatprep.subr.bf16.mxu0 0
      %3524 = vmatpush1.bf16.msra.mxu0 %v3521
      %3525 = vmatprep.subr.bf16.mxu0 0
      %3526 = vmatpush1.bf16.msra.mxu0 0
      %3527 = vmatprep.subr.bf16.mxu0 0
      %3528 = vmatpush1.bf16.msra.mxu0 0
      %3529 = vmatprep.subr.bf16.mxu0 0
      %3530 = vmatpush1.bf16.msra.mxu0 0
      %3531 = vmatprep.subr.bf16.mxu0 0
      %3532 = vmatpush1.bf16.msra.mxu0 0
      %3533 = vmatprep.subr.bf16.mxu0 0
      %3534 = vmatpush1.bf16.msra.mxu0 0
      %3535 = vmatprep.subr.bf16.mxu0 0
      %3536 = vmatpush1.bf16.msra.mxu0 0
      %3537 = vmatprep.subr.bf16.mxu0 0
      %3538 = vmatpush1.bf16.msra.mxu0 0
      %3539 = vmatprep.subr.bf16.mxu0 0
      %3540 = vmatpush1.bf16.msra.mxu0 0
      %3541 = vmatprep.subr.bf16.mxu0 0
      %3542 = vmatpush1.bf16.msra.mxu0 0
      %3543 = vmatprep.subr.bf16.mxu0 0
      %3544 = vmatpush1.bf16.msra.mxu0 0
      %3545 = vmatprep.subr.bf16.mxu0 0
      %3546 = vmatpush1.bf16.msra.mxu0 0
      %3547 = vmatprep.subr.bf16.mxu0 0
      %3548 = vmatpush1.bf16.msra.mxu0 0
      %3549 = vmatprep.subr.bf16.mxu0 0
      %3550 = vmatpush1.bf16.msra.mxu0 0
      %3551 = vmatprep.subr.bf16.mxu0 0
      %3552 = vmatpush1.bf16.msra.mxu0 0
      %3553 = vmatprep.subr.bf16.mxu0 0
      %3554 = vmatpush1.bf16.msra.mxu0 0
      %3555 = vmatprep.mubr.bf16.mxu0 0
      %3556 = vmatmul.mubr.bf16.gmra.mrb[0].mxu0 %v3473
      %v3557 = vpop.f32.mrb[0].mxu0
      %v3558 = vadd.f32 0.0, %v3557
      %v3559 = vpop.f32.mrb[0].mxu0
      %v3560 = vpop.f32.mrb[0].mxu0
      %v3561 = vadd.f32 0.0, %v3560
      %v3562 = vpop.f32.mrb[0].mxu0
      %3563 = vmatprep.mubr.bf16.mxu0 0
      %3564 = vmatmul.mubr.bf16.gmra.mrb[0].mxu0 %v3476
      %v3565 = vpop.f32.mrb[0].mxu0
      %v3566 = vadd.f32 0.0, %v3565
      %v3567 = vpop.f32.mrb[0].mxu0
      %v3568 = vpop.f32.mrb[0].mxu0
      %v3569 = vadd.f32 0.0, %v3568
      %v3570 = vpop.f32.mrb[0].mxu0
      %3571 = vmatprep.mubr.bf16.mxu0 0
      %3572 = vmatmul.mubr.bf16.gmra.mrb[0].mxu0 %v3479
      %v3573 = vpop.f32.mrb[0].mxu0
      %v3574 = vadd.f32 0.0, %v3573
      %v3575 = vpop.f32.mrb[0].mxu0
      %v3576 = vpop.f32.mrb[0].mxu0
      %v3577 = vadd.f32 0.0, %v3576
      %v3578 = vpop.f32.mrb[0].mxu0
      %3579 = vmatprep.mubr.bf16.mxu0 0
      %3580 = vmatmul.mubr.bf16.gmra.mrb[0].mxu0 %v3482
      %v3581 = vpop.f32.mrb[0].mxu0
      %v3582 = vadd.f32 0.0, %v3581
      %v3583 = vpop.f32.mrb[0].mxu0
      %v3584 = vpop.f32.mrb[0].mxu0
      %v3585 = vadd.f32 0.0, %v3584
      %v3586 = vpop.f32.mrb[0].mxu0
      %3587 = vmatprep.mubr.bf16.mxu0 0
      %3588 = vmatmul.mubr.bf16.gmra.mrb[0].mxu0 %v3485
      %v3589 = vpop.f32.mrb[0].mxu0
      %v3590 = vadd.f32 0.0, %v3589
      %v3591 = vpop.f32.mrb[0].mxu0
      %v3592 = vpop.f32.mrb[0].mxu0
      %v3593 = vadd.f32 0.0, %v3592
      %v3594 = vpop.f32.mrb[0].mxu0
      %3595 = vmatprep.mubr.bf16.mxu0 0
      %3596 = vmatmul.mubr.bf16.gmra.mrb[0].mxu0 %v3488
      %v3597 = vpop.f32.mrb[0].mxu0
      %v3598 = vadd.f32 0.0, %v3597
      %v3599 = vpop.f32.mrb[0].mxu0
      %v3600 = vpop.f32.mrb[0].mxu0
      %v3601 = vadd.f32 0.0, %v3600
      %v3602 = vpop.f32.mrb[0].mxu0
      %3603 = vmatprep.mubr.bf16.mxu0 0
      %3604 = vmatmul.mubr.bf16.gmra.mrb[0].mxu0 %v3491
      %v3605 = vpop.f32.mrb[0].mxu0
      %v3606 = vadd.f32 0.0, %v3605
      %v3607 = vpop.f32.mrb[0].mxu0
      %v3608 = vpop.f32.mrb[0].mxu0
      %v3609 = vadd.f32 0.0, %v3608
      %v3610 = vpop.f32.mrb[0].mxu0
      %3611 = vmatprep.mubr.bf16.mxu0 0
      %3612 = vmatmul.mubr.bf16.gmra.mrb[0].mxu0 %v3494
      %v3613 = vpop.f32.mrb[0].mxu0
      %v3614 = vadd.f32 0.0, %v3613
      %v3615 = vpop.f32.mrb[0].mxu0
      %v3616 = vpop.f32.mrb[0].mxu0
      %v3617 = vadd.f32 0.0, %v3616
      %v3618 = vpop.f32.mrb[0].mxu0
      %3619 = vmatprep.mubr.bf16.mxu0 0
      %3620 = vmatmul.mubr.bf16.gmra.mrb[0].mxu0 %v3497
      %v3621 = vpop.f32.mrb[0].mxu0
      %v3622 = vadd.f32 0.0, %v3621
      %v3623 = vpop.f32.mrb[0].mxu0
      %v3624 = vpop.f32.mrb[0].mxu0
      %v3625 = vadd.f32 0.0, %v3624
      %v3626 = vpop.f32.mrb[0].mxu0
      %3627 = vmatprep.mubr.bf16.mxu0 0
      %3628 = vmatmul.mubr.bf16.gmra.mrb[0].mxu0 %v3500
      %v3629 = vpop.f32.mrb[0].mxu0
      %v3630 = vadd.f32 0.0, %v3629
      %v3631 = vpop.f32.mrb[0].mxu0
      %v3632 = vpop.f32.mrb[0].mxu0
      %v3633 = vadd.f32 0.0, %v3632
      %v3634 = vpop.f32.mrb[0].mxu0
      %3635 = vmatprep.mubr.bf16.mxu0 0
      %3636 = vmatmul.mubr.bf16.gmra.mrb[0].mxu0 %v3503
      %v3637 = vpop.f32.mrb[0].mxu0
      %v3638 = vadd.f32 0.0, %v3637
      %v3639 = vpop.f32.mrb[0].mxu0
      %v3640 = vpop.f32.mrb[0].mxu0
      %v3641 = vadd.f32 0.0, %v3640
      %v3642 = vpop.f32.mrb[0].mxu0
      %3643 = vmatprep.mubr.bf16.mxu0 0
      %3644 = vmatmul.mubr.bf16.gmra.mrb[0].mxu0 %v3506
      %v3645 = vpop.f32.mrb[0].mxu0
      %v3646 = vadd.f32 0.0, %v3645
      %v3647 = vpop.f32.mrb[0].mxu0
      %v3648 = vpop.f32.mrb[0].mxu0
      %v3649 = vadd.f32 0.0, %v3648
      %v3650 = vpop.f32.mrb[0].mxu0
      %3651 = vmatprep.mubr.bf16.mxu0 0
      %3652 = vmatmul.mubr.bf16.gmra.mrb[0].mxu0 %v3509
      %v3653 = vpop.f32.mrb[0].mxu0
      %v3654 = vadd.f32 0.0, %v3653
      %v3655 = vpop.f32.mrb[0].mxu0
      %v3656 = vpop.f32.mrb[0].mxu0
      %v3657 = vadd.f32 0.0, %v3656
      %v3658 = vpop.f32.mrb[0].mxu0
      %3659 = vmatprep.mubr.bf16.mxu0 0
      %3660 = vmatmul.mubr.bf16.gmra.mrb[0].mxu0 %v3512
      %v3661 = vpop.f32.mrb[0].mxu0
      %v3662 = vadd.f32 0.0, %v3661
      %v3663 = vpop.f32.mrb[0].mxu0
      %v3664 = vpop.f32.mrb[0].mxu0
      %v3665 = vadd.f32 0.0, %v3664
      %v3666 = vpop.f32.mrb[0].mxu0
      %3667 = vmatprep.mubr.bf16.mxu0 0
      %3668 = vmatmul.mubr.bf16.gmra.mrb[0].mxu0 %v3515
      %v3669 = vpop.f32.mrb[0].mxu0
      %v3670 = vadd.f32 0.0, %v3669
      %v3671 = vpop.f32.mrb[0].mxu0
      %v3672 = vpop.f32.mrb[0].mxu0
      %v3673 = vadd.f32 0.0, %v3672
      %v3674 = vpop.f32.mrb[0].mxu0
      %3675 = vmatprep.mubr.bf16.mxu0 0
      %3676 = vmatmul.mubr.bf16.gmra.mrb[0].mxu0 %v3518
      %v3677 = vpop.f32.mrb[0].mxu0
      %v3678 = vadd.f32 0.0, %v3677
      %v3679 = vpop.f32.mrb[0].mxu0
      %v3680 = vpop.f32.mrb[0].mxu0
      %v3681 = vadd.f32 0.0, %v3680
      %v3682 = vpop.f32.mrb[0].mxu0
      %3683 = vdwg.mxu0
      %v3684 = vadd.f32 %v3179, %v3558
      %v3685 = vadd.f32 %v3180, %v3561
      %v3686 = vadd.f32 %v3181, %v3566
      %v3687 = vadd.f32 %v3182, %v3569
      %v3688 = vadd.f32 %v3183, %v3574
      %v3689 = vadd.f32 %v3184, %v3577
      %v3690 = vadd.f32 %v3185, %v3582
      %v3691 = vadd.f32 %v3186, %v3585
      %v3692 = vadd.f32 %v3187, %v3590
      %v3693 = vadd.f32 %v3188, %v3593
      %v3694 = vadd.f32 %v3189, %v3598
      %v3695 = vadd.f32 %v3190, %v3601
      %v3696 = vadd.f32 %v3191, %v3606
      %v3697 = vadd.f32 %v3192, %v3609
      %v3698 = vadd.f32 %v3193, %v3614
      %v3699 = vadd.f32 %v3194, %v3617
      %v3700 = vadd.f32 %v3195, %v3622
      %v3701 = vadd.f32 %v3196, %v3625
      %v3702 = vadd.f32 %v3197, %v3630
      %v3703 = vadd.f32 %v3198, %v3633
      %v3704 = vadd.f32 %v3199, %v3638
      %v3705 = vadd.f32 %v3200, %v3641
      %v3706 = vadd.f32 %v3201, %v3646
      %v3707 = vadd.f32 %v3202, %v3649
      %v3708 = vadd.f32 %v3203, %v3654
      %v3709 = vadd.f32 %v3204, %v3657
      %v3710 = vadd.f32 %v3205, %v3662
      %v3711 = vadd.f32 %v3206, %v3665
      %v3712 = vadd.f32 %v3207, %v3670
      %v3713 = vadd.f32 %v3208, %v3673
      %v3714 = vadd.f32 %v3209, %v3678
      %v3715 = vadd.f32 %v3210, %v3681
      %v3716 = vld [vmem:[%s2853] sm:$0xc]
      %v3717 = vld [vmem:[%s2853 + $0x8] sm:$0x3]
      %v3718 = vld [vmem:[%s2853 + $0xc] sm:$0xc]
      %v3719 = vld [vmem:[%s2853 + $0x14] sm:$0x3]
      %v3720 = vld [vmem:[%s2853 + $0x18] sm:$0xc]
      %v3721 = vld [vmem:[%s2853 + $0x20] sm:$0x3]
      %v3722 = vld [vmem:[%s2853 + $0x24] sm:$0xc]
      %v3723 = vld [vmem:[%s2853 + $0x2c] sm:$0x3]
      %v3724 = vld [vmem:[%s2853 + $0x30] sm:$0xc]
      %v3725 = vld [vmem:[%s2853 + $0x38] sm:$0x3]
      %v3726 = vld [vmem:[%s2853 + $0x3c] sm:$0xc]
      %v3727 = vld [vmem:[%s2853 + $0x44] sm:$0x3]
      %v3728 = vld [vmem:[%s2853 + $0x48] sm:$0xc]
      %v3729 = vld [vmem:[%s2853 + $0x50] sm:$0x3]
      %v3730 = vld [vmem:[%s2853 + $0x54] sm:$0xc]
      %v3731 = vld [vmem:[%s2853 + $0x5c] sm:$0x3]
      %v3732 = vld [vmem:[%s2853 + $0x60] sm:$0xc]
      %v3733 = vld [vmem:[%s2853 + $0x68] sm:$0x3]
      %v3734 = vld [vmem:[%s2853 + $0x6c] sm:$0xc]
      %v3735 = vld [vmem:[%s2853 + $0x74] sm:$0x3]
      %v3736 = vld [vmem:[%s2853 + $0x78] sm:$0xc]
      %v3737 = vld [vmem:[%s2853 + $0x80] sm:$0x3]
      %v3738 = vld [vmem:[%s2853 + $0x84] sm:$0xc]
      %v3739 = vld [vmem:[%s2853 + $0x8c] sm:$0x3]
      %v3740 = vld [vmem:[%s2853 + $0x90] sm:$0xc]
      %v3741 = vld [vmem:[%s2853 + $0x98] sm:$0x3]
      %v3742 = vld [vmem:[%s2853 + $0x9c] sm:$0xc]
      %v3743 = vld [vmem:[%s2853 + $0xa4] sm:$0x3]
      %v3744 = vld [vmem:[%s2853 + $0xa8] sm:$0xc]
      %v3745 = vld [vmem:[%s2853 + $0xb0] sm:$0x3]
      %v3746 = vld [vmem:[%s2853 + $0xb4] sm:$0xc]
      %v3747 = vld [vmem:[%s2853 + $0xbc] sm:$0x3]
      %v3780 = vrot.slane %v3716, 6
      %v3781 = vrot.slane %v3780, 4
      %v3782 = vrot.slane %v3212, 6
      %v3783 = vsel %vm1105, %v3781, %v3782
      %v3784 = vrot.slane %v3782, 4
      %v3785 = vrot.slane %v3717, 6
      %v3786 = vsel %vm1105, %v3784, %v3785
      %v3787 = vrot.slane %v3718, 6
      %v3788 = vrot.slane %v3787, 4
      %v3789 = vrot.slane %v3215, 6
      %v3790 = vsel %vm1105, %v3788, %v3789
      %v3791 = vrot.slane %v3789, 4
      %v3792 = vrot.slane %v3719, 6
      %v3793 = vsel %vm1105, %v3791, %v3792
      %v3794 = vrot.slane %v3720, 6
      %v3795 = vrot.slane %v3794, 4
      %v3796 = vrot.slane %v3218, 6
      %v3797 = vsel %vm1105, %v3795, %v3796
      %v3798 = vrot.slane %v3796, 4
      %v3799 = vrot.slane %v3721, 6
      %v3800 = vsel %vm1105, %v3798, %v3799
      %v3801 = vrot.slane %v3722, 6
      %v3802 = vrot.slane %v3801, 4
      %v3803 = vrot.slane %v3221, 6
      %v3804 = vsel %vm1105, %v3802, %v3803
      %v3805 = vrot.slane %v3803, 4
      %v3806 = vrot.slane %v3723, 6
      %v3807 = vsel %vm1105, %v3805, %v3806
      %v3808 = vrot.slane %v3724, 6
      %v3809 = vrot.slane %v3808, 4
      %v3810 = vrot.slane %v3224, 6
      %v3811 = vsel %vm1105, %v3809, %v3810
      %v3812 = vrot.slane %v3810, 4
      %v3813 = vrot.slane %v3725, 6
      %v3814 = vsel %vm1105, %v3812, %v3813
      %v3815 = vrot.slane %v3726, 6
      %v3816 = vrot.slane %v3815, 4
      %v3817 = vrot.slane %v3227, 6
      %v3818 = vsel %vm1105, %v3816, %v3817
      %v3819 = vrot.slane %v3817, 4
      %v3820 = vrot.slane %v3727, 6
      %v3821 = vsel %vm1105, %v3819, %v3820
      %v3822 = vrot.slane %v3728, 6
      %v3823 = vrot.slane %v3822, 4
      %v3824 = vrot.slane %v3230, 6
      %v3825 = vsel %vm1105, %v3823, %v3824
      %v3826 = vrot.slane %v3824, 4
      %v3827 = vrot.slane %v3729, 6
      %v3828 = vsel %vm1105, %v3826, %v3827
      %v3829 = vrot.slane %v3730, 6
      %v3830 = vrot.slane %v3829, 4
      %v3831 = vrot.slane %v3233, 6
      %v3832 = vsel %vm1105, %v3830, %v3831
      %v3833 = vrot.slane %v3831, 4
      %v3834 = vrot.slane %v3731, 6
      %v3835 = vsel %vm1105, %v3833, %v3834
      %v3836 = vrot.slane %v3732, 6
      %v3837 = vrot.slane %v3836, 4
      %v3838 = vrot.slane %v3236, 6
      %v3839 = vsel %vm1105, %v3837, %v3838
      %v3840 = vrot.slane %v3838, 4
      %v3841 = vrot.slane %v3733, 6
      %v3842 = vsel %vm1105, %v3840, %v3841
      %v3843 = vrot.slane %v3734, 6
      %v3844 = vrot.slane %v3843, 4
      %v3845 = vrot.slane %v3239, 6
      %v3846 = vsel %vm1105, %v3844, %v3845
      %v3847 = vrot.slane %v3845, 4
      %v3848 = vrot.slane %v3735, 6
      %v3849 = vsel %vm1105, %v3847, %v3848
      %v3850 = vrot.slane %v3736, 6
      %v3851 = vrot.slane %v3850, 4
      %v3852 = vrot.slane %v3242, 6
      %v3853 = vsel %vm1105, %v3851, %v3852
      %v3854 = vrot.slane %v3852, 4
      %v3855 = vrot.slane %v3737, 6
      %v3856 = vsel %vm1105, %v3854, %v3855
      %v3857 = vrot.slane %v3738, 6
      %v3858 = vrot.slane %v3857, 4
      %v3859 = vrot.slane %v3245, 6
      %v3860 = vsel %vm1105, %v3858, %v3859
      %v3861 = vrot.slane %v3859, 4
      %v3862 = vrot.slane %v3739, 6
      %v3863 = vsel %vm1105, %v3861, %v3862
      %v3864 = vrot.slane %v3740, 6
      %v3865 = vrot.slane %v3864, 4
      %v3866 = vrot.slane %v3248, 6
      %v3867 = vsel %vm1105, %v3865, %v3866
      %v3868 = vrot.slane %v3866, 4
      %v3869 = vrot.slane %v3741, 6
      %v3870 = vsel %vm1105, %v3868, %v3869
      %v3871 = vrot.slane %v3742, 6
      %v3872 = vrot.slane %v3871, 4
      %v3873 = vrot.slane %v3251, 6
      %v3874 = vsel %vm1105, %v3872, %v3873
      %v3875 = vrot.slane %v3873, 4
      %v3876 = vrot.slane %v3743, 6
      %v3877 = vsel %vm1105, %v3875, %v3876
      %v3878 = vrot.slane %v3744, 6
      %v3879 = vrot.slane %v3878, 4
      %v3880 = vrot.slane %v3254, 6
      %v3881 = vsel %vm1105, %v3879, %v3880
      %v3882 = vrot.slane %v3880, 4
      %v3883 = vrot.slane %v3745, 6
      %v3884 = vsel %vm1105, %v3882, %v3883
      %v3885 = vrot.slane %v3746, 6
      %v3886 = vrot.slane %v3885, 4
      %v3887 = vrot.slane %v3257, 6
      %v3888 = vsel %vm1105, %v3886, %v3887
      %v3889 = vrot.slane %v3887, 4
      %v3890 = vrot.slane %v3747, 6
      %v3891 = vsel %vm1105, %v3889, %v3890
      %v3892 = vld [vmem:[%s2 + $0x10] sm:$0x3]
      %v3893 = vunpack.c.l.b16 %v3783
      %v3894 = vunpack.c.l.b16 %v3786
      %v3895 = vunpack.c.l.b16 %v3790
      %v3896 = vunpack.c.l.b16 %v3793
      %v3897 = vunpack.c.l.b16 %v3797
      %v3898 = vunpack.c.l.b16 %v3800
      %v3899 = vunpack.c.l.b16 %v3804
      %v3900 = vunpack.c.l.b16 %v3807
      %v3901 = vunpack.c.l.b16 %v3811
      %v3902 = vunpack.c.l.b16 %v3814
      %v3903 = vunpack.c.l.b16 %v3818
      %v3904 = vunpack.c.l.b16 %v3821
      %v3905 = vunpack.c.l.b16 %v3825
      %v3906 = vunpack.c.l.b16 %v3828
      %v3907 = vunpack.c.l.b16 %v3832
      %v3908 = vunpack.c.l.b16 %v3835
      %v3909 = vunpack.c.l.b16 %v3839
      %v3910 = vunpack.c.l.b16 %v3842
      %v3911 = vunpack.c.l.b16 %v3846
      %v3912 = vunpack.c.l.b16 %v3849
      %v3913 = vunpack.c.l.b16 %v3853
      %v3914 = vunpack.c.l.b16 %v3856
      %v3915 = vunpack.c.l.b16 %v3860
      %v3916 = vunpack.c.l.b16 %v3863
      %v3917 = vunpack.c.l.b16 %v3867
      %v3918 = vunpack.c.l.b16 %v3870
      %v3919 = vunpack.c.l.b16 %v3874
      %v3920 = vunpack.c.l.b16 %v3877
      %v3921 = vunpack.c.l.b16 %v3881
      %v3922 = vunpack.c.l.b16 %v3884
      %v3923 = vunpack.c.l.b16 %v3888
      %v3924 = vunpack.c.l.b16 %v3891
      %v3925 = vpack.c.b16 %v3894, %v3893
      %v3926 = vpack.c.b16 %v3896, %v3895
      %v3927 = vpack.c.b16 %v3898, %v3897
      %v3928 = vpack.c.b16 %v3900, %v3899
      %v3929 = vpack.c.b16 %v3902, %v3901
      %v3930 = vpack.c.b16 %v3904, %v3903
      %v3931 = vpack.c.b16 %v3906, %v3905
      %v3932 = vpack.c.b16 %v3908, %v3907
      %v3933 = vpack.c.b16 %v3910, %v3909
      %v3934 = vpack.c.b16 %v3912, %v3911
      %v3935 = vpack.c.b16 %v3914, %v3913
      %v3936 = vpack.c.b16 %v3916, %v3915
      %v3937 = vpack.c.b16 %v3918, %v3917
      %v3938 = vpack.c.b16 %v3920, %v3919
      %v3939 = vpack.c.b16 %v3922, %v3921
      %v3940 = vpack.c.b16 %v3924, %v3923
      %v3942 = vsel %vm549, %v3925, 0
      %v3945 = vsel %vm549, %v3926, 0
      %v3948 = vsel %vm549, %v3927, 0
      %v3951 = vsel %vm549, %v3928, 0
      %v3954 = vsel %vm549, %v3929, 0
      %v3957 = vsel %vm549, %v3930, 0
      %v3960 = vsel %vm549, %v3931, 0
      %v3963 = vsel %vm549, %v3932, 0
      %v3966 = vsel %vm549, %v3933, 0
      %v3969 = vsel %vm549, %v3934, 0
      %v3972 = vsel %vm549, %v3935, 0
      %v3975 = vsel %vm549, %v3936, 0
      %v3978 = vsel %vm549, %v3937, 0
      %v3981 = vsel %vm549, %v3938, 0
      %v3984 = vsel %vm549, %v3939, 0
      %v3987 = vsel %vm549, %v3940, 0
      %v3990 = vsel %vm598, %v3892, 0
      %3992 = vmatprep.subr.bf16.mxu0 0
      %3993 = vmatpush1.bf16.msra.mxu0 %v3990
      %3994 = vmatprep.subr.bf16.mxu0 0
      %3995 = vmatpush1.bf16.msra.mxu0 0
      %3996 = vmatprep.subr.bf16.mxu0 0
      %3997 = vmatpush1.bf16.msra.mxu0 0
      %3998 = vmatprep.subr.bf16.mxu0 0
      %3999 = vmatpush1.bf16.msra.mxu0 0
      %4000 = vmatprep.subr.bf16.mxu0 0
      %4001 = vmatpush1.bf16.msra.mxu0 0
      %4002 = vmatprep.subr.bf16.mxu0 0
      %4003 = vmatpush1.bf16.msra.mxu0 0
      %4004 = vmatprep.subr.bf16.mxu0 0
      %4005 = vmatpush1.bf16.msra.mxu0 0
      %4006 = vmatprep.subr.bf16.mxu0 0
      %4007 = vmatpush1.bf16.msra.mxu0 0
      %4008 = vmatprep.subr.bf16.mxu0 0
      %4009 = vmatpush1.bf16.msra.mxu0 0
      %4010 = vmatprep.subr.bf16.mxu0 0
      %4011 = vmatpush1.bf16.msra.mxu0 0
      %4012 = vmatprep.subr.bf16.mxu0 0
      %4013 = vmatpush1.bf16.msra.mxu0 0
      %4014 = vmatprep.subr.bf16.mxu0 0
      %4015 = vmatpush1.bf16.msra.mxu0 0
      %4016 = vmatprep.subr.bf16.mxu0 0
      %4017 = vmatpush1.bf16.msra.mxu0 0
      %4018 = vmatprep.subr.bf16.mxu0 0
      %4019 = vmatpush1.bf16.msra.mxu0 0
      %4020 = vmatprep.subr.bf16.mxu0 0
      %4021 = vmatpush1.bf16.msra.mxu0 0
      %4022 = vmatprep.subr.bf16.mxu0 0
      %4023 = vmatpush1.bf16.msra.mxu0 0
      %4024 = vmatprep.mubr.bf16.mxu0 0
      %4025 = vmatmul.mubr.bf16.gmra.mrb[0].mxu0 %v3942
      %v4026 = vpop.f32.mrb[0].mxu0
      %v4027 = vadd.f32 0.0, %v4026
      %v4028 = vpop.f32.mrb[0].mxu0
      %v4029 = vpop.f32.mrb[0].mxu0
      %v4030 = vadd.f32 0.0, %v4029
      %v4031 = vpop.f32.mrb[0].mxu0
      %4032 = vmatprep.mubr.bf16.mxu0 0
      %4033 = vmatmul.mubr.bf16.gmra.mrb[0].mxu0 %v3945
      %v4034 = vpop.f32.mrb[0].mxu0
      %v4035 = vadd.f32 0.0, %v4034
      %v4036 = vpop.f32.mrb[0].mxu0
      %v4037 = vpop.f32.mrb[0].mxu0
      %v4038 = vadd.f32 0.0, %v4037
      %v4039 = vpop.f32.mrb[0].mxu0
      %4040 = vmatprep.mubr.bf16.mxu0 0
      %4041 = vmatmul.mubr.bf16.gmra.mrb[0].mxu0 %v3948
      %v4042 = vpop.f32.mrb[0].mxu0
      %v4043 = vadd.f32 0.0, %v4042
      %v4044 = vpop.f32.mrb[0].mxu0
      %v4045 = vpop.f32.mrb[0].mxu0
      %v4046 = vadd.f32 0.0, %v4045
      %v4047 = vpop.f32.mrb[0].mxu0
      %4048 = vmatprep.mubr.bf16.mxu0 0
      %4049 = vmatmul.mubr.bf16.gmra.mrb[0].mxu0 %v3951
      %v4050 = vpop.f32.mrb[0].mxu0
      %v4051 = vadd.f32 0.0, %v4050
      %v4052 = vpop.f32.mrb[0].mxu0
      %v4053 = vpop.f32.mrb[0].mxu0
      %v4054 = vadd.f32 0.0, %v4053
      %v4055 = vpop.f32.mrb[0].mxu0
      %4056 = vmatprep.mubr.bf16.mxu0 0
      %4057 = vmatmul.mubr.bf16.gmra.mrb[0].mxu0 %v3954
      %v4058 = vpop.f32.mrb[0].mxu0
      %v4059 = vadd.f32 0.0, %v4058
      %v4060 = vpop.f32.mrb[0].mxu0
      %v4061 = vpop.f32.mrb[0].mxu0
      %v4062 = vadd.f32 0.0, %v4061
      %v4063 = vpop.f32.mrb[0].mxu0
      %4064 = vmatprep.mubr.bf16.mxu0 0
      %4065 = vmatmul.mubr.bf16.gmra.mrb[0].mxu0 %v3957
      %v4066 = vpop.f32.mrb[0].mxu0
      %v4067 = vadd.f32 0.0, %v4066
      %v4068 = vpop.f32.mrb[0].mxu0
      %v4069 = vpop.f32.mrb[0].mxu0
      %v4070 = vadd.f32 0.0, %v4069
      %v4071 = vpop.f32.mrb[0].mxu0
      %4072 = vmatprep.mubr.bf16.mxu0 0
      %4073 = vmatmul.mubr.bf16.gmra.mrb[0].mxu0 %v3960
      %v4074 = vpop.f32.mrb[0].mxu0
      %v4075 = vadd.f32 0.0, %v4074
      %v4076 = vpop.f32.mrb[0].mxu0
      %v4077 = vpop.f32.mrb[0].mxu0
      %v4078 = vadd.f32 0.0, %v4077
      %v4079 = vpop.f32.mrb[0].mxu0
      %4080 = vmatprep.mubr.bf16.mxu0 0
      %4081 = vmatmul.mubr.bf16.gmra.mrb[0].mxu0 %v3963
      %v4082 = vpop.f32.mrb[0].mxu0
      %v4083 = vadd.f32 0.0, %v4082
      %v4084 = vpop.f32.mrb[0].mxu0
      %v4085 = vpop.f32.mrb[0].mxu0
      %v4086 = vadd.f32 0.0, %v4085
      %v4087 = vpop.f32.mrb[0].mxu0
      %4088 = vmatprep.mubr.bf16.mxu0 0
      %4089 = vmatmul.mubr.bf16.gmra.mrb[0].mxu0 %v3966
      %v4090 = vpop.f32.mrb[0].mxu0
      %v4091 = vadd.f32 0.0, %v4090
      %v4092 = vpop.f32.mrb[0].mxu0
      %v4093 = vpop.f32.mrb[0].mxu0
      %v4094 = vadd.f32 0.0, %v4093
      %v4095 = vpop.f32.mrb[0].mxu0
      %4096 = vmatprep.mubr.bf16.mxu0 0
      %4097 = vmatmul.mubr.bf16.gmra.mrb[0].mxu0 %v3969
      %v4098 = vpop.f32.mrb[0].mxu0
      %v4099 = vadd.f32 0.0, %v4098
      %v4100 = vpop.f32.mrb[0].mxu0
      %v4101 = vpop.f32.mrb[0].mxu0
      %v4102 = vadd.f32 0.0, %v4101
      %v4103 = vpop.f32.mrb[0].mxu0
      %4104 = vmatprep.mubr.bf16.mxu0 0
      %4105 = vmatmul.mubr.bf16.gmra.mrb[0].mxu0 %v3972
      %v4106 = vpop.f32.mrb[0].mxu0
      %v4107 = vadd.f32 0.0, %v4106
      %v4108 = vpop.f32.mrb[0].mxu0
      %v4109 = vpop.f32.mrb[0].mxu0
      %v4110 = vadd.f32 0.0, %v4109
      %v4111 = vpop.f32.mrb[0].mxu0
      %4112 = vmatprep.mubr.bf16.mxu0 0
      %4113 = vmatmul.mubr.bf16.gmra.mrb[0].mxu0 %v3975
      %v4114 = vpop.f32.mrb[0].mxu0
      %v4115 = vadd.f32 0.0, %v4114
      %v4116 = vpop.f32.mrb[0].mxu0
      %v4117 = vpop.f32.mrb[0].mxu0
      %v4118 = vadd.f32 0.0, %v4117
      %v4119 = vpop.f32.mrb[0].mxu0
      %4120 = vmatprep.mubr.bf16.mxu0 0
      %4121 = vmatmul.mubr.bf16.gmra.mrb[0].mxu0 %v3978
      %v4122 = vpop.f32.mrb[0].mxu0
      %v4123 = vadd.f32 0.0, %v4122
      %v4124 = vpop.f32.mrb[0].mxu0
      %v4125 = vpop.f32.mrb[0].mxu0
      %v4126 = vadd.f32 0.0, %v4125
      %v4127 = vpop.f32.mrb[0].mxu0
      %4128 = vmatprep.mubr.bf16.mxu0 0
      %4129 = vmatmul.mubr.bf16.gmra.mrb[0].mxu0 %v3981
      %v4130 = vpop.f32.mrb[0].mxu0
      %v4131 = vadd.f32 0.0, %v4130
      %v4132 = vpop.f32.mrb[0].mxu0
      %v4133 = vpop.f32.mrb[0].mxu0
      %v4134 = vadd.f32 0.0, %v4133
      %v4135 = vpop.f32.mrb[0].mxu0
      %4136 = vmatprep.mubr.bf16.mxu0 0
      %4137 = vmatmul.mubr.bf16.gmra.mrb[0].mxu0 %v3984
      %v4138 = vpop.f32.mrb[0].mxu0
      %v4139 = vadd.f32 0.0, %v4138
      %v4140 = vpop.f32.mrb[0].mxu0
      %v4141 = vpop.f32.mrb[0].mxu0
      %v4142 = vadd.f32 0.0, %v4141
      %v4143 = vpop.f32.mrb[0].mxu0
      %4144 = vmatprep.mubr.bf16.mxu0 0
      %4145 = vmatmul.mubr.bf16.gmra.mrb[0].mxu0 %v3987
      %v4146 = vpop.f32.mrb[0].mxu0
      %v4147 = vadd.f32 0.0, %v4146
      %v4148 = vpop.f32.mrb[0].mxu0
      %v4149 = vpop.f32.mrb[0].mxu0
      %v4150 = vadd.f32 0.0, %v4149
      %v4151 = vpop.f32.mrb[0].mxu0
      %4152 = vdwg.mxu0
      %v4153 = vadd.f32 %v3684, %v4027
      %v4154 = vadd.f32 %v3685, %v4030
      %v4155 = vadd.f32 %v3686, %v4035
      %v4156 = vadd.f32 %v3687, %v4038
      %v4157 = vadd.f32 %v3688, %v4043
      %v4158 = vadd.f32 %v3689, %v4046
      %v4159 = vadd.f32 %v3690, %v4051
      %v4160 = vadd.f32 %v3691, %v4054
      %v4161 = vadd.f32 %v3692, %v4059
      %v4162 = vadd.f32 %v3693, %v4062
      %v4163 = vadd.f32 %v3694, %v4067
      %v4164 = vadd.f32 %v3695, %v4070
      %v4165 = vadd.f32 %v3696, %v4075
      %v4166 = vadd.f32 %v3697, %v4078
      %v4167 = vadd.f32 %v3698, %v4083
      %v4168 = vadd.f32 %v3699, %v4086
      %v4169 = vadd.f32 %v3700, %v4091
      %v4170 = vadd.f32 %v3701, %v4094
      %v4171 = vadd.f32 %v3702, %v4099
      %v4172 = vadd.f32 %v3703, %v4102
      %v4173 = vadd.f32 %v3704, %v4107
      %v4174 = vadd.f32 %v3705, %v4110
      %v4175 = vadd.f32 %v3706, %v4115
      %v4176 = vadd.f32 %v3707, %v4118
      %v4177 = vadd.f32 %v3708, %v4123
      %v4178 = vadd.f32 %v3709, %v4126
      %v4179 = vadd.f32 %v3710, %v4131
      %v4180 = vadd.f32 %v3711, %v4134
      %v4181 = vadd.f32 %v3712, %v4139
      %v4182 = vadd.f32 %v3713, %v4142
      %v4183 = vadd.f32 %v3714, %v4147
      %v4184 = vadd.f32 %v3715, %v4150
      %s4185 = smul.addr %s265, 4
      %s4186 = scalar_lea.vmem %s254, %s4185
      %v4187 = vld [vmem:[%s4186] sm:$0xf]
      %v4188 = vld [vmem:[%s4186 + $0x4] sm:$0xf]
      %v4189 = vld [vmem:[%s4186 + $0xc] sm:$0xf]
      %v4190 = vld [vmem:[%s4186 + $0x10] sm:$0xf]
      %v4191 = vld [vmem:[%s4186 + $0x18] sm:$0xf]
      %v4192 = vld [vmem:[%s4186 + $0x1c] sm:$0xf]
      %v4193 = vld [vmem:[%s4186 + $0x24] sm:$0xf]
      %v4194 = vld [vmem:[%s4186 + $0x28] sm:$0xf]
      %v4195 = vld [vmem:[%s4186 + $0x30] sm:$0xf]
      %v4196 = vld [vmem:[%s4186 + $0x34] sm:$0xf]
      %v4197 = vld [vmem:[%s4186 + $0x3c] sm:$0xf]
      %v4198 = vld [vmem:[%s4186 + $0x40] sm:$0xf]
      %v4199 = vld [vmem:[%s4186 + $0x48] sm:$0xf]
      %v4200 = vld [vmem:[%s4186 + $0x4c] sm:$0xf]
      %v4201 = vld [vmem:[%s4186 + $0x54] sm:$0xf]
      %v4202 = vld [vmem:[%s4186 + $0x58] sm:$0xf]
      %v4203 = vld [vmem:[%s4186 + $0x60] sm:$0xf]
      %v4204 = vld [vmem:[%s4186 + $0x64] sm:$0xf]
      %v4205 = vld [vmem:[%s4186 + $0x6c] sm:$0xf]
      %v4206 = vld [vmem:[%s4186 + $0x70] sm:$0xf]
      %v4207 = vld [vmem:[%s4186 + $0x78] sm:$0xf]
      %v4208 = vld [vmem:[%s4186 + $0x7c] sm:$0xf]
      %v4209 = vld [vmem:[%s4186 + $0x84] sm:$0xf]
      %v4210 = vld [vmem:[%s4186 + $0x88] sm:$0xf]
      %v4211 = vld [vmem:[%s4186 + $0x90] sm:$0xf]
      %v4212 = vld [vmem:[%s4186 + $0x94] sm:$0xf]
      %v4213 = vld [vmem:[%s4186 + $0x9c] sm:$0xf]
      %v4214 = vld [vmem:[%s4186 + $0xa0] sm:$0xf]
      %v4215 = vld [vmem:[%s4186 + $0xa8] sm:$0xf]
      %v4216 = vld [vmem:[%s4186 + $0xac] sm:$0xf]
      %v4217 = vld [vmem:[%s4186 + $0xb4] sm:$0xf]
      %v4218 = vld [vmem:[%s4186 + $0xb8] sm:$0xf]
      %v4219 = vld [vmem:[%s3] sm:$0xf]
      %v4220 = vld [vmem:[%s3 + $0x4] sm:$0xf]
      %v4221 = vld [vmem:[%s3 + $0x8] sm:$0xf]
      %v4222 = vld [vmem:[%s3 + $0xc] sm:$0xf]
      %v4255 = vunpack.c.l.b16 %v4187
      %v4256 = vunpack.c.l.b16 %v4188
      %v4257 = vunpack.c.l.b16 %v4189
      %v4258 = vunpack.c.l.b16 %v4190
      %v4259 = vunpack.c.l.b16 %v4191
      %v4260 = vunpack.c.l.b16 %v4192
      %v4261 = vunpack.c.l.b16 %v4193
      %v4262 = vunpack.c.l.b16 %v4194
      %v4263 = vunpack.c.l.b16 %v4195
      %v4264 = vunpack.c.l.b16 %v4196
      %v4265 = vunpack.c.l.b16 %v4197
      %v4266 = vunpack.c.l.b16 %v4198
      %v4267 = vunpack.c.l.b16 %v4199
      %v4268 = vunpack.c.l.b16 %v4200
      %v4269 = vunpack.c.l.b16 %v4201
      %v4270 = vunpack.c.l.b16 %v4202
      %v4271 = vunpack.c.l.b16 %v4203
      %v4272 = vunpack.c.l.b16 %v4204
      %v4273 = vunpack.c.l.b16 %v4205
      %v4274 = vunpack.c.l.b16 %v4206
      %v4275 = vunpack.c.l.b16 %v4207
      %v4276 = vunpack.c.l.b16 %v4208
      %v4277 = vunpack.c.l.b16 %v4209
      %v4278 = vunpack.c.l.b16 %v4210
      %v4279 = vunpack.c.l.b16 %v4211
      %v4280 = vunpack.c.l.b16 %v4212
      %v4281 = vunpack.c.l.b16 %v4213
      %v4282 = vunpack.c.l.b16 %v4214
      %v4283 = vunpack.c.l.b16 %v4215
      %v4284 = vunpack.c.l.b16 %v4216
      %v4285 = vunpack.c.l.b16 %v4217
      %v4286 = vunpack.c.l.b16 %v4218
      %v4287 = vpack.c.b16 %v4256, %v4255
      %v4288 = vpack.c.b16 %v4258, %v4257
      %v4289 = vpack.c.b16 %v4260, %v4259
      %v4290 = vpack.c.b16 %v4262, %v4261
      %v4291 = vpack.c.b16 %v4264, %v4263
      %v4292 = vpack.c.b16 %v4266, %v4265
      %v4293 = vpack.c.b16 %v4268, %v4267
      %v4294 = vpack.c.b16 %v4270, %v4269
      %v4295 = vpack.c.b16 %v4272, %v4271
      %v4296 = vpack.c.b16 %v4274, %v4273
      %v4297 = vpack.c.b16 %v4276, %v4275
      %v4298 = vpack.c.b16 %v4278, %v4277
      %v4299 = vpack.c.b16 %v4280, %v4279
      %v4300 = vpack.c.b16 %v4282, %v4281
      %v4301 = vpack.c.b16 %v4284, %v4283
      %v4302 = vpack.c.b16 %v4286, %v4285
      %v4307 = vunpack.c.l.b16 %v4219
      %v4308 = vunpack.c.l.b16 %v4220
      %v4309 = vunpack.c.l.b16 %v4221
      %v4310 = vunpack.c.l.b16 %v4222
      %v4311 = vpack.c.b16 %v4308, %v4307
      %v4312 = vpack.c.b16 %v4310, %v4309
      %vm4315 = vcmask 261120
      %v4317 = vsel %vm4315, %v4287, 0
      %v4320 = vsel %vm4315, %v4288, 0
      %v4323 = vsel %vm4315, %v4289, 0
      %v4326 = vsel %vm4315, %v4290, 0
      %v4329 = vsel %vm4315, %v4291, 0
      %v4332 = vsel %vm4315, %v4292, 0
      %v4335 = vsel %vm4315, %v4293, 0
      %v4338 = vsel %vm4315, %v4294, 0
      %v4341 = vsel %vm4315, %v4295, 0
      %v4344 = vsel %vm4315, %v4296, 0
      %v4347 = vsel %vm4315, %v4297, 0
      %v4350 = vsel %vm4315, %v4298, 0
      %v4353 = vsel %vm4315, %v4299, 0
      %v4356 = vsel %vm4315, %v4300, 0
      %v4359 = vsel %vm4315, %v4301, 0
      %v4362 = vsel %vm4315, %v4302, 0
      %4364 = vmatprep.subr.bf16.mxu0 0
      %4365 = vmatpush1.bf16.msra.mxu0 %v4311
      %4366 = vmatprep.subr.bf16.mxu0 0
      %4367 = vmatpush1.bf16.msra.mxu0 %v4312
      %4368 = vmatprep.subr.bf16.mxu0 0
      %4369 = vmatpush1.bf16.msra.mxu0 0
      %4370 = vmatprep.subr.bf16.mxu0 0
      %4371 = vmatpush1.bf16.msra.mxu0 0
      %4372 = vmatprep.subr.bf16.mxu0 0
      %4373 = vmatpush1.bf16.msra.mxu0 0
      %4374 = vmatprep.subr.bf16.mxu0 0
      %4375 = vmatpush1.bf16.msra.mxu0 0
      %4376 = vmatprep.subr.bf16.mxu0 0
      %4377 = vmatpush1.bf16.msra.mxu0 0
      %4378 = vmatprep.subr.bf16.mxu0 0
      %4379 = vmatpush1.bf16.msra.mxu0 0
      %4380 = vmatprep.subr.bf16.mxu0 0
      %4381 = vmatpush1.bf16.msra.mxu0 0
      %4382 = vmatprep.subr.bf16.mxu0 0
      %4383 = vmatpush1.bf16.msra.mxu0 0
      %4384 = vmatprep.subr.bf16.mxu0 0
      %4385 = vmatpush1.bf16.msra.mxu0 0
      %4386 = vmatprep.subr.bf16.mxu0 0
      %4387 = vmatpush1.bf16.msra.mxu0 0
      %4388 = vmatprep.subr.bf16.mxu0 0
      %4389 = vmatpush1.bf16.msra.mxu0 0
      %4390 = vmatprep.subr.bf16.mxu0 0
      %4391 = vmatpush1.bf16.msra.mxu0 0
      %4392 = vmatprep.subr.bf16.mxu0 0
      %4393 = vmatpush1.bf16.msra.mxu0 0
      %4394 = vmatprep.subr.bf16.mxu0 0
      %4395 = vmatpush1.bf16.msra.mxu0 0
      %4396 = vmatprep.mubr.bf16.mxu0 0
      %4397 = vmatmul.mubr.bf16.gmra.mrb[0].mxu0 %v4317
      %v4398 = vpop.f32.mrb[0].mxu0
      %v4399 = vadd.f32 0.0, %v4398
      %v4400 = vpop.f32.mrb[0].mxu0
      %v4401 = vpop.f32.mrb[0].mxu0
      %v4402 = vadd.f32 0.0, %v4401
      %v4403 = vpop.f32.mrb[0].mxu0
      %4404 = vmatprep.mubr.bf16.mxu0 0
      %4405 = vmatmul.mubr.bf16.gmra.mrb[0].mxu0 %v4320
      %v4406 = vpop.f32.mrb[0].mxu0
      %v4407 = vadd.f32 0.0, %v4406
      %v4408 = vpop.f32.mrb[0].mxu0
      %v4409 = vpop.f32.mrb[0].mxu0
      %v4410 = vadd.f32 0.0, %v4409
      %v4411 = vpop.f32.mrb[0].mxu0
      %4412 = vmatprep.mubr.bf16.mxu0 0
      %4413 = vmatmul.mubr.bf16.gmra.mrb[0].mxu0 %v4323
      %v4414 = vpop.f32.mrb[0].mxu0
      %v4415 = vadd.f32 0.0, %v4414
      %v4416 = vpop.f32.mrb[0].mxu0
      %v4417 = vpop.f32.mrb[0].mxu0
      %v4418 = vadd.f32 0.0, %v4417
      %v4419 = vpop.f32.mrb[0].mxu0
      %4420 = vmatprep.mubr.bf16.mxu0 0
      %4421 = vmatmul.mubr.bf16.gmra.mrb[0].mxu0 %v4326
      %v4422 = vpop.f32.mrb[0].mxu0
      %v4423 = vadd.f32 0.0, %v4422
      %v4424 = vpop.f32.mrb[0].mxu0
      %v4425 = vpop.f32.mrb[0].mxu0
      %v4426 = vadd.f32 0.0, %v4425
      %v4427 = vpop.f32.mrb[0].mxu0
      %4428 = vmatprep.mubr.bf16.mxu0 0
      %4429 = vmatmul.mubr.bf16.gmra.mrb[0].mxu0 %v4329
      %v4430 = vpop.f32.mrb[0].mxu0
      %v4431 = vadd.f32 0.0, %v4430
      %v4432 = vpop.f32.mrb[0].mxu0
      %v4433 = vpop.f32.mrb[0].mxu0
      %v4434 = vadd.f32 0.0, %v4433
      %v4435 = vpop.f32.mrb[0].mxu0
      %4436 = vmatprep.mubr.bf16.mxu0 0
      %4437 = vmatmul.mubr.bf16.gmra.mrb[0].mxu0 %v4332
      %v4438 = vpop.f32.mrb[0].mxu0
      %v4439 = vadd.f32 0.0, %v4438
      %v4440 = vpop.f32.mrb[0].mxu0
      %v4441 = vpop.f32.mrb[0].mxu0
      %v4442 = vadd.f32 0.0, %v4441
      %v4443 = vpop.f32.mrb[0].mxu0
      %4444 = vmatprep.mubr.bf16.mxu0 0
      %4445 = vmatmul.mubr.bf16.gmra.mrb[0].mxu0 %v4335
      %v4446 = vpop.f32.mrb[0].mxu0
      %v4447 = vadd.f32 0.0, %v4446
      %v4448 = vpop.f32.mrb[0].mxu0
      %v4449 = vpop.f32.mrb[0].mxu0
      %v4450 = vadd.f32 0.0, %v4449
      %v4451 = vpop.f32.mrb[0].mxu0
      %4452 = vmatprep.mubr.bf16.mxu0 0
      %4453 = vmatmul.mubr.bf16.gmra.mrb[0].mxu0 %v4338
      %v4454 = vpop.f32.mrb[0].mxu0
      %v4455 = vadd.f32 0.0, %v4454
      %v4456 = vpop.f32.mrb[0].mxu0
      %v4457 = vpop.f32.mrb[0].mxu0
      %v4458 = vadd.f32 0.0, %v4457
      %v4459 = vpop.f32.mrb[0].mxu0
      %4460 = vmatprep.mubr.bf16.mxu0 0
      %4461 = vmatmul.mubr.bf16.gmra.mrb[0].mxu0 %v4341
      %v4462 = vpop.f32.mrb[0].mxu0
      %v4463 = vadd.f32 0.0, %v4462
      %v4464 = vpop.f32.mrb[0].mxu0
      %v4465 = vpop.f32.mrb[0].mxu0
      %v4466 = vadd.f32 0.0, %v4465
      %v4467 = vpop.f32.mrb[0].mxu0
      %4468 = vmatprep.mubr.bf16.mxu0 0
      %4469 = vmatmul.mubr.bf16.gmra.mrb[0].mxu0 %v4344
      %v4470 = vpop.f32.mrb[0].mxu0
      %v4471 = vadd.f32 0.0, %v4470
      %v4472 = vpop.f32.mrb[0].mxu0
      %v4473 = vpop.f32.mrb[0].mxu0
      %v4474 = vadd.f32 0.0, %v4473
      %v4475 = vpop.f32.mrb[0].mxu0
      %4476 = vmatprep.mubr.bf16.mxu0 0
      %4477 = vmatmul.mubr.bf16.gmra.mrb[0].mxu0 %v4347
      %v4478 = vpop.f32.mrb[0].mxu0
      %v4479 = vadd.f32 0.0, %v4478
      %v4480 = vpop.f32.mrb[0].mxu0
      %v4481 = vpop.f32.mrb[0].mxu0
      %v4482 = vadd.f32 0.0, %v4481
      %v4483 = vpop.f32.mrb[0].mxu0
      %4484 = vmatprep.mubr.bf16.mxu0 0
      %4485 = vmatmul.mubr.bf16.gmra.mrb[0].mxu0 %v4350
      %v4486 = vpop.f32.mrb[0].mxu0
      %v4487 = vadd.f32 0.0, %v4486
      %v4488 = vpop.f32.mrb[0].mxu0
      %v4489 = vpop.f32.mrb[0].mxu0
      %v4490 = vadd.f32 0.0, %v4489
      %v4491 = vpop.f32.mrb[0].mxu0
      %4492 = vmatprep.mubr.bf16.mxu0 0
      %4493 = vmatmul.mubr.bf16.gmra.mrb[0].mxu0 %v4353
      %v4494 = vpop.f32.mrb[0].mxu0
      %v4495 = vadd.f32 0.0, %v4494
      %v4496 = vpop.f32.mrb[0].mxu0
      %v4497 = vpop.f32.mrb[0].mxu0
      %v4498 = vadd.f32 0.0, %v4497
      %v4499 = vpop.f32.mrb[0].mxu0
      %4500 = vmatprep.mubr.bf16.mxu0 0
      %4501 = vmatmul.mubr.bf16.gmra.mrb[0].mxu0 %v4356
      %v4502 = vpop.f32.mrb[0].mxu0
      %v4503 = vadd.f32 0.0, %v4502
      %v4504 = vpop.f32.mrb[0].mxu0
      %v4505 = vpop.f32.mrb[0].mxu0
      %v4506 = vadd.f32 0.0, %v4505
      %v4507 = vpop.f32.mrb[0].mxu0
      %4508 = vmatprep.mubr.bf16.mxu0 0
      %4509 = vmatmul.mubr.bf16.gmra.mrb[0].mxu0 %v4359
      %v4510 = vpop.f32.mrb[0].mxu0
      %v4511 = vadd.f32 0.0, %v4510
      %v4512 = vpop.f32.mrb[0].mxu0
      %v4513 = vpop.f32.mrb[0].mxu0
      %v4514 = vadd.f32 0.0, %v4513
      %v4515 = vpop.f32.mrb[0].mxu0
      %4516 = vmatprep.mubr.bf16.mxu0 0
      %4517 = vmatmul.mubr.bf16.gmra.mrb[0].mxu0 %v4362
      %v4518 = vpop.f32.mrb[0].mxu0
      %v4519 = vadd.f32 0.0, %v4518
      %v4520 = vpop.f32.mrb[0].mxu0
      %v4521 = vpop.f32.mrb[0].mxu0
      %v4522 = vadd.f32 0.0, %v4521
      %v4523 = vpop.f32.mrb[0].mxu0
      %4524 = vdwg.mxu0
      %v4525 = vadd.f32 %v4153, %v4399
      %v4526 = vadd.f32 %v4154, %v4402
      %v4527 = vadd.f32 %v4155, %v4407
      %v4528 = vadd.f32 %v4156, %v4410
      %v4529 = vadd.f32 %v4157, %v4415
      %v4530 = vadd.f32 %v4158, %v4418
      %v4531 = vadd.f32 %v4159, %v4423
      %v4532 = vadd.f32 %v4160, %v4426
      %v4533 = vadd.f32 %v4161, %v4431
      %v4534 = vadd.f32 %v4162, %v4434
      %v4535 = vadd.f32 %v4163, %v4439
      %v4536 = vadd.f32 %v4164, %v4442
      %v4537 = vadd.f32 %v4165, %v4447
      %v4538 = vadd.f32 %v4166, %v4450
      %v4539 = vadd.f32 %v4167, %v4455
      %v4540 = vadd.f32 %v4168, %v4458
      %v4541 = vadd.f32 %v4169, %v4463
      %v4542 = vadd.f32 %v4170, %v4466
      %v4543 = vadd.f32 %v4171, %v4471
      %v4544 = vadd.f32 %v4172, %v4474
      %v4545 = vadd.f32 %v4173, %v4479
      %v4546 = vadd.f32 %v4174, %v4482
      %v4547 = vadd.f32 %v4175, %v4487
      %v4548 = vadd.f32 %v4176, %v4490
      %v4549 = vadd.f32 %v4177, %v4495
      %v4550 = vadd.f32 %v4178, %v4498
      %v4551 = vadd.f32 %v4179, %v4503
      %v4552 = vadd.f32 %v4180, %v4506
      %v4553 = vadd.f32 %v4181, %v4511
      %v4554 = vadd.f32 %v4182, %v4514
      %v4555 = vadd.f32 %v4183, %v4519
      %v4556 = vadd.f32 %v4184, %v4522
      %v4557 = vld [vmem:[%s4186] sm:$0xf]
      %v4558 = vld [vmem:[%s4186 + $0x4] sm:$0xf]
      %v4559 = vld [vmem:[%s4186 + $0x8] sm:$0x1]
      %v4560 = vld [vmem:[%s4186 + $0xc] sm:$0xf]
      %v4561 = vld [vmem:[%s4186 + $0x10] sm:$0xf]
      %v4562 = vld [vmem:[%s4186 + $0x14] sm:$0x1]
      %v4563 = vld [vmem:[%s4186 + $0x18] sm:$0xf]
      %v4564 = vld [vmem:[%s4186 + $0x1c] sm:$0xf]
      %v4565 = vld [vmem:[%s4186 + $0x20] sm:$0x1]
      %v4566 = vld [vmem:[%s4186 + $0x24] sm:$0xf]
      %v4567 = vld [vmem:[%s4186 + $0x28] sm:$0xf]
      %v4568 = vld [vmem:[%s4186 + $0x2c] sm:$0x1]
      %v4569 = vld [vmem:[%s4186 + $0x30] sm:$0xf]
      %v4570 = vld [vmem:[%s4186 + $0x34] sm:$0xf]
      %v4571 = vld [vmem:[%s4186 + $0x38] sm:$0x1]
      %v4572 = vld [vmem:[%s4186 + $0x3c] sm:$0xf]
      %v4573 = vld [vmem:[%s4186 + $0x40] sm:$0xf]
      %v4574 = vld [vmem:[%s4186 + $0x44] sm:$0x1]
      %v4575 = vld [vmem:[%s4186 + $0x48] sm:$0xf]
      %v4576 = vld [vmem:[%s4186 + $0x4c] sm:$0xf]
      %v4577 = vld [vmem:[%s4186 + $0x50] sm:$0x1]
      %v4578 = vld [vmem:[%s4186 + $0x54] sm:$0xf]
      %v4579 = vld [vmem:[%s4186 + $0x58] sm:$0xf]
      %v4580 = vld [vmem:[%s4186 + $0x5c] sm:$0x1]
      %v4581 = vld [vmem:[%s4186 + $0x60] sm:$0xf]
      %v4582 = vld [vmem:[%s4186 + $0x64] sm:$0xf]
      %v4583 = vld [vmem:[%s4186 + $0x68] sm:$0x1]
      %v4584 = vld [vmem:[%s4186 + $0x6c] sm:$0xf]
      %v4585 = vld [vmem:[%s4186 + $0x70] sm:$0xf]
      %v4586 = vld [vmem:[%s4186 + $0x74] sm:$0x1]
      %v4587 = vld [vmem:[%s4186 + $0x78] sm:$0xf]
      %v4588 = vld [vmem:[%s4186 + $0x7c] sm:$0xf]
      %v4589 = vld [vmem:[%s4186 + $0x80] sm:$0x1]
      %v4590 = vld [vmem:[%s4186 + $0x84] sm:$0xf]
      %v4591 = vld [vmem:[%s4186 + $0x88] sm:$0xf]
      %v4592 = vld [vmem:[%s4186 + $0x8c] sm:$0x1]
      %v4593 = vld [vmem:[%s4186 + $0x90] sm:$0xf]
      %v4594 = vld [vmem:[%s4186 + $0x94] sm:$0xf]
      %v4595 = vld [vmem:[%s4186 + $0x98] sm:$0x1]
      %v4596 = vld [vmem:[%s4186 + $0x9c] sm:$0xf]
      %v4597 = vld [vmem:[%s4186 + $0xa0] sm:$0xf]
      %v4598 = vld [vmem:[%s4186 + $0xa4] sm:$0x1]
      %v4599 = vld [vmem:[%s4186 + $0xa8] sm:$0xf]
      %v4600 = vld [vmem:[%s4186 + $0xac] sm:$0xf]
      %v4601 = vld [vmem:[%s4186 + $0xb0] sm:$0x1]
      %v4602 = vld [vmem:[%s4186 + $0xb4] sm:$0xf]
      %v4603 = vld [vmem:[%s4186 + $0xb8] sm:$0xf]
      %v4604 = vld [vmem:[%s4186 + $0xbc] sm:$0x1]
      %vm4605 = vsmask.f32 3328
      %vm4606 = vsmask.f32 7440
      %vm4607 = vmor %vm4605, %vm4606
      %v4609 = vshrl.u32 %v4557, 16
      %v4611 = vrot.slane %v4609, 4
      %v4612 = vshll.u32 %v4557, 16
      %v4614 = vrot.slane %v4612, 5
      %v4615 = vor.u32 %v4611, %v4614
      %v4616 = vrot.slane %v4615, 4
      %v4618 = vshll.u32 %v4558, 16
      %v4620 = vrot.slane %v4618, 5
      %v4621 = vsel %vm4607, %v4616, %v4620
      %v4622 = vshrl.u32 %v4558, 16
      %v4624 = vrot.slane %v4622, 4
      %v4625 = vor.u32 %v4624, %v4620
      %v4626 = vrot.slane %v4625, 4
      %v4628 = vshll.u32 %v4559, 16
      %v4630 = vrot.slane %v4628, 5
      %v4631 = vsel %vm4607, %v4626, %v4630
      %v4633 = vshrl.u32 %v4560, 16
      %v4635 = vrot.slane %v4633, 4
      %v4636 = vshll.u32 %v4560, 16
      %v4638 = vrot.slane %v4636, 5
      %v4639 = vor.u32 %v4635, %v4638
      %v4640 = vrot.slane %v4639, 4
      %v4642 = vshll.u32 %v4561, 16
      %v4644 = vrot.slane %v4642, 5
      %v4645 = vsel %vm4607, %v4640, %v4644
      %v4646 = vshrl.u32 %v4561, 16
      %v4648 = vrot.slane %v4646, 4
      %v4649 = vor.u32 %v4648, %v4644
      %v4650 = vrot.slane %v4649, 4
      %v4652 = vshll.u32 %v4562, 16
      %v4654 = vrot.slane %v4652, 5
      %v4655 = vsel %vm4607, %v4650, %v4654
      %v4657 = vshrl.u32 %v4563, 16
      %v4659 = vrot.slane %v4657, 4
      %v4660 = vshll.u32 %v4563, 16
      %v4662 = vrot.slane %v4660, 5
      %v4663 = vor.u32 %v4659, %v4662
      %v4664 = vrot.slane %v4663, 4
      %v4666 = vshll.u32 %v4564, 16
      %v4668 = vrot.slane %v4666, 5
      %v4669 = vsel %vm4607, %v4664, %v4668
      %v4670 = vshrl.u32 %v4564, 16
      %v4672 = vrot.slane %v4670, 4
      %v4673 = vor.u32 %v4672, %v4668
      %v4674 = vrot.slane %v4673, 4
      %v4676 = vshll.u32 %v4565, 16
      %v4678 = vrot.slane %v4676, 5
      %v4679 = vsel %vm4607, %v4674, %v4678
      %v4681 = vshrl.u32 %v4566, 16
      %v4683 = vrot.slane %v4681, 4
      %v4684 = vshll.u32 %v4566, 16
      %v4686 = vrot.slane %v4684, 5
      %v4687 = vor.u32 %v4683, %v4686
      %v4688 = vrot.slane %v4687, 4
      %v4690 = vshll.u32 %v4567, 16
      %v4692 = vrot.slane %v4690, 5
      %v4693 = vsel %vm4607, %v4688, %v4692
      %v4694 = vshrl.u32 %v4567, 16
      %v4696 = vrot.slane %v4694, 4
      %v4697 = vor.u32 %v4696, %v4692
      %v4698 = vrot.slane %v4697, 4
      %v4700 = vshll.u32 %v4568, 16
      %v4702 = vrot.slane %v4700, 5
      %v4703 = vsel %vm4607, %v4698, %v4702
      %v4705 = vshrl.u32 %v4569, 16
      %v4707 = vrot.slane %v4705, 4
      %v4708 = vshll.u32 %v4569, 16
      %v4710 = vrot.slane %v4708, 5
      %v4711 = vor.u32 %v4707, %v4710
      %v4712 = vrot.slane %v4711, 4
      %v4714 = vshll.u32 %v4570, 16
      %v4716 = vrot.slane %v4714, 5
      %v4717 = vsel %vm4607, %v4712, %v4716
      %v4718 = vshrl.u32 %v4570, 16
      %v4720 = vrot.slane %v4718, 4
      %v4721 = vor.u32 %v4720, %v4716
      %v4722 = vrot.slane %v4721, 4
      %v4724 = vshll.u32 %v4571, 16
      %v4726 = vrot.slane %v4724, 5
      %v4727 = vsel %vm4607, %v4722, %v4726
      %v4729 = vshrl.u32 %v4572, 16
      %v4731 = vrot.slane %v4729, 4
      %v4732 = vshll.u32 %v4572, 16
      %v4734 = vrot.slane %v4732, 5
      %v4735 = vor.u32 %v4731, %v4734
      %v4736 = vrot.slane %v4735, 4
      %v4738 = vshll.u32 %v4573, 16
      %v4740 = vrot.slane %v4738, 5
      %v4741 = vsel %vm4607, %v4736, %v4740
      %v4742 = vshrl.u32 %v4573, 16
      %v4744 = vrot.slane %v4742, 4
      %v4745 = vor.u32 %v4744, %v4740
      %v4746 = vrot.slane %v4745, 4
      %v4748 = vshll.u32 %v4574, 16
      %v4750 = vrot.slane %v4748, 5
      %v4751 = vsel %vm4607, %v4746, %v4750
      %v4753 = vshrl.u32 %v4575, 16
      %v4755 = vrot.slane %v4753, 4
      %v4756 = vshll.u32 %v4575, 16
      %v4758 = vrot.slane %v4756, 5
      %v4759 = vor.u32 %v4755, %v4758
      %v4760 = vrot.slane %v4759, 4
      %v4762 = vshll.u32 %v4576, 16
      %v4764 = vrot.slane %v4762, 5
      %v4765 = vsel %vm4607, %v4760, %v4764
      %v4766 = vshrl.u32 %v4576, 16
      %v4768 = vrot.slane %v4766, 4
      %v4769 = vor.u32 %v4768, %v4764
      %v4770 = vrot.slane %v4769, 4
      %v4772 = vshll.u32 %v4577, 16
      %v4774 = vrot.slane %v4772, 5
      %v4775 = vsel %vm4607, %v4770, %v4774
      %v4777 = vshrl.u32 %v4578, 16
      %v4779 = vrot.slane %v4777, 4
      %v4780 = vshll.u32 %v4578, 16
      %v4782 = vrot.slane %v4780, 5
      %v4783 = vor.u32 %v4779, %v4782
      %v4784 = vrot.slane %v4783, 4
      %v4786 = vshll.u32 %v4579, 16
      %v4788 = vrot.slane %v4786, 5
      %v4789 = vsel %vm4607, %v4784, %v4788
      %v4790 = vshrl.u32 %v4579, 16
      %v4792 = vrot.slane %v4790, 4
      %v4793 = vor.u32 %v4792, %v4788
      %v4794 = vrot.slane %v4793, 4
      %v4796 = vshll.u32 %v4580, 16
      %v4798 = vrot.slane %v4796, 5
      %v4799 = vsel %vm4607, %v4794, %v4798
      %v4801 = vshrl.u32 %v4581, 16
      %v4803 = vrot.slane %v4801, 4
      %v4804 = vshll.u32 %v4581, 16
      %v4806 = vrot.slane %v4804, 5
      %v4807 = vor.u32 %v4803, %v4806
      %v4808 = vrot.slane %v4807, 4
      %v4810 = vshll.u32 %v4582, 16
      %v4812 = vrot.slane %v4810, 5
      %v4813 = vsel %vm4607, %v4808, %v4812
      %v4814 = vshrl.u32 %v4582, 16
      %v4816 = vrot.slane %v4814, 4
      %v4817 = vor.u32 %v4816, %v4812
      %v4818 = vrot.slane %v4817, 4
      %v4820 = vshll.u32 %v4583, 16
      %v4822 = vrot.slane %v4820, 5
      %v4823 = vsel %vm4607, %v4818, %v4822
      %v4825 = vshrl.u32 %v4584, 16
      %v4827 = vrot.slane %v4825, 4
      %v4828 = vshll.u32 %v4584, 16
      %v4830 = vrot.slane %v4828, 5
      %v4831 = vor.u32 %v4827, %v4830
      %v4832 = vrot.slane %v4831, 4
      %v4834 = vshll.u32 %v4585, 16
      %v4836 = vrot.slane %v4834, 5
      %v4837 = vsel %vm4607, %v4832, %v4836
      %v4838 = vshrl.u32 %v4585, 16
      %v4840 = vrot.slane %v4838, 4
      %v4841 = vor.u32 %v4840, %v4836
      %v4842 = vrot.slane %v4841, 4
      %v4844 = vshll.u32 %v4586, 16
      %v4846 = vrot.slane %v4844, 5
      %v4847 = vsel %vm4607, %v4842, %v4846
      %v4849 = vshrl.u32 %v4587, 16
      %v4851 = vrot.slane %v4849, 4
      %v4852 = vshll.u32 %v4587, 16
      %v4854 = vrot.slane %v4852, 5
      %v4855 = vor.u32 %v4851, %v4854
      %v4856 = vrot.slane %v4855, 4
      %v4858 = vshll.u32 %v4588, 16
      %v4860 = vrot.slane %v4858, 5
      %v4861 = vsel %vm4607, %v4856, %v4860
      %v4862 = vshrl.u32 %v4588, 16
      %v4864 = vrot.slane %v4862, 4
      %v4865 = vor.u32 %v4864, %v4860
      %v4866 = vrot.slane %v4865, 4
      %v4868 = vshll.u32 %v4589, 16
      %v4870 = vrot.slane %v4868, 5
      %v4871 = vsel %vm4607, %v4866, %v4870
      %v4873 = vshrl.u32 %v4590, 16
      %v4875 = vrot.slane %v4873, 4
      %v4876 = vshll.u32 %v4590, 16
      %v4878 = vrot.slane %v4876, 5
      %v4879 = vor.u32 %v4875, %v4878
      %v4880 = vrot.slane %v4879, 4
      %v4882 = vshll.u32 %v4591, 16
      %v4884 = vrot.slane %v4882, 5
      %v4885 = vsel %vm4607, %v4880, %v4884
      %v4886 = vshrl.u32 %v4591, 16
      %v4888 = vrot.slane %v4886, 4
      %v4889 = vor.u32 %v4888, %v4884
      %v4890 = vrot.slane %v4889, 4
      %v4892 = vshll.u32 %v4592, 16
      %v4894 = vrot.slane %v4892, 5
      %v4895 = vsel %vm4607, %v4890, %v4894
      %v4897 = vshrl.u32 %v4593, 16
      %v4899 = vrot.slane %v4897, 4
      %v4900 = vshll.u32 %v4593, 16
      %v4902 = vrot.slane %v4900, 5
      %v4903 = vor.u32 %v4899, %v4902
      %v4904 = vrot.slane %v4903, 4
      %v4906 = vshll.u32 %v4594, 16
      %v4908 = vrot.slane %v4906, 5
      %v4909 = vsel %vm4607, %v4904, %v4908
      %v4910 = vshrl.u32 %v4594, 16
      %v4912 = vrot.slane %v4910, 4
      %v4913 = vor.u32 %v4912, %v4908
      %v4914 = vrot.slane %v4913, 4
      %v4916 = vshll.u32 %v4595, 16
      %v4918 = vrot.slane %v4916, 5
      %v4919 = vsel %vm4607, %v4914, %v4918
      %v4921 = vshrl.u32 %v4596, 16
      %v4923 = vrot.slane %v4921, 4
      %v4924 = vshll.u32 %v4596, 16
      %v4926 = vrot.slane %v4924, 5
      %v4927 = vor.u32 %v4923, %v4926
      %v4928 = vrot.slane %v4927, 4
      %v4930 = vshll.u32 %v4597, 16
      %v4932 = vrot.slane %v4930, 5
      %v4933 = vsel %vm4607, %v4928, %v4932
      %v4934 = vshrl.u32 %v4597, 16
      %v4936 = vrot.slane %v4934, 4
      %v4937 = vor.u32 %v4936, %v4932
      %v4938 = vrot.slane %v4937, 4
      %v4940 = vshll.u32 %v4598, 16
      %v4942 = vrot.slane %v4940, 5
      %v4943 = vsel %vm4607, %v4938, %v4942
      %v4945 = vshrl.u32 %v4599, 16
      %v4947 = vrot.slane %v4945, 4
      %v4948 = vshll.u32 %v4599, 16
      %v4950 = vrot.slane %v4948, 5
      %v4951 = vor.u32 %v4947, %v4950
      %v4952 = vrot.slane %v4951, 4
      %v4954 = vshll.u32 %v4600, 16
      %v4956 = vrot.slane %v4954, 5
      %v4957 = vsel %vm4607, %v4952, %v4956
      %v4958 = vshrl.u32 %v4600, 16
      %v4960 = vrot.slane %v4958, 4
      %v4961 = vor.u32 %v4960, %v4956
      %v4962 = vrot.slane %v4961, 4
      %v4964 = vshll.u32 %v4601, 16
      %v4966 = vrot.slane %v4964, 5
      %v4967 = vsel %vm4607, %v4962, %v4966
      %v4969 = vshrl.u32 %v4602, 16
      %v4971 = vrot.slane %v4969, 4
      %v4972 = vshll.u32 %v4602, 16
      %v4974 = vrot.slane %v4972, 5
      %v4975 = vor.u32 %v4971, %v4974
      %v4976 = vrot.slane %v4975, 4
      %v4978 = vshll.u32 %v4603, 16
      %v4980 = vrot.slane %v4978, 5
      %v4981 = vsel %vm4607, %v4976, %v4980
      %v4982 = vshrl.u32 %v4603, 16
      %v4984 = vrot.slane %v4982, 4
      %v4985 = vor.u32 %v4984, %v4980
      %v4986 = vrot.slane %v4985, 4
      %v4988 = vshll.u32 %v4604, 16
      %v4990 = vrot.slane %v4988, 5
      %v4991 = vsel %vm4607, %v4986, %v4990
      %v4992 = vld [vmem:[%s3 + $0x10] sm:$0xf]
      %v4993 = vld [vmem:[%s3 + $0x14] sm:$0xf]
      %v4994 = vld [vmem:[%s3 + $0x18] sm:$0xf]
      %v4995 = vld [vmem:[%s3 + $0x1c] sm:$0xf]
      %v4996 = vunpack.c.l.b16 %v4621
      %v4997 = vunpack.c.l.b16 %v4631
      %v4998 = vunpack.c.l.b16 %v4645
      %v4999 = vunpack.c.l.b16 %v4655
      %v5000 = vunpack.c.l.b16 %v4669
      %v5001 = vunpack.c.l.b16 %v4679
      %v5002 = vunpack.c.l.b16 %v4693
      %v5003 = vunpack.c.l.b16 %v4703
      %v5004 = vunpack.c.l.b16 %v4717
      %v5005 = vunpack.c.l.b16 %v4727
      %v5006 = vunpack.c.l.b16 %v4741
      %v5007 = vunpack.c.l.b16 %v4751
      %v5008 = vunpack.c.l.b16 %v4765
      %v5009 = vunpack.c.l.b16 %v4775
      %v5010 = vunpack.c.l.b16 %v4789
      %v5011 = vunpack.c.l.b16 %v4799
      %v5012 = vunpack.c.l.b16 %v4813
      %v5013 = vunpack.c.l.b16 %v4823
      %v5014 = vunpack.c.l.b16 %v4837
      %v5015 = vunpack.c.l.b16 %v4847
      %v5016 = vunpack.c.l.b16 %v4861
      %v5017 = vunpack.c.l.b16 %v4871
      %v5018 = vunpack.c.l.b16 %v4885
      %v5019 = vunpack.c.l.b16 %v4895
      %v5020 = vunpack.c.l.b16 %v4909
      %v5021 = vunpack.c.l.b16 %v4919
      %v5022 = vunpack.c.l.b16 %v4933
      %v5023 = vunpack.c.l.b16 %v4943
      %v5024 = vunpack.c.l.b16 %v4957
      %v5025 = vunpack.c.l.b16 %v4967
      %v5026 = vunpack.c.l.b16 %v4981
      %v5027 = vunpack.c.l.b16 %v4991
      %v5028 = vpack.c.b16 %v4997, %v4996
      %v5029 = vpack.c.b16 %v4999, %v4998
      %v5030 = vpack.c.b16 %v5001, %v5000
      %v5031 = vpack.c.b16 %v5003, %v5002
      %v5032 = vpack.c.b16 %v5005, %v5004
      %v5033 = vpack.c.b16 %v5007, %v5006
      %v5034 = vpack.c.b16 %v5009, %v5008
      %v5035 = vpack.c.b16 %v5011, %v5010
      %v5036 = vpack.c.b16 %v5013, %v5012
      %v5037 = vpack.c.b16 %v5015, %v5014
      %v5038 = vpack.c.b16 %v5017, %v5016
      %v5039 = vpack.c.b16 %v5019, %v5018
      %v5040 = vpack.c.b16 %v5021, %v5020
      %v5041 = vpack.c.b16 %v5023, %v5022
      %v5042 = vpack.c.b16 %v5025, %v5024
      %v5043 = vpack.c.b16 %v5027, %v5026
      %v5048 = vunpack.c.l.b16 %v4992
      %v5049 = vunpack.c.l.b16 %v4993
      %v5050 = vunpack.c.l.b16 %v4994
      %v5051 = vunpack.c.l.b16 %v4995
      %v5052 = vpack.c.b16 %v5049, %v5048
      %v5053 = vpack.c.b16 %v5051, %v5050
      %v5057 = vsel %vm4315, %v5028, 0
      %v5060 = vsel %vm4315, %v5029, 0
      %v5063 = vsel %vm4315, %v5030, 0
      %v5066 = vsel %vm4315, %v5031, 0
      %v5069 = vsel %vm4315, %v5032, 0
      %v5072 = vsel %vm4315, %v5033, 0
      %v5075 = vsel %vm4315, %v5034, 0
      %v5078 = vsel %vm4315, %v5035, 0
      %v5081 = vsel %vm4315, %v5036, 0
      %v5084 = vsel %vm4315, %v5037, 0
      %v5087 = vsel %vm4315, %v5038, 0
      %v5090 = vsel %vm4315, %v5039, 0
      %v5093 = vsel %vm4315, %v5040, 0
      %v5096 = vsel %vm4315, %v5041, 0
      %v5099 = vsel %vm4315, %v5042, 0
      %v5102 = vsel %vm4315, %v5043, 0
      %5104 = vmatprep.subr.bf16.mxu0 0
      %5105 = vmatpush1.bf16.msra.mxu0 %v5052
      %5106 = vmatprep.subr.bf16.mxu0 0
      %5107 = vmatpush1.bf16.msra.mxu0 %v5053
      %5108 = vmatprep.subr.bf16.mxu0 0
      %5109 = vmatpush1.bf16.msra.mxu0 0
      %5110 = vmatprep.subr.bf16.mxu0 0
      %5111 = vmatpush1.bf16.msra.mxu0 0
      %5112 = vmatprep.subr.bf16.mxu0 0
      %5113 = vmatpush1.bf16.msra.mxu0 0
      %5114 = vmatprep.subr.bf16.mxu0 0
      %5115 = vmatpush1.bf16.msra.mxu0 0
      %5116 = vmatprep.subr.bf16.mxu0 0
      %5117 = vmatpush1.bf16.msra.mxu0 0
      %5118 = vmatprep.subr.bf16.mxu0 0
      %5119 = vmatpush1.bf16.msra.mxu0 0
      %5120 = vmatprep.subr.bf16.mxu0 0
      %5121 = vmatpush1.bf16.msra.mxu0 0
      %5122 = vmatprep.subr.bf16.mxu0 0
      %5123 = vmatpush1.bf16.msra.mxu0 0
      %5124 = vmatprep.subr.bf16.mxu0 0
      %5125 = vmatpush1.bf16.msra.mxu0 0
      %5126 = vmatprep.subr.bf16.mxu0 0
      %5127 = vmatpush1.bf16.msra.mxu0 0
      %5128 = vmatprep.subr.bf16.mxu0 0
      %5129 = vmatpush1.bf16.msra.mxu0 0
      %5130 = vmatprep.subr.bf16.mxu0 0
      %5131 = vmatpush1.bf16.msra.mxu0 0
      %5132 = vmatprep.subr.bf16.mxu0 0
      %5133 = vmatpush1.bf16.msra.mxu0 0
      %5134 = vmatprep.subr.bf16.mxu0 0
      %5135 = vmatpush1.bf16.msra.mxu0 0
      %5136 = vmatprep.mubr.bf16.mxu0 0
      %5137 = vmatmul.mubr.bf16.gmra.mrb[0].mxu0 %v5057
      %v5138 = vpop.f32.mrb[0].mxu0
      %v5139 = vadd.f32 0.0, %v5138
      %v5140 = vpop.f32.mrb[0].mxu0
      %v5141 = vpop.f32.mrb[0].mxu0
      %v5142 = vadd.f32 0.0, %v5141
      %v5143 = vpop.f32.mrb[0].mxu0
      %5144 = vmatprep.mubr.bf16.mxu0 0
      %5145 = vmatmul.mubr.bf16.gmra.mrb[0].mxu0 %v5060
      %v5146 = vpop.f32.mrb[0].mxu0
      %v5147 = vadd.f32 0.0, %v5146
      %v5148 = vpop.f32.mrb[0].mxu0
      %v5149 = vpop.f32.mrb[0].mxu0
      %v5150 = vadd.f32 0.0, %v5149
      %v5151 = vpop.f32.mrb[0].mxu0
      %5152 = vmatprep.mubr.bf16.mxu0 0
      %5153 = vmatmul.mubr.bf16.gmra.mrb[0].mxu0 %v5063
      %v5154 = vpop.f32.mrb[0].mxu0
      %v5155 = vadd.f32 0.0, %v5154
      %v5156 = vpop.f32.mrb[0].mxu0
      %v5157 = vpop.f32.mrb[0].mxu0
      %v5158 = vadd.f32 0.0, %v5157
      %v5159 = vpop.f32.mrb[0].mxu0
      %5160 = vmatprep.mubr.bf16.mxu0 0
      %5161 = vmatmul.mubr.bf16.gmra.mrb[0].mxu0 %v5066
      %v5162 = vpop.f32.mrb[0].mxu0
      %v5163 = vadd.f32 0.0, %v5162
      %v5164 = vpop.f32.mrb[0].mxu0
      %v5165 = vpop.f32.mrb[0].mxu0
      %v5166 = vadd.f32 0.0, %v5165
      %v5167 = vpop.f32.mrb[0].mxu0
      %5168 = vmatprep.mubr.bf16.mxu0 0
      %5169 = vmatmul.mubr.bf16.gmra.mrb[0].mxu0 %v5069
      %v5170 = vpop.f32.mrb[0].mxu0
      %v5171 = vadd.f32 0.0, %v5170
      %v5172 = vpop.f32.mrb[0].mxu0
      %v5173 = vpop.f32.mrb[0].mxu0
      %v5174 = vadd.f32 0.0, %v5173
      %v5175 = vpop.f32.mrb[0].mxu0
      %5176 = vmatprep.mubr.bf16.mxu0 0
      %5177 = vmatmul.mubr.bf16.gmra.mrb[0].mxu0 %v5072
      %v5178 = vpop.f32.mrb[0].mxu0
      %v5179 = vadd.f32 0.0, %v5178
      %v5180 = vpop.f32.mrb[0].mxu0
      %v5181 = vpop.f32.mrb[0].mxu0
      %v5182 = vadd.f32 0.0, %v5181
      %v5183 = vpop.f32.mrb[0].mxu0
      %5184 = vmatprep.mubr.bf16.mxu0 0
      %5185 = vmatmul.mubr.bf16.gmra.mrb[0].mxu0 %v5075
      %v5186 = vpop.f32.mrb[0].mxu0
      %v5187 = vadd.f32 0.0, %v5186
      %v5188 = vpop.f32.mrb[0].mxu0
      %v5189 = vpop.f32.mrb[0].mxu0
      %v5190 = vadd.f32 0.0, %v5189
      %v5191 = vpop.f32.mrb[0].mxu0
      %5192 = vmatprep.mubr.bf16.mxu0 0
      %5193 = vmatmul.mubr.bf16.gmra.mrb[0].mxu0 %v5078
      %v5194 = vpop.f32.mrb[0].mxu0
      %v5195 = vadd.f32 0.0, %v5194
      %v5196 = vpop.f32.mrb[0].mxu0
      %v5197 = vpop.f32.mrb[0].mxu0
      %v5198 = vadd.f32 0.0, %v5197
      %v5199 = vpop.f32.mrb[0].mxu0
      %5200 = vmatprep.mubr.bf16.mxu0 0
      %5201 = vmatmul.mubr.bf16.gmra.mrb[0].mxu0 %v5081
      %v5202 = vpop.f32.mrb[0].mxu0
      %v5203 = vadd.f32 0.0, %v5202
      %v5204 = vpop.f32.mrb[0].mxu0
      %v5205 = vpop.f32.mrb[0].mxu0
      %v5206 = vadd.f32 0.0, %v5205
      %v5207 = vpop.f32.mrb[0].mxu0
      %5208 = vmatprep.mubr.bf16.mxu0 0
      %5209 = vmatmul.mubr.bf16.gmra.mrb[0].mxu0 %v5084
      %v5210 = vpop.f32.mrb[0].mxu0
      %v5211 = vadd.f32 0.0, %v5210
      %v5212 = vpop.f32.mrb[0].mxu0
      %v5213 = vpop.f32.mrb[0].mxu0
      %v5214 = vadd.f32 0.0, %v5213
      %v5215 = vpop.f32.mrb[0].mxu0
      %5216 = vmatprep.mubr.bf16.mxu0 0
      %5217 = vmatmul.mubr.bf16.gmra.mrb[0].mxu0 %v5087
      %v5218 = vpop.f32.mrb[0].mxu0
      %v5219 = vadd.f32 0.0, %v5218
      %v5220 = vpop.f32.mrb[0].mxu0
      %v5221 = vpop.f32.mrb[0].mxu0
      %v5222 = vadd.f32 0.0, %v5221
      %v5223 = vpop.f32.mrb[0].mxu0
      %5224 = vmatprep.mubr.bf16.mxu0 0
      %5225 = vmatmul.mubr.bf16.gmra.mrb[0].mxu0 %v5090
      %v5226 = vpop.f32.mrb[0].mxu0
      %v5227 = vadd.f32 0.0, %v5226
      %v5228 = vpop.f32.mrb[0].mxu0
      %v5229 = vpop.f32.mrb[0].mxu0
      %v5230 = vadd.f32 0.0, %v5229
      %v5231 = vpop.f32.mrb[0].mxu0
      %5232 = vmatprep.mubr.bf16.mxu0 0
      %5233 = vmatmul.mubr.bf16.gmra.mrb[0].mxu0 %v5093
      %v5234 = vpop.f32.mrb[0].mxu0
      %v5235 = vadd.f32 0.0, %v5234
      %v5236 = vpop.f32.mrb[0].mxu0
      %v5237 = vpop.f32.mrb[0].mxu0
      %v5238 = vadd.f32 0.0, %v5237
      %v5239 = vpop.f32.mrb[0].mxu0
      %5240 = vmatprep.mubr.bf16.mxu0 0
      %5241 = vmatmul.mubr.bf16.gmra.mrb[0].mxu0 %v5096
      %v5242 = vpop.f32.mrb[0].mxu0
      %v5243 = vadd.f32 0.0, %v5242
      %v5244 = vpop.f32.mrb[0].mxu0
      %v5245 = vpop.f32.mrb[0].mxu0
      %v5246 = vadd.f32 0.0, %v5245
      %v5247 = vpop.f32.mrb[0].mxu0
      %5248 = vmatprep.mubr.bf16.mxu0 0
      %5249 = vmatmul.mubr.bf16.gmra.mrb[0].mxu0 %v5099
      %v5250 = vpop.f32.mrb[0].mxu0
      %v5251 = vadd.f32 0.0, %v5250
      %v5252 = vpop.f32.mrb[0].mxu0
      %v5253 = vpop.f32.mrb[0].mxu0
      %v5254 = vadd.f32 0.0, %v5253
      %v5255 = vpop.f32.mrb[0].mxu0
      %5256 = vmatprep.mubr.bf16.mxu0 0
      %5257 = vmatmul.mubr.bf16.gmra.mrb[0].mxu0 %v5102
      %v5258 = vpop.f32.mrb[0].mxu0
      %v5259 = vadd.f32 0.0, %v5258
      %v5260 = vpop.f32.mrb[0].mxu0
      %v5261 = vpop.f32.mrb[0].mxu0
      %v5262 = vadd.f32 0.0, %v5261
      %v5263 = vpop.f32.mrb[0].mxu0
      %5264 = vdwg.mxu0
      %v5265 = vadd.f32 %v4525, %v5139
      %v5266 = vadd.f32 %v4526, %v5142
      %v5267 = vadd.f32 %v4527, %v5147
      %v5268 = vadd.f32 %v4528, %v5150
      %v5269 = vadd.f32 %v4529, %v5155
      %v5270 = vadd.f32 %v4530, %v5158
      %v5271 = vadd.f32 %v4531, %v5163
      %v5272 = vadd.f32 %v4532, %v5166
      %v5273 = vadd.f32 %v4533, %v5171
      %v5274 = vadd.f32 %v4534, %v5174
      %v5275 = vadd.f32 %v4535, %v5179
      %v5276 = vadd.f32 %v4536, %v5182
      %v5277 = vadd.f32 %v4537, %v5187
      %v5278 = vadd.f32 %v4538, %v5190
      %v5279 = vadd.f32 %v4539, %v5195
      %v5280 = vadd.f32 %v4540, %v5198
      %v5281 = vadd.f32 %v4541, %v5203
      %v5282 = vadd.f32 %v4542, %v5206
      %v5283 = vadd.f32 %v4543, %v5211
      %v5284 = vadd.f32 %v4544, %v5214
      %v5285 = vadd.f32 %v4545, %v5219
      %v5286 = vadd.f32 %v4546, %v5222
      %v5287 = vadd.f32 %v4547, %v5227
      %v5288 = vadd.f32 %v4548, %v5230
      %v5289 = vadd.f32 %v4549, %v5235
      %v5290 = vadd.f32 %v4550, %v5238
      %v5291 = vadd.f32 %v4551, %v5243
      %v5292 = vadd.f32 %v4552, %v5246
      %v5293 = vadd.f32 %v4553, %v5251
      %v5294 = vadd.f32 %v4554, %v5254
      %v5295 = vadd.f32 %v4555, %v5259
      %v5296 = vadd.f32 %v4556, %v5262
      %v5297 = vld [vmem:[%s4186] sm:$0xe]
      %v5298 = vld [vmem:[%s4186 + $0xc] sm:$0xe]
      %v5299 = vld [vmem:[%s4186 + $0x18] sm:$0xe]
      %v5300 = vld [vmem:[%s4186 + $0x24] sm:$0xe]
      %v5301 = vld [vmem:[%s4186 + $0x30] sm:$0xe]
      %v5302 = vld [vmem:[%s4186 + $0x3c] sm:$0xe]
      %v5303 = vld [vmem:[%s4186 + $0x48] sm:$0xe]
      %v5304 = vld [vmem:[%s4186 + $0x54] sm:$0xe]
      %v5305 = vld [vmem:[%s4186 + $0x60] sm:$0xe]
      %v5306 = vld [vmem:[%s4186 + $0x6c] sm:$0xe]
      %v5307 = vld [vmem:[%s4186 + $0x78] sm:$0xe]
      %v5308 = vld [vmem:[%s4186 + $0x84] sm:$0xe]
      %v5309 = vld [vmem:[%s4186 + $0x90] sm:$0xe]
      %v5310 = vld [vmem:[%s4186 + $0x9c] sm:$0xe]
      %v5311 = vld [vmem:[%s4186 + $0xa8] sm:$0xe]
      %v5312 = vld [vmem:[%s4186 + $0xb4] sm:$0xe]
      %v5361 = vrot.slane %v5297, 5
      %v5362 = vrot.slane %v5361, 4
      %v5363 = vrot.slane %v4558, 5
      %v5364 = vsel %vm383, %v5362, %v5363
      %v5365 = vrot.slane %v5363, 4
      %v5366 = vrot.slane %v4559, 5
      %v5367 = vsel %vm383, %v5365, %v5366
      %v5368 = vrot.slane %v5298, 5
      %v5369 = vrot.slane %v5368, 4
      %v5370 = vrot.slane %v4561, 5
      %v5371 = vsel %vm383, %v5369, %v5370
      %v5372 = vrot.slane %v5370, 4
      %v5373 = vrot.slane %v4562, 5
      %v5374 = vsel %vm383, %v5372, %v5373
      %v5375 = vrot.slane %v5299, 5
      %v5376 = vrot.slane %v5375, 4
      %v5377 = vrot.slane %v4564, 5
      %v5378 = vsel %vm383, %v5376, %v5377
      %v5379 = vrot.slane %v5377, 4
      %v5380 = vrot.slane %v4565, 5
      %v5381 = vsel %vm383, %v5379, %v5380
      %v5382 = vrot.slane %v5300, 5
      %v5383 = vrot.slane %v5382, 4
      %v5384 = vrot.slane %v4567, 5
      %v5385 = vsel %vm383, %v5383, %v5384
      %v5386 = vrot.slane %v5384, 4
      %v5387 = vrot.slane %v4568, 5
      %v5388 = vsel %vm383, %v5386, %v5387
      %v5389 = vrot.slane %v5301, 5
      %v5390 = vrot.slane %v5389, 4
      %v5391 = vrot.slane %v4570, 5
      %v5392 = vsel %vm383, %v5390, %v5391
      %v5393 = vrot.slane %v5391, 4
      %v5394 = vrot.slane %v4571, 5
      %v5395 = vsel %vm383, %v5393, %v5394
      %v5396 = vrot.slane %v5302, 5
      %v5397 = vrot.slane %v5396, 4
      %v5398 = vrot.slane %v4573, 5
      %v5399 = vsel %vm383, %v5397, %v5398
      %v5400 = vrot.slane %v5398, 4
      %v5401 = vrot.slane %v4574, 5
      %v5402 = vsel %vm383, %v5400, %v5401
      %v5403 = vrot.slane %v5303, 5
      %v5404 = vrot.slane %v5403, 4
      %v5405 = vrot.slane %v4576, 5
      %v5406 = vsel %vm383, %v5404, %v5405
      %v5407 = vrot.slane %v5405, 4
      %v5408 = vrot.slane %v4577, 5
      %v5409 = vsel %vm383, %v5407, %v5408
      %v5410 = vrot.slane %v5304, 5
      %v5411 = vrot.slane %v5410, 4
      %v5412 = vrot.slane %v4579, 5
      %v5413 = vsel %vm383, %v5411, %v5412
      %v5414 = vrot.slane %v5412, 4
      %v5415 = vrot.slane %v4580, 5
      %v5416 = vsel %vm383, %v5414, %v5415
      %v5417 = vrot.slane %v5305, 5
      %v5418 = vrot.slane %v5417, 4
      %v5419 = vrot.slane %v4582, 5
      %v5420 = vsel %vm383, %v5418, %v5419
      %v5421 = vrot.slane %v5419, 4
      %v5422 = vrot.slane %v4583, 5
      %v5423 = vsel %vm383, %v5421, %v5422
      %v5424 = vrot.slane %v5306, 5
      %v5425 = vrot.slane %v5424, 4
      %v5426 = vrot.slane %v4585, 5
      %v5427 = vsel %vm383, %v5425, %v5426
      %v5428 = vrot.slane %v5426, 4
      %v5429 = vrot.slane %v4586, 5
      %v5430 = vsel %vm383, %v5428, %v5429
      %v5431 = vrot.slane %v5307, 5
      %v5432 = vrot.slane %v5431, 4
      %v5433 = vrot.slane %v4588, 5
      %v5434 = vsel %vm383, %v5432, %v5433
      %v5435 = vrot.slane %v5433, 4
      %v5436 = vrot.slane %v4589, 5
      %v5437 = vsel %vm383, %v5435, %v5436
      %v5438 = vrot.slane %v5308, 5
      %v5439 = vrot.slane %v5438, 4
      %v5440 = vrot.slane %v4591, 5
      %v5441 = vsel %vm383, %v5439, %v5440
      %v5442 = vrot.slane %v5440, 4
      %v5443 = vrot.slane %v4592, 5
      %v5444 = vsel %vm383, %v5442, %v5443
      %v5445 = vrot.slane %v5309, 5
      %v5446 = vrot.slane %v5445, 4
      %v5447 = vrot.slane %v4594, 5
      %v5448 = vsel %vm383, %v5446, %v5447
      %v5449 = vrot.slane %v5447, 4
      %v5450 = vrot.slane %v4595, 5
      %v5451 = vsel %vm383, %v5449, %v5450
      %v5452 = vrot.slane %v5310, 5
      %v5453 = vrot.slane %v5452, 4
      %v5454 = vrot.slane %v4597, 5
      %v5455 = vsel %vm383, %v5453, %v5454
      %v5456 = vrot.slane %v5454, 4
      %v5457 = vrot.slane %v4598, 5
      %v5458 = vsel %vm383, %v5456, %v5457
      %v5459 = vrot.slane %v5311, 5
      %v5460 = vrot.slane %v5459, 4
      %v5461 = vrot.slane %v4600, 5
      %v5462 = vsel %vm383, %v5460, %v5461
      %v5463 = vrot.slane %v5461, 4
      %v5464 = vrot.slane %v4601, 5
      %v5465 = vsel %vm383, %v5463, %v5464
      %v5466 = vrot.slane %v5312, 5
      %v5467 = vrot.slane %v5466, 4
      %v5468 = vrot.slane %v4603, 5
      %v5469 = vsel %vm383, %v5467, %v5468
      %v5470 = vrot.slane %v5468, 4
      %v5471 = vrot.slane %v4604, 5
      %v5472 = vsel %vm383, %v5470, %v5471
      %v5473 = vld [vmem:[%s3 + $0x20] sm:$0xf]
      %v5474 = vld [vmem:[%s3 + $0x24] sm:$0xf]
      %v5475 = vld [vmem:[%s3 + $0x28] sm:$0xf]
      %v5476 = vld [vmem:[%s3 + $0x2c] sm:$0xf]
      %v5477 = vunpack.c.l.b16 %v5364
      %v5478 = vunpack.c.l.b16 %v5367
      %v5479 = vunpack.c.l.b16 %v5371
      %v5480 = vunpack.c.l.b16 %v5374
      %v5481 = vunpack.c.l.b16 %v5378
      %v5482 = vunpack.c.l.b16 %v5381
      %v5483 = vunpack.c.l.b16 %v5385
      %v5484 = vunpack.c.l.b16 %v5388
      %v5485 = vunpack.c.l.b16 %v5392
      %v5486 = vunpack.c.l.b16 %v5395
      %v5487 = vunpack.c.l.b16 %v5399
      %v5488 = vunpack.c.l.b16 %v5402
      %v5489 = vunpack.c.l.b16 %v5406
      %v5490 = vunpack.c.l.b16 %v5409
      %v5491 = vunpack.c.l.b16 %v5413
      %v5492 = vunpack.c.l.b16 %v5416
      %v5493 = vunpack.c.l.b16 %v5420
      %v5494 = vunpack.c.l.b16 %v5423
      %v5495 = vunpack.c.l.b16 %v5427
      %v5496 = vunpack.c.l.b16 %v5430
      %v5497 = vunpack.c.l.b16 %v5434
      %v5498 = vunpack.c.l.b16 %v5437
      %v5499 = vunpack.c.l.b16 %v5441
      %v5500 = vunpack.c.l.b16 %v5444
      %v5501 = vunpack.c.l.b16 %v5448
      %v5502 = vunpack.c.l.b16 %v5451
      %v5503 = vunpack.c.l.b16 %v5455
      %v5504 = vunpack.c.l.b16 %v5458
      %v5505 = vunpack.c.l.b16 %v5462
      %v5506 = vunpack.c.l.b16 %v5465
      %v5507 = vunpack.c.l.b16 %v5469
      %v5508 = vunpack.c.l.b16 %v5472
      %v5509 = vpack.c.b16 %v5478, %v5477
      %v5510 = vpack.c.b16 %v5480, %v5479
      %v5511 = vpack.c.b16 %v5482, %v5481
      %v5512 = vpack.c.b16 %v5484, %v5483
      %v5513 = vpack.c.b16 %v5486, %v5485
      %v5514 = vpack.c.b16 %v5488, %v5487
      %v5515 = vpack.c.b16 %v5490, %v5489
      %v5516 = vpack.c.b16 %v5492, %v5491
      %v5517 = vpack.c.b16 %v5494, %v5493
      %v5518 = vpack.c.b16 %v5496, %v5495
      %v5519 = vpack.c.b16 %v5498, %v5497
      %v5520 = vpack.c.b16 %v5500, %v5499
      %v5521 = vpack.c.b16 %v5502, %v5501
      %v5522 = vpack.c.b16 %v5504, %v5503
      %v5523 = vpack.c.b16 %v5506, %v5505
      %v5524 = vpack.c.b16 %v5508, %v5507
      %v5529 = vunpack.c.l.b16 %v5473
      %v5530 = vunpack.c.l.b16 %v5474
      %v5531 = vunpack.c.l.b16 %v5475
      %v5532 = vunpack.c.l.b16 %v5476
      %v5533 = vpack.c.b16 %v5530, %v5529
      %v5534 = vpack.c.b16 %v5532, %v5531
      %v5538 = vsel %vm4315, %v5509, 0
      %v5541 = vsel %vm4315, %v5510, 0
      %v5544 = vsel %vm4315, %v5511, 0
      %v5547 = vsel %vm4315, %v5512, 0
      %v5550 = vsel %vm4315, %v5513, 0
      %v5553 = vsel %vm4315, %v5514, 0
      %v5556 = vsel %vm4315, %v5515, 0
      %v5559 = vsel %vm4315, %v5516, 0
      %v5562 = vsel %vm4315, %v5517, 0
      %v5565 = vsel %vm4315, %v5518, 0
      %v5568 = vsel %vm4315, %v5519, 0
      %v5571 = vsel %vm4315, %v5520, 0
      %v5574 = vsel %vm4315, %v5521, 0
      %v5577 = vsel %vm4315, %v5522, 0
      %v5580 = vsel %vm4315, %v5523, 0
      %v5583 = vsel %vm4315, %v5524, 0
      %5585 = vmatprep.subr.bf16.mxu0 0
      %5586 = vmatpush1.bf16.msra.mxu0 %v5533
      %5587 = vmatprep.subr.bf16.mxu0 0
      %5588 = vmatpush1.bf16.msra.mxu0 %v5534
      %5589 = vmatprep.subr.bf16.mxu0 0
      %5590 = vmatpush1.bf16.msra.mxu0 0
      %5591 = vmatprep.subr.bf16.mxu0 0
      %5592 = vmatpush1.bf16.msra.mxu0 0
      %5593 = vmatprep.subr.bf16.mxu0 0
      %5594 = vmatpush1.bf16.msra.mxu0 0
      %5595 = vmatprep.subr.bf16.mxu0 0
      %5596 = vmatpush1.bf16.msra.mxu0 0
      %5597 = vmatprep.subr.bf16.mxu0 0
      %5598 = vmatpush1.bf16.msra.mxu0 0
      %5599 = vmatprep.subr.bf16.mxu0 0
      %5600 = vmatpush1.bf16.msra.mxu0 0
      %5601 = vmatprep.subr.bf16.mxu0 0
      %5602 = vmatpush1.bf16.msra.mxu0 0
      %5603 = vmatprep.subr.bf16.mxu0 0
      %5604 = vmatpush1.bf16.msra.mxu0 0
      %5605 = vmatprep.subr.bf16.mxu0 0
      %5606 = vmatpush1.bf16.msra.mxu0 0
      %5607 = vmatprep.subr.bf16.mxu0 0
      %5608 = vmatpush1.bf16.msra.mxu0 0
      %5609 = vmatprep.subr.bf16.mxu0 0
      %5610 = vmatpush1.bf16.msra.mxu0 0
      %5611 = vmatprep.subr.bf16.mxu0 0
      %5612 = vmatpush1.bf16.msra.mxu0 0
      %5613 = vmatprep.subr.bf16.mxu0 0
      %5614 = vmatpush1.bf16.msra.mxu0 0
      %5615 = vmatprep.subr.bf16.mxu0 0
      %5616 = vmatpush1.bf16.msra.mxu0 0
      %5617 = vmatprep.mubr.bf16.mxu0 0
      %5618 = vmatmul.mubr.bf16.gmra.mrb[0].mxu0 %v5538
      %v5619 = vpop.f32.mrb[0].mxu0
      %v5620 = vadd.f32 0.0, %v5619
      %v5621 = vpop.f32.mrb[0].mxu0
      %v5622 = vpop.f32.mrb[0].mxu0
      %v5623 = vadd.f32 0.0, %v5622
      %v5624 = vpop.f32.mrb[0].mxu0
      %5625 = vmatprep.mubr.bf16.mxu0 0
      %5626 = vmatmul.mubr.bf16.gmra.mrb[0].mxu0 %v5541
      %v5627 = vpop.f32.mrb[0].mxu0
      %v5628 = vadd.f32 0.0, %v5627
      %v5629 = vpop.f32.mrb[0].mxu0
      %v5630 = vpop.f32.mrb[0].mxu0
      %v5631 = vadd.f32 0.0, %v5630
      %v5632 = vpop.f32.mrb[0].mxu0
      %5633 = vmatprep.mubr.bf16.mxu0 0
      %5634 = vmatmul.mubr.bf16.gmra.mrb[0].mxu0 %v5544
      %v5635 = vpop.f32.mrb[0].mxu0
      %v5636 = vadd.f32 0.0, %v5635
      %v5637 = vpop.f32.mrb[0].mxu0
      %v5638 = vpop.f32.mrb[0].mxu0
      %v5639 = vadd.f32 0.0, %v5638
      %v5640 = vpop.f32.mrb[0].mxu0
      %5641 = vmatprep.mubr.bf16.mxu0 0
      %5642 = vmatmul.mubr.bf16.gmra.mrb[0].mxu0 %v5547
      %v5643 = vpop.f32.mrb[0].mxu0
      %v5644 = vadd.f32 0.0, %v5643
      %v5645 = vpop.f32.mrb[0].mxu0
      %v5646 = vpop.f32.mrb[0].mxu0
      %v5647 = vadd.f32 0.0, %v5646
      %v5648 = vpop.f32.mrb[0].mxu0
      %5649 = vmatprep.mubr.bf16.mxu0 0
      %5650 = vmatmul.mubr.bf16.gmra.mrb[0].mxu0 %v5550
      %v5651 = vpop.f32.mrb[0].mxu0
      %v5652 = vadd.f32 0.0, %v5651
      %v5653 = vpop.f32.mrb[0].mxu0
      %v5654 = vpop.f32.mrb[0].mxu0
      %v5655 = vadd.f32 0.0, %v5654
      %v5656 = vpop.f32.mrb[0].mxu0
      %5657 = vmatprep.mubr.bf16.mxu0 0
      %5658 = vmatmul.mubr.bf16.gmra.mrb[0].mxu0 %v5553
      %v5659 = vpop.f32.mrb[0].mxu0
      %v5660 = vadd.f32 0.0, %v5659
      %v5661 = vpop.f32.mrb[0].mxu0
      %v5662 = vpop.f32.mrb[0].mxu0
      %v5663 = vadd.f32 0.0, %v5662
      %v5664 = vpop.f32.mrb[0].mxu0
      %5665 = vmatprep.mubr.bf16.mxu0 0
      %5666 = vmatmul.mubr.bf16.gmra.mrb[0].mxu0 %v5556
      %v5667 = vpop.f32.mrb[0].mxu0
      %v5668 = vadd.f32 0.0, %v5667
      %v5669 = vpop.f32.mrb[0].mxu0
      %v5670 = vpop.f32.mrb[0].mxu0
      %v5671 = vadd.f32 0.0, %v5670
      %v5672 = vpop.f32.mrb[0].mxu0
      %5673 = vmatprep.mubr.bf16.mxu0 0
      %5674 = vmatmul.mubr.bf16.gmra.mrb[0].mxu0 %v5559
      %v5675 = vpop.f32.mrb[0].mxu0
      %v5676 = vadd.f32 0.0, %v5675
      %v5677 = vpop.f32.mrb[0].mxu0
      %v5678 = vpop.f32.mrb[0].mxu0
      %v5679 = vadd.f32 0.0, %v5678
      %v5680 = vpop.f32.mrb[0].mxu0
      %5681 = vmatprep.mubr.bf16.mxu0 0
      %5682 = vmatmul.mubr.bf16.gmra.mrb[0].mxu0 %v5562
      %v5683 = vpop.f32.mrb[0].mxu0
      %v5684 = vadd.f32 0.0, %v5683
      %v5685 = vpop.f32.mrb[0].mxu0
      %v5686 = vpop.f32.mrb[0].mxu0
      %v5687 = vadd.f32 0.0, %v5686
      %v5688 = vpop.f32.mrb[0].mxu0
      %5689 = vmatprep.mubr.bf16.mxu0 0
      %5690 = vmatmul.mubr.bf16.gmra.mrb[0].mxu0 %v5565
      %v5691 = vpop.f32.mrb[0].mxu0
      %v5692 = vadd.f32 0.0, %v5691
      %v5693 = vpop.f32.mrb[0].mxu0
      %v5694 = vpop.f32.mrb[0].mxu0
      %v5695 = vadd.f32 0.0, %v5694
      %v5696 = vpop.f32.mrb[0].mxu0
      %5697 = vmatprep.mubr.bf16.mxu0 0
      %5698 = vmatmul.mubr.bf16.gmra.mrb[0].mxu0 %v5568
      %v5699 = vpop.f32.mrb[0].mxu0
      %v5700 = vadd.f32 0.0, %v5699
      %v5701 = vpop.f32.mrb[0].mxu0
      %v5702 = vpop.f32.mrb[0].mxu0
      %v5703 = vadd.f32 0.0, %v5702
      %v5704 = vpop.f32.mrb[0].mxu0
      %5705 = vmatprep.mubr.bf16.mxu0 0
      %5706 = vmatmul.mubr.bf16.gmra.mrb[0].mxu0 %v5571
      %v5707 = vpop.f32.mrb[0].mxu0
      %v5708 = vadd.f32 0.0, %v5707
      %v5709 = vpop.f32.mrb[0].mxu0
      %v5710 = vpop.f32.mrb[0].mxu0
      %v5711 = vadd.f32 0.0, %v5710
      %v5712 = vpop.f32.mrb[0].mxu0
      %5713 = vmatprep.mubr.bf16.mxu0 0
      %5714 = vmatmul.mubr.bf16.gmra.mrb[0].mxu0 %v5574
      %v5715 = vpop.f32.mrb[0].mxu0
      %v5716 = vadd.f32 0.0, %v5715
      %v5717 = vpop.f32.mrb[0].mxu0
      %v5718 = vpop.f32.mrb[0].mxu0
      %v5719 = vadd.f32 0.0, %v5718
      %v5720 = vpop.f32.mrb[0].mxu0
      %5721 = vmatprep.mubr.bf16.mxu0 0
      %5722 = vmatmul.mubr.bf16.gmra.mrb[0].mxu0 %v5577
      %v5723 = vpop.f32.mrb[0].mxu0
      %v5724 = vadd.f32 0.0, %v5723
      %v5725 = vpop.f32.mrb[0].mxu0
      %v5726 = vpop.f32.mrb[0].mxu0
      %v5727 = vadd.f32 0.0, %v5726
      %v5728 = vpop.f32.mrb[0].mxu0
      %5729 = vmatprep.mubr.bf16.mxu0 0
      %5730 = vmatmul.mubr.bf16.gmra.mrb[0].mxu0 %v5580
      %v5731 = vpop.f32.mrb[0].mxu0
      %v5732 = vadd.f32 0.0, %v5731
      %v5733 = vpop.f32.mrb[0].mxu0
      %v5734 = vpop.f32.mrb[0].mxu0
      %v5735 = vadd.f32 0.0, %v5734
      %v5736 = vpop.f32.mrb[0].mxu0
      %5737 = vmatprep.mubr.bf16.mxu0 0
      %5738 = vmatmul.mubr.bf16.gmra.mrb[0].mxu0 %v5583
      %v5739 = vpop.f32.mrb[0].mxu0
      %v5740 = vadd.f32 0.0, %v5739
      %v5741 = vpop.f32.mrb[0].mxu0
      %v5742 = vpop.f32.mrb[0].mxu0
      %v5743 = vadd.f32 0.0, %v5742
      %v5744 = vpop.f32.mrb[0].mxu0
      %5745 = vdwg.mxu0
      %v5746 = vadd.f32 %v5265, %v5620
      %v5747 = vadd.f32 %v5266, %v5623
      %v5748 = vadd.f32 %v5267, %v5628
      %v5749 = vadd.f32 %v5268, %v5631
      %v5750 = vadd.f32 %v5269, %v5636
      %v5751 = vadd.f32 %v5270, %v5639
      %v5752 = vadd.f32 %v5271, %v5644
      %v5753 = vadd.f32 %v5272, %v5647
      %v5754 = vadd.f32 %v5273, %v5652
      %v5755 = vadd.f32 %v5274, %v5655
      %v5756 = vadd.f32 %v5275, %v5660
      %v5757 = vadd.f32 %v5276, %v5663
      %v5758 = vadd.f32 %v5277, %v5668
      %v5759 = vadd.f32 %v5278, %v5671
      %v5760 = vadd.f32 %v5279, %v5676
      %v5761 = vadd.f32 %v5280, %v5679
      %v5762 = vadd.f32 %v5281, %v5684
      %v5763 = vadd.f32 %v5282, %v5687
      %v5764 = vadd.f32 %v5283, %v5692
      %v5765 = vadd.f32 %v5284, %v5695
      %v5766 = vadd.f32 %v5285, %v5700
      %v5767 = vadd.f32 %v5286, %v5703
      %v5768 = vadd.f32 %v5287, %v5708
      %v5769 = vadd.f32 %v5288, %v5711
      %v5770 = vadd.f32 %v5289, %v5716
      %v5771 = vadd.f32 %v5290, %v5719
      %v5772 = vadd.f32 %v5291, %v5724
      %v5773 = vadd.f32 %v5292, %v5727
      %v5774 = vadd.f32 %v5293, %v5732
      %v5775 = vadd.f32 %v5294, %v5735
      %v5776 = vadd.f32 %v5295, %v5740
      %v5777 = vadd.f32 %v5296, %v5743
      %s5778 = sadd.s32 %s264, 1
      %s5779 = smul.u32 %s5778, 3
      %s5780 = smul.addr %s5779, 4
      %s5781 = scalar_lea.vmem %s254, %s5780
      %v5782 = vld [vmem:[%s5781] sm:$0xf]
      %v5783 = vld [vmem:[%s5781 + $0x4] sm:$0xf]
      %v5784 = vld [vmem:[%s5781 + $0xc] sm:$0xf]
      %v5785 = vld [vmem:[%s5781 + $0x10] sm:$0xf]
      %v5786 = vld [vmem:[%s5781 + $0x18] sm:$0xf]
      %v5787 = vld [vmem:[%s5781 + $0x1c] sm:$0xf]
      %v5788 = vld [vmem:[%s5781 + $0x24] sm:$0xf]
      %v5789 = vld [vmem:[%s5781 + $0x28] sm:$0xf]
      %v5790 = vld [vmem:[%s5781 + $0x30] sm:$0xf]
      %v5791 = vld [vmem:[%s5781 + $0x34] sm:$0xf]
      %v5792 = vld [vmem:[%s5781 + $0x3c] sm:$0xf]
      %v5793 = vld [vmem:[%s5781 + $0x40] sm:$0xf]
      %v5794 = vld [vmem:[%s5781 + $0x48] sm:$0xf]
      %v5795 = vld [vmem:[%s5781 + $0x4c] sm:$0xf]
      %v5796 = vld [vmem:[%s5781 + $0x54] sm:$0xf]
      %v5797 = vld [vmem:[%s5781 + $0x58] sm:$0xf]
      %v5798 = vld [vmem:[%s5781 + $0x60] sm:$0xf]
      %v5799 = vld [vmem:[%s5781 + $0x64] sm:$0xf]
      %v5800 = vld [vmem:[%s5781 + $0x6c] sm:$0xf]
      %v5801 = vld [vmem:[%s5781 + $0x70] sm:$0xf]
      %v5802 = vld [vmem:[%s5781 + $0x78] sm:$0xf]
      %v5803 = vld [vmem:[%s5781 + $0x7c] sm:$0xf]
      %v5804 = vld [vmem:[%s5781 + $0x84] sm:$0xf]
      %v5805 = vld [vmem:[%s5781 + $0x88] sm:$0xf]
      %v5806 = vld [vmem:[%s5781 + $0x90] sm:$0xf]
      %v5807 = vld [vmem:[%s5781 + $0x94] sm:$0xf]
      %v5808 = vld [vmem:[%s5781 + $0x9c] sm:$0xf]
      %v5809 = vld [vmem:[%s5781 + $0xa0] sm:$0xf]
      %v5810 = vld [vmem:[%s5781 + $0xa8] sm:$0xf]
      %v5811 = vld [vmem:[%s5781 + $0xac] sm:$0xf]
      %v5812 = vld [vmem:[%s5781 + $0xb4] sm:$0xf]
      %v5813 = vld [vmem:[%s5781 + $0xb8] sm:$0xf]
      %v5814 = vld [vmem:[%s3 + $0x30] sm:$0xf]
      %v5815 = vld [vmem:[%s3 + $0x34] sm:$0xf]
      %v5816 = vld [vmem:[%s3 + $0x38] sm:$0xf]
      %v5817 = vld [vmem:[%s3 + $0x3c] sm:$0xf]
      %v5850 = vunpack.c.l.b16 %v5782
      %v5851 = vunpack.c.l.b16 %v5783
      %v5852 = vunpack.c.l.b16 %v5784
      %v5853 = vunpack.c.l.b16 %v5785
      %v5854 = vunpack.c.l.b16 %v5786
      %v5855 = vunpack.c.l.b16 %v5787
      %v5856 = vunpack.c.l.b16 %v5788
      %v5857 = vunpack.c.l.b16 %v5789
      %v5858 = vunpack.c.l.b16 %v5790
      %v5859 = vunpack.c.l.b16 %v5791
      %v5860 = vunpack.c.l.b16 %v5792
      %v5861 = vunpack.c.l.b16 %v5793
      %v5862 = vunpack.c.l.b16 %v5794
      %v5863 = vunpack.c.l.b16 %v5795
      %v5864 = vunpack.c.l.b16 %v5796
      %v5865 = vunpack.c.l.b16 %v5797
      %v5866 = vunpack.c.l.b16 %v5798
      %v5867 = vunpack.c.l.b16 %v5799
      %v5868 = vunpack.c.l.b16 %v5800
      %v5869 = vunpack.c.l.b16 %v5801
      %v5870 = vunpack.c.l.b16 %v5802
      %v5871 = vunpack.c.l.b16 %v5803
      %v5872 = vunpack.c.l.b16 %v5804
      %v5873 = vunpack.c.l.b16 %v5805
      %v5874 = vunpack.c.l.b16 %v5806
      %v5875 = vunpack.c.l.b16 %v5807
      %v5876 = vunpack.c.l.b16 %v5808
      %v5877 = vunpack.c.l.b16 %v5809
      %v5878 = vunpack.c.l.b16 %v5810
      %v5879 = vunpack.c.l.b16 %v5811
      %v5880 = vunpack.c.l.b16 %v5812
      %v5881 = vunpack.c.l.b16 %v5813
      %v5882 = vpack.c.b16 %v5851, %v5850
      %v5883 = vpack.c.b16 %v5853, %v5852
      %v5884 = vpack.c.b16 %v5855, %v5854
      %v5885 = vpack.c.b16 %v5857, %v5856
      %v5886 = vpack.c.b16 %v5859, %v5858
      %v5887 = vpack.c.b16 %v5861, %v5860
      %v5888 = vpack.c.b16 %v5863, %v5862
      %v5889 = vpack.c.b16 %v5865, %v5864
      %v5890 = vpack.c.b16 %v5867, %v5866
      %v5891 = vpack.c.b16 %v5869, %v5868
      %v5892 = vpack.c.b16 %v5871, %v5870
      %v5893 = vpack.c.b16 %v5873, %v5872
      %v5894 = vpack.c.b16 %v5875, %v5874
      %v5895 = vpack.c.b16 %v5877, %v5876
      %v5896 = vpack.c.b16 %v5879, %v5878
      %v5897 = vpack.c.b16 %v5881, %v5880
      %v5902 = vunpack.c.l.b16 %v5814
      %v5903 = vunpack.c.l.b16 %v5815
      %v5904 = vunpack.c.l.b16 %v5816
      %v5905 = vunpack.c.l.b16 %v5817
      %v5906 = vpack.c.b16 %v5903, %v5902
      %v5907 = vpack.c.b16 %v5905, %v5904
      %v5911 = vsel %vm4315, %v5882, 0
      %v5914 = vsel %vm4315, %v5883, 0
      %v5917 = vsel %vm4315, %v5884, 0
      %v5920 = vsel %vm4315, %v5885, 0
      %v5923 = vsel %vm4315, %v5886, 0
      %v5926 = vsel %vm4315, %v5887, 0
      %v5929 = vsel %vm4315, %v5888, 0
      %v5932 = vsel %vm4315, %v5889, 0
      %v5935 = vsel %vm4315, %v5890, 0
      %v5938 = vsel %vm4315, %v5891, 0
      %v5941 = vsel %vm4315, %v5892, 0
      %v5944 = vsel %vm4315, %v5893, 0
      %v5947 = vsel %vm4315, %v5894, 0
      %v5950 = vsel %vm4315, %v5895, 0
      %v5953 = vsel %vm4315, %v5896, 0
      %v5956 = vsel %vm4315, %v5897, 0
      %5958 = vmatprep.subr.bf16.mxu0 0
      %5959 = vmatpush1.bf16.msra.mxu0 %v5906
      %5960 = vmatprep.subr.bf16.mxu0 0
      %5961 = vmatpush1.bf16.msra.mxu0 %v5907
      %5962 = vmatprep.subr.bf16.mxu0 0
      %5963 = vmatpush1.bf16.msra.mxu0 0
      %5964 = vmatprep.subr.bf16.mxu0 0
      %5965 = vmatpush1.bf16.msra.mxu0 0
      %5966 = vmatprep.subr.bf16.mxu0 0
      %5967 = vmatpush1.bf16.msra.mxu0 0
      %5968 = vmatprep.subr.bf16.mxu0 0
      %5969 = vmatpush1.bf16.msra.mxu0 0
      %5970 = vmatprep.subr.bf16.mxu0 0
      %5971 = vmatpush1.bf16.msra.mxu0 0
      %5972 = vmatprep.subr.bf16.mxu0 0
      %5973 = vmatpush1.bf16.msra.mxu0 0
      %5974 = vmatprep.subr.bf16.mxu0 0
      %5975 = vmatpush1.bf16.msra.mxu0 0
      %5976 = vmatprep.subr.bf16.mxu0 0
      %5977 = vmatpush1.bf16.msra.mxu0 0
      %5978 = vmatprep.subr.bf16.mxu0 0
      %5979 = vmatpush1.bf16.msra.mxu0 0
      %5980 = vmatprep.subr.bf16.mxu0 0
      %5981 = vmatpush1.bf16.msra.mxu0 0
      %5982 = vmatprep.subr.bf16.mxu0 0
      %5983 = vmatpush1.bf16.msra.mxu0 0
      %5984 = vmatprep.subr.bf16.mxu0 0
      %5985 = vmatpush1.bf16.msra.mxu0 0
      %5986 = vmatprep.subr.bf16.mxu0 0
      %5987 = vmatpush1.bf16.msra.mxu0 0
      %5988 = vmatprep.subr.bf16.mxu0 0
      %5989 = vmatpush1.bf16.msra.mxu0 0
      %5990 = vmatprep.mubr.bf16.mxu0 0
      %5991 = vmatmul.mubr.bf16.gmra.mrb[0].mxu0 %v5911
      %v5992 = vpop.f32.mrb[0].mxu0
      %v5993 = vadd.f32 0.0, %v5992
      %v5994 = vpop.f32.mrb[0].mxu0
      %v5995 = vpop.f32.mrb[0].mxu0
      %v5996 = vadd.f32 0.0, %v5995
      %v5997 = vpop.f32.mrb[0].mxu0
      %5998 = vmatprep.mubr.bf16.mxu0 0
      %5999 = vmatmul.mubr.bf16.gmra.mrb[0].mxu0 %v5914
      %v6000 = vpop.f32.mrb[0].mxu0
      %v6001 = vadd.f32 0.0, %v6000
      %v6002 = vpop.f32.mrb[0].mxu0
      %v6003 = vpop.f32.mrb[0].mxu0
      %v6004 = vadd.f32 0.0, %v6003
      %v6005 = vpop.f32.mrb[0].mxu0
      %6006 = vmatprep.mubr.bf16.mxu0 0
      %6007 = vmatmul.mubr.bf16.gmra.mrb[0].mxu0 %v5917
      %v6008 = vpop.f32.mrb[0].mxu0
      %v6009 = vadd.f32 0.0, %v6008
      %v6010 = vpop.f32.mrb[0].mxu0
      %v6011 = vpop.f32.mrb[0].mxu0
      %v6012 = vadd.f32 0.0, %v6011
      %v6013 = vpop.f32.mrb[0].mxu0
      %6014 = vmatprep.mubr.bf16.mxu0 0
      %6015 = vmatmul.mubr.bf16.gmra.mrb[0].mxu0 %v5920
      %v6016 = vpop.f32.mrb[0].mxu0
      %v6017 = vadd.f32 0.0, %v6016
      %v6018 = vpop.f32.mrb[0].mxu0
      %v6019 = vpop.f32.mrb[0].mxu0
      %v6020 = vadd.f32 0.0, %v6019
      %v6021 = vpop.f32.mrb[0].mxu0
      %6022 = vmatprep.mubr.bf16.mxu0 0
      %6023 = vmatmul.mubr.bf16.gmra.mrb[0].mxu0 %v5923
      %v6024 = vpop.f32.mrb[0].mxu0
      %v6025 = vadd.f32 0.0, %v6024
      %v6026 = vpop.f32.mrb[0].mxu0
      %v6027 = vpop.f32.mrb[0].mxu0
      %v6028 = vadd.f32 0.0, %v6027
      %v6029 = vpop.f32.mrb[0].mxu0
      %6030 = vmatprep.mubr.bf16.mxu0 0
      %6031 = vmatmul.mubr.bf16.gmra.mrb[0].mxu0 %v5926
      %v6032 = vpop.f32.mrb[0].mxu0
      %v6033 = vadd.f32 0.0, %v6032
      %v6034 = vpop.f32.mrb[0].mxu0
      %v6035 = vpop.f32.mrb[0].mxu0
      %v6036 = vadd.f32 0.0, %v6035
      %v6037 = vpop.f32.mrb[0].mxu0
      %6038 = vmatprep.mubr.bf16.mxu0 0
      %6039 = vmatmul.mubr.bf16.gmra.mrb[0].mxu0 %v5929
      %v6040 = vpop.f32.mrb[0].mxu0
      %v6041 = vadd.f32 0.0, %v6040
      %v6042 = vpop.f32.mrb[0].mxu0
      %v6043 = vpop.f32.mrb[0].mxu0
      %v6044 = vadd.f32 0.0, %v6043
      %v6045 = vpop.f32.mrb[0].mxu0
      %6046 = vmatprep.mubr.bf16.mxu0 0
      %6047 = vmatmul.mubr.bf16.gmra.mrb[0].mxu0 %v5932
      %v6048 = vpop.f32.mrb[0].mxu0
      %v6049 = vadd.f32 0.0, %v6048
      %v6050 = vpop.f32.mrb[0].mxu0
      %v6051 = vpop.f32.mrb[0].mxu0
      %v6052 = vadd.f32 0.0, %v6051
      %v6053 = vpop.f32.mrb[0].mxu0
      %6054 = vmatprep.mubr.bf16.mxu0 0
      %6055 = vmatmul.mubr.bf16.gmra.mrb[0].mxu0 %v5935
      %v6056 = vpop.f32.mrb[0].mxu0
      %v6057 = vadd.f32 0.0, %v6056
      %v6058 = vpop.f32.mrb[0].mxu0
      %v6059 = vpop.f32.mrb[0].mxu0
      %v6060 = vadd.f32 0.0, %v6059
      %v6061 = vpop.f32.mrb[0].mxu0
      %6062 = vmatprep.mubr.bf16.mxu0 0
      %6063 = vmatmul.mubr.bf16.gmra.mrb[0].mxu0 %v5938
      %v6064 = vpop.f32.mrb[0].mxu0
      %v6065 = vadd.f32 0.0, %v6064
      %v6066 = vpop.f32.mrb[0].mxu0
      %v6067 = vpop.f32.mrb[0].mxu0
      %v6068 = vadd.f32 0.0, %v6067
      %v6069 = vpop.f32.mrb[0].mxu0
      %6070 = vmatprep.mubr.bf16.mxu0 0
      %6071 = vmatmul.mubr.bf16.gmra.mrb[0].mxu0 %v5941
      %v6072 = vpop.f32.mrb[0].mxu0
      %v6073 = vadd.f32 0.0, %v6072
      %v6074 = vpop.f32.mrb[0].mxu0
      %v6075 = vpop.f32.mrb[0].mxu0
      %v6076 = vadd.f32 0.0, %v6075
      %v6077 = vpop.f32.mrb[0].mxu0
      %6078 = vmatprep.mubr.bf16.mxu0 0
      %6079 = vmatmul.mubr.bf16.gmra.mrb[0].mxu0 %v5944
      %v6080 = vpop.f32.mrb[0].mxu0
      %v6081 = vadd.f32 0.0, %v6080
      %v6082 = vpop.f32.mrb[0].mxu0
      %v6083 = vpop.f32.mrb[0].mxu0
      %v6084 = vadd.f32 0.0, %v6083
      %v6085 = vpop.f32.mrb[0].mxu0
      %6086 = vmatprep.mubr.bf16.mxu0 0
      %6087 = vmatmul.mubr.bf16.gmra.mrb[0].mxu0 %v5947
      %v6088 = vpop.f32.mrb[0].mxu0
      %v6089 = vadd.f32 0.0, %v6088
      %v6090 = vpop.f32.mrb[0].mxu0
      %v6091 = vpop.f32.mrb[0].mxu0
      %v6092 = vadd.f32 0.0, %v6091
      %v6093 = vpop.f32.mrb[0].mxu0
      %6094 = vmatprep.mubr.bf16.mxu0 0
      %6095 = vmatmul.mubr.bf16.gmra.mrb[0].mxu0 %v5950
      %v6096 = vpop.f32.mrb[0].mxu0
      %v6097 = vadd.f32 0.0, %v6096
      %v6098 = vpop.f32.mrb[0].mxu0
      %v6099 = vpop.f32.mrb[0].mxu0
      %v6100 = vadd.f32 0.0, %v6099
      %v6101 = vpop.f32.mrb[0].mxu0
      %6102 = vmatprep.mubr.bf16.mxu0 0
      %6103 = vmatmul.mubr.bf16.gmra.mrb[0].mxu0 %v5953
      %v6104 = vpop.f32.mrb[0].mxu0
      %v6105 = vadd.f32 0.0, %v6104
      %v6106 = vpop.f32.mrb[0].mxu0
      %v6107 = vpop.f32.mrb[0].mxu0
      %v6108 = vadd.f32 0.0, %v6107
      %v6109 = vpop.f32.mrb[0].mxu0
      %6110 = vmatprep.mubr.bf16.mxu0 0
      %6111 = vmatmul.mubr.bf16.gmra.mrb[0].mxu0 %v5956
      %v6112 = vpop.f32.mrb[0].mxu0
      %v6113 = vadd.f32 0.0, %v6112
      %v6114 = vpop.f32.mrb[0].mxu0
      %v6115 = vpop.f32.mrb[0].mxu0
      %v6116 = vadd.f32 0.0, %v6115
      %v6117 = vpop.f32.mrb[0].mxu0
      %6118 = vdwg.mxu0
      %v6119 = vadd.f32 %v5746, %v5993
      %v6120 = vadd.f32 %v5747, %v5996
      %v6121 = vadd.f32 %v5748, %v6001
      %v6122 = vadd.f32 %v5749, %v6004
      %v6123 = vadd.f32 %v5750, %v6009
      %v6124 = vadd.f32 %v5751, %v6012
      %v6125 = vadd.f32 %v5752, %v6017
      %v6126 = vadd.f32 %v5753, %v6020
      %v6127 = vadd.f32 %v5754, %v6025
      %v6128 = vadd.f32 %v5755, %v6028
      %v6129 = vadd.f32 %v5756, %v6033
      %v6130 = vadd.f32 %v5757, %v6036
      %v6131 = vadd.f32 %v5758, %v6041
      %v6132 = vadd.f32 %v5759, %v6044
      %v6133 = vadd.f32 %v5760, %v6049
      %v6134 = vadd.f32 %v5761, %v6052
      %v6135 = vadd.f32 %v5762, %v6057
      %v6136 = vadd.f32 %v5763, %v6060
      %v6137 = vadd.f32 %v5764, %v6065
      %v6138 = vadd.f32 %v5765, %v6068
      %v6139 = vadd.f32 %v5766, %v6073
      %v6140 = vadd.f32 %v5767, %v6076
      %v6141 = vadd.f32 %v5768, %v6081
      %v6142 = vadd.f32 %v5769, %v6084
      %v6143 = vadd.f32 %v5770, %v6089
      %v6144 = vadd.f32 %v5771, %v6092
      %v6145 = vadd.f32 %v5772, %v6097
      %v6146 = vadd.f32 %v5773, %v6100
      %v6147 = vadd.f32 %v5774, %v6105
      %v6148 = vadd.f32 %v5775, %v6108
      %v6149 = vadd.f32 %v5776, %v6113
      %v6150 = vadd.f32 %v5777, %v6116
      %v6151 = vld [vmem:[%s5781] sm:$0xf]
      %v6152 = vld [vmem:[%s5781 + $0x4] sm:$0xf]
      %v6153 = vld [vmem:[%s5781 + $0x8] sm:$0x1]
      %v6154 = vld [vmem:[%s5781 + $0xc] sm:$0xf]
      %v6155 = vld [vmem:[%s5781 + $0x10] sm:$0xf]
      %v6156 = vld [vmem:[%s5781 + $0x14] sm:$0x1]
      %v6157 = vld [vmem:[%s5781 + $0x18] sm:$0xf]
      %v6158 = vld [vmem:[%s5781 + $0x1c] sm:$0xf]
      %v6159 = vld [vmem:[%s5781 + $0x20] sm:$0x1]
      %v6160 = vld [vmem:[%s5781 + $0x24] sm:$0xf]
      %v6161 = vld [vmem:[%s5781 + $0x28] sm:$0xf]
      %v6162 = vld [vmem:[%s5781 + $0x2c] sm:$0x1]
      %v6163 = vld [vmem:[%s5781 + $0x30] sm:$0xf]
      %v6164 = vld [vmem:[%s5781 + $0x34] sm:$0xf]
      %v6165 = vld [vmem:[%s5781 + $0x38] sm:$0x1]
      %v6166 = vld [vmem:[%s5781 + $0x3c] sm:$0xf]
      %v6167 = vld [vmem:[%s5781 + $0x40] sm:$0xf]
      %v6168 = vld [vmem:[%s5781 + $0x44] sm:$0x1]
      %v6169 = vld [vmem:[%s5781 + $0x48] sm:$0xf]
      %v6170 = vld [vmem:[%s5781 + $0x4c] sm:$0xf]
      %v6171 = vld [vmem:[%s5781 + $0x50] sm:$0x1]
      %v6172 = vld [vmem:[%s5781 + $0x54] sm:$0xf]
      %v6173 = vld [vmem:[%s5781 + $0x58] sm:$0xf]
      %v6174 = vld [vmem:[%s5781 + $0x5c] sm:$0x1]
      %v6175 = vld [vmem:[%s5781 + $0x60] sm:$0xf]
      %v6176 = vld [vmem:[%s5781 + $0x64] sm:$0xf]
      %v6177 = vld [vmem:[%s5781 + $0x68] sm:$0x1]
      %v6178 = vld [vmem:[%s5781 + $0x6c] sm:$0xf]
      %v6179 = vld [vmem:[%s5781 + $0x70] sm:$0xf]
      %v6180 = vld [vmem:[%s5781 + $0x74] sm:$0x1]
      %v6181 = vld [vmem:[%s5781 + $0x78] sm:$0xf]
      %v6182 = vld [vmem:[%s5781 + $0x7c] sm:$0xf]
      %v6183 = vld [vmem:[%s5781 + $0x80] sm:$0x1]
      %v6184 = vld [vmem:[%s5781 + $0x84] sm:$0xf]
      %v6185 = vld [vmem:[%s5781 + $0x88] sm:$0xf]
      %v6186 = vld [vmem:[%s5781 + $0x8c] sm:$0x1]
      %v6187 = vld [vmem:[%s5781 + $0x90] sm:$0xf]
      %v6188 = vld [vmem:[%s5781 + $0x94] sm:$0xf]
      %v6189 = vld [vmem:[%s5781 + $0x98] sm:$0x1]
      %v6190 = vld [vmem:[%s5781 + $0x9c] sm:$0xf]
      %v6191 = vld [vmem:[%s5781 + $0xa0] sm:$0xf]
      %v6192 = vld [vmem:[%s5781 + $0xa4] sm:$0x1]
      %v6193 = vld [vmem:[%s5781 + $0xa8] sm:$0xf]
      %v6194 = vld [vmem:[%s5781 + $0xac] sm:$0xf]
      %v6195 = vld [vmem:[%s5781 + $0xb0] sm:$0x1]
      %v6196 = vld [vmem:[%s5781 + $0xb4] sm:$0xf]
      %v6197 = vld [vmem:[%s5781 + $0xb8] sm:$0xf]
      %v6198 = vld [vmem:[%s5781 + $0xbc] sm:$0x1]
      %v6200 = vshrl.u32 %v6151, 16
      %v6202 = vrot.slane %v6200, 4
      %v6203 = vshll.u32 %v6151, 16
      %v6205 = vrot.slane %v6203, 5
      %v6206 = vor.u32 %v6202, %v6205
      %v6207 = vrot.slane %v6206, 4
      %v6209 = vshll.u32 %v6152, 16
      %v6211 = vrot.slane %v6209, 5
      %v6212 = vsel %vm4607, %v6207, %v6211
      %v6213 = vshrl.u32 %v6152, 16
      %v6215 = vrot.slane %v6213, 4
      %v6216 = vor.u32 %v6215, %v6211
      %v6217 = vrot.slane %v6216, 4
      %v6219 = vshll.u32 %v6153, 16
      %v6221 = vrot.slane %v6219, 5
      %v6222 = vsel %vm4607, %v6217, %v6221
      %v6224 = vshrl.u32 %v6154, 16
      %v6226 = vrot.slane %v6224, 4
      %v6227 = vshll.u32 %v6154, 16
      %v6229 = vrot.slane %v6227, 5
      %v6230 = vor.u32 %v6226, %v6229
      %v6231 = vrot.slane %v6230, 4
      %v6233 = vshll.u32 %v6155, 16
      %v6235 = vrot.slane %v6233, 5
      %v6236 = vsel %vm4607, %v6231, %v6235
      %v6237 = vshrl.u32 %v6155, 16
      %v6239 = vrot.slane %v6237, 4
      %v6240 = vor.u32 %v6239, %v6235
      %v6241 = vrot.slane %v6240, 4
      %v6243 = vshll.u32 %v6156, 16
      %v6245 = vrot.slane %v6243, 5
      %v6246 = vsel %vm4607, %v6241, %v6245
      %v6248 = vshrl.u32 %v6157, 16
      %v6250 = vrot.slane %v6248, 4
      %v6251 = vshll.u32 %v6157, 16
      %v6253 = vrot.slane %v6251, 5
      %v6254 = vor.u32 %v6250, %v6253
      %v6255 = vrot.slane %v6254, 4
      %v6257 = vshll.u32 %v6158, 16
      %v6259 = vrot.slane %v6257, 5
      %v6260 = vsel %vm4607, %v6255, %v6259
      %v6261 = vshrl.u32 %v6158, 16
      %v6263 = vrot.slane %v6261, 4
      %v6264 = vor.u32 %v6263, %v6259
      %v6265 = vrot.slane %v6264, 4
      %v6267 = vshll.u32 %v6159, 16
      %v6269 = vrot.slane %v6267, 5
      %v6270 = vsel %vm4607, %v6265, %v6269
      %v6272 = vshrl.u32 %v6160, 16
      %v6274 = vrot.slane %v6272, 4
      %v6275 = vshll.u32 %v6160, 16
      %v6277 = vrot.slane %v6275, 5
      %v6278 = vor.u32 %v6274, %v6277
      %v6279 = vrot.slane %v6278, 4
      %v6281 = vshll.u32 %v6161, 16
      %v6283 = vrot.slane %v6281, 5
      %v6284 = vsel %vm4607, %v6279, %v6283
      %v6285 = vshrl.u32 %v6161, 16
      %v6287 = vrot.slane %v6285, 4
      %v6288 = vor.u32 %v6287, %v6283
      %v6289 = vrot.slane %v6288, 4
      %v6291 = vshll.u32 %v6162, 16
      %v6293 = vrot.slane %v6291, 5
      %v6294 = vsel %vm4607, %v6289, %v6293
      %v6296 = vshrl.u32 %v6163, 16
      %v6298 = vrot.slane %v6296, 4
      %v6299 = vshll.u32 %v6163, 16
      %v6301 = vrot.slane %v6299, 5
      %v6302 = vor.u32 %v6298, %v6301
      %v6303 = vrot.slane %v6302, 4
      %v6305 = vshll.u32 %v6164, 16
      %v6307 = vrot.slane %v6305, 5
      %v6308 = vsel %vm4607, %v6303, %v6307
      %v6309 = vshrl.u32 %v6164, 16
      %v6311 = vrot.slane %v6309, 4
      %v6312 = vor.u32 %v6311, %v6307
      %v6313 = vrot.slane %v6312, 4
      %v6315 = vshll.u32 %v6165, 16
      %v6317 = vrot.slane %v6315, 5
      %v6318 = vsel %vm4607, %v6313, %v6317
      %v6320 = vshrl.u32 %v6166, 16
      %v6322 = vrot.slane %v6320, 4
      %v6323 = vshll.u32 %v6166, 16
      %v6325 = vrot.slane %v6323, 5
      %v6326 = vor.u32 %v6322, %v6325
      %v6327 = vrot.slane %v6326, 4
      %v6329 = vshll.u32 %v6167, 16
      %v6331 = vrot.slane %v6329, 5
      %v6332 = vsel %vm4607, %v6327, %v6331
      %v6333 = vshrl.u32 %v6167, 16
      %v6335 = vrot.slane %v6333, 4
      %v6336 = vor.u32 %v6335, %v6331
      %v6337 = vrot.slane %v6336, 4
      %v6339 = vshll.u32 %v6168, 16
      %v6341 = vrot.slane %v6339, 5
      %v6342 = vsel %vm4607, %v6337, %v6341
      %v6344 = vshrl.u32 %v6169, 16
      %v6346 = vrot.slane %v6344, 4
      %v6347 = vshll.u32 %v6169, 16
      %v6349 = vrot.slane %v6347, 5
      %v6350 = vor.u32 %v6346, %v6349
      %v6351 = vrot.slane %v6350, 4
      %v6353 = vshll.u32 %v6170, 16
      %v6355 = vrot.slane %v6353, 5
      %v6356 = vsel %vm4607, %v6351, %v6355
      %v6357 = vshrl.u32 %v6170, 16
      %v6359 = vrot.slane %v6357, 4
      %v6360 = vor.u32 %v6359, %v6355
      %v6361 = vrot.slane %v6360, 4
      %v6363 = vshll.u32 %v6171, 16
      %v6365 = vrot.slane %v6363, 5
      %v6366 = vsel %vm4607, %v6361, %v6365
      %v6368 = vshrl.u32 %v6172, 16
      %v6370 = vrot.slane %v6368, 4
      %v6371 = vshll.u32 %v6172, 16
      %v6373 = vrot.slane %v6371, 5
      %v6374 = vor.u32 %v6370, %v6373
      %v6375 = vrot.slane %v6374, 4
      %v6377 = vshll.u32 %v6173, 16
      %v6379 = vrot.slane %v6377, 5
      %v6380 = vsel %vm4607, %v6375, %v6379
      %v6381 = vshrl.u32 %v6173, 16
      %v6383 = vrot.slane %v6381, 4
      %v6384 = vor.u32 %v6383, %v6379
      %v6385 = vrot.slane %v6384, 4
      %v6387 = vshll.u32 %v6174, 16
      %v6389 = vrot.slane %v6387, 5
      %v6390 = vsel %vm4607, %v6385, %v6389
      %v6392 = vshrl.u32 %v6175, 16
      %v6394 = vrot.slane %v6392, 4
      %v6395 = vshll.u32 %v6175, 16
      %v6397 = vrot.slane %v6395, 5
      %v6398 = vor.u32 %v6394, %v6397
      %v6399 = vrot.slane %v6398, 4
      %v6401 = vshll.u32 %v6176, 16
      %v6403 = vrot.slane %v6401, 5
      %v6404 = vsel %vm4607, %v6399, %v6403
      %v6405 = vshrl.u32 %v6176, 16
      %v6407 = vrot.slane %v6405, 4
      %v6408 = vor.u32 %v6407, %v6403
      %v6409 = vrot.slane %v6408, 4
      %v6411 = vshll.u32 %v6177, 16
      %v6413 = vrot.slane %v6411, 5
      %v6414 = vsel %vm4607, %v6409, %v6413
      %v6416 = vshrl.u32 %v6178, 16
      %v6418 = vrot.slane %v6416, 4
      %v6419 = vshll.u32 %v6178, 16
      %v6421 = vrot.slane %v6419, 5
      %v6422 = vor.u32 %v6418, %v6421
      %v6423 = vrot.slane %v6422, 4
      %v6425 = vshll.u32 %v6179, 16
      %v6427 = vrot.slane %v6425, 5
      %v6428 = vsel %vm4607, %v6423, %v6427
      %v6429 = vshrl.u32 %v6179, 16
      %v6431 = vrot.slane %v6429, 4
      %v6432 = vor.u32 %v6431, %v6427
      %v6433 = vrot.slane %v6432, 4
      %v6435 = vshll.u32 %v6180, 16
      %v6437 = vrot.slane %v6435, 5
      %v6438 = vsel %vm4607, %v6433, %v6437
      %v6440 = vshrl.u32 %v6181, 16
      %v6442 = vrot.slane %v6440, 4
      %v6443 = vshll.u32 %v6181, 16
      %v6445 = vrot.slane %v6443, 5
      %v6446 = vor.u32 %v6442, %v6445
      %v6447 = vrot.slane %v6446, 4
      %v6449 = vshll.u32 %v6182, 16
      %v6451 = vrot.slane %v6449, 5
      %v6452 = vsel %vm4607, %v6447, %v6451
      %v6453 = vshrl.u32 %v6182, 16
      %v6455 = vrot.slane %v6453, 4
      %v6456 = vor.u32 %v6455, %v6451
      %v6457 = vrot.slane %v6456, 4
      %v6459 = vshll.u32 %v6183, 16
      %v6461 = vrot.slane %v6459, 5
      %v6462 = vsel %vm4607, %v6457, %v6461
      %v6464 = vshrl.u32 %v6184, 16
      %v6466 = vrot.slane %v6464, 4
      %v6467 = vshll.u32 %v6184, 16
      %v6469 = vrot.slane %v6467, 5
      %v6470 = vor.u32 %v6466, %v6469
      %v6471 = vrot.slane %v6470, 4
      %v6473 = vshll.u32 %v6185, 16
      %v6475 = vrot.slane %v6473, 5
      %v6476 = vsel %vm4607, %v6471, %v6475
      %v6477 = vshrl.u32 %v6185, 16
      %v6479 = vrot.slane %v6477, 4
      %v6480 = vor.u32 %v6479, %v6475
      %v6481 = vrot.slane %v6480, 4
      %v6483 = vshll.u32 %v6186, 16
      %v6485 = vrot.slane %v6483, 5
      %v6486 = vsel %vm4607, %v6481, %v6485
      %v6488 = vshrl.u32 %v6187, 16
      %v6490 = vrot.slane %v6488, 4
      %v6491 = vshll.u32 %v6187, 16
      %v6493 = vrot.slane %v6491, 5
      %v6494 = vor.u32 %v6490, %v6493
      %v6495 = vrot.slane %v6494, 4
      %v6497 = vshll.u32 %v6188, 16
      %v6499 = vrot.slane %v6497, 5
      %v6500 = vsel %vm4607, %v6495, %v6499
      %v6501 = vshrl.u32 %v6188, 16
      %v6503 = vrot.slane %v6501, 4
      %v6504 = vor.u32 %v6503, %v6499
      %v6505 = vrot.slane %v6504, 4
      %v6507 = vshll.u32 %v6189, 16
      %v6509 = vrot.slane %v6507, 5
      %v6510 = vsel %vm4607, %v6505, %v6509
      %v6512 = vshrl.u32 %v6190, 16
      %v6514 = vrot.slane %v6512, 4
      %v6515 = vshll.u32 %v6190, 16
      %v6517 = vrot.slane %v6515, 5
      %v6518 = vor.u32 %v6514, %v6517
      %v6519 = vrot.slane %v6518, 4
      %v6521 = vshll.u32 %v6191, 16
      %v6523 = vrot.slane %v6521, 5
      %v6524 = vsel %vm4607, %v6519, %v6523
      %v6525 = vshrl.u32 %v6191, 16
      %v6527 = vrot.slane %v6525, 4
      %v6528 = vor.u32 %v6527, %v6523
      %v6529 = vrot.slane %v6528, 4
      %v6531 = vshll.u32 %v6192, 16
      %v6533 = vrot.slane %v6531, 5
      %v6534 = vsel %vm4607, %v6529, %v6533
      %v6536 = vshrl.u32 %v6193, 16
      %v6538 = vrot.slane %v6536, 4
      %v6539 = vshll.u32 %v6193, 16
      %v6541 = vrot.slane %v6539, 5
      %v6542 = vor.u32 %v6538, %v6541
      %v6543 = vrot.slane %v6542, 4
      %v6545 = vshll.u32 %v6194, 16
      %v6547 = vrot.slane %v6545, 5
      %v6548 = vsel %vm4607, %v6543, %v6547
      %v6549 = vshrl.u32 %v6194, 16
      %v6551 = vrot.slane %v6549, 4
      %v6552 = vor.u32 %v6551, %v6547
      %v6553 = vrot.slane %v6552, 4
      %v6555 = vshll.u32 %v6195, 16
      %v6557 = vrot.slane %v6555, 5
      %v6558 = vsel %vm4607, %v6553, %v6557
      %v6560 = vshrl.u32 %v6196, 16
      %v6562 = vrot.slane %v6560, 4
      %v6563 = vshll.u32 %v6196, 16
      %v6565 = vrot.slane %v6563, 5
      %v6566 = vor.u32 %v6562, %v6565
      %v6567 = vrot.slane %v6566, 4
      %v6569 = vshll.u32 %v6197, 16
      %v6571 = vrot.slane %v6569, 5
      %v6572 = vsel %vm4607, %v6567, %v6571
      %v6573 = vshrl.u32 %v6197, 16
      %v6575 = vrot.slane %v6573, 4
      %v6576 = vor.u32 %v6575, %v6571
      %v6577 = vrot.slane %v6576, 4
      %v6579 = vshll.u32 %v6198, 16
      %v6581 = vrot.slane %v6579, 5
      %v6582 = vsel %vm4607, %v6577, %v6581
      %v6583 = vld [vmem:[%s3 + $0x40] sm:$0xf]
      %v6584 = vld [vmem:[%s3 + $0x44] sm:$0xf]
      %v6585 = vld [vmem:[%s3 + $0x48] sm:$0xf]
      %v6586 = vld [vmem:[%s3 + $0x4c] sm:$0xf]
      %v6587 = vunpack.c.l.b16 %v6212
      %v6588 = vunpack.c.l.b16 %v6222
      %v6589 = vunpack.c.l.b16 %v6236
      %v6590 = vunpack.c.l.b16 %v6246
      %v6591 = vunpack.c.l.b16 %v6260
      %v6592 = vunpack.c.l.b16 %v6270
      %v6593 = vunpack.c.l.b16 %v6284
      %v6594 = vunpack.c.l.b16 %v6294
      %v6595 = vunpack.c.l.b16 %v6308
      %v6596 = vunpack.c.l.b16 %v6318
      %v6597 = vunpack.c.l.b16 %v6332
      %v6598 = vunpack.c.l.b16 %v6342
      %v6599 = vunpack.c.l.b16 %v6356
      %v6600 = vunpack.c.l.b16 %v6366
      %v6601 = vunpack.c.l.b16 %v6380
      %v6602 = vunpack.c.l.b16 %v6390
      %v6603 = vunpack.c.l.b16 %v6404
      %v6604 = vunpack.c.l.b16 %v6414
      %v6605 = vunpack.c.l.b16 %v6428
      %v6606 = vunpack.c.l.b16 %v6438
      %v6607 = vunpack.c.l.b16 %v6452
      %v6608 = vunpack.c.l.b16 %v6462
      %v6609 = vunpack.c.l.b16 %v6476
      %v6610 = vunpack.c.l.b16 %v6486
      %v6611 = vunpack.c.l.b16 %v6500
      %v6612 = vunpack.c.l.b16 %v6510
      %v6613 = vunpack.c.l.b16 %v6524
      %v6614 = vunpack.c.l.b16 %v6534
      %v6615 = vunpack.c.l.b16 %v6548
      %v6616 = vunpack.c.l.b16 %v6558
      %v6617 = vunpack.c.l.b16 %v6572
      %v6618 = vunpack.c.l.b16 %v6582
      %v6619 = vpack.c.b16 %v6588, %v6587
      %v6620 = vpack.c.b16 %v6590, %v6589
      %v6621 = vpack.c.b16 %v6592, %v6591
      %v6622 = vpack.c.b16 %v6594, %v6593
      %v6623 = vpack.c.b16 %v6596, %v6595
      %v6624 = vpack.c.b16 %v6598, %v6597
      %v6625 = vpack.c.b16 %v6600, %v6599
      %v6626 = vpack.c.b16 %v6602, %v6601
      %v6627 = vpack.c.b16 %v6604, %v6603
      %v6628 = vpack.c.b16 %v6606, %v6605
      %v6629 = vpack.c.b16 %v6608, %v6607
      %v6630 = vpack.c.b16 %v6610, %v6609
      %v6631 = vpack.c.b16 %v6612, %v6611
      %v6632 = vpack.c.b16 %v6614, %v6613
      %v6633 = vpack.c.b16 %v6616, %v6615
      %v6634 = vpack.c.b16 %v6618, %v6617
      %v6639 = vunpack.c.l.b16 %v6583
      %v6640 = vunpack.c.l.b16 %v6584
      %v6641 = vunpack.c.l.b16 %v6585
      %v6642 = vunpack.c.l.b16 %v6586
      %v6643 = vpack.c.b16 %v6640, %v6639
      %v6644 = vpack.c.b16 %v6642, %v6641
      %v6648 = vsel %vm4315, %v6619, 0
      %v6651 = vsel %vm4315, %v6620, 0
      %v6654 = vsel %vm4315, %v6621, 0
      %v6657 = vsel %vm4315, %v6622, 0
      %v6660 = vsel %vm4315, %v6623, 0
      %v6663 = vsel %vm4315, %v6624, 0
      %v6666 = vsel %vm4315, %v6625, 0
      %v6669 = vsel %vm4315, %v6626, 0
      %v6672 = vsel %vm4315, %v6627, 0
      %v6675 = vsel %vm4315, %v6628, 0
      %v6678 = vsel %vm4315, %v6629, 0
      %v6681 = vsel %vm4315, %v6630, 0
      %v6684 = vsel %vm4315, %v6631, 0
      %v6687 = vsel %vm4315, %v6632, 0
      %v6690 = vsel %vm4315, %v6633, 0
      %v6693 = vsel %vm4315, %v6634, 0
      %6695 = vmatprep.subr.bf16.mxu0 0
      %6696 = vmatpush1.bf16.msra.mxu0 %v6643
      %6697 = vmatprep.subr.bf16.mxu0 0
      %6698 = vmatpush1.bf16.msra.mxu0 %v6644
      %6699 = vmatprep.subr.bf16.mxu0 0
      %6700 = vmatpush1.bf16.msra.mxu0 0
      %6701 = vmatprep.subr.bf16.mxu0 0
      %6702 = vmatpush1.bf16.msra.mxu0 0
      %6703 = vmatprep.subr.bf16.mxu0 0
      %6704 = vmatpush1.bf16.msra.mxu0 0
      %6705 = vmatprep.subr.bf16.mxu0 0
      %6706 = vmatpush1.bf16.msra.mxu0 0
      %6707 = vmatprep.subr.bf16.mxu0 0
      %6708 = vmatpush1.bf16.msra.mxu0 0
      %6709 = vmatprep.subr.bf16.mxu0 0
      %6710 = vmatpush1.bf16.msra.mxu0 0
      %6711 = vmatprep.subr.bf16.mxu0 0
      %6712 = vmatpush1.bf16.msra.mxu0 0
      %6713 = vmatprep.subr.bf16.mxu0 0
      %6714 = vmatpush1.bf16.msra.mxu0 0
      %6715 = vmatprep.subr.bf16.mxu0 0
      %6716 = vmatpush1.bf16.msra.mxu0 0
      %6717 = vmatprep.subr.bf16.mxu0 0
      %6718 = vmatpush1.bf16.msra.mxu0 0
      %6719 = vmatprep.subr.bf16.mxu0 0
      %6720 = vmatpush1.bf16.msra.mxu0 0
      %6721 = vmatprep.subr.bf16.mxu0 0
      %6722 = vmatpush1.bf16.msra.mxu0 0
      %6723 = vmatprep.subr.bf16.mxu0 0
      %6724 = vmatpush1.bf16.msra.mxu0 0
      %6725 = vmatprep.subr.bf16.mxu0 0
      %6726 = vmatpush1.bf16.msra.mxu0 0
      %6727 = vmatprep.mubr.bf16.mxu0 0
      %6728 = vmatmul.mubr.bf16.gmra.mrb[0].mxu0 %v6648
      %v6729 = vpop.f32.mrb[0].mxu0
      %v6730 = vadd.f32 0.0, %v6729
      %v6731 = vpop.f32.mrb[0].mxu0
      %v6732 = vpop.f32.mrb[0].mxu0
      %v6733 = vadd.f32 0.0, %v6732
      %v6734 = vpop.f32.mrb[0].mxu0
      %6735 = vmatprep.mubr.bf16.mxu0 0
      %6736 = vmatmul.mubr.bf16.gmra.mrb[0].mxu0 %v6651
      %v6737 = vpop.f32.mrb[0].mxu0
      %v6738 = vadd.f32 0.0, %v6737
      %v6739 = vpop.f32.mrb[0].mxu0
      %v6740 = vpop.f32.mrb[0].mxu0
      %v6741 = vadd.f32 0.0, %v6740
      %v6742 = vpop.f32.mrb[0].mxu0
      %6743 = vmatprep.mubr.bf16.mxu0 0
      %6744 = vmatmul.mubr.bf16.gmra.mrb[0].mxu0 %v6654
      %v6745 = vpop.f32.mrb[0].mxu0
      %v6746 = vadd.f32 0.0, %v6745
      %v6747 = vpop.f32.mrb[0].mxu0
      %v6748 = vpop.f32.mrb[0].mxu0
      %v6749 = vadd.f32 0.0, %v6748
      %v6750 = vpop.f32.mrb[0].mxu0
      %6751 = vmatprep.mubr.bf16.mxu0 0
      %6752 = vmatmul.mubr.bf16.gmra.mrb[0].mxu0 %v6657
      %v6753 = vpop.f32.mrb[0].mxu0
      %v6754 = vadd.f32 0.0, %v6753
      %v6755 = vpop.f32.mrb[0].mxu0
      %v6756 = vpop.f32.mrb[0].mxu0
      %v6757 = vadd.f32 0.0, %v6756
      %v6758 = vpop.f32.mrb[0].mxu0
      %6759 = vmatprep.mubr.bf16.mxu0 0
      %6760 = vmatmul.mubr.bf16.gmra.mrb[0].mxu0 %v6660
      %v6761 = vpop.f32.mrb[0].mxu0
      %v6762 = vadd.f32 0.0, %v6761
      %v6763 = vpop.f32.mrb[0].mxu0
      %v6764 = vpop.f32.mrb[0].mxu0
      %v6765 = vadd.f32 0.0, %v6764
      %v6766 = vpop.f32.mrb[0].mxu0
      %6767 = vmatprep.mubr.bf16.mxu0 0
      %6768 = vmatmul.mubr.bf16.gmra.mrb[0].mxu0 %v6663
      %v6769 = vpop.f32.mrb[0].mxu0
      %v6770 = vadd.f32 0.0, %v6769
      %v6771 = vpop.f32.mrb[0].mxu0
      %v6772 = vpop.f32.mrb[0].mxu0
      %v6773 = vadd.f32 0.0, %v6772
      %v6774 = vpop.f32.mrb[0].mxu0
      %6775 = vmatprep.mubr.bf16.mxu0 0
      %6776 = vmatmul.mubr.bf16.gmra.mrb[0].mxu0 %v6666
      %v6777 = vpop.f32.mrb[0].mxu0
      %v6778 = vadd.f32 0.0, %v6777
      %v6779 = vpop.f32.mrb[0].mxu0
      %v6780 = vpop.f32.mrb[0].mxu0
      %v6781 = vadd.f32 0.0, %v6780
      %v6782 = vpop.f32.mrb[0].mxu0
      %6783 = vmatprep.mubr.bf16.mxu0 0
      %6784 = vmatmul.mubr.bf16.gmra.mrb[0].mxu0 %v6669
      %v6785 = vpop.f32.mrb[0].mxu0
      %v6786 = vadd.f32 0.0, %v6785
      %v6787 = vpop.f32.mrb[0].mxu0
      %v6788 = vpop.f32.mrb[0].mxu0
      %v6789 = vadd.f32 0.0, %v6788
      %v6790 = vpop.f32.mrb[0].mxu0
      %6791 = vmatprep.mubr.bf16.mxu0 0
      %6792 = vmatmul.mubr.bf16.gmra.mrb[0].mxu0 %v6672
      %v6793 = vpop.f32.mrb[0].mxu0
      %v6794 = vadd.f32 0.0, %v6793
      %v6795 = vpop.f32.mrb[0].mxu0
      %v6796 = vpop.f32.mrb[0].mxu0
      %v6797 = vadd.f32 0.0, %v6796
      %v6798 = vpop.f32.mrb[0].mxu0
      %6799 = vmatprep.mubr.bf16.mxu0 0
      %6800 = vmatmul.mubr.bf16.gmra.mrb[0].mxu0 %v6675
      %v6801 = vpop.f32.mrb[0].mxu0
      %v6802 = vadd.f32 0.0, %v6801
      %v6803 = vpop.f32.mrb[0].mxu0
      %v6804 = vpop.f32.mrb[0].mxu0
      %v6805 = vadd.f32 0.0, %v6804
      %v6806 = vpop.f32.mrb[0].mxu0
      %6807 = vmatprep.mubr.bf16.mxu0 0
      %6808 = vmatmul.mubr.bf16.gmra.mrb[0].mxu0 %v6678
      %v6809 = vpop.f32.mrb[0].mxu0
      %v6810 = vadd.f32 0.0, %v6809
      %v6811 = vpop.f32.mrb[0].mxu0
      %v6812 = vpop.f32.mrb[0].mxu0
      %v6813 = vadd.f32 0.0, %v6812
      %v6814 = vpop.f32.mrb[0].mxu0
      %6815 = vmatprep.mubr.bf16.mxu0 0
      %6816 = vmatmul.mubr.bf16.gmra.mrb[0].mxu0 %v6681
      %v6817 = vpop.f32.mrb[0].mxu0
      %v6818 = vadd.f32 0.0, %v6817
      %v6819 = vpop.f32.mrb[0].mxu0
      %v6820 = vpop.f32.mrb[0].mxu0
      %v6821 = vadd.f32 0.0, %v6820
      %v6822 = vpop.f32.mrb[0].mxu0
      %6823 = vmatprep.mubr.bf16.mxu0 0
      %6824 = vmatmul.mubr.bf16.gmra.mrb[0].mxu0 %v6684
      %v6825 = vpop.f32.mrb[0].mxu0
      %v6826 = vadd.f32 0.0, %v6825
      %v6827 = vpop.f32.mrb[0].mxu0
      %v6828 = vpop.f32.mrb[0].mxu0
      %v6829 = vadd.f32 0.0, %v6828
      %v6830 = vpop.f32.mrb[0].mxu0
      %6831 = vmatprep.mubr.bf16.mxu0 0
      %6832 = vmatmul.mubr.bf16.gmra.mrb[0].mxu0 %v6687
      %v6833 = vpop.f32.mrb[0].mxu0
      %v6834 = vadd.f32 0.0, %v6833
      %v6835 = vpop.f32.mrb[0].mxu0
      %v6836 = vpop.f32.mrb[0].mxu0
      %v6837 = vadd.f32 0.0, %v6836
      %v6838 = vpop.f32.mrb[0].mxu0
      %6839 = vmatprep.mubr.bf16.mxu0 0
      %6840 = vmatmul.mubr.bf16.gmra.mrb[0].mxu0 %v6690
      %v6841 = vpop.f32.mrb[0].mxu0
      %v6842 = vadd.f32 0.0, %v6841
      %v6843 = vpop.f32.mrb[0].mxu0
      %v6844 = vpop.f32.mrb[0].mxu0
      %v6845 = vadd.f32 0.0, %v6844
      %v6846 = vpop.f32.mrb[0].mxu0
      %6847 = vmatprep.mubr.bf16.mxu0 0
      %6848 = vmatmul.mubr.bf16.gmra.mrb[0].mxu0 %v6693
      %v6849 = vpop.f32.mrb[0].mxu0
      %v6850 = vadd.f32 0.0, %v6849
      %v6851 = vpop.f32.mrb[0].mxu0
      %v6852 = vpop.f32.mrb[0].mxu0
      %v6853 = vadd.f32 0.0, %v6852
      %v6854 = vpop.f32.mrb[0].mxu0
      %6855 = vdwg.mxu0
      %v6856 = vadd.f32 %v6119, %v6730
      %v6857 = vadd.f32 %v6120, %v6733
      %v6858 = vadd.f32 %v6121, %v6738
      %v6859 = vadd.f32 %v6122, %v6741
      %v6860 = vadd.f32 %v6123, %v6746
      %v6861 = vadd.f32 %v6124, %v6749
      %v6862 = vadd.f32 %v6125, %v6754
      %v6863 = vadd.f32 %v6126, %v6757
      %v6864 = vadd.f32 %v6127, %v6762
      %v6865 = vadd.f32 %v6128, %v6765
      %v6866 = vadd.f32 %v6129, %v6770
      %v6867 = vadd.f32 %v6130, %v6773
      %v6868 = vadd.f32 %v6131, %v6778
      %v6869 = vadd.f32 %v6132, %v6781
      %v6870 = vadd.f32 %v6133, %v6786
      %v6871 = vadd.f32 %v6134, %v6789
      %v6872 = vadd.f32 %v6135, %v6794
      %v6873 = vadd.f32 %v6136, %v6797
      %v6874 = vadd.f32 %v6137, %v6802
      %v6875 = vadd.f32 %v6138, %v6805
      %v6876 = vadd.f32 %v6139, %v6810
      %v6877 = vadd.f32 %v6140, %v6813
      %v6878 = vadd.f32 %v6141, %v6818
      %v6879 = vadd.f32 %v6142, %v6821
      %v6880 = vadd.f32 %v6143, %v6826
      %v6881 = vadd.f32 %v6144, %v6829
      %v6882 = vadd.f32 %v6145, %v6834
      %v6883 = vadd.f32 %v6146, %v6837
      %v6884 = vadd.f32 %v6147, %v6842
      %v6885 = vadd.f32 %v6148, %v6845
      %v6886 = vadd.f32 %v6149, %v6850
      %v6887 = vadd.f32 %v6150, %v6853
      %v6888 = vld [vmem:[%s5781] sm:$0xe]
      %v6889 = vld [vmem:[%s5781 + $0xc] sm:$0xe]
      %v6890 = vld [vmem:[%s5781 + $0x18] sm:$0xe]
      %v6891 = vld [vmem:[%s5781 + $0x24] sm:$0xe]
      %v6892 = vld [vmem:[%s5781 + $0x30] sm:$0xe]
      %v6893 = vld [vmem:[%s5781 + $0x3c] sm:$0xe]
      %v6894 = vld [vmem:[%s5781 + $0x48] sm:$0xe]
      %v6895 = vld [vmem:[%s5781 + $0x54] sm:$0xe]
      %v6896 = vld [vmem:[%s5781 + $0x60] sm:$0xe]
      %v6897 = vld [vmem:[%s5781 + $0x6c] sm:$0xe]
      %v6898 = vld [vmem:[%s5781 + $0x78] sm:$0xe]
      %v6899 = vld [vmem:[%s5781 + $0x84] sm:$0xe]
      %v6900 = vld [vmem:[%s5781 + $0x90] sm:$0xe]
      %v6901 = vld [vmem:[%s5781 + $0x9c] sm:$0xe]
      %v6902 = vld [vmem:[%s5781 + $0xa8] sm:$0xe]
      %v6903 = vld [vmem:[%s5781 + $0xb4] sm:$0xe]
      %v6952 = vrot.slane %v6888, 5
      %v6953 = vrot.slane %v6952, 4
      %v6954 = vrot.slane %v6152, 5
      %v6955 = vsel %vm383, %v6953, %v6954
      %v6956 = vrot.slane %v6954, 4
      %v6957 = vrot.slane %v6153, 5
      %v6958 = vsel %vm383, %v6956, %v6957
      %v6959 = vrot.slane %v6889, 5
      %v6960 = vrot.slane %v6959, 4
      %v6961 = vrot.slane %v6155, 5
      %v6962 = vsel %vm383, %v6960, %v6961
      %v6963 = vrot.slane %v6961, 4
      %v6964 = vrot.slane %v6156, 5
      %v6965 = vsel %vm383, %v6963, %v6964
      %v6966 = vrot.slane %v6890, 5
      %v6967 = vrot.slane %v6966, 4
      %v6968 = vrot.slane %v6158, 5
      %v6969 = vsel %vm383, %v6967, %v6968
      %v6970 = vrot.slane %v6968, 4
      %v6971 = vrot.slane %v6159, 5
      %v6972 = vsel %vm383, %v6970, %v6971
      %v6973 = vrot.slane %v6891, 5
      %v6974 = vrot.slane %v6973, 4
      %v6975 = vrot.slane %v6161, 5
      %v6976 = vsel %vm383, %v6974, %v6975
      %v6977 = vrot.slane %v6975, 4
      %v6978 = vrot.slane %v6162, 5
      %v6979 = vsel %vm383, %v6977, %v6978
      %v6980 = vrot.slane %v6892, 5
      %v6981 = vrot.slane %v6980, 4
      %v6982 = vrot.slane %v6164, 5
      %v6983 = vsel %vm383, %v6981, %v6982
      %v6984 = vrot.slane %v6982, 4
      %v6985 = vrot.slane %v6165, 5
      %v6986 = vsel %vm383, %v6984, %v6985
      %v6987 = vrot.slane %v6893, 5
      %v6988 = vrot.slane %v6987, 4
      %v6989 = vrot.slane %v6167, 5
      %v6990 = vsel %vm383, %v6988, %v6989
      %v6991 = vrot.slane %v6989, 4
      %v6992 = vrot.slane %v6168, 5
      %v6993 = vsel %vm383, %v6991, %v6992
      %v6994 = vrot.slane %v6894, 5
      %v6995 = vrot.slane %v6994, 4
      %v6996 = vrot.slane %v6170, 5
      %v6997 = vsel %vm383, %v6995, %v6996
      %v6998 = vrot.slane %v6996, 4
      %v6999 = vrot.slane %v6171, 5
      %v7000 = vsel %vm383, %v6998, %v6999
      %v7001 = vrot.slane %v6895, 5
      %v7002 = vrot.slane %v7001, 4
      %v7003 = vrot.slane %v6173, 5
      %v7004 = vsel %vm383, %v7002, %v7003
      %v7005 = vrot.slane %v7003, 4
      %v7006 = vrot.slane %v6174, 5
      %v7007 = vsel %vm383, %v7005, %v7006
      %v7008 = vrot.slane %v6896, 5
      %v7009 = vrot.slane %v7008, 4
      %v7010 = vrot.slane %v6176, 5
      %v7011 = vsel %vm383, %v7009, %v7010
      %v7012 = vrot.slane %v7010, 4
      %v7013 = vrot.slane %v6177, 5
      %v7014 = vsel %vm383, %v7012, %v7013
      %v7015 = vrot.slane %v6897, 5
      %v7016 = vrot.slane %v7015, 4
      %v7017 = vrot.slane %v6179, 5
      %v7018 = vsel %vm383, %v7016, %v7017
      %v7019 = vrot.slane %v7017, 4
      %v7020 = vrot.slane %v6180, 5
      %v7021 = vsel %vm383, %v7019, %v7020
      %v7022 = vrot.slane %v6898, 5
      %v7023 = vrot.slane %v7022, 4
      %v7024 = vrot.slane %v6182, 5
      %v7025 = vsel %vm383, %v7023, %v7024
      %v7026 = vrot.slane %v7024, 4
      %v7027 = vrot.slane %v6183, 5
      %v7028 = vsel %vm383, %v7026, %v7027
      %v7029 = vrot.slane %v6899, 5
      %v7030 = vrot.slane %v7029, 4
      %v7031 = vrot.slane %v6185, 5
      %v7032 = vsel %vm383, %v7030, %v7031
      %v7033 = vrot.slane %v7031, 4
      %v7034 = vrot.slane %v6186, 5
      %v7035 = vsel %vm383, %v7033, %v7034
      %v7036 = vrot.slane %v6900, 5
      %v7037 = vrot.slane %v7036, 4
      %v7038 = vrot.slane %v6188, 5
      %v7039 = vsel %vm383, %v7037, %v7038
      %v7040 = vrot.slane %v7038, 4
      %v7041 = vrot.slane %v6189, 5
      %v7042 = vsel %vm383, %v7040, %v7041
      %v7043 = vrot.slane %v6901, 5
      %v7044 = vrot.slane %v7043, 4
      %v7045 = vrot.slane %v6191, 5
      %v7046 = vsel %vm383, %v7044, %v7045
      %v7047 = vrot.slane %v7045, 4
      %v7048 = vrot.slane %v6192, 5
      %v7049 = vsel %vm383, %v7047, %v7048
      %v7050 = vrot.slane %v6902, 5
      %v7051 = vrot.slane %v7050, 4
      %v7052 = vrot.slane %v6194, 5
      %v7053 = vsel %vm383, %v7051, %v7052
      %v7054 = vrot.slane %v7052, 4
      %v7055 = vrot.slane %v6195, 5
      %v7056 = vsel %vm383, %v7054, %v7055
      %v7057 = vrot.slane %v6903, 5
      %v7058 = vrot.slane %v7057, 4
      %v7059 = vrot.slane %v6197, 5
      %v7060 = vsel %vm383, %v7058, %v7059
      %v7061 = vrot.slane %v7059, 4
      %v7062 = vrot.slane %v6198, 5
      %v7063 = vsel %vm383, %v7061, %v7062
      %v7064 = vld [vmem:[%s3 + $0x50] sm:$0xf]
      %v7065 = vld [vmem:[%s3 + $0x54] sm:$0xf]
      %v7066 = vld [vmem:[%s3 + $0x58] sm:$0xf]
      %v7067 = vld [vmem:[%s3 + $0x5c] sm:$0xf]
      %v7068 = vunpack.c.l.b16 %v6955
      %v7069 = vunpack.c.l.b16 %v6958
      %v7070 = vunpack.c.l.b16 %v6962
      %v7071 = vunpack.c.l.b16 %v6965
      %v7072 = vunpack.c.l.b16 %v6969
      %v7073 = vunpack.c.l.b16 %v6972
      %v7074 = vunpack.c.l.b16 %v6976
      %v7075 = vunpack.c.l.b16 %v6979
      %v7076 = vunpack.c.l.b16 %v6983
      %v7077 = vunpack.c.l.b16 %v6986
      %v7078 = vunpack.c.l.b16 %v6990
      %v7079 = vunpack.c.l.b16 %v6993
      %v7080 = vunpack.c.l.b16 %v6997
      %v7081 = vunpack.c.l.b16 %v7000
      %v7082 = vunpack.c.l.b16 %v7004
      %v7083 = vunpack.c.l.b16 %v7007
      %v7084 = vunpack.c.l.b16 %v7011
      %v7085 = vunpack.c.l.b16 %v7014
      %v7086 = vunpack.c.l.b16 %v7018
      %v7087 = vunpack.c.l.b16 %v7021
      %v7088 = vunpack.c.l.b16 %v7025
      %v7089 = vunpack.c.l.b16 %v7028
      %v7090 = vunpack.c.l.b16 %v7032
      %v7091 = vunpack.c.l.b16 %v7035
      %v7092 = vunpack.c.l.b16 %v7039
      %v7093 = vunpack.c.l.b16 %v7042
      %v7094 = vunpack.c.l.b16 %v7046
      %v7095 = vunpack.c.l.b16 %v7049
      %v7096 = vunpack.c.l.b16 %v7053
      %v7097 = vunpack.c.l.b16 %v7056
      %v7098 = vunpack.c.l.b16 %v7060
      %v7099 = vunpack.c.l.b16 %v7063
      %v7100 = vpack.c.b16 %v7069, %v7068
      %v7101 = vpack.c.b16 %v7071, %v7070
      %v7102 = vpack.c.b16 %v7073, %v7072
      %v7103 = vpack.c.b16 %v7075, %v7074
      %v7104 = vpack.c.b16 %v7077, %v7076
      %v7105 = vpack.c.b16 %v7079, %v7078
      %v7106 = vpack.c.b16 %v7081, %v7080
      %v7107 = vpack.c.b16 %v7083, %v7082
      %v7108 = vpack.c.b16 %v7085, %v7084
      %v7109 = vpack.c.b16 %v7087, %v7086
      %v7110 = vpack.c.b16 %v7089, %v7088
      %v7111 = vpack.c.b16 %v7091, %v7090
      %v7112 = vpack.c.b16 %v7093, %v7092
      %v7113 = vpack.c.b16 %v7095, %v7094
      %v7114 = vpack.c.b16 %v7097, %v7096
      %v7115 = vpack.c.b16 %v7099, %v7098
      %v7120 = vunpack.c.l.b16 %v7064
      %v7121 = vunpack.c.l.b16 %v7065
      %v7122 = vunpack.c.l.b16 %v7066
      %v7123 = vunpack.c.l.b16 %v7067
      %v7124 = vpack.c.b16 %v7121, %v7120
      %v7125 = vpack.c.b16 %v7123, %v7122
      %v7129 = vsel %vm4315, %v7100, 0
      %v7132 = vsel %vm4315, %v7101, 0
      %v7135 = vsel %vm4315, %v7102, 0
      %v7138 = vsel %vm4315, %v7103, 0
      %v7141 = vsel %vm4315, %v7104, 0
      %v7144 = vsel %vm4315, %v7105, 0
      %v7147 = vsel %vm4315, %v7106, 0
      %v7150 = vsel %vm4315, %v7107, 0
      %v7153 = vsel %vm4315, %v7108, 0
      %v7156 = vsel %vm4315, %v7109, 0
      %v7159 = vsel %vm4315, %v7110, 0
      %v7162 = vsel %vm4315, %v7111, 0
      %v7165 = vsel %vm4315, %v7112, 0
      %v7168 = vsel %vm4315, %v7113, 0
      %v7171 = vsel %vm4315, %v7114, 0
      %v7174 = vsel %vm4315, %v7115, 0
      %7176 = vmatprep.subr.bf16.mxu0 0
      %7177 = vmatpush1.bf16.msra.mxu0 %v7124
      %7178 = vmatprep.subr.bf16.mxu0 0
      %7179 = vmatpush1.bf16.msra.mxu0 %v7125
      %7180 = vmatprep.subr.bf16.mxu0 0
      %7181 = vmatpush1.bf16.msra.mxu0 0
      %7182 = vmatprep.subr.bf16.mxu0 0
      %7183 = vmatpush1.bf16.msra.mxu0 0
      %7184 = vmatprep.subr.bf16.mxu0 0
      %7185 = vmatpush1.bf16.msra.mxu0 0
      %7186 = vmatprep.subr.bf16.mxu0 0
      %7187 = vmatpush1.bf16.msra.mxu0 0
      %7188 = vmatprep.subr.bf16.mxu0 0
      %7189 = vmatpush1.bf16.msra.mxu0 0
      %7190 = vmatprep.subr.bf16.mxu0 0
      %7191 = vmatpush1.bf16.msra.mxu0 0
      %7192 = vmatprep.subr.bf16.mxu0 0
      %7193 = vmatpush1.bf16.msra.mxu0 0
      %7194 = vmatprep.subr.bf16.mxu0 0
      %7195 = vmatpush1.bf16.msra.mxu0 0
      %7196 = vmatprep.subr.bf16.mxu0 0
      %7197 = vmatpush1.bf16.msra.mxu0 0
      %7198 = vmatprep.subr.bf16.mxu0 0
      %7199 = vmatpush1.bf16.msra.mxu0 0
      %7200 = vmatprep.subr.bf16.mxu0 0
      %7201 = vmatpush1.bf16.msra.mxu0 0
      %7202 = vmatprep.subr.bf16.mxu0 0
      %7203 = vmatpush1.bf16.msra.mxu0 0
      %7204 = vmatprep.subr.bf16.mxu0 0
      %7205 = vmatpush1.bf16.msra.mxu0 0
      %7206 = vmatprep.subr.bf16.mxu0 0
      %7207 = vmatpush1.bf16.msra.mxu0 0
      %7208 = vmatprep.mubr.bf16.mxu0 0
      %7209 = vmatmul.mubr.bf16.gmra.mrb[0].mxu0 %v7129
      %v7210 = vpop.f32.mrb[0].mxu0
      %v7211 = vadd.f32 0.0, %v7210
      %v7212 = vpop.f32.mrb[0].mxu0
      %v7213 = vpop.f32.mrb[0].mxu0
      %v7214 = vadd.f32 0.0, %v7213
      %v7215 = vpop.f32.mrb[0].mxu0
      %7216 = vmatprep.mubr.bf16.mxu0 0
      %7217 = vmatmul.mubr.bf16.gmra.mrb[0].mxu0 %v7132
      %v7218 = vpop.f32.mrb[0].mxu0
      %v7219 = vadd.f32 0.0, %v7218
      %v7220 = vpop.f32.mrb[0].mxu0
      %v7221 = vpop.f32.mrb[0].mxu0
      %v7222 = vadd.f32 0.0, %v7221
      %v7223 = vpop.f32.mrb[0].mxu0
      %7224 = vmatprep.mubr.bf16.mxu0 0
      %7225 = vmatmul.mubr.bf16.gmra.mrb[0].mxu0 %v7135
      %v7226 = vpop.f32.mrb[0].mxu0
      %v7227 = vadd.f32 0.0, %v7226
      %v7228 = vpop.f32.mrb[0].mxu0
      %v7229 = vpop.f32.mrb[0].mxu0
      %v7230 = vadd.f32 0.0, %v7229
      %v7231 = vpop.f32.mrb[0].mxu0
      %7232 = vmatprep.mubr.bf16.mxu0 0
      %7233 = vmatmul.mubr.bf16.gmra.mrb[0].mxu0 %v7138
      %v7234 = vpop.f32.mrb[0].mxu0
      %v7235 = vadd.f32 0.0, %v7234
      %v7236 = vpop.f32.mrb[0].mxu0
      %v7237 = vpop.f32.mrb[0].mxu0
      %v7238 = vadd.f32 0.0, %v7237
      %v7239 = vpop.f32.mrb[0].mxu0
      %7240 = vmatprep.mubr.bf16.mxu0 0
      %7241 = vmatmul.mubr.bf16.gmra.mrb[0].mxu0 %v7141
      %v7242 = vpop.f32.mrb[0].mxu0
      %v7243 = vadd.f32 0.0, %v7242
      %v7244 = vpop.f32.mrb[0].mxu0
      %v7245 = vpop.f32.mrb[0].mxu0
      %v7246 = vadd.f32 0.0, %v7245
      %v7247 = vpop.f32.mrb[0].mxu0
      %7248 = vmatprep.mubr.bf16.mxu0 0
      %7249 = vmatmul.mubr.bf16.gmra.mrb[0].mxu0 %v7144
      %v7250 = vpop.f32.mrb[0].mxu0
      %v7251 = vadd.f32 0.0, %v7250
      %v7252 = vpop.f32.mrb[0].mxu0
      %v7253 = vpop.f32.mrb[0].mxu0
      %v7254 = vadd.f32 0.0, %v7253
      %v7255 = vpop.f32.mrb[0].mxu0
      %7256 = vmatprep.mubr.bf16.mxu0 0
      %7257 = vmatmul.mubr.bf16.gmra.mrb[0].mxu0 %v7147
      %v7258 = vpop.f32.mrb[0].mxu0
      %v7259 = vadd.f32 0.0, %v7258
      %v7260 = vpop.f32.mrb[0].mxu0
      %v7261 = vpop.f32.mrb[0].mxu0
      %v7262 = vadd.f32 0.0, %v7261
      %v7263 = vpop.f32.mrb[0].mxu0
      %7264 = vmatprep.mubr.bf16.mxu0 0
      %7265 = vmatmul.mubr.bf16.gmra.mrb[0].mxu0 %v7150
      %v7266 = vpop.f32.mrb[0].mxu0
      %v7267 = vadd.f32 0.0, %v7266
      %v7268 = vpop.f32.mrb[0].mxu0
      %v7269 = vpop.f32.mrb[0].mxu0
      %v7270 = vadd.f32 0.0, %v7269
      %v7271 = vpop.f32.mrb[0].mxu0
      %7272 = vmatprep.mubr.bf16.mxu0 0
      %7273 = vmatmul.mubr.bf16.gmra.mrb[0].mxu0 %v7153
      %v7274 = vpop.f32.mrb[0].mxu0
      %v7275 = vadd.f32 0.0, %v7274
      %v7276 = vpop.f32.mrb[0].mxu0
      %v7277 = vpop.f32.mrb[0].mxu0
      %v7278 = vadd.f32 0.0, %v7277
      %v7279 = vpop.f32.mrb[0].mxu0
      %7280 = vmatprep.mubr.bf16.mxu0 0
      %7281 = vmatmul.mubr.bf16.gmra.mrb[0].mxu0 %v7156
      %v7282 = vpop.f32.mrb[0].mxu0
      %v7283 = vadd.f32 0.0, %v7282
      %v7284 = vpop.f32.mrb[0].mxu0
      %v7285 = vpop.f32.mrb[0].mxu0
      %v7286 = vadd.f32 0.0, %v7285
      %v7287 = vpop.f32.mrb[0].mxu0
      %7288 = vmatprep.mubr.bf16.mxu0 0
      %7289 = vmatmul.mubr.bf16.gmra.mrb[0].mxu0 %v7159
      %v7290 = vpop.f32.mrb[0].mxu0
      %v7291 = vadd.f32 0.0, %v7290
      %v7292 = vpop.f32.mrb[0].mxu0
      %v7293 = vpop.f32.mrb[0].mxu0
      %v7294 = vadd.f32 0.0, %v7293
      %v7295 = vpop.f32.mrb[0].mxu0
      %7296 = vmatprep.mubr.bf16.mxu0 0
      %7297 = vmatmul.mubr.bf16.gmra.mrb[0].mxu0 %v7162
      %v7298 = vpop.f32.mrb[0].mxu0
      %v7299 = vadd.f32 0.0, %v7298
      %v7300 = vpop.f32.mrb[0].mxu0
      %v7301 = vpop.f32.mrb[0].mxu0
      %v7302 = vadd.f32 0.0, %v7301
      %v7303 = vpop.f32.mrb[0].mxu0
      %7304 = vmatprep.mubr.bf16.mxu0 0
      %7305 = vmatmul.mubr.bf16.gmra.mrb[0].mxu0 %v7165
      %v7306 = vpop.f32.mrb[0].mxu0
      %v7307 = vadd.f32 0.0, %v7306
      %v7308 = vpop.f32.mrb[0].mxu0
      %v7309 = vpop.f32.mrb[0].mxu0
      %v7310 = vadd.f32 0.0, %v7309
      %v7311 = vpop.f32.mrb[0].mxu0
      %7312 = vmatprep.mubr.bf16.mxu0 0
      %7313 = vmatmul.mubr.bf16.gmra.mrb[0].mxu0 %v7168
      %v7314 = vpop.f32.mrb[0].mxu0
      %v7315 = vadd.f32 0.0, %v7314
      %v7316 = vpop.f32.mrb[0].mxu0
      %v7317 = vpop.f32.mrb[0].mxu0
      %v7318 = vadd.f32 0.0, %v7317
      %v7319 = vpop.f32.mrb[0].mxu0
      %7320 = vmatprep.mubr.bf16.mxu0 0
      %7321 = vmatmul.mubr.bf16.gmra.mrb[0].mxu0 %v7171
      %v7322 = vpop.f32.mrb[0].mxu0
      %v7323 = vadd.f32 0.0, %v7322
      %v7324 = vpop.f32.mrb[0].mxu0
      %v7325 = vpop.f32.mrb[0].mxu0
      %v7326 = vadd.f32 0.0, %v7325
      %v7327 = vpop.f32.mrb[0].mxu0
      %7328 = vmatprep.mubr.bf16.mxu0 0
      %7329 = vmatmul.mubr.bf16.gmra.mrb[0].mxu0 %v7174
      %v7330 = vpop.f32.mrb[0].mxu0
      %v7331 = vadd.f32 0.0, %v7330
      %v7332 = vpop.f32.mrb[0].mxu0
      %v7333 = vpop.f32.mrb[0].mxu0
      %v7334 = vadd.f32 0.0, %v7333
      %v7335 = vpop.f32.mrb[0].mxu0
      %7336 = vdwg.mxu0
      %v7337 = vadd.f32 %v6856, %v7211
      %v7338 = vadd.f32 %v6857, %v7214
      %v7339 = vadd.f32 %v6858, %v7219
      %v7340 = vadd.f32 %v6859, %v7222
      %v7341 = vadd.f32 %v6860, %v7227
      %v7342 = vadd.f32 %v6861, %v7230
      %v7343 = vadd.f32 %v6862, %v7235
      %v7344 = vadd.f32 %v6863, %v7238
      %v7345 = vadd.f32 %v6864, %v7243
      %v7346 = vadd.f32 %v6865, %v7246
      %v7347 = vadd.f32 %v6866, %v7251
      %v7348 = vadd.f32 %v6867, %v7254
      %v7349 = vadd.f32 %v6868, %v7259
      %v7350 = vadd.f32 %v6869, %v7262
      %v7351 = vadd.f32 %v6870, %v7267
      %v7352 = vadd.f32 %v6871, %v7270
      %v7353 = vadd.f32 %v6872, %v7275
      %v7354 = vadd.f32 %v6873, %v7278
      %v7355 = vadd.f32 %v6874, %v7283
      %v7356 = vadd.f32 %v6875, %v7286
      %v7357 = vadd.f32 %v6876, %v7291
      %v7358 = vadd.f32 %v6877, %v7294
      %v7359 = vadd.f32 %v6878, %v7299
      %v7360 = vadd.f32 %v6879, %v7302
      %v7361 = vadd.f32 %v6880, %v7307
      %v7362 = vadd.f32 %v6881, %v7310
      %v7363 = vadd.f32 %v6882, %v7315
      %v7364 = vadd.f32 %v6883, %v7318
      %v7365 = vadd.f32 %v6884, %v7323
      %v7366 = vadd.f32 %v6885, %v7326
      %v7367 = vadd.f32 %v6886, %v7331
      %v7368 = vadd.f32 %v6887, %v7334
      %s7369 = smul.addr %s1512, 4
      %s7370 = scalar_lea.vmem %s254, %s7369
      %v7371 = vld [vmem:[%s7370] sm:$0xf]
      %v7372 = vld [vmem:[%s7370 + $0x4] sm:$0xf]
      %v7373 = vld [vmem:[%s7370 + $0xc] sm:$0xf]
      %v7374 = vld [vmem:[%s7370 + $0x10] sm:$0xf]
      %v7375 = vld [vmem:[%s7370 + $0x18] sm:$0xf]
      %v7376 = vld [vmem:[%s7370 + $0x1c] sm:$0xf]
      %v7377 = vld [vmem:[%s7370 + $0x24] sm:$0xf]
      %v7378 = vld [vmem:[%s7370 + $0x28] sm:$0xf]
      %v7379 = vld [vmem:[%s7370 + $0x30] sm:$0xf]
      %v7380 = vld [vmem:[%s7370 + $0x34] sm:$0xf]
      %v7381 = vld [vmem:[%s7370 + $0x3c] sm:$0xf]
      %v7382 = vld [vmem:[%s7370 + $0x40] sm:$0xf]
      %v7383 = vld [vmem:[%s7370 + $0x48] sm:$0xf]
      %v7384 = vld [vmem:[%s7370 + $0x4c] sm:$0xf]
      %v7385 = vld [vmem:[%s7370 + $0x54] sm:$0xf]
      %v7386 = vld [vmem:[%s7370 + $0x58] sm:$0xf]
      %v7387 = vld [vmem:[%s7370 + $0x60] sm:$0xf]
      %v7388 = vld [vmem:[%s7370 + $0x64] sm:$0xf]
      %v7389 = vld [vmem:[%s7370 + $0x6c] sm:$0xf]
      %v7390 = vld [vmem:[%s7370 + $0x70] sm:$0xf]
      %v7391 = vld [vmem:[%s7370 + $0x78] sm:$0xf]
      %v7392 = vld [vmem:[%s7370 + $0x7c] sm:$0xf]
      %v7393 = vld [vmem:[%s7370 + $0x84] sm:$0xf]
      %v7394 = vld [vmem:[%s7370 + $0x88] sm:$0xf]
      %v7395 = vld [vmem:[%s7370 + $0x90] sm:$0xf]
      %v7396 = vld [vmem:[%s7370 + $0x94] sm:$0xf]
      %v7397 = vld [vmem:[%s7370 + $0x9c] sm:$0xf]
      %v7398 = vld [vmem:[%s7370 + $0xa0] sm:$0xf]
      %v7399 = vld [vmem:[%s7370 + $0xa8] sm:$0xf]
      %v7400 = vld [vmem:[%s7370 + $0xac] sm:$0xf]
      %v7401 = vld [vmem:[%s7370 + $0xb4] sm:$0xf]
      %v7402 = vld [vmem:[%s7370 + $0xb8] sm:$0xf]
      %v7403 = vld [vmem:[%s3 + $0x60] sm:$0xf]
      %v7404 = vld [vmem:[%s3 + $0x64] sm:$0xf]
      %v7405 = vld [vmem:[%s3 + $0x68] sm:$0xf]
      %v7406 = vld [vmem:[%s3 + $0x6c] sm:$0xf]
      %v7439 = vunpack.c.l.b16 %v7371
      %v7440 = vunpack.c.l.b16 %v7372
      %v7441 = vunpack.c.l.b16 %v7373
      %v7442 = vunpack.c.l.b16 %v7374
      %v7443 = vunpack.c.l.b16 %v7375
      %v7444 = vunpack.c.l.b16 %v7376
      %v7445 = vunpack.c.l.b16 %v7377
      %v7446 = vunpack.c.l.b16 %v7378
      %v7447 = vunpack.c.l.b16 %v7379
      %v7448 = vunpack.c.l.b16 %v7380
      %v7449 = vunpack.c.l.b16 %v7381
      %v7450 = vunpack.c.l.b16 %v7382
      %v7451 = vunpack.c.l.b16 %v7383
      %v7452 = vunpack.c.l.b16 %v7384
      %v7453 = vunpack.c.l.b16 %v7385
      %v7454 = vunpack.c.l.b16 %v7386
      %v7455 = vunpack.c.l.b16 %v7387
      %v7456 = vunpack.c.l.b16 %v7388
      %v7457 = vunpack.c.l.b16 %v7389
      %v7458 = vunpack.c.l.b16 %v7390
      %v7459 = vunpack.c.l.b16 %v7391
      %v7460 = vunpack.c.l.b16 %v7392
      %v7461 = vunpack.c.l.b16 %v7393
      %v7462 = vunpack.c.l.b16 %v7394
      %v7463 = vunpack.c.l.b16 %v7395
      %v7464 = vunpack.c.l.b16 %v7396
      %v7465 = vunpack.c.l.b16 %v7397
      %v7466 = vunpack.c.l.b16 %v7398
      %v7467 = vunpack.c.l.b16 %v7399
      %v7468 = vunpack.c.l.b16 %v7400
      %v7469 = vunpack.c.l.b16 %v7401
      %v7470 = vunpack.c.l.b16 %v7402
      %v7471 = vpack.c.b16 %v7440, %v7439
      %v7472 = vpack.c.b16 %v7442, %v7441
      %v7473 = vpack.c.b16 %v7444, %v7443
      %v7474 = vpack.c.b16 %v7446, %v7445
      %v7475 = vpack.c.b16 %v7448, %v7447
      %v7476 = vpack.c.b16 %v7450, %v7449
      %v7477 = vpack.c.b16 %v7452, %v7451
      %v7478 = vpack.c.b16 %v7454, %v7453
      %v7479 = vpack.c.b16 %v7456, %v7455
      %v7480 = vpack.c.b16 %v7458, %v7457
      %v7481 = vpack.c.b16 %v7460, %v7459
      %v7482 = vpack.c.b16 %v7462, %v7461
      %v7483 = vpack.c.b16 %v7464, %v7463
      %v7484 = vpack.c.b16 %v7466, %v7465
      %v7485 = vpack.c.b16 %v7468, %v7467
      %v7486 = vpack.c.b16 %v7470, %v7469
      %v7491 = vunpack.c.l.b16 %v7403
      %v7492 = vunpack.c.l.b16 %v7404
      %v7493 = vunpack.c.l.b16 %v7405
      %v7494 = vunpack.c.l.b16 %v7406
      %v7495 = vpack.c.b16 %v7492, %v7491
      %v7496 = vpack.c.b16 %v7494, %v7493
      %v7500 = vsel %vm4315, %v7471, 0
      %v7503 = vsel %vm4315, %v7472, 0
      %v7506 = vsel %vm4315, %v7473, 0
      %v7509 = vsel %vm4315, %v7474, 0
      %v7512 = vsel %vm4315, %v7475, 0
      %v7515 = vsel %vm4315, %v7476, 0
      %v7518 = vsel %vm4315, %v7477, 0
      %v7521 = vsel %vm4315, %v7478, 0
      %v7524 = vsel %vm4315, %v7479, 0
      %v7527 = vsel %vm4315, %v7480, 0
      %v7530 = vsel %vm4315, %v7481, 0
      %v7533 = vsel %vm4315, %v7482, 0
      %v7536 = vsel %vm4315, %v7483, 0
      %v7539 = vsel %vm4315, %v7484, 0
      %v7542 = vsel %vm4315, %v7485, 0
      %v7545 = vsel %vm4315, %v7486, 0
      %7547 = vmatprep.subr.bf16.mxu0 0
      %7548 = vmatpush1.bf16.msra.mxu0 %v7495
      %7549 = vmatprep.subr.bf16.mxu0 0
      %7550 = vmatpush1.bf16.msra.mxu0 %v7496
      %7551 = vmatprep.subr.bf16.mxu0 0
      %7552 = vmatpush1.bf16.msra.mxu0 0
      %7553 = vmatprep.subr.bf16.mxu0 0
      %7554 = vmatpush1.bf16.msra.mxu0 0
      %7555 = vmatprep.subr.bf16.mxu0 0
      %7556 = vmatpush1.bf16.msra.mxu0 0
      %7557 = vmatprep.subr.bf16.mxu0 0
      %7558 = vmatpush1.bf16.msra.mxu0 0
      %7559 = vmatprep.subr.bf16.mxu0 0
      %7560 = vmatpush1.bf16.msra.mxu0 0
      %7561 = vmatprep.subr.bf16.mxu0 0
      %7562 = vmatpush1.bf16.msra.mxu0 0
      %7563 = vmatprep.subr.bf16.mxu0 0
      %7564 = vmatpush1.bf16.msra.mxu0 0
      %7565 = vmatprep.subr.bf16.mxu0 0
      %7566 = vmatpush1.bf16.msra.mxu0 0
      %7567 = vmatprep.subr.bf16.mxu0 0
      %7568 = vmatpush1.bf16.msra.mxu0 0
      %7569 = vmatprep.subr.bf16.mxu0 0
      %7570 = vmatpush1.bf16.msra.mxu0 0
      %7571 = vmatprep.subr.bf16.mxu0 0
      %7572 = vmatpush1.bf16.msra.mxu0 0
      %7573 = vmatprep.subr.bf16.mxu0 0
      %7574 = vmatpush1.bf16.msra.mxu0 0
      %7575 = vmatprep.subr.bf16.mxu0 0
      %7576 = vmatpush1.bf16.msra.mxu0 0
      %7577 = vmatprep.subr.bf16.mxu0 0
      %7578 = vmatpush1.bf16.msra.mxu0 0
      %7579 = vmatprep.mubr.bf16.mxu0 0
      %7580 = vmatmul.mubr.bf16.gmra.mrb[0].mxu0 %v7500
      %v7581 = vpop.f32.mrb[0].mxu0
      %v7582 = vadd.f32 0.0, %v7581
      %v7583 = vpop.f32.mrb[0].mxu0
      %v7584 = vpop.f32.mrb[0].mxu0
      %v7585 = vadd.f32 0.0, %v7584
      %v7586 = vpop.f32.mrb[0].mxu0
      %7587 = vmatprep.mubr.bf16.mxu0 0
      %7588 = vmatmul.mubr.bf16.gmra.mrb[0].mxu0 %v7503
      %v7589 = vpop.f32.mrb[0].mxu0
      %v7590 = vadd.f32 0.0, %v7589
      %v7591 = vpop.f32.mrb[0].mxu0
      %v7592 = vpop.f32.mrb[0].mxu0
      %v7593 = vadd.f32 0.0, %v7592
      %v7594 = vpop.f32.mrb[0].mxu0
      %7595 = vmatprep.mubr.bf16.mxu0 0
      %7596 = vmatmul.mubr.bf16.gmra.mrb[0].mxu0 %v7506
      %v7597 = vpop.f32.mrb[0].mxu0
      %v7598 = vadd.f32 0.0, %v7597
      %v7599 = vpop.f32.mrb[0].mxu0
      %v7600 = vpop.f32.mrb[0].mxu0
      %v7601 = vadd.f32 0.0, %v7600
      %v7602 = vpop.f32.mrb[0].mxu0
      %7603 = vmatprep.mubr.bf16.mxu0 0
      %7604 = vmatmul.mubr.bf16.gmra.mrb[0].mxu0 %v7509
      %v7605 = vpop.f32.mrb[0].mxu0
      %v7606 = vadd.f32 0.0, %v7605
      %v7607 = vpop.f32.mrb[0].mxu0
      %v7608 = vpop.f32.mrb[0].mxu0
      %v7609 = vadd.f32 0.0, %v7608
      %v7610 = vpop.f32.mrb[0].mxu0
      %7611 = vmatprep.mubr.bf16.mxu0 0
      %7612 = vmatmul.mubr.bf16.gmra.mrb[0].mxu0 %v7512
      %v7613 = vpop.f32.mrb[0].mxu0
      %v7614 = vadd.f32 0.0, %v7613
      %v7615 = vpop.f32.mrb[0].mxu0
      %v7616 = vpop.f32.mrb[0].mxu0
      %v7617 = vadd.f32 0.0, %v7616
      %v7618 = vpop.f32.mrb[0].mxu0
      %7619 = vmatprep.mubr.bf16.mxu0 0
      %7620 = vmatmul.mubr.bf16.gmra.mrb[0].mxu0 %v7515
      %v7621 = vpop.f32.mrb[0].mxu0
      %v7622 = vadd.f32 0.0, %v7621
      %v7623 = vpop.f32.mrb[0].mxu0
      %v7624 = vpop.f32.mrb[0].mxu0
      %v7625 = vadd.f32 0.0, %v7624
      %v7626 = vpop.f32.mrb[0].mxu0
      %7627 = vmatprep.mubr.bf16.mxu0 0
      %7628 = vmatmul.mubr.bf16.gmra.mrb[0].mxu0 %v7518
      %v7629 = vpop.f32.mrb[0].mxu0
      %v7630 = vadd.f32 0.0, %v7629
      %v7631 = vpop.f32.mrb[0].mxu0
      %v7632 = vpop.f32.mrb[0].mxu0
      %v7633 = vadd.f32 0.0, %v7632
      %v7634 = vpop.f32.mrb[0].mxu0
      %7635 = vmatprep.mubr.bf16.mxu0 0
      %7636 = vmatmul.mubr.bf16.gmra.mrb[0].mxu0 %v7521
      %v7637 = vpop.f32.mrb[0].mxu0
      %v7638 = vadd.f32 0.0, %v7637
      %v7639 = vpop.f32.mrb[0].mxu0
      %v7640 = vpop.f32.mrb[0].mxu0
      %v7641 = vadd.f32 0.0, %v7640
      %v7642 = vpop.f32.mrb[0].mxu0
      %7643 = vmatprep.mubr.bf16.mxu0 0
      %7644 = vmatmul.mubr.bf16.gmra.mrb[0].mxu0 %v7524
      %v7645 = vpop.f32.mrb[0].mxu0
      %v7646 = vadd.f32 0.0, %v7645
      %v7647 = vpop.f32.mrb[0].mxu0
      %v7648 = vpop.f32.mrb[0].mxu0
      %v7649 = vadd.f32 0.0, %v7648
      %v7650 = vpop.f32.mrb[0].mxu0
      %7651 = vmatprep.mubr.bf16.mxu0 0
      %7652 = vmatmul.mubr.bf16.gmra.mrb[0].mxu0 %v7527
      %v7653 = vpop.f32.mrb[0].mxu0
      %v7654 = vadd.f32 0.0, %v7653
      %v7655 = vpop.f32.mrb[0].mxu0
      %v7656 = vpop.f32.mrb[0].mxu0
      %v7657 = vadd.f32 0.0, %v7656
      %v7658 = vpop.f32.mrb[0].mxu0
      %7659 = vmatprep.mubr.bf16.mxu0 0
      %7660 = vmatmul.mubr.bf16.gmra.mrb[0].mxu0 %v7530
      %v7661 = vpop.f32.mrb[0].mxu0
      %v7662 = vadd.f32 0.0, %v7661
      %v7663 = vpop.f32.mrb[0].mxu0
      %v7664 = vpop.f32.mrb[0].mxu0
      %v7665 = vadd.f32 0.0, %v7664
      %v7666 = vpop.f32.mrb[0].mxu0
      %7667 = vmatprep.mubr.bf16.mxu0 0
      %7668 = vmatmul.mubr.bf16.gmra.mrb[0].mxu0 %v7533
      %v7669 = vpop.f32.mrb[0].mxu0
      %v7670 = vadd.f32 0.0, %v7669
      %v7671 = vpop.f32.mrb[0].mxu0
      %v7672 = vpop.f32.mrb[0].mxu0
      %v7673 = vadd.f32 0.0, %v7672
      %v7674 = vpop.f32.mrb[0].mxu0
      %7675 = vmatprep.mubr.bf16.mxu0 0
      %7676 = vmatmul.mubr.bf16.gmra.mrb[0].mxu0 %v7536
      %v7677 = vpop.f32.mrb[0].mxu0
      %v7678 = vadd.f32 0.0, %v7677
      %v7679 = vpop.f32.mrb[0].mxu0
      %v7680 = vpop.f32.mrb[0].mxu0
      %v7681 = vadd.f32 0.0, %v7680
      %v7682 = vpop.f32.mrb[0].mxu0
      %7683 = vmatprep.mubr.bf16.mxu0 0
      %7684 = vmatmul.mubr.bf16.gmra.mrb[0].mxu0 %v7539
      %v7685 = vpop.f32.mrb[0].mxu0
      %v7686 = vadd.f32 0.0, %v7685
      %v7687 = vpop.f32.mrb[0].mxu0
      %v7688 = vpop.f32.mrb[0].mxu0
      %v7689 = vadd.f32 0.0, %v7688
      %v7690 = vpop.f32.mrb[0].mxu0
      %7691 = vmatprep.mubr.bf16.mxu0 0
      %7692 = vmatmul.mubr.bf16.gmra.mrb[0].mxu0 %v7542
      %v7693 = vpop.f32.mrb[0].mxu0
      %v7694 = vadd.f32 0.0, %v7693
      %v7695 = vpop.f32.mrb[0].mxu0
      %v7696 = vpop.f32.mrb[0].mxu0
      %v7697 = vadd.f32 0.0, %v7696
      %v7698 = vpop.f32.mrb[0].mxu0
      %7699 = vmatprep.mubr.bf16.mxu0 0
      %7700 = vmatmul.mubr.bf16.gmra.mrb[0].mxu0 %v7545
      %v7701 = vpop.f32.mrb[0].mxu0
      %v7702 = vadd.f32 0.0, %v7701
      %v7703 = vpop.f32.mrb[0].mxu0
      %v7704 = vpop.f32.mrb[0].mxu0
      %v7705 = vadd.f32 0.0, %v7704
      %v7706 = vpop.f32.mrb[0].mxu0
      %7707 = vdwg.mxu0
      %v7708 = vadd.f32 %v7337, %v7582
      %v7709 = vadd.f32 %v7338, %v7585
      %v7710 = vadd.f32 %v7339, %v7590
      %v7711 = vadd.f32 %v7340, %v7593
      %v7712 = vadd.f32 %v7341, %v7598
      %v7713 = vadd.f32 %v7342, %v7601
      %v7714 = vadd.f32 %v7343, %v7606
      %v7715 = vadd.f32 %v7344, %v7609
      %v7716 = vadd.f32 %v7345, %v7614
      %v7717 = vadd.f32 %v7346, %v7617
      %v7718 = vadd.f32 %v7347, %v7622
      %v7719 = vadd.f32 %v7348, %v7625
      %v7720 = vadd.f32 %v7349, %v7630
      %v7721 = vadd.f32 %v7350, %v7633
      %v7722 = vadd.f32 %v7351, %v7638
      %v7723 = vadd.f32 %v7352, %v7641
      %v7724 = vadd.f32 %v7353, %v7646
      %v7725 = vadd.f32 %v7354, %v7649
      %v7726 = vadd.f32 %v7355, %v7654
      %v7727 = vadd.f32 %v7356, %v7657
      %v7728 = vadd.f32 %v7357, %v7662
      %v7729 = vadd.f32 %v7358, %v7665
      %v7730 = vadd.f32 %v7359, %v7670
      %v7731 = vadd.f32 %v7360, %v7673
      %v7732 = vadd.f32 %v7361, %v7678
      %v7733 = vadd.f32 %v7362, %v7681
      %v7734 = vadd.f32 %v7363, %v7686
      %v7735 = vadd.f32 %v7364, %v7689
      %v7736 = vadd.f32 %v7365, %v7694
      %v7737 = vadd.f32 %v7366, %v7697
      %v7738 = vadd.f32 %v7367, %v7702
      %v7739 = vadd.f32 %v7368, %v7705
      %v7740 = vld [vmem:[%s7370] sm:$0xf]
      %v7741 = vld [vmem:[%s7370 + $0x4] sm:$0xf]
      %v7742 = vld [vmem:[%s7370 + $0x8] sm:$0x1]
      %v7743 = vld [vmem:[%s7370 + $0xc] sm:$0xf]
      %v7744 = vld [vmem:[%s7370 + $0x10] sm:$0xf]
      %v7745 = vld [vmem:[%s7370 + $0x14] sm:$0x1]
      %v7746 = vld [vmem:[%s7370 + $0x18] sm:$0xf]
      %v7747 = vld [vmem:[%s7370 + $0x1c] sm:$0xf]
      %v7748 = vld [vmem:[%s7370 + $0x20] sm:$0x1]
      %v7749 = vld [vmem:[%s7370 + $0x24] sm:$0xf]
      %v7750 = vld [vmem:[%s7370 + $0x28] sm:$0xf]
      %v7751 = vld [vmem:[%s7370 + $0x2c] sm:$0x1]
      %v7752 = vld [vmem:[%s7370 + $0x30] sm:$0xf]
      %v7753 = vld [vmem:[%s7370 + $0x34] sm:$0xf]
      %v7754 = vld [vmem:[%s7370 + $0x38] sm:$0x1]
      %v7755 = vld [vmem:[%s7370 + $0x3c] sm:$0xf]
      %v7756 = vld [vmem:[%s7370 + $0x40] sm:$0xf]
      %v7757 = vld [vmem:[%s7370 + $0x44] sm:$0x1]
      %v7758 = vld [vmem:[%s7370 + $0x48] sm:$0xf]
      %v7759 = vld [vmem:[%s7370 + $0x4c] sm:$0xf]
      %v7760 = vld [vmem:[%s7370 + $0x50] sm:$0x1]
      %v7761 = vld [vmem:[%s7370 + $0x54] sm:$0xf]
      %v7762 = vld [vmem:[%s7370 + $0x58] sm:$0xf]
      %v7763 = vld [vmem:[%s7370 + $0x5c] sm:$0x1]
      %v7764 = vld [vmem:[%s7370 + $0x60] sm:$0xf]
      %v7765 = vld [vmem:[%s7370 + $0x64] sm:$0xf]
      %v7766 = vld [vmem:[%s7370 + $0x68] sm:$0x1]
      %v7767 = vld [vmem:[%s7370 + $0x6c] sm:$0xf]
      %v7768 = vld [vmem:[%s7370 + $0x70] sm:$0xf]
      %v7769 = vld [vmem:[%s7370 + $0x74] sm:$0x1]
      %v7770 = vld [vmem:[%s7370 + $0x78] sm:$0xf]
      %v7771 = vld [vmem:[%s7370 + $0x7c] sm:$0xf]
      %v7772 = vld [vmem:[%s7370 + $0x80] sm:$0x1]
      %v7773 = vld [vmem:[%s7370 + $0x84] sm:$0xf]
      %v7774 = vld [vmem:[%s7370 + $0x88] sm:$0xf]
      %v7775 = vld [vmem:[%s7370 + $0x8c] sm:$0x1]
      %v7776 = vld [vmem:[%s7370 + $0x90] sm:$0xf]
      %v7777 = vld [vmem:[%s7370 + $0x94] sm:$0xf]
      %v7778 = vld [vmem:[%s7370 + $0x98] sm:$0x1]
      %v7779 = vld [vmem:[%s7370 + $0x9c] sm:$0xf]
      %v7780 = vld [vmem:[%s7370 + $0xa0] sm:$0xf]
      %v7781 = vld [vmem:[%s7370 + $0xa4] sm:$0x1]
      %v7782 = vld [vmem:[%s7370 + $0xa8] sm:$0xf]
      %v7783 = vld [vmem:[%s7370 + $0xac] sm:$0xf]
      %v7784 = vld [vmem:[%s7370 + $0xb0] sm:$0x1]
      %v7785 = vld [vmem:[%s7370 + $0xb4] sm:$0xf]
      %v7786 = vld [vmem:[%s7370 + $0xb8] sm:$0xf]
      %v7787 = vld [vmem:[%s7370 + $0xbc] sm:$0x1]
      %v7789 = vshrl.u32 %v7740, 16
      %v7791 = vrot.slane %v7789, 4
      %v7792 = vshll.u32 %v7740, 16
      %v7794 = vrot.slane %v7792, 5
      %v7795 = vor.u32 %v7791, %v7794
      %v7796 = vrot.slane %v7795, 4
      %v7798 = vshll.u32 %v7741, 16
      %v7800 = vrot.slane %v7798, 5
      %v7801 = vsel %vm4607, %v7796, %v7800
      %v7802 = vshrl.u32 %v7741, 16
      %v7804 = vrot.slane %v7802, 4
      %v7805 = vor.u32 %v7804, %v7800
      %v7806 = vrot.slane %v7805, 4
      %v7808 = vshll.u32 %v7742, 16
      %v7810 = vrot.slane %v7808, 5
      %v7811 = vsel %vm4607, %v7806, %v7810
      %v7813 = vshrl.u32 %v7743, 16
      %v7815 = vrot.slane %v7813, 4
      %v7816 = vshll.u32 %v7743, 16
      %v7818 = vrot.slane %v7816, 5
      %v7819 = vor.u32 %v7815, %v7818
      %v7820 = vrot.slane %v7819, 4
      %v7822 = vshll.u32 %v7744, 16
      %v7824 = vrot.slane %v7822, 5
      %v7825 = vsel %vm4607, %v7820, %v7824
      %v7826 = vshrl.u32 %v7744, 16
      %v7828 = vrot.slane %v7826, 4
      %v7829 = vor.u32 %v7828, %v7824
      %v7830 = vrot.slane %v7829, 4
      %v7832 = vshll.u32 %v7745, 16
      %v7834 = vrot.slane %v7832, 5
      %v7835 = vsel %vm4607, %v7830, %v7834
      %v7837 = vshrl.u32 %v7746, 16
      %v7839 = vrot.slane %v7837, 4
      %v7840 = vshll.u32 %v7746, 16
      %v7842 = vrot.slane %v7840, 5
      %v7843 = vor.u32 %v7839, %v7842
      %v7844 = vrot.slane %v7843, 4
      %v7846 = vshll.u32 %v7747, 16
      %v7848 = vrot.slane %v7846, 5
      %v7849 = vsel %vm4607, %v7844, %v7848
      %v7850 = vshrl.u32 %v7747, 16
      %v7852 = vrot.slane %v7850, 4
      %v7853 = vor.u32 %v7852, %v7848
      %v7854 = vrot.slane %v7853, 4
      %v7856 = vshll.u32 %v7748, 16
      %v7858 = vrot.slane %v7856, 5
      %v7859 = vsel %vm4607, %v7854, %v7858
      %v7861 = vshrl.u32 %v7749, 16
      %v7863 = vrot.slane %v7861, 4
      %v7864 = vshll.u32 %v7749, 16
      %v7866 = vrot.slane %v7864, 5
      %v7867 = vor.u32 %v7863, %v7866
      %v7868 = vrot.slane %v7867, 4
      %v7870 = vshll.u32 %v7750, 16
      %v7872 = vrot.slane %v7870, 5
      %v7873 = vsel %vm4607, %v7868, %v7872
      %v7874 = vshrl.u32 %v7750, 16
      %v7876 = vrot.slane %v7874, 4
      %v7877 = vor.u32 %v7876, %v7872
      %v7878 = vrot.slane %v7877, 4
      %v7880 = vshll.u32 %v7751, 16
      %v7882 = vrot.slane %v7880, 5
      %v7883 = vsel %vm4607, %v7878, %v7882
      %v7885 = vshrl.u32 %v7752, 16
      %v7887 = vrot.slane %v7885, 4
      %v7888 = vshll.u32 %v7752, 16
      %v7890 = vrot.slane %v7888, 5
      %v7891 = vor.u32 %v7887, %v7890
      %v7892 = vrot.slane %v7891, 4
      %v7894 = vshll.u32 %v7753, 16
      %v7896 = vrot.slane %v7894, 5
      %v7897 = vsel %vm4607, %v7892, %v7896
      %v7898 = vshrl.u32 %v7753, 16
      %v7900 = vrot.slane %v7898, 4
      %v7901 = vor.u32 %v7900, %v7896
      %v7902 = vrot.slane %v7901, 4
      %v7904 = vshll.u32 %v7754, 16
      %v7906 = vrot.slane %v7904, 5
      %v7907 = vsel %vm4607, %v7902, %v7906
      %v7909 = vshrl.u32 %v7755, 16
      %v7911 = vrot.slane %v7909, 4
      %v7912 = vshll.u32 %v7755, 16
      %v7914 = vrot.slane %v7912, 5
      %v7915 = vor.u32 %v7911, %v7914
      %v7916 = vrot.slane %v7915, 4
      %v7918 = vshll.u32 %v7756, 16
      %v7920 = vrot.slane %v7918, 5
      %v7921 = vsel %vm4607, %v7916, %v7920
      %v7922 = vshrl.u32 %v7756, 16
      %v7924 = vrot.slane %v7922, 4
      %v7925 = vor.u32 %v7924, %v7920
      %v7926 = vrot.slane %v7925, 4
      %v7928 = vshll.u32 %v7757, 16
      %v7930 = vrot.slane %v7928, 5
      %v7931 = vsel %vm4607, %v7926, %v7930
      %v7933 = vshrl.u32 %v7758, 16
      %v7935 = vrot.slane %v7933, 4
      %v7936 = vshll.u32 %v7758, 16
      %v7938 = vrot.slane %v7936, 5
      %v7939 = vor.u32 %v7935, %v7938
      %v7940 = vrot.slane %v7939, 4
      %v7942 = vshll.u32 %v7759, 16
      %v7944 = vrot.slane %v7942, 5
      %v7945 = vsel %vm4607, %v7940, %v7944
      %v7946 = vshrl.u32 %v7759, 16
      %v7948 = vrot.slane %v7946, 4
      %v7949 = vor.u32 %v7948, %v7944
      %v7950 = vrot.slane %v7949, 4
      %v7952 = vshll.u32 %v7760, 16
      %v7954 = vrot.slane %v7952, 5
      %v7955 = vsel %vm4607, %v7950, %v7954
      %v7957 = vshrl.u32 %v7761, 16
      %v7959 = vrot.slane %v7957, 4
      %v7960 = vshll.u32 %v7761, 16
      %v7962 = vrot.slane %v7960, 5
      %v7963 = vor.u32 %v7959, %v7962
      %v7964 = vrot.slane %v7963, 4
      %v7966 = vshll.u32 %v7762, 16
      %v7968 = vrot.slane %v7966, 5
      %v7969 = vsel %vm4607, %v7964, %v7968
      %v7970 = vshrl.u32 %v7762, 16
      %v7972 = vrot.slane %v7970, 4
      %v7973 = vor.u32 %v7972, %v7968
      %v7974 = vrot.slane %v7973, 4
      %v7976 = vshll.u32 %v7763, 16
      %v7978 = vrot.slane %v7976, 5
      %v7979 = vsel %vm4607, %v7974, %v7978
      %v7981 = vshrl.u32 %v7764, 16
      %v7983 = vrot.slane %v7981, 4
      %v7984 = vshll.u32 %v7764, 16
      %v7986 = vrot.slane %v7984, 5
      %v7987 = vor.u32 %v7983, %v7986
      %v7988 = vrot.slane %v7987, 4
      %v7990 = vshll.u32 %v7765, 16
      %v7992 = vrot.slane %v7990, 5
      %v7993 = vsel %vm4607, %v7988, %v7992
      %v7994 = vshrl.u32 %v7765, 16
      %v7996 = vrot.slane %v7994, 4
      %v7997 = vor.u32 %v7996, %v7992
      %v7998 = vrot.slane %v7997, 4
      %v8000 = vshll.u32 %v7766, 16
      %v8002 = vrot.slane %v8000, 5
      %v8003 = vsel %vm4607, %v7998, %v8002
      %v8005 = vshrl.u32 %v7767, 16
      %v8007 = vrot.slane %v8005, 4
      %v8008 = vshll.u32 %v7767, 16
      %v8010 = vrot.slane %v8008, 5
      %v8011 = vor.u32 %v8007, %v8010
      %v8012 = vrot.slane %v8011, 4
      %v8014 = vshll.u32 %v7768, 16
      %v8016 = vrot.slane %v8014, 5
      %v8017 = vsel %vm4607, %v8012, %v8016
      %v8018 = vshrl.u32 %v7768, 16
      %v8020 = vrot.slane %v8018, 4
      %v8021 = vor.u32 %v8020, %v8016
      %v8022 = vrot.slane %v8021, 4
      %v8024 = vshll.u32 %v7769, 16
      %v8026 = vrot.slane %v8024, 5
      %v8027 = vsel %vm4607, %v8022, %v8026
      %v8029 = vshrl.u32 %v7770, 16
      %v8031 = vrot.slane %v8029, 4
      %v8032 = vshll.u32 %v7770, 16
      %v8034 = vrot.slane %v8032, 5
      %v8035 = vor.u32 %v8031, %v8034
      %v8036 = vrot.slane %v8035, 4
      %v8038 = vshll.u32 %v7771, 16
      %v8040 = vrot.slane %v8038, 5
      %v8041 = vsel %vm4607, %v8036, %v8040
      %v8042 = vshrl.u32 %v7771, 16
      %v8044 = vrot.slane %v8042, 4
      %v8045 = vor.u32 %v8044, %v8040
      %v8046 = vrot.slane %v8045, 4
      %v8048 = vshll.u32 %v7772, 16
      %v8050 = vrot.slane %v8048, 5
      %v8051 = vsel %vm4607, %v8046, %v8050
      %v8053 = vshrl.u32 %v7773, 16
      %v8055 = vrot.slane %v8053, 4
      %v8056 = vshll.u32 %v7773, 16
      %v8058 = vrot.slane %v8056, 5
      %v8059 = vor.u32 %v8055, %v8058
      %v8060 = vrot.slane %v8059, 4
      %v8062 = vshll.u32 %v7774, 16
      %v8064 = vrot.slane %v8062, 5
      %v8065 = vsel %vm4607, %v8060, %v8064
      %v8066 = vshrl.u32 %v7774, 16
      %v8068 = vrot.slane %v8066, 4
      %v8069 = vor.u32 %v8068, %v8064
      %v8070 = vrot.slane %v8069, 4
      %v8072 = vshll.u32 %v7775, 16
      %v8074 = vrot.slane %v8072, 5
      %v8075 = vsel %vm4607, %v8070, %v8074
      %v8077 = vshrl.u32 %v7776, 16
      %v8079 = vrot.slane %v8077, 4
      %v8080 = vshll.u32 %v7776, 16
      %v8082 = vrot.slane %v8080, 5
      %v8083 = vor.u32 %v8079, %v8082
      %v8084 = vrot.slane %v8083, 4
      %v8086 = vshll.u32 %v7777, 16
      %v8088 = vrot.slane %v8086, 5
      %v8089 = vsel %vm4607, %v8084, %v8088
      %v8090 = vshrl.u32 %v7777, 16
      %v8092 = vrot.slane %v8090, 4
      %v8093 = vor.u32 %v8092, %v8088
      %v8094 = vrot.slane %v8093, 4
      %v8096 = vshll.u32 %v7778, 16
      %v8098 = vrot.slane %v8096, 5
      %v8099 = vsel %vm4607, %v8094, %v8098
      %v8101 = vshrl.u32 %v7779, 16
      %v8103 = vrot.slane %v8101, 4
      %v8104 = vshll.u32 %v7779, 16
      %v8106 = vrot.slane %v8104, 5
      %v8107 = vor.u32 %v8103, %v8106
      %v8108 = vrot.slane %v8107, 4
      %v8110 = vshll.u32 %v7780, 16
      %v8112 = vrot.slane %v8110, 5
      %v8113 = vsel %vm4607, %v8108, %v8112
      %v8114 = vshrl.u32 %v7780, 16
      %v8116 = vrot.slane %v8114, 4
      %v8117 = vor.u32 %v8116, %v8112
      %v8118 = vrot.slane %v8117, 4
      %v8120 = vshll.u32 %v7781, 16
      %v8122 = vrot.slane %v8120, 5
      %v8123 = vsel %vm4607, %v8118, %v8122
      %v8125 = vshrl.u32 %v7782, 16
      %v8127 = vrot.slane %v8125, 4
      %v8128 = vshll.u32 %v7782, 16
      %v8130 = vrot.slane %v8128, 5
      %v8131 = vor.u32 %v8127, %v8130
      %v8132 = vrot.slane %v8131, 4
      %v8134 = vshll.u32 %v7783, 16
      %v8136 = vrot.slane %v8134, 5
      %v8137 = vsel %vm4607, %v8132, %v8136
      %v8138 = vshrl.u32 %v7783, 16
      %v8140 = vrot.slane %v8138, 4
      %v8141 = vor.u32 %v8140, %v8136
      %v8142 = vrot.slane %v8141, 4
      %v8144 = vshll.u32 %v7784, 16
      %v8146 = vrot.slane %v8144, 5
      %v8147 = vsel %vm4607, %v8142, %v8146
      %v8149 = vshrl.u32 %v7785, 16
      %v8151 = vrot.slane %v8149, 4
      %v8152 = vshll.u32 %v7785, 16
      %v8154 = vrot.slane %v8152, 5
      %v8155 = vor.u32 %v8151, %v8154
      %v8156 = vrot.slane %v8155, 4
      %v8158 = vshll.u32 %v7786, 16
      %v8160 = vrot.slane %v8158, 5
      %v8161 = vsel %vm4607, %v8156, %v8160
      %v8162 = vshrl.u32 %v7786, 16
      %v8164 = vrot.slane %v8162, 4
      %v8165 = vor.u32 %v8164, %v8160
      %v8166 = vrot.slane %v8165, 4
      %v8168 = vshll.u32 %v7787, 16
      %v8170 = vrot.slane %v8168, 5
      %v8171 = vsel %vm4607, %v8166, %v8170
      %v8172 = vld [vmem:[%s3 + $0x70] sm:$0xf]
      %v8173 = vld [vmem:[%s3 + $0x74] sm:$0xf]
      %v8174 = vld [vmem:[%s3 + $0x78] sm:$0xf]
      %v8175 = vld [vmem:[%s3 + $0x7c] sm:$0xf]
      %v8176 = vunpack.c.l.b16 %v7801
      %v8177 = vunpack.c.l.b16 %v7811
      %v8178 = vunpack.c.l.b16 %v7825
      %v8179 = vunpack.c.l.b16 %v7835
      %v8180 = vunpack.c.l.b16 %v7849
      %v8181 = vunpack.c.l.b16 %v7859
      %v8182 = vunpack.c.l.b16 %v7873
      %v8183 = vunpack.c.l.b16 %v7883
      %v8184 = vunpack.c.l.b16 %v7897
      %v8185 = vunpack.c.l.b16 %v7907
      %v8186 = vunpack.c.l.b16 %v7921
      %v8187 = vunpack.c.l.b16 %v7931
      %v8188 = vunpack.c.l.b16 %v7945
      %v8189 = vunpack.c.l.b16 %v7955
      %v8190 = vunpack.c.l.b16 %v7969
      %v8191 = vunpack.c.l.b16 %v7979
      %v8192 = vunpack.c.l.b16 %v7993
      %v8193 = vunpack.c.l.b16 %v8003
      %v8194 = vunpack.c.l.b16 %v8017
      %v8195 = vunpack.c.l.b16 %v8027
      %v8196 = vunpack.c.l.b16 %v8041
      %v8197 = vunpack.c.l.b16 %v8051
      %v8198 = vunpack.c.l.b16 %v8065
      %v8199 = vunpack.c.l.b16 %v8075
      %v8200 = vunpack.c.l.b16 %v8089
      %v8201 = vunpack.c.l.b16 %v8099
      %v8202 = vunpack.c.l.b16 %v8113
      %v8203 = vunpack.c.l.b16 %v8123
      %v8204 = vunpack.c.l.b16 %v8137
      %v8205 = vunpack.c.l.b16 %v8147
      %v8206 = vunpack.c.l.b16 %v8161
      %v8207 = vunpack.c.l.b16 %v8171
      %v8208 = vpack.c.b16 %v8177, %v8176
      %v8209 = vpack.c.b16 %v8179, %v8178
      %v8210 = vpack.c.b16 %v8181, %v8180
      %v8211 = vpack.c.b16 %v8183, %v8182
      %v8212 = vpack.c.b16 %v8185, %v8184
      %v8213 = vpack.c.b16 %v8187, %v8186
      %v8214 = vpack.c.b16 %v8189, %v8188
      %v8215 = vpack.c.b16 %v8191, %v8190
      %v8216 = vpack.c.b16 %v8193, %v8192
      %v8217 = vpack.c.b16 %v8195, %v8194
      %v8218 = vpack.c.b16 %v8197, %v8196
      %v8219 = vpack.c.b16 %v8199, %v8198
      %v8220 = vpack.c.b16 %v8201, %v8200
      %v8221 = vpack.c.b16 %v8203, %v8202
      %v8222 = vpack.c.b16 %v8205, %v8204
      %v8223 = vpack.c.b16 %v8207, %v8206
      %v8228 = vunpack.c.l.b16 %v8172
      %v8229 = vunpack.c.l.b16 %v8173
      %v8230 = vunpack.c.l.b16 %v8174
      %v8231 = vunpack.c.l.b16 %v8175
      %v8232 = vpack.c.b16 %v8229, %v8228
      %v8233 = vpack.c.b16 %v8231, %v8230
      %v8237 = vsel %vm4315, %v8208, 0
      %v8240 = vsel %vm4315, %v8209, 0
      %v8243 = vsel %vm4315, %v8210, 0
      %v8246 = vsel %vm4315, %v8211, 0
      %v8249 = vsel %vm4315, %v8212, 0
      %v8252 = vsel %vm4315, %v8213, 0
      %v8255 = vsel %vm4315, %v8214, 0
      %v8258 = vsel %vm4315, %v8215, 0
      %v8261 = vsel %vm4315, %v8216, 0
      %v8264 = vsel %vm4315, %v8217, 0
      %v8267 = vsel %vm4315, %v8218, 0
      %v8270 = vsel %vm4315, %v8219, 0
      %v8273 = vsel %vm4315, %v8220, 0
      %v8276 = vsel %vm4315, %v8221, 0
      %v8279 = vsel %vm4315, %v8222, 0
      %v8282 = vsel %vm4315, %v8223, 0
      %8284 = vmatprep.subr.bf16.mxu0 0
      %8285 = vmatpush1.bf16.msra.mxu0 %v8232
      %8286 = vmatprep.subr.bf16.mxu0 0
      %8287 = vmatpush1.bf16.msra.mxu0 %v8233
      %8288 = vmatprep.subr.bf16.mxu0 0
      %8289 = vmatpush1.bf16.msra.mxu0 0
      %8290 = vmatprep.subr.bf16.mxu0 0
      %8291 = vmatpush1.bf16.msra.mxu0 0
      %8292 = vmatprep.subr.bf16.mxu0 0
      %8293 = vmatpush1.bf16.msra.mxu0 0
      %8294 = vmatprep.subr.bf16.mxu0 0
      %8295 = vmatpush1.bf16.msra.mxu0 0
      %8296 = vmatprep.subr.bf16.mxu0 0
      %8297 = vmatpush1.bf16.msra.mxu0 0
      %8298 = vmatprep.subr.bf16.mxu0 0
      %8299 = vmatpush1.bf16.msra.mxu0 0
      %8300 = vmatprep.subr.bf16.mxu0 0
      %8301 = vmatpush1.bf16.msra.mxu0 0
      %8302 = vmatprep.subr.bf16.mxu0 0
      %8303 = vmatpush1.bf16.msra.mxu0 0
      %8304 = vmatprep.subr.bf16.mxu0 0
      %8305 = vmatpush1.bf16.msra.mxu0 0
      %8306 = vmatprep.subr.bf16.mxu0 0
      %8307 = vmatpush1.bf16.msra.mxu0 0
      %8308 = vmatprep.subr.bf16.mxu0 0
      %8309 = vmatpush1.bf16.msra.mxu0 0
      %8310 = vmatprep.subr.bf16.mxu0 0
      %8311 = vmatpush1.bf16.msra.mxu0 0
      %8312 = vmatprep.subr.bf16.mxu0 0
      %8313 = vmatpush1.bf16.msra.mxu0 0
      %8314 = vmatprep.subr.bf16.mxu0 0
      %8315 = vmatpush1.bf16.msra.mxu0 0
      %8316 = vmatprep.mubr.bf16.mxu0 0
      %8317 = vmatmul.mubr.bf16.gmra.mrb[0].mxu0 %v8237
      %v8318 = vpop.f32.mrb[0].mxu0
      %v8319 = vadd.f32 0.0, %v8318
      %v8320 = vpop.f32.mrb[0].mxu0
      %v8321 = vpop.f32.mrb[0].mxu0
      %v8322 = vadd.f32 0.0, %v8321
      %v8323 = vpop.f32.mrb[0].mxu0
      %8324 = vmatprep.mubr.bf16.mxu0 0
      %8325 = vmatmul.mubr.bf16.gmra.mrb[0].mxu0 %v8240
      %v8326 = vpop.f32.mrb[0].mxu0
      %v8327 = vadd.f32 0.0, %v8326
      %v8328 = vpop.f32.mrb[0].mxu0
      %v8329 = vpop.f32.mrb[0].mxu0
      %v8330 = vadd.f32 0.0, %v8329
      %v8331 = vpop.f32.mrb[0].mxu0
      %8332 = vmatprep.mubr.bf16.mxu0 0
      %8333 = vmatmul.mubr.bf16.gmra.mrb[0].mxu0 %v8243
      %v8334 = vpop.f32.mrb[0].mxu0
      %v8335 = vadd.f32 0.0, %v8334
      %v8336 = vpop.f32.mrb[0].mxu0
      %v8337 = vpop.f32.mrb[0].mxu0
      %v8338 = vadd.f32 0.0, %v8337
      %v8339 = vpop.f32.mrb[0].mxu0
      %8340 = vmatprep.mubr.bf16.mxu0 0
      %8341 = vmatmul.mubr.bf16.gmra.mrb[0].mxu0 %v8246
      %v8342 = vpop.f32.mrb[0].mxu0
      %v8343 = vadd.f32 0.0, %v8342
      %v8344 = vpop.f32.mrb[0].mxu0
      %v8345 = vpop.f32.mrb[0].mxu0
      %v8346 = vadd.f32 0.0, %v8345
      %v8347 = vpop.f32.mrb[0].mxu0
      %8348 = vmatprep.mubr.bf16.mxu0 0
      %8349 = vmatmul.mubr.bf16.gmra.mrb[0].mxu0 %v8249
      %v8350 = vpop.f32.mrb[0].mxu0
      %v8351 = vadd.f32 0.0, %v8350
      %v8352 = vpop.f32.mrb[0].mxu0
      %v8353 = vpop.f32.mrb[0].mxu0
      %v8354 = vadd.f32 0.0, %v8353
      %v8355 = vpop.f32.mrb[0].mxu0
      %8356 = vmatprep.mubr.bf16.mxu0 0
      %8357 = vmatmul.mubr.bf16.gmra.mrb[0].mxu0 %v8252
      %v8358 = vpop.f32.mrb[0].mxu0
      %v8359 = vadd.f32 0.0, %v8358
      %v8360 = vpop.f32.mrb[0].mxu0
      %v8361 = vpop.f32.mrb[0].mxu0
      %v8362 = vadd.f32 0.0, %v8361
      %v8363 = vpop.f32.mrb[0].mxu0
      %8364 = vmatprep.mubr.bf16.mxu0 0
      %8365 = vmatmul.mubr.bf16.gmra.mrb[0].mxu0 %v8255
      %v8366 = vpop.f32.mrb[0].mxu0
      %v8367 = vadd.f32 0.0, %v8366
      %v8368 = vpop.f32.mrb[0].mxu0
      %v8369 = vpop.f32.mrb[0].mxu0
      %v8370 = vadd.f32 0.0, %v8369
      %v8371 = vpop.f32.mrb[0].mxu0
      %8372 = vmatprep.mubr.bf16.mxu0 0
      %8373 = vmatmul.mubr.bf16.gmra.mrb[0].mxu0 %v8258
      %v8374 = vpop.f32.mrb[0].mxu0
      %v8375 = vadd.f32 0.0, %v8374
      %v8376 = vpop.f32.mrb[0].mxu0
      %v8377 = vpop.f32.mrb[0].mxu0
      %v8378 = vadd.f32 0.0, %v8377
      %v8379 = vpop.f32.mrb[0].mxu0
      %8380 = vmatprep.mubr.bf16.mxu0 0
      %8381 = vmatmul.mubr.bf16.gmra.mrb[0].mxu0 %v8261
      %v8382 = vpop.f32.mrb[0].mxu0
      %v8383 = vadd.f32 0.0, %v8382
      %v8384 = vpop.f32.mrb[0].mxu0
      %v8385 = vpop.f32.mrb[0].mxu0
      %v8386 = vadd.f32 0.0, %v8385
      %v8387 = vpop.f32.mrb[0].mxu0
      %8388 = vmatprep.mubr.bf16.mxu0 0
      %8389 = vmatmul.mubr.bf16.gmra.mrb[0].mxu0 %v8264
      %v8390 = vpop.f32.mrb[0].mxu0
      %v8391 = vadd.f32 0.0, %v8390
      %v8392 = vpop.f32.mrb[0].mxu0
      %v8393 = vpop.f32.mrb[0].mxu0
      %v8394 = vadd.f32 0.0, %v8393
      %v8395 = vpop.f32.mrb[0].mxu0
      %8396 = vmatprep.mubr.bf16.mxu0 0
      %8397 = vmatmul.mubr.bf16.gmra.mrb[0].mxu0 %v8267
      %v8398 = vpop.f32.mrb[0].mxu0
      %v8399 = vadd.f32 0.0, %v8398
      %v8400 = vpop.f32.mrb[0].mxu0
      %v8401 = vpop.f32.mrb[0].mxu0
      %v8402 = vadd.f32 0.0, %v8401
      %v8403 = vpop.f32.mrb[0].mxu0
      %8404 = vmatprep.mubr.bf16.mxu0 0
      %8405 = vmatmul.mubr.bf16.gmra.mrb[0].mxu0 %v8270
      %v8406 = vpop.f32.mrb[0].mxu0
      %v8407 = vadd.f32 0.0, %v8406
      %v8408 = vpop.f32.mrb[0].mxu0
      %v8409 = vpop.f32.mrb[0].mxu0
      %v8410 = vadd.f32 0.0, %v8409
      %v8411 = vpop.f32.mrb[0].mxu0
      %8412 = vmatprep.mubr.bf16.mxu0 0
      %8413 = vmatmul.mubr.bf16.gmra.mrb[0].mxu0 %v8273
      %v8414 = vpop.f32.mrb[0].mxu0
      %v8415 = vadd.f32 0.0, %v8414
      %v8416 = vpop.f32.mrb[0].mxu0
      %v8417 = vpop.f32.mrb[0].mxu0
      %v8418 = vadd.f32 0.0, %v8417
      %v8419 = vpop.f32.mrb[0].mxu0
      %8420 = vmatprep.mubr.bf16.mxu0 0
      %8421 = vmatmul.mubr.bf16.gmra.mrb[0].mxu0 %v8276
      %v8422 = vpop.f32.mrb[0].mxu0
      %v8423 = vadd.f32 0.0, %v8422
      %v8424 = vpop.f32.mrb[0].mxu0
      %v8425 = vpop.f32.mrb[0].mxu0
      %v8426 = vadd.f32 0.0, %v8425
      %v8427 = vpop.f32.mrb[0].mxu0
      %8428 = vmatprep.mubr.bf16.mxu0 0
      %8429 = vmatmul.mubr.bf16.gmra.mrb[0].mxu0 %v8279
      %v8430 = vpop.f32.mrb[0].mxu0
      %v8431 = vadd.f32 0.0, %v8430
      %v8432 = vpop.f32.mrb[0].mxu0
      %v8433 = vpop.f32.mrb[0].mxu0
      %v8434 = vadd.f32 0.0, %v8433
      %v8435 = vpop.f32.mrb[0].mxu0
      %8436 = vmatprep.mubr.bf16.mxu0 0
      %8437 = vmatmul.mubr.bf16.gmra.mrb[0].mxu0 %v8282
      %v8438 = vpop.f32.mrb[0].mxu0
      %v8439 = vadd.f32 0.0, %v8438
      %v8440 = vpop.f32.mrb[0].mxu0
      %v8441 = vpop.f32.mrb[0].mxu0
      %v8442 = vadd.f32 0.0, %v8441
      %v8443 = vpop.f32.mrb[0].mxu0
      %8444 = vdwg.mxu0
      %v8445 = vadd.f32 %v7708, %v8319
      %v8446 = vadd.f32 %v7709, %v8322
      %v8447 = vadd.f32 %v7710, %v8327
      %v8448 = vadd.f32 %v7711, %v8330
      %v8449 = vadd.f32 %v7712, %v8335
      %v8450 = vadd.f32 %v7713, %v8338
      %v8451 = vadd.f32 %v7714, %v8343
      %v8452 = vadd.f32 %v7715, %v8346
      %v8453 = vadd.f32 %v7716, %v8351
      %v8454 = vadd.f32 %v7717, %v8354
      %v8455 = vadd.f32 %v7718, %v8359
      %v8456 = vadd.f32 %v7719, %v8362
      %v8457 = vadd.f32 %v7720, %v8367
      %v8458 = vadd.f32 %v7721, %v8370
      %v8459 = vadd.f32 %v7722, %v8375
      %v8460 = vadd.f32 %v7723, %v8378
      %v8461 = vadd.f32 %v7724, %v8383
      %v8462 = vadd.f32 %v7725, %v8386
      %v8463 = vadd.f32 %v7726, %v8391
      %v8464 = vadd.f32 %v7727, %v8394
      %v8465 = vadd.f32 %v7728, %v8399
      %v8466 = vadd.f32 %v7729, %v8402
      %v8467 = vadd.f32 %v7730, %v8407
      %v8468 = vadd.f32 %v7731, %v8410
      %v8469 = vadd.f32 %v7732, %v8415
      %v8470 = vadd.f32 %v7733, %v8418
      %v8471 = vadd.f32 %v7734, %v8423
      %v8472 = vadd.f32 %v7735, %v8426
      %v8473 = vadd.f32 %v7736, %v8431
      %v8474 = vadd.f32 %v7737, %v8434
      %v8475 = vadd.f32 %v7738, %v8439
      %v8476 = vadd.f32 %v7739, %v8442
      %v8477 = vld [vmem:[%s7370] sm:$0xe]
      %v8478 = vld [vmem:[%s7370 + $0xc] sm:$0xe]
      %v8479 = vld [vmem:[%s7370 + $0x18] sm:$0xe]
      %v8480 = vld [vmem:[%s7370 + $0x24] sm:$0xe]
      %v8481 = vld [vmem:[%s7370 + $0x30] sm:$0xe]
      %v8482 = vld [vmem:[%s7370 + $0x3c] sm:$0xe]
      %v8483 = vld [vmem:[%s7370 + $0x48] sm:$0xe]
      %v8484 = vld [vmem:[%s7370 + $0x54] sm:$0xe]
      %v8485 = vld [vmem:[%s7370 + $0x60] sm:$0xe]
      %v8486 = vld [vmem:[%s7370 + $0x6c] sm:$0xe]
      %v8487 = vld [vmem:[%s7370 + $0x78] sm:$0xe]
      %v8488 = vld [vmem:[%s7370 + $0x84] sm:$0xe]
      %v8489 = vld [vmem:[%s7370 + $0x90] sm:$0xe]
      %v8490 = vld [vmem:[%s7370 + $0x9c] sm:$0xe]
      %v8491 = vld [vmem:[%s7370 + $0xa8] sm:$0xe]
      %v8492 = vld [vmem:[%s7370 + $0xb4] sm:$0xe]
      %v8541 = vrot.slane %v8477, 5
      %v8542 = vrot.slane %v8541, 4
      %v8543 = vrot.slane %v7741, 5
      %v8544 = vsel %vm383, %v8542, %v8543
      %v8545 = vrot.slane %v8543, 4
      %v8546 = vrot.slane %v7742, 5
      %v8547 = vsel %vm383, %v8545, %v8546
      %v8548 = vrot.slane %v8478, 5
      %v8549 = vrot.slane %v8548, 4
      %v8550 = vrot.slane %v7744, 5
      %v8551 = vsel %vm383, %v8549, %v8550
      %v8552 = vrot.slane %v8550, 4
      %v8553 = vrot.slane %v7745, 5
      %v8554 = vsel %vm383, %v8552, %v8553
      %v8555 = vrot.slane %v8479, 5
      %v8556 = vrot.slane %v8555, 4
      %v8557 = vrot.slane %v7747, 5
      %v8558 = vsel %vm383, %v8556, %v8557
      %v8559 = vrot.slane %v8557, 4
      %v8560 = vrot.slane %v7748, 5
      %v8561 = vsel %vm383, %v8559, %v8560
      %v8562 = vrot.slane %v8480, 5
      %v8563 = vrot.slane %v8562, 4
      %v8564 = vrot.slane %v7750, 5
      %v8565 = vsel %vm383, %v8563, %v8564
      %v8566 = vrot.slane %v8564, 4
      %v8567 = vrot.slane %v7751, 5
      %v8568 = vsel %vm383, %v8566, %v8567
      %v8569 = vrot.slane %v8481, 5
      %v8570 = vrot.slane %v8569, 4
      %v8571 = vrot.slane %v7753, 5
      %v8572 = vsel %vm383, %v8570, %v8571
      %v8573 = vrot.slane %v8571, 4
      %v8574 = vrot.slane %v7754, 5
      %v8575 = vsel %vm383, %v8573, %v8574
      %v8576 = vrot.slane %v8482, 5
      %v8577 = vrot.slane %v8576, 4
      %v8578 = vrot.slane %v7756, 5
      %v8579 = vsel %vm383, %v8577, %v8578
      %v8580 = vrot.slane %v8578, 4
      %v8581 = vrot.slane %v7757, 5
      %v8582 = vsel %vm383, %v8580, %v8581
      %v8583 = vrot.slane %v8483, 5
      %v8584 = vrot.slane %v8583, 4
      %v8585 = vrot.slane %v7759, 5
      %v8586 = vsel %vm383, %v8584, %v8585
      %v8587 = vrot.slane %v8585, 4
      %v8588 = vrot.slane %v7760, 5
      %v8589 = vsel %vm383, %v8587, %v8588
      %v8590 = vrot.slane %v8484, 5
      %v8591 = vrot.slane %v8590, 4
      %v8592 = vrot.slane %v7762, 5
      %v8593 = vsel %vm383, %v8591, %v8592
      %v8594 = vrot.slane %v8592, 4
      %v8595 = vrot.slane %v7763, 5
      %v8596 = vsel %vm383, %v8594, %v8595
      %v8597 = vrot.slane %v8485, 5
      %v8598 = vrot.slane %v8597, 4
      %v8599 = vrot.slane %v7765, 5
      %v8600 = vsel %vm383, %v8598, %v8599
      %v8601 = vrot.slane %v8599, 4
      %v8602 = vrot.slane %v7766, 5
      %v8603 = vsel %vm383, %v8601, %v8602
      %v8604 = vrot.slane %v8486, 5
      %v8605 = vrot.slane %v8604, 4
      %v8606 = vrot.slane %v7768, 5
      %v8607 = vsel %vm383, %v8605, %v8606
      %v8608 = vrot.slane %v8606, 4
      %v8609 = vrot.slane %v7769, 5
      %v8610 = vsel %vm383, %v8608, %v8609
      %v8611 = vrot.slane %v8487, 5
      %v8612 = vrot.slane %v8611, 4
      %v8613 = vrot.slane %v7771, 5
      %v8614 = vsel %vm383, %v8612, %v8613
      %v8615 = vrot.slane %v8613, 4
      %v8616 = vrot.slane %v7772, 5
      %v8617 = vsel %vm383, %v8615, %v8616
      %v8618 = vrot.slane %v8488, 5
      %v8619 = vrot.slane %v8618, 4
      %v8620 = vrot.slane %v7774, 5
      %v8621 = vsel %vm383, %v8619, %v8620
      %v8622 = vrot.slane %v8620, 4
      %v8623 = vrot.slane %v7775, 5
      %v8624 = vsel %vm383, %v8622, %v8623
      %v8625 = vrot.slane %v8489, 5
      %v8626 = vrot.slane %v8625, 4
      %v8627 = vrot.slane %v7777, 5
      %v8628 = vsel %vm383, %v8626, %v8627
      %v8629 = vrot.slane %v8627, 4
      %v8630 = vrot.slane %v7778, 5
      %v8631 = vsel %vm383, %v8629, %v8630
      %v8632 = vrot.slane %v8490, 5
      %v8633 = vrot.slane %v8632, 4
      %v8634 = vrot.slane %v7780, 5
      %v8635 = vsel %vm383, %v8633, %v8634
      %v8636 = vrot.slane %v8634, 4
      %v8637 = vrot.slane %v7781, 5
      %v8638 = vsel %vm383, %v8636, %v8637
      %v8639 = vrot.slane %v8491, 5
      %v8640 = vrot.slane %v8639, 4
      %v8641 = vrot.slane %v7783, 5
      %v8642 = vsel %vm383, %v8640, %v8641
      %v8643 = vrot.slane %v8641, 4
      %v8644 = vrot.slane %v7784, 5
      %v8645 = vsel %vm383, %v8643, %v8644
      %v8646 = vrot.slane %v8492, 5
      %v8647 = vrot.slane %v8646, 4
      %v8648 = vrot.slane %v7786, 5
      %v8649 = vsel %vm383, %v8647, %v8648
      %v8650 = vrot.slane %v8648, 4
      %v8651 = vrot.slane %v7787, 5
      %v8652 = vsel %vm383, %v8650, %v8651
      %v8653 = vld [vmem:[%s3 + $0x80] sm:$0xf]
      %v8654 = vld [vmem:[%s3 + $0x84] sm:$0xf]
      %v8655 = vld [vmem:[%s3 + $0x88] sm:$0xf]
      %v8656 = vld [vmem:[%s3 + $0x8c] sm:$0xf]
      %v8657 = vunpack.c.l.b16 %v8544
      %v8658 = vunpack.c.l.b16 %v8547
      %v8659 = vunpack.c.l.b16 %v8551
      %v8660 = vunpack.c.l.b16 %v8554
      %v8661 = vunpack.c.l.b16 %v8558
      %v8662 = vunpack.c.l.b16 %v8561
      %v8663 = vunpack.c.l.b16 %v8565
      %v8664 = vunpack.c.l.b16 %v8568
      %v8665 = vunpack.c.l.b16 %v8572
      %v8666 = vunpack.c.l.b16 %v8575
      %v8667 = vunpack.c.l.b16 %v8579
      %v8668 = vunpack.c.l.b16 %v8582
      %v8669 = vunpack.c.l.b16 %v8586
      %v8670 = vunpack.c.l.b16 %v8589
      %v8671 = vunpack.c.l.b16 %v8593
      %v8672 = vunpack.c.l.b16 %v8596
      %v8673 = vunpack.c.l.b16 %v8600
      %v8674 = vunpack.c.l.b16 %v8603
      %v8675 = vunpack.c.l.b16 %v8607
      %v8676 = vunpack.c.l.b16 %v8610
      %v8677 = vunpack.c.l.b16 %v8614
      %v8678 = vunpack.c.l.b16 %v8617
      %v8679 = vunpack.c.l.b16 %v8621
      %v8680 = vunpack.c.l.b16 %v8624
      %v8681 = vunpack.c.l.b16 %v8628
      %v8682 = vunpack.c.l.b16 %v8631
      %v8683 = vunpack.c.l.b16 %v8635
      %v8684 = vunpack.c.l.b16 %v8638
      %v8685 = vunpack.c.l.b16 %v8642
      %v8686 = vunpack.c.l.b16 %v8645
      %v8687 = vunpack.c.l.b16 %v8649
      %v8688 = vunpack.c.l.b16 %v8652
      %v8689 = vpack.c.b16 %v8658, %v8657
      %v8690 = vpack.c.b16 %v8660, %v8659
      %v8691 = vpack.c.b16 %v8662, %v8661
      %v8692 = vpack.c.b16 %v8664, %v8663
      %v8693 = vpack.c.b16 %v8666, %v8665
      %v8694 = vpack.c.b16 %v8668, %v8667
      %v8695 = vpack.c.b16 %v8670, %v8669
      %v8696 = vpack.c.b16 %v8672, %v8671
      %v8697 = vpack.c.b16 %v8674, %v8673
      %v8698 = vpack.c.b16 %v8676, %v8675
      %v8699 = vpack.c.b16 %v8678, %v8677
      %v8700 = vpack.c.b16 %v8680, %v8679
      %v8701 = vpack.c.b16 %v8682, %v8681
      %v8702 = vpack.c.b16 %v8684, %v8683
      %v8703 = vpack.c.b16 %v8686, %v8685
      %v8704 = vpack.c.b16 %v8688, %v8687
      %v8709 = vunpack.c.l.b16 %v8653
      %v8710 = vunpack.c.l.b16 %v8654
      %v8711 = vunpack.c.l.b16 %v8655
      %v8712 = vunpack.c.l.b16 %v8656
      %v8713 = vpack.c.b16 %v8710, %v8709
      %v8714 = vpack.c.b16 %v8712, %v8711
      %v8718 = vsel %vm4315, %v8689, 0
      %v8721 = vsel %vm4315, %v8690, 0
      %v8724 = vsel %vm4315, %v8691, 0
      %v8727 = vsel %vm4315, %v8692, 0
      %v8730 = vsel %vm4315, %v8693, 0
      %v8733 = vsel %vm4315, %v8694, 0
      %v8736 = vsel %vm4315, %v8695, 0
      %v8739 = vsel %vm4315, %v8696, 0
      %v8742 = vsel %vm4315, %v8697, 0
      %v8745 = vsel %vm4315, %v8698, 0
      %v8748 = vsel %vm4315, %v8699, 0
      %v8751 = vsel %vm4315, %v8700, 0
      %v8754 = vsel %vm4315, %v8701, 0
      %v8757 = vsel %vm4315, %v8702, 0
      %v8760 = vsel %vm4315, %v8703, 0
      %v8763 = vsel %vm4315, %v8704, 0
      %8765 = vmatprep.subr.bf16.mxu0 0
      %8766 = vmatpush1.bf16.msra.mxu0 %v8713
      %8767 = vmatprep.subr.bf16.mxu0 0
      %8768 = vmatpush1.bf16.msra.mxu0 %v8714
      %8769 = vmatprep.subr.bf16.mxu0 0
      %8770 = vmatpush1.bf16.msra.mxu0 0
      %8771 = vmatprep.subr.bf16.mxu0 0
      %8772 = vmatpush1.bf16.msra.mxu0 0
      %8773 = vmatprep.subr.bf16.mxu0 0
      %8774 = vmatpush1.bf16.msra.mxu0 0
      %8775 = vmatprep.subr.bf16.mxu0 0
      %8776 = vmatpush1.bf16.msra.mxu0 0
      %8777 = vmatprep.subr.bf16.mxu0 0
      %8778 = vmatpush1.bf16.msra.mxu0 0
      %8779 = vmatprep.subr.bf16.mxu0 0
      %8780 = vmatpush1.bf16.msra.mxu0 0
      %8781 = vmatprep.subr.bf16.mxu0 0
      %8782 = vmatpush1.bf16.msra.mxu0 0
      %8783 = vmatprep.subr.bf16.mxu0 0
      %8784 = vmatpush1.bf16.msra.mxu0 0
      %8785 = vmatprep.subr.bf16.mxu0 0
      %8786 = vmatpush1.bf16.msra.mxu0 0
      %8787 = vmatprep.subr.bf16.mxu0 0
      %8788 = vmatpush1.bf16.msra.mxu0 0
      %8789 = vmatprep.subr.bf16.mxu0 0
      %8790 = vmatpush1.bf16.msra.mxu0 0
      %8791 = vmatprep.subr.bf16.mxu0 0
      %8792 = vmatpush1.bf16.msra.mxu0 0
      %8793 = vmatprep.subr.bf16.mxu0 0
      %8794 = vmatpush1.bf16.msra.mxu0 0
      %8795 = vmatprep.subr.bf16.mxu0 0
      %8796 = vmatpush1.bf16.msra.mxu0 0
      %8797 = vmatprep.mubr.bf16.mxu0 0
      %8798 = vmatmul.mubr.bf16.gmra.mrb[0].mxu0 %v8718
      %v8799 = vpop.f32.mrb[0].mxu0
      %v8800 = vadd.f32 0.0, %v8799
      %v8801 = vpop.f32.mrb[0].mxu0
      %v8802 = vpop.f32.mrb[0].mxu0
      %v8803 = vadd.f32 0.0, %v8802
      %v8804 = vpop.f32.mrb[0].mxu0
      %8805 = vmatprep.mubr.bf16.mxu0 0
      %8806 = vmatmul.mubr.bf16.gmra.mrb[0].mxu0 %v8721
      %v8807 = vpop.f32.mrb[0].mxu0
      %v8808 = vadd.f32 0.0, %v8807
      %v8809 = vpop.f32.mrb[0].mxu0
      %v8810 = vpop.f32.mrb[0].mxu0
      %v8811 = vadd.f32 0.0, %v8810
      %v8812 = vpop.f32.mrb[0].mxu0
      %8813 = vmatprep.mubr.bf16.mxu0 0
      %8814 = vmatmul.mubr.bf16.gmra.mrb[0].mxu0 %v8724
      %v8815 = vpop.f32.mrb[0].mxu0
      %v8816 = vadd.f32 0.0, %v8815
      %v8817 = vpop.f32.mrb[0].mxu0
      %v8818 = vpop.f32.mrb[0].mxu0
      %v8819 = vadd.f32 0.0, %v8818
      %v8820 = vpop.f32.mrb[0].mxu0
      %8821 = vmatprep.mubr.bf16.mxu0 0
      %8822 = vmatmul.mubr.bf16.gmra.mrb[0].mxu0 %v8727
      %v8823 = vpop.f32.mrb[0].mxu0
      %v8824 = vadd.f32 0.0, %v8823
      %v8825 = vpop.f32.mrb[0].mxu0
      %v8826 = vpop.f32.mrb[0].mxu0
      %v8827 = vadd.f32 0.0, %v8826
      %v8828 = vpop.f32.mrb[0].mxu0
      %8829 = vmatprep.mubr.bf16.mxu0 0
      %8830 = vmatmul.mubr.bf16.gmra.mrb[0].mxu0 %v8730
      %v8831 = vpop.f32.mrb[0].mxu0
      %v8832 = vadd.f32 0.0, %v8831
      %v8833 = vpop.f32.mrb[0].mxu0
      %v8834 = vpop.f32.mrb[0].mxu0
      %v8835 = vadd.f32 0.0, %v8834
      %v8836 = vpop.f32.mrb[0].mxu0
      %8837 = vmatprep.mubr.bf16.mxu0 0
      %8838 = vmatmul.mubr.bf16.gmra.mrb[0].mxu0 %v8733
      %v8839 = vpop.f32.mrb[0].mxu0
      %v8840 = vadd.f32 0.0, %v8839
      %v8841 = vpop.f32.mrb[0].mxu0
      %v8842 = vpop.f32.mrb[0].mxu0
      %v8843 = vadd.f32 0.0, %v8842
      %v8844 = vpop.f32.mrb[0].mxu0
      %8845 = vmatprep.mubr.bf16.mxu0 0
      %8846 = vmatmul.mubr.bf16.gmra.mrb[0].mxu0 %v8736
      %v8847 = vpop.f32.mrb[0].mxu0
      %v8848 = vadd.f32 0.0, %v8847
      %v8849 = vpop.f32.mrb[0].mxu0
      %v8850 = vpop.f32.mrb[0].mxu0
      %v8851 = vadd.f32 0.0, %v8850
      %v8852 = vpop.f32.mrb[0].mxu0
      %8853 = vmatprep.mubr.bf16.mxu0 0
      %8854 = vmatmul.mubr.bf16.gmra.mrb[0].mxu0 %v8739
      %v8855 = vpop.f32.mrb[0].mxu0
      %v8856 = vadd.f32 0.0, %v8855
      %v8857 = vpop.f32.mrb[0].mxu0
      %v8858 = vpop.f32.mrb[0].mxu0
      %v8859 = vadd.f32 0.0, %v8858
      %v8860 = vpop.f32.mrb[0].mxu0
      %8861 = vmatprep.mubr.bf16.mxu0 0
      %8862 = vmatmul.mubr.bf16.gmra.mrb[0].mxu0 %v8742
      %v8863 = vpop.f32.mrb[0].mxu0
      %v8864 = vadd.f32 0.0, %v8863
      %v8865 = vpop.f32.mrb[0].mxu0
      %v8866 = vpop.f32.mrb[0].mxu0
      %v8867 = vadd.f32 0.0, %v8866
      %v8868 = vpop.f32.mrb[0].mxu0
      %8869 = vmatprep.mubr.bf16.mxu0 0
      %8870 = vmatmul.mubr.bf16.gmra.mrb[0].mxu0 %v8745
      %v8871 = vpop.f32.mrb[0].mxu0
      %v8872 = vadd.f32 0.0, %v8871
      %v8873 = vpop.f32.mrb[0].mxu0
      %v8874 = vpop.f32.mrb[0].mxu0
      %v8875 = vadd.f32 0.0, %v8874
      %v8876 = vpop.f32.mrb[0].mxu0
      %8877 = vmatprep.mubr.bf16.mxu0 0
      %8878 = vmatmul.mubr.bf16.gmra.mrb[0].mxu0 %v8748
      %v8879 = vpop.f32.mrb[0].mxu0
      %v8880 = vadd.f32 0.0, %v8879
      %v8881 = vpop.f32.mrb[0].mxu0
      %v8882 = vpop.f32.mrb[0].mxu0
      %v8883 = vadd.f32 0.0, %v8882
      %v8884 = vpop.f32.mrb[0].mxu0
      %8885 = vmatprep.mubr.bf16.mxu0 0
      %8886 = vmatmul.mubr.bf16.gmra.mrb[0].mxu0 %v8751
      %v8887 = vpop.f32.mrb[0].mxu0
      %v8888 = vadd.f32 0.0, %v8887
      %v8889 = vpop.f32.mrb[0].mxu0
      %v8890 = vpop.f32.mrb[0].mxu0
      %v8891 = vadd.f32 0.0, %v8890
      %v8892 = vpop.f32.mrb[0].mxu0
      %8893 = vmatprep.mubr.bf16.mxu0 0
      %8894 = vmatmul.mubr.bf16.gmra.mrb[0].mxu0 %v8754
      %v8895 = vpop.f32.mrb[0].mxu0
      %v8896 = vadd.f32 0.0, %v8895
      %v8897 = vpop.f32.mrb[0].mxu0
      %v8898 = vpop.f32.mrb[0].mxu0
      %v8899 = vadd.f32 0.0, %v8898
      %v8900 = vpop.f32.mrb[0].mxu0
      %8901 = vmatprep.mubr.bf16.mxu0 0
      %8902 = vmatmul.mubr.bf16.gmra.mrb[0].mxu0 %v8757
      %v8903 = vpop.f32.mrb[0].mxu0
      %v8904 = vadd.f32 0.0, %v8903
      %v8905 = vpop.f32.mrb[0].mxu0
      %v8906 = vpop.f32.mrb[0].mxu0
      %v8907 = vadd.f32 0.0, %v8906
      %v8908 = vpop.f32.mrb[0].mxu0
      %8909 = vmatprep.mubr.bf16.mxu0 0
      %8910 = vmatmul.mubr.bf16.gmra.mrb[0].mxu0 %v8760
      %v8911 = vpop.f32.mrb[0].mxu0
      %v8912 = vadd.f32 0.0, %v8911
      %v8913 = vpop.f32.mrb[0].mxu0
      %v8914 = vpop.f32.mrb[0].mxu0
      %v8915 = vadd.f32 0.0, %v8914
      %v8916 = vpop.f32.mrb[0].mxu0
      %8917 = vmatprep.mubr.bf16.mxu0 0
      %8918 = vmatmul.mubr.bf16.gmra.mrb[0].mxu0 %v8763
      %v8919 = vpop.f32.mrb[0].mxu0
      %v8920 = vadd.f32 0.0, %v8919
      %v8921 = vpop.f32.mrb[0].mxu0
      %v8922 = vpop.f32.mrb[0].mxu0
      %v8923 = vadd.f32 0.0, %v8922
      %v8924 = vpop.f32.mrb[0].mxu0
      %8925 = vdwg.mxu0
      %v8926 = vadd.f32 %v8445, %v8800
      %v8927 = vadd.f32 %v8446, %v8803
      %v8928 = vadd.f32 %v8447, %v8808
      %v8929 = vadd.f32 %v8448, %v8811
      %v8930 = vadd.f32 %v8449, %v8816
      %v8931 = vadd.f32 %v8450, %v8819
      %v8932 = vadd.f32 %v8451, %v8824
      %v8933 = vadd.f32 %v8452, %v8827
      %v8934 = vadd.f32 %v8453, %v8832
      %v8935 = vadd.f32 %v8454, %v8835
      %v8936 = vadd.f32 %v8455, %v8840
      %v8937 = vadd.f32 %v8456, %v8843
      %v8938 = vadd.f32 %v8457, %v8848
      %v8939 = vadd.f32 %v8458, %v8851
      %v8940 = vadd.f32 %v8459, %v8856
      %v8941 = vadd.f32 %v8460, %v8859
      %v8942 = vadd.f32 %v8461, %v8864
      %v8943 = vadd.f32 %v8462, %v8867
      %v8944 = vadd.f32 %v8463, %v8872
      %v8945 = vadd.f32 %v8464, %v8875
      %v8946 = vadd.f32 %v8465, %v8880
      %v8947 = vadd.f32 %v8466, %v8883
      %v8948 = vadd.f32 %v8467, %v8888
      %v8949 = vadd.f32 %v8468, %v8891
      %v8950 = vadd.f32 %v8469, %v8896
      %v8951 = vadd.f32 %v8470, %v8899
      %v8952 = vadd.f32 %v8471, %v8904
      %v8953 = vadd.f32 %v8472, %v8907
      %v8954 = vadd.f32 %v8473, %v8912
      %v8955 = vadd.f32 %v8474, %v8915
      %v8956 = vadd.f32 %v8475, %v8920
      %v8957 = vadd.f32 %v8476, %v8923
      %v8958 = vld [vmem:[%s4] sm:$0x1]
      %v8960 = vlaneseq
      %v8961 = vshrl.u32 %v8960, 7
      %v8962 = vsub.s32 0, %v8961
      %v8963 = vrot.slane %v8958, %v8962
      %v8965 = vadd.f32 %v8926, %v8963
      %v8966 = vadd.f32 %v8927, %v8963
      %v8967 = vadd.f32 %v8928, %v8963
      %v8968 = vadd.f32 %v8929, %v8963
      %v8969 = vadd.f32 %v8930, %v8963
      %v8970 = vadd.f32 %v8931, %v8963
      %v8971 = vadd.f32 %v8932, %v8963
      %v8972 = vadd.f32 %v8933, %v8963
      %v8973 = vadd.f32 %v8934, %v8963
      %v8974 = vadd.f32 %v8935, %v8963
      %v8975 = vadd.f32 %v8936, %v8963
      %v8976 = vadd.f32 %v8937, %v8963
      %v8977 = vadd.f32 %v8938, %v8963
      %v8978 = vadd.f32 %v8939, %v8963
      %v8979 = vadd.f32 %v8940, %v8963
      %v8980 = vadd.f32 %v8941, %v8963
      %v8981 = vadd.f32 %v8942, %v8963
      %v8982 = vadd.f32 %v8943, %v8963
      %v8983 = vadd.f32 %v8944, %v8963
      %v8984 = vadd.f32 %v8945, %v8963
      %v8985 = vadd.f32 %v8946, %v8963
      %v8986 = vadd.f32 %v8947, %v8963
      %v8987 = vadd.f32 %v8948, %v8963
      %v8988 = vadd.f32 %v8949, %v8963
      %v8989 = vadd.f32 %v8950, %v8963
      %v8990 = vadd.f32 %v8951, %v8963
      %v8991 = vadd.f32 %v8952, %v8963
      %v8992 = vadd.f32 %v8953, %v8963
      %v8993 = vadd.f32 %v8954, %v8963
      %v8994 = vadd.f32 %v8955, %v8963
      %v8995 = vadd.f32 %v8956, %v8963
      %v8996 = vadd.f32 %v8957, %v8963
      %vm8997 = vcmp.gt.f32.partialorder %v8965, 0.0
      %vm8998 = vcmp.gt.f32.partialorder %v8966, 0.0
      %vm8999 = vcmp.gt.f32.partialorder %v8967, 0.0
      %vm9000 = vcmp.gt.f32.partialorder %v8968, 0.0
      %vm9001 = vcmp.gt.f32.partialorder %v8969, 0.0
      %vm9002 = vcmp.gt.f32.partialorder %v8970, 0.0
      %vm9003 = vcmp.gt.f32.partialorder %v8971, 0.0
      %vm9004 = vcmp.gt.f32.partialorder %v8972, 0.0
      %vm9005 = vcmp.gt.f32.partialorder %v8973, 0.0
      %vm9006 = vcmp.gt.f32.partialorder %v8974, 0.0
      %vm9007 = vcmp.gt.f32.partialorder %v8975, 0.0
      %vm9008 = vcmp.gt.f32.partialorder %v8976, 0.0
      %vm9009 = vcmp.gt.f32.partialorder %v8977, 0.0
      %vm9010 = vcmp.gt.f32.partialorder %v8978, 0.0
      %vm9011 = vcmp.gt.f32.partialorder %v8979, 0.0
      %vm9012 = vcmp.gt.f32.partialorder %v8980, 0.0
      %vm9013 = vcmp.gt.f32.partialorder %v8981, 0.0
      %vm9014 = vcmp.gt.f32.partialorder %v8982, 0.0
      %vm9015 = vcmp.gt.f32.partialorder %v8983, 0.0
      %vm9016 = vcmp.gt.f32.partialorder %v8984, 0.0
      %vm9017 = vcmp.gt.f32.partialorder %v8985, 0.0
      %vm9018 = vcmp.gt.f32.partialorder %v8986, 0.0
      %vm9019 = vcmp.gt.f32.partialorder %v8987, 0.0
      %vm9020 = vcmp.gt.f32.partialorder %v8988, 0.0
      %vm9021 = vcmp.gt.f32.partialorder %v8989, 0.0
      %vm9022 = vcmp.gt.f32.partialorder %v8990, 0.0
      %vm9023 = vcmp.gt.f32.partialorder %v8991, 0.0
      %vm9024 = vcmp.gt.f32.partialorder %v8992, 0.0
      %vm9025 = vcmp.gt.f32.partialorder %v8993, 0.0
      %vm9026 = vcmp.gt.f32.partialorder %v8994, 0.0
      %vm9027 = vcmp.gt.f32.partialorder %v8995, 0.0
      %vm9028 = vcmp.gt.f32.partialorder %v8996, 0.0
      %v9029 = vmul.f32 %v8965, 0.01
      %v9030 = vmul.f32 %v8966, 0.01
      %v9031 = vmul.f32 %v8967, 0.01
      %v9032 = vmul.f32 %v8968, 0.01
      %v9033 = vmul.f32 %v8969, 0.01
      %v9034 = vmul.f32 %v8970, 0.01
      %v9035 = vmul.f32 %v8971, 0.01
      %v9036 = vmul.f32 %v8972, 0.01
      %v9037 = vmul.f32 %v8973, 0.01
      %v9038 = vmul.f32 %v8974, 0.01
      %v9039 = vmul.f32 %v8975, 0.01
      %v9040 = vmul.f32 %v8976, 0.01
      %v9041 = vmul.f32 %v8977, 0.01
      %v9042 = vmul.f32 %v8978, 0.01
      %v9043 = vmul.f32 %v8979, 0.01
      %v9044 = vmul.f32 %v8980, 0.01
      %v9045 = vmul.f32 %v8981, 0.01
      %v9046 = vmul.f32 %v8982, 0.01
      %v9047 = vmul.f32 %v8983, 0.01
      %v9048 = vmul.f32 %v8984, 0.01
      %v9049 = vmul.f32 %v8985, 0.01
      %v9050 = vmul.f32 %v8986, 0.01
      %v9051 = vmul.f32 %v8987, 0.01
      %v9052 = vmul.f32 %v8988, 0.01
      %v9053 = vmul.f32 %v8989, 0.01
      %v9054 = vmul.f32 %v8990, 0.01
      %v9055 = vmul.f32 %v8991, 0.01
      %v9056 = vmul.f32 %v8992, 0.01
      %v9057 = vmul.f32 %v8993, 0.01
      %v9058 = vmul.f32 %v8994, 0.01
      %v9059 = vmul.f32 %v8995, 0.01
      %v9060 = vmul.f32 %v8996, 0.01
      %v9061 = vsel %vm8997, %v8965, %v9029
      %v9062 = vsel %vm8998, %v8966, %v9030
      %v9063 = vsel %vm8999, %v8967, %v9031
      %v9064 = vsel %vm9000, %v8968, %v9032
      %v9065 = vsel %vm9001, %v8969, %v9033
      %v9066 = vsel %vm9002, %v8970, %v9034
      %v9067 = vsel %vm9003, %v8971, %v9035
      %v9068 = vsel %vm9004, %v8972, %v9036
      %v9069 = vsel %vm9005, %v8973, %v9037
      %v9070 = vsel %vm9006, %v8974, %v9038
      %v9071 = vsel %vm9007, %v8975, %v9039
      %v9072 = vsel %vm9008, %v8976, %v9040
      %v9073 = vsel %vm9009, %v8977, %v9041
      %v9074 = vsel %vm9010, %v8978, %v9042
      %v9075 = vsel %vm9011, %v8979, %v9043
      %v9076 = vsel %vm9012, %v8980, %v9044
      %v9077 = vsel %vm9013, %v8981, %v9045
      %v9078 = vsel %vm9014, %v8982, %v9046
      %v9079 = vsel %vm9015, %v8983, %v9047
      %v9080 = vsel %vm9016, %v8984, %v9048
      %v9081 = vsel %vm9017, %v8985, %v9049
      %v9082 = vsel %vm9018, %v8986, %v9050
      %v9083 = vsel %vm9019, %v8987, %v9051
      %v9084 = vsel %vm9020, %v8988, %v9052
      %v9085 = vsel %vm9021, %v8989, %v9053
      %v9086 = vsel %vm9022, %v8990, %v9054
      %v9087 = vsel %vm9023, %v8991, %v9055
      %v9088 = vsel %vm9024, %v8992, %v9056
      %v9089 = vsel %vm9025, %v8993, %v9057
      %v9090 = vsel %vm9026, %v8994, %v9058
      %v9091 = vsel %vm9027, %v8995, %v9059
      %v9092 = vsel %vm9028, %v8996, %v9060
      %9093 = vst.msk [vmem:[%s260] sm:$0xff] %vm4315, %v9061
      %9094 = vst.msk [vmem:[%s260 + $0x8] sm:$0xff] %vm4315, %v9062
      %9095 = vst.msk [vmem:[%s260 + $0x10] sm:$0xff] %vm4315, %v9063
      %9096 = vst.msk [vmem:[%s260 + $0x18] sm:$0xff] %vm4315, %v9064
      %9097 = vst.msk [vmem:[%s260 + $0x20] sm:$0xff] %vm4315, %v9065
      %9098 = vst.msk [vmem:[%s260 + $0x28] sm:$0xff] %vm4315, %v9066
      %9099 = vst.msk [vmem:[%s260 + $0x30] sm:$0xff] %vm4315, %v9067
      %9100 = vst.msk [vmem:[%s260 + $0x38] sm:$0xff] %vm4315, %v9068
      %9101 = vst.msk [vmem:[%s260 + $0x40] sm:$0xff] %vm4315, %v9069
      %9102 = vst.msk [vmem:[%s260 + $0x48] sm:$0xff] %vm4315, %v9070
      %9103 = vst.msk [vmem:[%s260 + $0x50] sm:$0xff] %vm4315, %v9071
      %9104 = vst.msk [vmem:[%s260 + $0x58] sm:$0xff] %vm4315, %v9072
      %9105 = vst.msk [vmem:[%s260 + $0x60] sm:$0xff] %vm4315, %v9073
      %9106 = vst.msk [vmem:[%s260 + $0x68] sm:$0xff] %vm4315, %v9074
      %9107 = vst.msk [vmem:[%s260 + $0x70] sm:$0xff] %vm4315, %v9075
      %9108 = vst.msk [vmem:[%s260 + $0x78] sm:$0xff] %vm4315, %v9076
      %9109 = vst.msk [vmem:[%s260 + $0x80] sm:$0xff] %vm4315, %v9077
      %9110 = vst.msk [vmem:[%s260 + $0x88] sm:$0xff] %vm4315, %v9078
      %9111 = vst.msk [vmem:[%s260 + $0x90] sm:$0xff] %vm4315, %v9079
      %9112 = vst.msk [vmem:[%s260 + $0x98] sm:$0xff] %vm4315, %v9080
      %9113 = vst.msk [vmem:[%s260 + $0xa0] sm:$0xff] %vm4315, %v9081
      %9114 = vst.msk [vmem:[%s260 + $0xa8] sm:$0xff] %vm4315, %v9082
      %9115 = vst.msk [vmem:[%s260 + $0xb0] sm:$0xff] %vm4315, %v9083
      %9116 = vst.msk [vmem:[%s260 + $0xb8] sm:$0xff] %vm4315, %v9084
      %9117 = vst.msk [vmem:[%s260 + $0xc0] sm:$0xff] %vm4315, %v9085
      %9118 = vst.msk [vmem:[%s260 + $0xc8] sm:$0xff] %vm4315, %v9086
      %9119 = vst.msk [vmem:[%s260 + $0xd0] sm:$0xff] %vm4315, %v9087
      %9120 = vst.msk [vmem:[%s260 + $0xd8] sm:$0xff] %vm4315, %v9088
      %9121 = vst.msk [vmem:[%s260 + $0xe0] sm:$0xff] %vm4315, %v9089
      %9122 = vst.msk [vmem:[%s260 + $0xe8] sm:$0xff] %vm4315, %v9090
      %9123 = vst.msk [vmem:[%s260 + $0xf0] sm:$0xff] %vm4315, %v9091
      %9124 = vst.msk [vmem:[%s260 + $0xf8] sm:$0xff] %vm4315, %v9092
      %s9125 = sadd.s32 %s20, %s21
      %s9126 = smul.u32 32, %s9125
      %p9127 = scmp.lt.s32.totalorder %s9126, 63
      %s9128 = scalar_select %p9127, %s9126, 63
      %s9129 = smul.addr %s9128, 8
      %s9130 = scalar_lea.vmem %s5, %s9129
      // Predicated region
      $region41: #{tpu_custom_call.1} parent=39 // pred_check
        %p9131 = pneg %p163
      $region42: #{tpu_custom_call.1} parent=39 // pred_check_branch
        %9133 = sbr.rel (%p9131) target = $region44
      $region43: #{tpu_custom_call.1} parent=39 // pred_region
        %s9134 = sadd.s32 %s20, %s21
        %s9135 = smul.u32 32, %s9134
      $region44: #{tpu_custom_call.1} parent=39 // pred_fallthru
        _
    $region40: #{tpu_custom_call.1} parent=5 // pred_fallthru
      _
    %p9136 = scmp.le.s32.totalorder 2, %s11
    // Predicated region
    $region45: #{tpu_custom_call.1} parent=5 // pred_check
      %p9137 = pneg %p9136
    $region46: #{tpu_custom_call.1} parent=5 // pred_check_branch
      %9139 = sbr.rel (%p9137) target = $region48
    $region47: #{tpu_custom_call.1} parent=5 // pred_region
      %s9140 = ssub.s32 %s11, 2
      // Predicated region
      $region49: #{tpu_custom_call.1} parent=47 // pred_check
        %p9141 = pneg %p169
      $region50: #{tpu_custom_call.1} parent=47 // pred_check_branch
        %9143 = sbr.rel (%p9141) target = $region52
      $region51: #{tpu_custom_call.1} parent=47 // pred_region
        %s9144 = sadd.s32 %s22, %s23
        %s9145 = smul.u32 32, %s9144
        %p9146 = scmp.lt.s32.totalorder %s9145, 63
        %s9147 = scalar_select %p9146, %s9145, 63
        %s9148 = smul.addr %s9147, 8
        %s9149 = scalar_lea.vmem %s5, %s9148
      $region52: #{tpu_custom_call.1} parent=47 // pred_fallthru
        _
    $region48: #{tpu_custom_call.1} parent=5 // pred_fallthru
      _
  $region6: #{tpu_custom_call.1} parent=0 // loop_footer
    %s15 = sadd.s32 1, %s11
  $region7: #{tpu_custom_call.1} parent=0 // loop_footer_branch
    %10 = sbr.rel target = $region3
  $region8: #{tpu_custom_call.1} parent=0 // loop_exit
    _

</llo_original>
